<compile_context>
chip_gen: v6e
topology: v6e:2x2x1
jax: 0.10.0
libtpu: 0.0.40
codegen_flags: <defaults>
</compile_context>

<pallas_src>
import functools

import numpy as np
import jax
import jax.numpy as jnp
from jax import lax
from jax.experimental import pallas as pl
from jax.experimental.pallas import tpu as pltpu

MAX_OBJECT = 100          # fixed in the PyTorch module
_NSUM = 12                # number of scalar partial sums produced per block
_SUMW = 128               # lane-padded width of the partial-sum output row


def _sst_kernel(x_ref, t_ref, m0_ref, m1_ref, sums_ref, idx_ref, *, n1, n):
    """Processes TB (n1, n1) association slabs; emits 12 partial sums + argmax."""
    x = x_ref[...]                      # (tb, n1, n1) f32
    t_bf = t_ref[...]                   # (tb, n1, n1) bf16 (exact 0/1)
    m0c = m0_ref[...]                   # (tb, n1, 1)  f32  mask0 as column
    m1r = m1_ref[...]                   # (tb, 1, n1)  f32  mask1 as row

    # tiny index vectors (1 vreg each); broadcast lazily inside the selects
    sub_i = lax.broadcasted_iota(jnp.int32, (1, n1, 1), 1)
    lane_j = lax.broadcasted_iota(jnp.int32, (1, 1, n1), 2)
    big = n1                            # sentinel larger than any valid index

    # masks with the dummy slot (index n) zeroed, derived in-kernel
    m0p = jnp.where(sub_i == n, 0.0, m0c)      # (tb, n1, 1)
    m1n = jnp.where(lane_j == n, 0.0, m1r)     # (tb, 1, n1)

    t = t_bf.astype(jnp.float32)
    tm1 = m1r * t      # row-masked target  (== target_pre  on rows with mask0==1)
    tm1n = m1n * t     # row-masked target  (== target_next on rows with mask0==1)

    # ---- binary per-row sums on the MXU (exact: 0/1 operands, f32 acc) -------
    #   rs[b,i,0] = sum_j t[b,i,j]
    #   rs[b,i,1] = sum_j m1r[b,j]*t[b,i,j]
    #   rs[b,i,2] = sum_j m1n[b,j]*t[b,i,j]
    kidx = lax.broadcasted_iota(jnp.int32, (1, 8, 1), 1)
    w = jnp.where(kidx == 0, 1.0,
                  jnp.where(kidx == 1, m1r,
                            jnp.where(kidx == 2, m1n, 0.0)))      # (tb, 8, n1)
    rs = jnp.einsum('bij,bkj->bik', t_bf, w.astype(jnp.bfloat16),
                    preferred_element_type=jnp.float32)           # (tb, n1, 8)
    r_t = rs[:, :, 0:1]
    r_tm1 = rs[:, :, 1:2]
    r_tm1n = rs[:, :, 2:3]

    s_t = jnp.sum(r_t)                         # target.sum()
    s_tp = jnp.sum(m0p * r_tm1)                # target_pre.sum()
    s_tn = jnp.sum(m0c * r_tm1n)               # target_next.sum()
    s_tu = jnp.sum(m0p * r_tm1n)               # target_union.sum()

    # ---------------- "pre": log-softmax over dim 2 (lanes) --------------------
    z = (m0p * m1r) * x                        # mask_region_pre * input
    z = z - jnp.max(z, axis=2, keepdims=True)
    e = jnp.exp(z)
    s_e = jnp.sum(e, axis=2, keepdims=True)    # (tb, n1, 1), >= 1
    logp_pre = z - jnp.log(s_e)
    p_pre = e * pl.reciprocal(s_e, approx=False)

    # ---------------- "next": log-softmax over dim 1 (sublanes) ----------------
    zn = (m0c * m1n) * x                       # mask_region_next * input
    zn = zn - jnp.max(zn, axis=1, keepdims=True)
    en = jnp.exp(zn)
    s_en = jnp.sum(en, axis=1, keepdims=True)  # (tb, 1, n1), >= 1
    logp_next = zn - jnp.log(s_en)
    p_next = en * pl.reciprocal(s_en, approx=False)

    # cross-entropy terms: mask0 factor applied to the per-row lane sums
    ce_pre = jnp.sum(m0p * jnp.sum(tm1 * logp_pre, axis=2, keepdims=True))
    ce_next = jnp.sum(m0c * jnp.sum(tm1n * logp_next, axis=2, keepdims=True))

    # input_all in log space: top-left n x n block is max(pre, next), rest pre.
    region = jnp.logical_and(sub_i < n, lane_j < n)     # (1, n1, n1)
    logp_all = jnp.where(region, jnp.maximum(logp_pre, logp_next), logp_pre)
    ce_all = jnp.sum(m0p * jnp.sum(tm1 * logp_all, axis=2, keepdims=True))

    # |1 - p_pre - (1 - p_next)| == |p_next - p_pre|
    sim = jnp.sum(m0p * jnp.sum(tm1n * jnp.abs(p_next - p_pre),
                                axis=2, keepdims=True))

    # binary-target argmaxes: first index > 0.5, fallback 0 (rows/cols outside
    # the validity masks are irrelevant - they are multiplied out below)
    idx_t3 = jnp.min(jnp.where(tm1 > 0.5, lane_j, big), axis=2, keepdims=True)
    idx_t3 = jnp.where(idx_t3 == big, 0, idx_t3)        # (tb, n1, 1)
    idx_t2 = jnp.min(jnp.where(jnp.logical_and(m0c > 0.5, tm1n > 0.5),
                               sub_i, big), axis=1, keepdims=True)
    idx_t2 = jnp.where(idx_t2 == big, 0, idx_t2)        # (tb, 1, n1)

    # input_all / input_next argmaxes (log domain: log is monotone -> same argmax)
    mx = jnp.max(logp_all, axis=2, keepdims=True)
    idx_all = jnp.min(jnp.where(logp_all == mx, lane_j, big),
                      axis=2, keepdims=True)            # (tb, n1, 1)
    mxn = jnp.max(logp_next, axis=1, keepdims=True)
    idx_nx = jnp.min(jnp.where(logp_next == mxn, sub_i, big),
                     axis=1, keepdims=True)             # (tb, 1, n1)

    correct_pre = jnp.sum(m0p * (idx_all == idx_t3).astype(jnp.float32))
    mask_pre_cnt = jnp.sum(m0p)
    correct_next = jnp.sum(m1n * (idx_nx == idx_t2).astype(jnp.float32))
    mask_next_cnt = jnp.sum(m1n)

    # Pack the 12 scalar partials into lanes 0..11 and store per block
    # (no accumulate / no init -> grid axis stays "parallel").
    vals = [s_t, s_tp, s_tn, s_tu, ce_pre, ce_next, ce_all, sim,
            correct_pre, mask_pre_cnt, correct_next, mask_next_cnt]
    assert len(vals) == _NSUM
    lane = lax.broadcasted_iota(jnp.int32, (1, 1, _SUMW), 2)
    vec = jnp.zeros((1, 1, _SUMW), jnp.float32)
    for k, v in enumerate(vals):
        vec = jnp.where(lane == k, v, vec)
    sums_ref[...] = vec

    # TODO(synk): lane-dense (tb, n1) idx store skipped - the required
    # (tb,n1,1)->(tb,n1) relayout is not guaranteed to lower in Mosaic.
    idx_ref[...] = idx_all


def sst_loss_pallas(inp, target, mask0, mask1, *, tb=16,
                    vmem_limit_bytes=48 * 1024 * 1024):
    B, C, n1, _ = inp.shape
    n = n1 - 1
    bc = B * C

    tb = int(max(1, min(tb, bc)))
    if -(-bc // tb) < 2 and bc > 1:
        # keep >= 2 grid steps so a 2-TensorCore chip (v7x) can shard the
        # "parallel" axis; harmless on 1-TC chips.
        tb = -(-bc // 2)
    nblk = -(-bc // tb)
    bc_pad = nblk * tb
    pad = bc_pad - bc

    x = inp.reshape(bc, n1, n1).astype(jnp.float32)
    # target / masks are exactly 0/1 -> bf16 target is lossless and halves DMA.
    t = target.reshape(bc, n1, n1).astype(jnp.bfloat16)
    m0 = mask0.reshape(bc, n1).astype(jnp.float32)
    m1 = mask1.reshape(bc, n1).astype(jnp.float32)
    if pad:
        # zero-padded slabs contribute exactly 0 to every partial sum
        x = jnp.pad(x, ((0, pad), (0, 0), (0, 0)))
        t = jnp.pad(t, ((0, pad), (0, 0), (0, 0)))
        m0 = jnp.pad(m0, ((0, pad), (0, 0)))
        m1 = jnp.pad(m1, ((0, pad), (0, 0)))

    m0c = m0[:, :, None]                     # (bc_pad, n1, 1)
    m1r = m1[:, None, :]                     # (bc_pad, 1, n1)

    kernel = functools.partial(_sst_kernel, n1=n1, n=n)
    sums, idx = pl.pallas_call(
        kernel,
        out_shape=(jax.ShapeDtypeStruct((nblk, 1, _SUMW), jnp.float32),
                   jax.ShapeDtypeStruct((bc_pad, n1, 1), jnp.int32)),
        grid_spec=pltpu.PrefetchScalarGridSpec(
            num_scalar_prefetch=0,
            grid=(nblk,),
            in_specs=[pl.BlockSpec((tb, n1, n1), lambda b: (b, 0, 0)),
                      pl.BlockSpec((tb, n1, n1), lambda b: (b, 0, 0)),
                      pl.BlockSpec((tb, n1, 1), lambda b: (b, 0, 0)),
                      pl.BlockSpec((tb, 1, n1), lambda b: (b, 0, 0))],
            out_specs=[pl.BlockSpec((1, 1, _SUMW), lambda b: (b, 0, 0)),
                       pl.BlockSpec((tb, n1, 1), lambda b: (b, 0, 0))]),
        compiler_params=pltpu.CompilerParams(
            dimension_semantics=("parallel",),   # safe: outputs are per-block
            vmem_limit_bytes=vmem_limit_bytes),
    )(x, t, m0c, m1r)

    s = jnp.sum(sums[:, 0, :], axis=0)           # final 12-way reduction on host
    target_num, tnp_, tnn, tnu = s[0], s[1], s[2], s[3]
    ce_pre, ce_next, ce_all, sim = s[4], s[5], s[6], s[7]
    corr_pre, mpn, corr_next, mnn = s[8], s[9], s[10], s[11]

    one = jnp.float32(1.0)
    # The PyTorch `if int(x.item())` data-dependent branches become scalar
    # jnp.where glue (values are non-negative integer counts, exact in f32).
    loss_pre = -ce_pre / jnp.where(tnp_ >= 1.0, tnp_, one)
    loss_next = -ce_next / jnp.where(tnn >= 1.0, tnn, one)
    loss = -ce_all / jnp.where(jnp.logical_and(tnp_ >= 1.0, tnn >= 1.0), tnp_, one)
    loss_similarity = sim / jnp.where(tnu >= 1.0, target_num, one)

    accuracy_pre = jnp.where(mpn > 0, corr_pre / mpn, corr_pre + 1.0)
    accuracy_next = jnp.where(mnn > 0, corr_next / mnn, corr_next + 1.0)

    indexes_pre = idx[:bc, :n, 0].reshape(B, C, n)
    total_loss = (loss_pre + loss_next + loss + loss_similarity) / 4.0
    mean_acc = (accuracy_pre + accuracy_next) / 2.0
    return (loss_pre, loss_next, loss_similarity, total_loss,
            accuracy_pre, accuracy_next, mean_acc, indexes_pre)


def sst_loss_ref(inp, target, mask0, mask1):
    """Pure-JAX mirror of the PyTorch forward (for verification)."""
    B, C, n1, _ = inp.shape
    n = n1 - 1
    m0 = jnp.repeat(mask0[:, :, :, None], n1, axis=3)
    m1 = jnp.repeat(mask1[:, :, None, :], n1, axis=2)
    mask_region = m0 * m1
    mask_region_pre = mask_region.at[:, :, n, :].set(0.0)
    mask_region_next = mask_region.at[:, :, :, n].set(0.0)
    mask_region_union = mask_region_pre * mask_region_next

    input_pre = jax.nn.softmax(mask_region_pre * inp, axis=3)
    input_next = jax.nn.softmax(mask_region_next * inp, axis=2)
    input_all = input_pre.at[:, :, :n, :n].set(
        jnp.maximum(input_pre, input_next)[:, :, :n, :n])

    t = target
    target_pre = mask_region_pre * t
    target_next = mask_region_next * t
    target_union = mask_region_union * t
    tn, tnp_, tnn, tnu = t.sum(), target_pre.sum(), target_next.sum(), target_union.sum()
    one = jnp.float32(1.0)

    loss_pre = -(target_pre * jnp.log(input_pre)).sum() / jnp.where(tnp_ >= 1, tnp_, one)
    loss_next = -(target_next * jnp.log(input_next)).sum() / jnp.where(tnn >= 1, tnn, one)
    loss = -(target_pre * jnp.log(input_all)).sum() / jnp.where(
        (tnp_ >= 1) & (tnn >= 1), tnp_, one)
    loss_similarity = (target_union * jnp.abs(1 - input_pre - (1 - input_next))).sum() \
        / jnp.where(tnu >= 1, tn, one)

    idx_t = jnp.argmax(target_pre, axis=3)[:, :, :-1]
    idx_pre = jnp.argmax(input_all, axis=3)[:, :, :-1]
    mp = mask0[:, :, :-1]
    mpn = mp.sum()
    corr_pre = ((idx_pre == idx_t) & (mp > 0)).astype(jnp.float32).sum()
    acc_pre = jnp.where(mpn > 0, corr_pre / mpn, corr_pre + 1.0)

    idx_t2 = jnp.argmax(target_next, axis=2)[:, :, :-1]
    idx_next = jnp.argmax(input_next, axis=2)[:, :, :-1]
    mn = mask1[:, :, :-1]
    mnn = mn.sum()
    corr_next = ((idx_next == idx_t2) & (mn > 0)).astype(jnp.float32).sum()
    acc_next = jnp.where(mnn > 0, corr_next / mnn, corr_next + 1.0)

    return (loss_pre, loss_next, loss_similarity,
            (loss_pre + loss_next + loss + loss_similarity) / 4.0,
            acc_pre, acc_next, (acc_pre + acc_next) / 2.0,
            idx_pre.astype(jnp.int32))


if __name__ == "__main__":
    key = jax.random.PRNGKey(0)
    k1, k2, k3, k4 = jax.random.split(key, 4)
    B, C = 2, 3
    n1 = MAX_OBJECT + 1

    inp = jax.random.normal(k1, (B, C, n1, n1), jnp.float32)
    target = jax.random.bernoulli(k2, 0.05, (B, C, n1, n1)).astype(jnp.float32)
    mask0 = jax.random.bernoulli(k3, 0.3, (B, C, n1)).astype(jnp.float32)
    mask1 = jax.random.bernoulli(k4, 0.3, (B, C, n1)).astype(jnp.float32)
    # last ("dummy") slot is always valid, as in SST
    mask0 = mask0.at[..., MAX_OBJECT].set(1.0)
    mask1 = mask1.at[..., MAX_OBJECT].set(1.0)

    # tb=4 with bc=6 exercises both the multi-step parallel grid and slab padding.
    out = jax.block_until_ready(sst_loss_pallas(inp, target, mask0, mask1, tb=4))
    ref = jax.block_until_ready(sst_loss_ref(inp, target, mask0, mask1))

    for got, want in zip(out[:7], ref[:7]):
        np.testing.assert_allclose(np.asarray(got), np.asarray(want),
                                   rtol=1e-4, atol=1e-4)
    np.testing.assert_array_equal(np.asarray(out[7]), np.asarray(ref[7]))

    print("KERNEL_OK")
</pallas_src>

<mosaic_0001>
module attributes {stable_mosaic.version = 11 : i64} {
  func.func @_sst_kernel(%arg0: i32, %arg1: memref<4x101x101xf32, #tpu.memory_space<vmem>>, %arg2: memref<4x101x101xbf16, #tpu.memory_space<vmem>>, %arg3: memref<4x101x1xf32, #tpu.memory_space<vmem>>, %arg4: memref<4x1x101xf32, #tpu.memory_space<vmem>>, %arg5: memref<1x1x128xf32, #tpu.memory_space<vmem>>, %arg6: memref<4x101x1xi32, #tpu.memory_space<vmem>>) attributes {dimension_semantics = [#tpu.dimension_semantics<parallel>], iteration_bounds = array<i64: 2>, scalar_prefetch = 0 : i64, scratch_operands = 0 : i64, tpu.core_type = #tpu.core_type<tc>, window_params = [{transform_indices = @transform_0, window_bounds = array<i64: 4, 101, 101>}, {transform_indices = @transform_1, window_bounds = array<i64: 4, 101, 101>}, {transform_indices = @transform_2, window_bounds = array<i64: 4, 101, 1>}, {transform_indices = @transform_3, window_bounds = array<i64: 4, 1, 101>}, {transform_indices = @transform_4, window_bounds = array<i64: 1, 1, 128>}, {transform_indices = @transform_5, window_bounds = array<i64: 4, 101, 1>}]} {
    %c0 = arith.constant 0 : index
    %c0_0 = arith.constant 0 : index
    %c0_1 = arith.constant 0 : index
    %0 = vector.load %arg1[%c0, %c0_0, %c0_1] : memref<4x101x101xf32, #tpu.memory_space<vmem>>, vector<4x101x101xf32>
    %c0_2 = arith.constant 0 : index
    %c0_3 = arith.constant 0 : index
    %c0_4 = arith.constant 0 : index
    %1 = vector.load %arg2[%c0_2, %c0_3, %c0_4] : memref<4x101x101xbf16, #tpu.memory_space<vmem>>, vector<4x101x101xbf16>
    %c0_5 = arith.constant 0 : index
    %c0_6 = arith.constant 0 : index
    %c0_7 = arith.constant 0 : index
    %2 = vector.load %arg3[%c0_5, %c0_6, %c0_7] : memref<4x101x1xf32, #tpu.memory_space<vmem>>, vector<4x101x1xf32>
    %c0_8 = arith.constant 0 : index
    %c0_9 = arith.constant 0 : index
    %c0_10 = arith.constant 0 : index
    %3 = vector.load %arg4[%c0_8, %c0_9, %c0_10] : memref<4x1x101xf32, #tpu.memory_space<vmem>>, vector<4x1x101xf32>
    %4 = tpu.iota {dimensions = array<i32: 1>} : vector<1x101x1xi32>
    %5 = tpu.iota {dimensions = array<i32: 2>} : vector<1x1x101xi32>
    %c100_i32 = arith.constant 100 : i32
    %6 = vector.broadcast %c100_i32 : i32 to vector<1x101x1xi32>
    %7 = arith.cmpi eq, %4, %6 : vector<1x101x1xi32>
    %cst = arith.constant 0.000000e+00 : f32
    %8 = vector.shape_cast %7 : vector<1x101x1xi1> to vector<1x101x1xi1>
    %9 = vector.broadcast %8 : vector<1x101x1xi1> to vector<4x101x1xi1>
    %10 = vector.broadcast %cst : f32 to vector<4x101x1xf32>
    %11 = arith.select %9, %10, %2 : vector<4x101x1xi1>, vector<4x101x1xf32>
    %c100_i32_11 = arith.constant 100 : i32
    %12 = vector.broadcast %c100_i32_11 : i32 to vector<1x1x101xi32>
    %13 = arith.cmpi eq, %5, %12 : vector<1x1x101xi32>
    %cst_12 = arith.constant 0.000000e+00 : f32
    %14 = vector.shape_cast %13 : vector<1x1x101xi1> to vector<1x1x101xi1>
    %15 = vector.broadcast %14 : vector<1x1x101xi1> to vector<4x1x101xi1>
    %16 = vector.broadcast %cst_12 : f32 to vector<4x1x101xf32>
    %17 = arith.select %15, %16, %3 : vector<4x1x101xi1>, vector<4x1x101xf32>
    %18 = arith.extf %1 : vector<4x101x101xbf16> to vector<4x101x101xf32>
    %19 = vector.broadcast %3 : vector<4x1x101xf32> to vector<4x101x101xf32>
    %20 = arith.mulf %19, %18 : vector<4x101x101xf32>
    %21 = vector.broadcast %17 : vector<4x1x101xf32> to vector<4x101x101xf32>
    %22 = arith.mulf %21, %18 : vector<4x101x101xf32>
    %23 = tpu.iota {dimensions = array<i32: 1>} : vector<1x8x1xi32>
    %c0_i32 = arith.constant 0 : i32
    %24 = vector.broadcast %c0_i32 : i32 to vector<1x8x1xi32>
    %25 = arith.cmpi eq, %23, %24 : vector<1x8x1xi32>
    %c1_i32 = arith.constant 1 : i32
    %26 = vector.broadcast %c1_i32 : i32 to vector<1x8x1xi32>
    %27 = arith.cmpi eq, %23, %26 : vector<1x8x1xi32>
    %c2_i32 = arith.constant 2 : i32
    %28 = vector.broadcast %c2_i32 : i32 to vector<1x8x1xi32>
    %29 = arith.cmpi eq, %23, %28 : vector<1x8x1xi32>
    %cst_13 = arith.constant 0.000000e+00 : f32
    %30 = vector.shape_cast %29 : vector<1x8x1xi1> to vector<1x8x1xi1>
    %31 = vector.broadcast %30 : vector<1x8x1xi1> to vector<4x8x101xi1>
    %32 = vector.shape_cast %17 : vector<4x1x101xf32> to vector<4x1x101xf32>
    %33 = vector.broadcast %32 : vector<4x1x101xf32> to vector<4x8x101xf32>
    %34 = vector.broadcast %cst_13 : f32 to vector<4x8x101xf32>
    %35 = arith.select %31, %33, %34 : vector<4x8x101xi1>, vector<4x8x101xf32>
    %36 = vector.shape_cast %27 : vector<1x8x1xi1> to vector<1x8x1xi1>
    %37 = vector.broadcast %36 : vector<1x8x1xi1> to vector<4x8x101xi1>
    %38 = vector.shape_cast %3 : vector<4x1x101xf32> to vector<4x1x101xf32>
    %39 = vector.broadcast %38 : vector<4x1x101xf32> to vector<4x8x101xf32>
    %40 = arith.select %37, %39, %35 : vector<4x8x101xi1>, vector<4x8x101xf32>
    %cst_14 = arith.constant 1.000000e+00 : f32
    %41 = vector.shape_cast %25 : vector<1x8x1xi1> to vector<1x8x1xi1>
    %42 = vector.broadcast %41 : vector<1x8x1xi1> to vector<4x8x101xi1>
    %43 = vector.broadcast %cst_14 : f32 to vector<4x8x101xf32>
    %44 = arith.select %42, %43, %40 : vector<4x8x101xi1>, vector<4x8x101xf32>
    %45 = arith.truncf %44 : vector<4x8x101xf32> to vector<4x8x101xbf16>
    "tpu.trace_start"() <{level = 10 : i32, message = "bij,bkj->bik"}> : () -> ()
    %cst_15 = arith.constant dense<0.000000e+00> : vector<4x101x8xf32>
    %46 = tpu.matmul %1, %45, %cst_15 {dimension_numbers = #tpu.dot_dimension_numbers<[2], [2], [1], [1], [0, 0, 0, 1, 1, 1], [0], [0]>} : vector<4x101x101xbf16>, vector<4x8x101xbf16>, vector<4x101x8xf32> -> vector<4x101x8xf32>
    "tpu.trace_stop"() : () -> ()
    %47 = vector.extract_strided_slice %46 {offsets = [0, 0, 0], sizes = [4, 101, 1], strides = [1, 1, 1]} : vector<4x101x8xf32> to vector<4x101x1xf32>
    %48 = vector.extract_strided_slice %46 {offsets = [0, 0, 1], sizes = [4, 101, 1], strides = [1, 1, 1]} : vector<4x101x8xf32> to vector<4x101x1xf32>
    %49 = vector.extract_strided_slice %46 {offsets = [0, 0, 2], sizes = [4, 101, 1], strides = [1, 1, 1]} : vector<4x101x8xf32> to vector<4x101x1xf32>
    %50 = vector.shape_cast %47 : vector<4x101x1xf32> to vector<1x4x101x1xf32>
    %cst_16 = arith.constant dense<0.000000e+00> : vector<1xf32>
    %51 = vector.multi_reduction <add>, %50, %cst_16 [1, 2, 3] : vector<1x4x101x1xf32> to vector<1xf32>
    %52 = vector.shape_cast %51 : vector<1xf32> to vector<1x1x1x1xf32>
    %53 = vector.extract %52[0, 0, 0, 0] : f32 from vector<1x1x1x1xf32>
    %54 = arith.mulf %11, %48 : vector<4x101x1xf32>
    %55 = vector.shape_cast %54 : vector<4x101x1xf32> to vector<1x4x101x1xf32>
    %cst_17 = arith.constant dense<0.000000e+00> : vector<1xf32>
    %56 = vector.multi_reduction <add>, %55, %cst_17 [1, 2, 3] : vector<1x4x101x1xf32> to vector<1xf32>
    %57 = vector.shape_cast %56 : vector<1xf32> to vector<1x1x1x1xf32>
    %58 = vector.extract %57[0, 0, 0, 0] : f32 from vector<1x1x1x1xf32>
    %59 = arith.mulf %2, %49 : vector<4x101x1xf32>
    %60 = vector.shape_cast %59 : vector<4x101x1xf32> to vector<1x4x101x1xf32>
    %cst_18 = arith.constant dense<0.000000e+00> : vector<1xf32>
    %61 = vector.multi_reduction <add>, %60, %cst_18 [1, 2, 3] : vector<1x4x101x1xf32> to vector<1xf32>
    %62 = vector.shape_cast %61 : vector<1xf32> to vector<1x1x1x1xf32>
    %63 = vector.extract %62[0, 0, 0, 0] : f32 from vector<1x1x1x1xf32>
    %64 = arith.mulf %11, %49 : vector<4x101x1xf32>
    %65 = vector.shape_cast %64 : vector<4x101x1xf32> to vector<1x4x101x1xf32>
    %cst_19 = arith.constant dense<0.000000e+00> : vector<1xf32>
    %66 = vector.multi_reduction <add>, %65, %cst_19 [1, 2, 3] : vector<1x4x101x1xf32> to vector<1xf32>
    %67 = vector.shape_cast %66 : vector<1xf32> to vector<1x1x1x1xf32>
    %68 = vector.extract %67[0, 0, 0, 0] : f32 from vector<1x1x1x1xf32>
    %69 = vector.broadcast %11 : vector<4x101x1xf32> to vector<4x101x101xf32>
    %70 = vector.broadcast %3 : vector<4x1x101xf32> to vector<4x101x101xf32>
    %71 = arith.mulf %69, %70 : vector<4x101x101xf32>
    %72 = arith.mulf %71, %0 : vector<4x101x101xf32>
    %cst_20 = arith.constant dense<0xFF800000> : vector<4x101xf32>
    %73 = vector.multi_reduction <maximumf>, %72, %cst_20 [2] : vector<4x101x101xf32> to vector<4x101xf32>
    %74 = vector.shape_cast %73 : vector<4x101xf32> to vector<4x101x1xf32>
    %75 = vector.broadcast %74 : vector<4x101x1xf32> to vector<4x101x101xf32>
    %76 = arith.subf %72, %75 : vector<4x101x101xf32>
    %77 = math.exp %76 : vector<4x101x101xf32>
    %cst_21 = arith.constant dense<0.000000e+00> : vector<4x101xf32>
    %78 = vector.multi_reduction <add>, %77, %cst_21 [2] : vector<4x101x101xf32> to vector<4x101xf32>
    %79 = vector.shape_cast %78 : vector<4x101xf32> to vector<4x101x1xf32>
    %80 = math.log %79 : vector<4x101x1xf32>
    %81 = vector.broadcast %80 : vector<4x101x1xf32> to vector<4x101x101xf32>
    %82 = arith.subf %76, %81 : vector<4x101x101xf32>
    %83 = tpu.reciprocal %79 : vector<4x101x1xf32> -> vector<4x101x1xf32>
    %84 = vector.broadcast %83 : vector<4x101x1xf32> to vector<4x101x101xf32>
    %85 = arith.mulf %77, %84 : vector<4x101x101xf32>
    %86 = vector.broadcast %2 : vector<4x101x1xf32> to vector<4x101x101xf32>
    %87 = vector.broadcast %17 : vector<4x1x101xf32> to vector<4x101x101xf32>
    %88 = arith.mulf %86, %87 : vector<4x101x101xf32>
    %89 = arith.mulf %88, %0 : vector<4x101x101xf32>
    %cst_22 = arith.constant dense<0xFF800000> : vector<4x101xf32>
    %90 = vector.multi_reduction <maximumf>, %89, %cst_22 [1] : vector<4x101x101xf32> to vector<4x101xf32>
    %91 = vector.shape_cast %90 : vector<4x101xf32> to vector<4x1x101xf32>
    %92 = vector.broadcast %91 : vector<4x1x101xf32> to vector<4x101x101xf32>
    %93 = arith.subf %89, %92 : vector<4x101x101xf32>
    %94 = math.exp %93 : vector<4x101x101xf32>
    %cst_23 = arith.constant dense<0.000000e+00> : vector<4x101xf32>
    %95 = vector.multi_reduction <add>, %94, %cst_23 [1] : vector<4x101x101xf32> to vector<4x101xf32>
    %96 = vector.shape_cast %95 : vector<4x101xf32> to vector<4x1x101xf32>
    %97 = math.log %96 : vector<4x1x101xf32>
    %98 = vector.broadcast %97 : vector<4x1x101xf32> to vector<4x101x101xf32>
    %99 = arith.subf %93, %98 : vector<4x101x101xf32>
    %100 = tpu.reciprocal %96 : vector<4x1x101xf32> -> vector<4x1x101xf32>
    %101 = vector.broadcast %100 : vector<4x1x101xf32> to vector<4x101x101xf32>
    %102 = arith.mulf %94, %101 : vector<4x101x101xf32>
    %103 = arith.mulf %20, %82 : vector<4x101x101xf32>
    %cst_24 = arith.constant dense<0.000000e+00> : vector<4x101xf32>
    %104 = vector.multi_reduction <add>, %103, %cst_24 [2] : vector<4x101x101xf32> to vector<4x101xf32>
    %105 = vector.shape_cast %104 : vector<4x101xf32> to vector<4x101x1xf32>
    %106 = arith.mulf %11, %105 : vector<4x101x1xf32>
    %107 = vector.shape_cast %106 : vector<4x101x1xf32> to vector<1x4x101x1xf32>
    %cst_25 = arith.constant dense<0.000000e+00> : vector<1xf32>
    %108 = vector.multi_reduction <add>, %107, %cst_25 [1, 2, 3] : vector<1x4x101x1xf32> to vector<1xf32>
    %109 = vector.shape_cast %108 : vector<1xf32> to vector<1x1x1x1xf32>
    %110 = vector.extract %109[0, 0, 0, 0] : f32 from vector<1x1x1x1xf32>
    %111 = arith.mulf %22, %99 : vector<4x101x101xf32>
    %cst_26 = arith.constant dense<0.000000e+00> : vector<4x101xf32>
    %112 = vector.multi_reduction <add>, %111, %cst_26 [2] : vector<4x101x101xf32> to vector<4x101xf32>
    %113 = vector.shape_cast %112 : vector<4x101xf32> to vector<4x101x1xf32>
    %114 = arith.mulf %2, %113 : vector<4x101x1xf32>
    %115 = vector.shape_cast %114 : vector<4x101x1xf32> to vector<1x4x101x1xf32>
    %cst_27 = arith.constant dense<0.000000e+00> : vector<1xf32>
    %116 = vector.multi_reduction <add>, %115, %cst_27 [1, 2, 3] : vector<1x4x101x1xf32> to vector<1xf32>
    %117 = vector.shape_cast %116 : vector<1xf32> to vector<1x1x1x1xf32>
    %118 = vector.extract %117[0, 0, 0, 0] : f32 from vector<1x1x1x1xf32>
    %c100_i32_28 = arith.constant 100 : i32
    %119 = vector.broadcast %c100_i32_28 : i32 to vector<1x101x1xi32>
    %120 = arith.cmpi slt, %4, %119 : vector<1x101x1xi32>
    %c100_i32_29 = arith.constant 100 : i32
    %121 = vector.broadcast %c100_i32_29 : i32 to vector<1x1x101xi32>
    %122 = arith.cmpi slt, %5, %121 : vector<1x1x101xi32>
    %123 = vector.broadcast %120 : vector<1x101x1xi1> to vector<1x101x101xi1>
    %124 = vector.broadcast %122 : vector<1x1x101xi1> to vector<1x101x101xi1>
    %125 = arith.andi %123, %124 : vector<1x101x101xi1>
    %126 = arith.maximumf %82, %99 : vector<4x101x101xf32>
    %127 = vector.shape_cast %125 : vector<1x101x101xi1> to vector<1x101x101xi1>
    %128 = vector.broadcast %127 : vector<1x101x101xi1> to vector<4x101x101xi1>
    %129 = arith.select %128, %126, %82 : vector<4x101x101xi1>, vector<4x101x101xf32>
    %130 = arith.mulf %20, %129 : vector<4x101x101xf32>
    %cst_30 = arith.constant dense<0.000000e+00> : vector<4x101xf32>
    %131 = vector.multi_reduction <add>, %130, %cst_30 [2] : vector<4x101x101xf32> to vector<4x101xf32>
    %132 = vector.shape_cast %131 : vector<4x101xf32> to vector<4x101x1xf32>
    %133 = arith.mulf %11, %132 : vector<4x101x1xf32>
    %134 = vector.shape_cast %133 : vector<4x101x1xf32> to vector<1x4x101x1xf32>
    %cst_31 = arith.constant dense<0.000000e+00> : vector<1xf32>
    %135 = vector.multi_reduction <add>, %134, %cst_31 [1, 2, 3] : vector<1x4x101x1xf32> to vector<1xf32>
    %136 = vector.shape_cast %135 : vector<1xf32> to vector<1x1x1x1xf32>
    %137 = vector.extract %136[0, 0, 0, 0] : f32 from vector<1x1x1x1xf32>
    %138 = arith.subf %102, %85 : vector<4x101x101xf32>
    %139 = math.absf %138 : vector<4x101x101xf32>
    %140 = arith.mulf %22, %139 : vector<4x101x101xf32>
    %cst_32 = arith.constant dense<0.000000e+00> : vector<4x101xf32>
    %141 = vector.multi_reduction <add>, %140, %cst_32 [2] : vector<4x101x101xf32> to vector<4x101xf32>
    %142 = vector.shape_cast %141 : vector<4x101xf32> to vector<4x101x1xf32>
    %143 = arith.mulf %11, %142 : vector<4x101x1xf32>
    %144 = vector.shape_cast %143 : vector<4x101x1xf32> to vector<1x4x101x1xf32>
    %cst_33 = arith.constant dense<0.000000e+00> : vector<1xf32>
    %145 = vector.multi_reduction <add>, %144, %cst_33 [1, 2, 3] : vector<1x4x101x1xf32> to vector<1xf32>
    %146 = vector.shape_cast %145 : vector<1xf32> to vector<1x1x1x1xf32>
    %147 = vector.extract %146[0, 0, 0, 0] : f32 from vector<1x1x1x1xf32>
    %cst_34 = arith.constant 5.000000e-01 : f32
    %148 = vector.broadcast %cst_34 : f32 to vector<4x101x101xf32>
    %149 = arith.cmpf ogt, %20, %148 : vector<4x101x101xf32>
    %c101_i32 = arith.constant 101 : i32
    %150 = vector.shape_cast %5 : vector<1x1x101xi32> to vector<1x1x101xi32>
    %151 = vector.broadcast %150 : vector<1x1x101xi32> to vector<4x101x101xi32>
    %152 = vector.broadcast %c101_i32 : i32 to vector<4x101x101xi32>
    %153 = arith.select %149, %151, %152 : vector<4x101x101xi1>, vector<4x101x101xi32>
    %cst_35 = arith.constant dense<2147483647> : vector<4x101xi32>
    %154 = vector.multi_reduction <minsi>, %153, %cst_35 [2] : vector<4x101x101xi32> to vector<4x101xi32>
    %155 = vector.shape_cast %154 : vector<4x101xi32> to vector<4x101x1xi32>
    %c101_i32_36 = arith.constant 101 : i32
    %156 = vector.broadcast %c101_i32_36 : i32 to vector<4x101x1xi32>
    %157 = arith.cmpi eq, %155, %156 : vector<4x101x1xi32>
    %c0_i32_37 = arith.constant 0 : i32
    %158 = vector.broadcast %c0_i32_37 : i32 to vector<4x101x1xi32>
    %159 = arith.select %157, %158, %155 : vector<4x101x1xi1>, vector<4x101x1xi32>
    %cst_38 = arith.constant 5.000000e-01 : f32
    %160 = vector.broadcast %cst_38 : f32 to vector<4x101x1xf32>
    %161 = arith.cmpf ogt, %2, %160 : vector<4x101x1xf32>
    %cst_39 = arith.constant 5.000000e-01 : f32
    %162 = vector.broadcast %cst_39 : f32 to vector<4x101x101xf32>
    %163 = arith.cmpf ogt, %22, %162 : vector<4x101x101xf32>
    %164 = vector.broadcast %161 : vector<4x101x1xi1> to vector<4x101x101xi1>
    %165 = arith.andi %164, %163 : vector<4x101x101xi1>
    %c101_i32_40 = arith.constant 101 : i32
    %166 = vector.shape_cast %4 : vector<1x101x1xi32> to vector<1x101x1xi32>
    %167 = vector.broadcast %166 : vector<1x101x1xi32> to vector<4x101x101xi32>
    %168 = vector.broadcast %c101_i32_40 : i32 to vector<4x101x101xi32>
    %169 = arith.select %165, %167, %168 : vector<4x101x101xi1>, vector<4x101x101xi32>
    %cst_41 = arith.constant dense<2147483647> : vector<4x101xi32>
    %170 = vector.multi_reduction <minsi>, %169, %cst_41 [1] : vector<4x101x101xi32> to vector<4x101xi32>
    %171 = vector.shape_cast %170 : vector<4x101xi32> to vector<4x1x101xi32>
    %c101_i32_42 = arith.constant 101 : i32
    %172 = vector.broadcast %c101_i32_42 : i32 to vector<4x1x101xi32>
    %173 = arith.cmpi eq, %171, %172 : vector<4x1x101xi32>
    %c0_i32_43 = arith.constant 0 : i32
    %174 = vector.broadcast %c0_i32_43 : i32 to vector<4x1x101xi32>
    %175 = arith.select %173, %174, %171 : vector<4x1x101xi1>, vector<4x1x101xi32>
    %cst_44 = arith.constant dense<0xFF800000> : vector<4x101xf32>
    %176 = vector.multi_reduction <maximumf>, %129, %cst_44 [2] : vector<4x101x101xf32> to vector<4x101xf32>
    %177 = vector.shape_cast %176 : vector<4x101xf32> to vector<4x101x1xf32>
    %178 = vector.broadcast %177 : vector<4x101x1xf32> to vector<4x101x101xf32>
    %179 = arith.cmpf oeq, %129, %178 : vector<4x101x101xf32>
    %c101_i32_45 = arith.constant 101 : i32
    %180 = vector.shape_cast %5 : vector<1x1x101xi32> to vector<1x1x101xi32>
    %181 = vector.broadcast %180 : vector<1x1x101xi32> to vector<4x101x101xi32>
    %182 = vector.broadcast %c101_i32_45 : i32 to vector<4x101x101xi32>
    %183 = arith.select %179, %181, %182 : vector<4x101x101xi1>, vector<4x101x101xi32>
    %cst_46 = arith.constant dense<2147483647> : vector<4x101xi32>
    %184 = vector.multi_reduction <minsi>, %183, %cst_46 [2] : vector<4x101x101xi32> to vector<4x101xi32>
    %185 = vector.shape_cast %184 : vector<4x101xi32> to vector<4x101x1xi32>
    %cst_47 = arith.constant dense<0xFF800000> : vector<4x101xf32>
    %186 = vector.multi_reduction <maximumf>, %99, %cst_47 [1] : vector<4x101x101xf32> to vector<4x101xf32>
    %187 = vector.shape_cast %186 : vector<4x101xf32> to vector<4x1x101xf32>
    %188 = vector.broadcast %187 : vector<4x1x101xf32> to vector<4x101x101xf32>
    %189 = arith.cmpf oeq, %99, %188 : vector<4x101x101xf32>
    %c101_i32_48 = arith.constant 101 : i32
    %190 = vector.shape_cast %4 : vector<1x101x1xi32> to vector<1x101x1xi32>
    %191 = vector.broadcast %190 : vector<1x101x1xi32> to vector<4x101x101xi32>
    %192 = vector.broadcast %c101_i32_48 : i32 to vector<4x101x101xi32>
    %193 = arith.select %189, %191, %192 : vector<4x101x101xi1>, vector<4x101x101xi32>
    %cst_49 = arith.constant dense<2147483647> : vector<4x101xi32>
    %194 = vector.multi_reduction <minsi>, %193, %cst_49 [1] : vector<4x101x101xi32> to vector<4x101xi32>
    %195 = vector.shape_cast %194 : vector<4x101xi32> to vector<4x1x101xi32>
    %196 = arith.cmpi eq, %185, %159 : vector<4x101x1xi32>
    %197 = arith.extui %196 : vector<4x101x1xi1> to vector<4x101x1xi32>
    %198 = arith.sitofp %197 : vector<4x101x1xi32> to vector<4x101x1xf32>
    %199 = arith.mulf %11, %198 : vector<4x101x1xf32>
    %200 = vector.shape_cast %199 : vector<4x101x1xf32> to vector<1x4x101x1xf32>
    %cst_50 = arith.constant dense<0.000000e+00> : vector<1xf32>
    %201 = vector.multi_reduction <add>, %200, %cst_50 [1, 2, 3] : vector<1x4x101x1xf32> to vector<1xf32>
    %202 = vector.shape_cast %201 : vector<1xf32> to vector<1x1x1x1xf32>
    %203 = vector.extract %202[0, 0, 0, 0] : f32 from vector<1x1x1x1xf32>
    %204 = vector.shape_cast %11 : vector<4x101x1xf32> to vector<1x4x101x1xf32>
    %cst_51 = arith.constant dense<0.000000e+00> : vector<1xf32>
    %205 = vector.multi_reduction <add>, %204, %cst_51 [1, 2, 3] : vector<1x4x101x1xf32> to vector<1xf32>
    %206 = vector.shape_cast %205 : vector<1xf32> to vector<1x1x1x1xf32>
    %207 = vector.extract %206[0, 0, 0, 0] : f32 from vector<1x1x1x1xf32>
    %208 = arith.cmpi eq, %195, %175 : vector<4x1x101xi32>
    %209 = arith.extui %208 : vector<4x1x101xi1> to vector<4x1x101xi32>
    %210 = arith.sitofp %209 : vector<4x1x101xi32> to vector<4x1x101xf32>
    %211 = arith.mulf %17, %210 : vector<4x1x101xf32>
    %212 = vector.shape_cast %211 : vector<4x1x101xf32> to vector<1x4x1x101xf32>
    %cst_52 = arith.constant dense<0.000000e+00> : vector<1xf32>
    %213 = vector.multi_reduction <add>, %212, %cst_52 [1, 2, 3] : vector<1x4x1x101xf32> to vector<1xf32>
    %214 = vector.shape_cast %213 : vector<1xf32> to vector<1x1x1x1xf32>
    %215 = vector.extract %214[0, 0, 0, 0] : f32 from vector<1x1x1x1xf32>
    %216 = vector.shape_cast %17 : vector<4x1x101xf32> to vector<1x4x1x101xf32>
    %cst_53 = arith.constant dense<0.000000e+00> : vector<1xf32>
    %217 = vector.multi_reduction <add>, %216, %cst_53 [1, 2, 3] : vector<1x4x1x101xf32> to vector<1xf32>
    %218 = vector.shape_cast %217 : vector<1xf32> to vector<1x1x1x1xf32>
    %219 = vector.extract %218[0, 0, 0, 0] : f32 from vector<1x1x1x1xf32>
    %220 = tpu.iota {dimensions = array<i32: 2>} : vector<1x1x128xi32>
    %cst_54 = arith.constant 0.000000e+00 : f32
    %221 = vector.broadcast %cst_54 : f32 to vector<1x1x128xf32>
    %c0_i32_55 = arith.constant 0 : i32
    %222 = vector.broadcast %c0_i32_55 : i32 to vector<1x1x128xi32>
    %223 = arith.cmpi eq, %220, %222 : vector<1x1x128xi32>
    %224 = vector.broadcast %53 : f32 to vector<1x1x128xf32>
    %225 = arith.select %223, %224, %221 : vector<1x1x128xi1>, vector<1x1x128xf32>
    %c1_i32_56 = arith.constant 1 : i32
    %226 = vector.broadcast %c1_i32_56 : i32 to vector<1x1x128xi32>
    %227 = arith.cmpi eq, %220, %226 : vector<1x1x128xi32>
    %228 = vector.broadcast %58 : f32 to vector<1x1x128xf32>
    %229 = arith.select %227, %228, %225 : vector<1x1x128xi1>, vector<1x1x128xf32>
    %c2_i32_57 = arith.constant 2 : i32
    %230 = vector.broadcast %c2_i32_57 : i32 to vector<1x1x128xi32>
    %231 = arith.cmpi eq, %220, %230 : vector<1x1x128xi32>
    %232 = vector.broadcast %63 : f32 to vector<1x1x128xf32>
    %233 = arith.select %231, %232, %229 : vector<1x1x128xi1>, vector<1x1x128xf32>
    %c3_i32 = arith.constant 3 : i32
    %234 = vector.broadcast %c3_i32 : i32 to vector<1x1x128xi32>
    %235 = arith.cmpi eq, %220, %234 : vector<1x1x128xi32>
    %236 = vector.broadcast %68 : f32 to vector<1x1x128xf32>
    %237 = arith.select %235, %236, %233 : vector<1x1x128xi1>, vector<1x1x128xf32>
    %c4_i32 = arith.constant 4 : i32
    %238 = vector.broadcast %c4_i32 : i32 to vector<1x1x128xi32>
    %239 = arith.cmpi eq, %220, %238 : vector<1x1x128xi32>
    %240 = vector.broadcast %110 : f32 to vector<1x1x128xf32>
    %241 = arith.select %239, %240, %237 : vector<1x1x128xi1>, vector<1x1x128xf32>
    %c5_i32 = arith.constant 5 : i32
    %242 = vector.broadcast %c5_i32 : i32 to vector<1x1x128xi32>
    %243 = arith.cmpi eq, %220, %242 : vector<1x1x128xi32>
    %244 = vector.broadcast %118 : f32 to vector<1x1x128xf32>
    %245 = arith.select %243, %244, %241 : vector<1x1x128xi1>, vector<1x1x128xf32>
    %c6_i32 = arith.constant 6 : i32
    %246 = vector.broadcast %c6_i32 : i32 to vector<1x1x128xi32>
    %247 = arith.cmpi eq, %220, %246 : vector<1x1x128xi32>
    %248 = vector.broadcast %137 : f32 to vector<1x1x128xf32>
    %249 = arith.select %247, %248, %245 : vector<1x1x128xi1>, vector<1x1x128xf32>
    %c7_i32 = arith.constant 7 : i32
    %250 = vector.broadcast %c7_i32 : i32 to vector<1x1x128xi32>
    %251 = arith.cmpi eq, %220, %250 : vector<1x1x128xi32>
    %252 = vector.broadcast %147 : f32 to vector<1x1x128xf32>
    %253 = arith.select %251, %252, %249 : vector<1x1x128xi1>, vector<1x1x128xf32>
    %c8_i32 = arith.constant 8 : i32
    %254 = vector.broadcast %c8_i32 : i32 to vector<1x1x128xi32>
    %255 = arith.cmpi eq, %220, %254 : vector<1x1x128xi32>
    %256 = vector.broadcast %203 : f32 to vector<1x1x128xf32>
    %257 = arith.select %255, %256, %253 : vector<1x1x128xi1>, vector<1x1x128xf32>
    %c9_i32 = arith.constant 9 : i32
    %258 = vector.broadcast %c9_i32 : i32 to vector<1x1x128xi32>
    %259 = arith.cmpi eq, %220, %258 : vector<1x1x128xi32>
    %260 = vector.broadcast %207 : f32 to vector<1x1x128xf32>
    %261 = arith.select %259, %260, %257 : vector<1x1x128xi1>, vector<1x1x128xf32>
    %c10_i32 = arith.constant 10 : i32
    %262 = vector.broadcast %c10_i32 : i32 to vector<1x1x128xi32>
    %263 = arith.cmpi eq, %220, %262 : vector<1x1x128xi32>
    %264 = vector.broadcast %215 : f32 to vector<1x1x128xf32>
    %265 = arith.select %263, %264, %261 : vector<1x1x128xi1>, vector<1x1x128xf32>
    %c11_i32 = arith.constant 11 : i32
    %266 = vector.broadcast %c11_i32 : i32 to vector<1x1x128xi32>
    %267 = arith.cmpi eq, %220, %266 : vector<1x1x128xi32>
    %268 = vector.broadcast %219 : f32 to vector<1x1x128xf32>
    %269 = arith.select %267, %268, %265 : vector<1x1x128xi1>, vector<1x1x128xf32>
    %c0_58 = arith.constant 0 : index
    %c0_59 = arith.constant 0 : index
    %c0_60 = arith.constant 0 : index
    %270 = vector.load %arg5[%c0_58, %c0_59, %c0_60] : memref<1x1x128xf32, #tpu.memory_space<vmem>>, vector<1x1x128xf32>
    tpu.vector_store %arg5[%c0_58, %c0_59, %c0_60], %269 {strides = array<i32>} : memref<1x1x128xf32, #tpu.memory_space<vmem>>, vector<1x1x128xf32>,
    %c0_61 = arith.constant 0 : index
    %c0_62 = arith.constant 0 : index
    %c0_63 = arith.constant 0 : index
    %271 = vector.load %arg6[%c0_61, %c0_62, %c0_63] : memref<4x101x1xi32, #tpu.memory_space<vmem>>, vector<4x101x1xi32>
    tpu.vector_store %arg6[%c0_61, %c0_62, %c0_63], %185 {strides = array<i32>} : memref<4x101x1xi32, #tpu.memory_space<vmem>>, vector<4x101x1xi32>,
    return
  }
  func.func @transform_0(%arg0: i32) -> (i32, i32, i32) {
    %c0_i32 = arith.constant 0 : i32
    %c0_i32_0 = arith.constant 0 : i32
    %c0_i32_1 = arith.constant 0 : i32
    return %arg0, %c0_i32, %c0_i32_0 : i32, i32, i32
  }
  func.func @transform_1(%arg0: i32) -> (i32, i32, i32) {
    %c0_i32 = arith.constant 0 : i32
    %c0_i32_0 = arith.constant 0 : i32
    %c0_i32_1 = arith.constant 0 : i32
    return %arg0, %c0_i32, %c0_i32_0 : i32, i32, i32
  }
  func.func @transform_2(%arg0: i32) -> (i32, i32, i32) {
    %c0_i32 = arith.constant 0 : i32
    %c0_i32_0 = arith.constant 0 : i32
    %c0_i32_1 = arith.constant 0 : i32
    return %arg0, %c0_i32, %c0_i32_0 : i32, i32, i32
  }
  func.func @transform_3(%arg0: i32) -> (i32, i32, i32) {
    %c0_i32 = arith.constant 0 : i32
    %c0_i32_0 = arith.constant 0 : i32
    %c0_i32_1 = arith.constant 0 : i32
    return %arg0, %c0_i32, %c0_i32_0 : i32, i32, i32
  }
  func.func @transform_4(%arg0: i32) -> (i32, i32, i32) {
    %c0_i32 = arith.constant 0 : i32
    %c0_i32_0 = arith.constant 0 : i32
    %c0_i32_1 = arith.constant 0 : i32
    return %arg0, %c0_i32, %c0_i32_0 : i32, i32, i32
  }
  func.func @transform_5(%arg0: i32) -> (i32, i32, i32) {
    %c0_i32 = arith.constant 0 : i32
    %c0_i32_0 = arith.constant 0 : i32
    %c0_i32_1 = arith.constant 0 : i32
    return %arg0, %c0_i32, %c0_i32_0 : i32, i32, i32
  }
}

</mosaic_0001>

<llo_original>
// kernel: tpu_custom_call.1
$region0: #{tpu_custom_call.1}
  #allocation0 [shape = 'u32[]', space=smem, size = 0x4, offset = 0x4, fixed_abs, tag = 'smem constant byte address 0x4 - core index']
  #allocation1 [shape = 'u32[144,128]{1,0:T(1,128)}', space=vmem, size = 0x12000, scoped, tag = 'internal scratch']
  %s0 = inlined_call_operand.vmem [shape: f32[8,101,101], index: 0, kind: input, shape index: {}]
  %s1 = inlined_call_operand.vmem [shape: bf16[8,101,101], index: 1, kind: input, shape index: {}]
  %s2 = inlined_call_operand.vmem [shape: f32[8,101,1], index: 2, kind: input, shape index: {}]
  %s3 = inlined_call_operand.vmem [shape: f32[8,1,101], index: 3, kind: input, shape index: {}]
  %s4 = inlined_call_operand.hbm [shape: f32[2,1,128], index: 4, kind: output, shape index: {0}]
  %s5 = inlined_call_operand.vmem [shape: s32[8,101,1], index: 5, kind: output, shape index: {1}]
  %6 = xla_tuple %s4, %s5
  %s7 = sld [smem:[#allocation0]]
  $region57: #{tpu_custom_call.1} parent=0
    _
  %s9 = ssub.s32 1, %s7
  %s10 = scalar_select 0, %s9, %s7
  $region1: #{tpu_custom_call.1} parent=0
    #allocation2 [shape = 'u8[1024]{0}', space=vmem, size = 0x400, scoped, tag = 'output window, operand 0']
    #allocation3 [shape = 's32[2]{0}', space=sflag, size = 0x8, scoped, tag = 'scoped memory for tpu_custom_call.1']
    %11 = vsyncpa [#allocation3], 0
    %s12 = scalar_lea.sflag [#allocation3], 1
    %13 = vsyncpa %s12, 0
    loop: start=0, step=1, limit=4
    $region2: #{tpu_custom_call.1} parent=1 // loop_pre_header
      _
    $region3: #{tpu_custom_call.1} parent=1 // loop_header
      %s15 = sphi 0, %s19
      %p16 = scmp.ge.s32.totalorder %s15, 4
      %s25 = sphi 0, %s27
      %s28 = sphi 0, %s25
      %s29 = sphi 0, %s28
      %s45 = sphi 0, %s29
      %s51 = sphi 0, %s53
      %s54 = sphi 0, %s51
      %s55 = sphi 0, %s54
      %s71 = sphi 0, %s55
      %s77 = sphi 0, %s79
      %s80 = sphi 0, %s77
      %s81 = sphi 0, %s80
      %s97 = sphi 0, %s81
      %s103 = sphi 0, %s105
      %s106 = sphi 0, %s103
      %s107 = sphi 0, %s106
      %s123 = sphi 0, %s107
      %s129 = sphi 0, %s131
      %s132 = sphi 0, %s129
      %s133 = sphi 0, %s132
      %s149 = sphi 0, %s133
      %s155 = sphi 0, %s157
      %s158 = sphi 0, %s155
      %s159 = sphi 0, %s158
      %s175 = sphi 0, %s159
    $region4: #{tpu_custom_call.1} parent=1 // loop_header_branch
      %18 = sbr.rel (%p16) target = $region8
    $region5: #{tpu_custom_call.1} parent=1 // loop_body
      %s20 = ssub.s32 %s15, 1
      %s21 = ssub.s32 %s15, 2
      %s22 = sadd.s32 %s15, 1
      %s23 = ssub.s32 %s15, %s22
      %p24 = scmp.eq.s32.totalorder %s23, 0
      %s26 = sadd.s32 %s25, 1
      %s27 = scalar_select %p24, %s25, %s26
      %p30 = pneg %p24
      %p31 = scmp.eq.s32.totalorder %s15, 1
      %p32 = por %p30, %p31
      %p33 = scmp.ne.s32.totalorder %s25, %s28
      %p34 = scmp.eq.s32.totalorder %s15, 0
      %p35 = por %p33, %p34
      %p36 = scmp.ne.s32.totalorder %s25, %s28
      %p37 = scmp.eq.s32.totalorder %s20, 1
      %p38 = por %p36, %p37
      %p39 = scmp.ne.s32.totalorder %s28, %s29
      %p40 = scmp.eq.s32.totalorder %s20, 0
      %p41 = por %p39, %p40
      %p42 = scmp.ne.s32.totalorder %s28, %s29
      %p43 = scmp.eq.s32.totalorder %s21, 1
      %p44 = por %p42, %p43
      %p46 = scmp.ne.s32.totalorder %s29, %s45
      %p47 = scmp.eq.s32.totalorder %s21, 0
      %p48 = por %p46, %p47
      %s49 = ssub.s32 %s15, %s22
      %p50 = scmp.eq.s32.totalorder %s49, 0
      %s52 = sadd.s32 %s51, 1
      %s53 = scalar_select %p50, %s51, %s52
      %p56 = pneg %p50
      %p57 = scmp.eq.s32.totalorder %s15, 1
      %p58 = por %p56, %p57
      %p59 = scmp.ne.s32.totalorder %s51, %s54
      %p60 = scmp.eq.s32.totalorder %s15, 0
      %p61 = por %p59, %p60
      %p62 = scmp.ne.s32.totalorder %s51, %s54
      %p63 = scmp.eq.s32.totalorder %s20, 1
      %p64 = por %p62, %p63
      %p65 = scmp.ne.s32.totalorder %s54, %s55
      %p66 = scmp.eq.s32.totalorder %s20, 0
      %p67 = por %p65, %p66
      %p68 = scmp.ne.s32.totalorder %s54, %s55
      %p69 = scmp.eq.s32.totalorder %s21, 1
      %p70 = por %p68, %p69
      %p72 = scmp.ne.s32.totalorder %s55, %s71
      %p73 = scmp.eq.s32.totalorder %s21, 0
      %p74 = por %p72, %p73
      %s75 = ssub.s32 %s15, %s22
      %p76 = scmp.eq.s32.totalorder %s75, 0
      %s78 = sadd.s32 %s77, 1
      %s79 = scalar_select %p76, %s77, %s78
      %p82 = pneg %p76
      %p83 = scmp.eq.s32.totalorder %s15, 1
      %p84 = por %p82, %p83
      %p85 = scmp.ne.s32.totalorder %s77, %s80
      %p86 = scmp.eq.s32.totalorder %s15, 0
      %p87 = por %p85, %p86
      %p88 = scmp.ne.s32.totalorder %s77, %s80
      %p89 = scmp.eq.s32.totalorder %s20, 1
      %p90 = por %p88, %p89
      %p91 = scmp.ne.s32.totalorder %s80, %s81
      %p92 = scmp.eq.s32.totalorder %s20, 0
      %p93 = por %p91, %p92
      %p94 = scmp.ne.s32.totalorder %s80, %s81
      %p95 = scmp.eq.s32.totalorder %s21, 1
      %p96 = por %p94, %p95
      %p98 = scmp.ne.s32.totalorder %s81, %s97
      %p99 = scmp.eq.s32.totalorder %s21, 0
      %p100 = por %p98, %p99
      %s101 = ssub.s32 %s15, %s22
      %p102 = scmp.eq.s32.totalorder %s101, 0
      %s104 = sadd.s32 %s103, 1
      %s105 = scalar_select %p102, %s103, %s104
      %p108 = pneg %p102
      %p109 = scmp.eq.s32.totalorder %s15, 1
      %p110 = por %p108, %p109
      %p111 = scmp.ne.s32.totalorder %s103, %s106
      %p112 = scmp.eq.s32.totalorder %s15, 0
      %p113 = por %p111, %p112
      %p114 = scmp.ne.s32.totalorder %s103, %s106
      %p115 = scmp.eq.s32.totalorder %s20, 1
      %p116 = por %p114, %p115
      %p117 = scmp.ne.s32.totalorder %s106, %s107
      %p118 = scmp.eq.s32.totalorder %s20, 0
      %p119 = por %p117, %p118
      %p120 = scmp.ne.s32.totalorder %s106, %s107
      %p121 = scmp.eq.s32.totalorder %s21, 1
      %p122 = por %p120, %p121
      %p124 = scmp.ne.s32.totalorder %s107, %s123
      %p125 = scmp.eq.s32.totalorder %s21, 0
      %p126 = por %p124, %p125
      %s127 = ssub.s32 %s15, %s22
      %p128 = scmp.eq.s32.totalorder %s127, 0
      %s130 = sadd.s32 %s129, 1
      %s131 = scalar_select %p128, %s129, %s130
      %p134 = pneg %p128
      %p135 = scmp.eq.s32.totalorder %s15, 1
      %p136 = por %p134, %p135
      %p137 = scmp.ne.s32.totalorder %s129, %s132
      %p138 = scmp.eq.s32.totalorder %s15, 0
      %p139 = por %p137, %p138
      %p140 = scmp.ne.s32.totalorder %s129, %s132
      %p141 = scmp.eq.s32.totalorder %s20, 1
      %p142 = por %p140, %p141
      %p143 = scmp.ne.s32.totalorder %s132, %s133
      %p144 = scmp.eq.s32.totalorder %s20, 0
      %p145 = por %p143, %p144
      %p146 = scmp.ne.s32.totalorder %s132, %s133
      %p147 = scmp.eq.s32.totalorder %s21, 1
      %p148 = por %p146, %p147
      %p150 = scmp.ne.s32.totalorder %s133, %s149
      %p151 = scmp.eq.s32.totalorder %s21, 0
      %p152 = por %p150, %p151
      %s153 = ssub.s32 %s15, %s22
      %p154 = scmp.eq.s32.totalorder %s153, 0
      %s156 = sadd.s32 %s155, 1
      %s157 = scalar_select %p154, %s155, %s156
      %p160 = pneg %p154
      %p161 = scmp.eq.s32.totalorder %s15, 1
      %p162 = por %p160, %p161
      %p163 = scmp.ne.s32.totalorder %s155, %s158
      %p164 = scmp.eq.s32.totalorder %s15, 0
      %p165 = por %p163, %p164
      %p166 = scmp.ne.s32.totalorder %s155, %s158
      %p167 = scmp.eq.s32.totalorder %s20, 1
      %p168 = por %p166, %p167
      %p169 = scmp.ne.s32.totalorder %s158, %s159
      %p170 = scmp.eq.s32.totalorder %s20, 0
      %p171 = por %p169, %p170
      %p172 = scmp.ne.s32.totalorder %s158, %s159
      %p173 = scmp.eq.s32.totalorder %s21, 1
      %p174 = por %p172, %p173
      %p176 = scmp.ne.s32.totalorder %s159, %s175
      %p177 = scmp.eq.s32.totalorder %s21, 0
      %p178 = por %p176, %p177
      %p179 = scmp.le.s32.totalorder 1, %s15
      %p180 = scmp.lt.s32.totalorder %s15, 3
      %p181 = pnand %p179, %p180
      %p182 = pneg %p181
      // Predicated region
      $region9: #{tpu_custom_call.1} parent=5 // pred_check
        _
      $region10: #{tpu_custom_call.1} parent=5 // pred_check_branch
        %184 = sbr.rel (%p181) target = $region12
      $region11: #{tpu_custom_call.1} parent=5 // pred_region
        %s185 = ssub.s32 %s15, 1
      $region12: #{tpu_custom_call.1} parent=5 // pred_fallthru
        _
      %p186 = scmp.lt.s32.totalorder %s15, 2
      // Predicated region
      $region13: #{tpu_custom_call.1} parent=5 // pred_check
        %p187 = pneg %p186
      $region14: #{tpu_custom_call.1} parent=5 // pred_check_branch
        %189 = sbr.rel (%p187) target = $region16
      $region15: #{tpu_custom_call.1} parent=5 // pred_region
        // Predicated region
        $region17: #{tpu_custom_call.1} parent=15 // pred_check
          %p190 = pneg %p35
        $region18: #{tpu_custom_call.1} parent=15 // pred_check_branch
          %192 = sbr.rel (%p190) target = $region20
        $region19: #{tpu_custom_call.1} parent=15 // pred_region
          %s193 = smul.u32 4, %s15
          %p194 = scmp.lt.s32.totalorder %s193, 7
          %s195 = scalar_select %p194, %s193, 7
          %s196 = smul.addr %s195, 13
          %s197 = smul.addr %s196, 8
          %s198 = scalar_lea.vmem %s0, %s197
          %s199 = smul.u32 4, %s15
        $region20: #{tpu_custom_call.1} parent=15 // pred_fallthru
          _
        // Predicated region
        $region21: #{tpu_custom_call.1} parent=15 // pred_check
          %p200 = pneg %p61
        $region22: #{tpu_custom_call.1} parent=15 // pred_check_branch
          %202 = sbr.rel (%p200) target = $region24
        $region23: #{tpu_custom_call.1} parent=15 // pred_region
          %s203 = smul.u32 4, %s15
          %p204 = scmp.lt.s32.totalorder %s203, 7
          %s205 = scalar_select %p204, %s203, 7
          %s206 = smul.addr %s205, 13
          %s207 = smul.addr %s206, 4
          %s208 = scalar_lea.vmem %s1, %s207
          %s209 = smul.u32 4, %s15
        $region24: #{tpu_custom_call.1} parent=15 // pred_fallthru
          _
        // Predicated region
        $region25: #{tpu_custom_call.1} parent=15 // pred_check
          %p210 = pneg %p87
        $region26: #{tpu_custom_call.1} parent=15 // pred_check_branch
          %212 = sbr.rel (%p210) target = $region28
        $region27: #{tpu_custom_call.1} parent=15 // pred_region
          %s213 = smul.u32 4, %s15
          %p214 = scmp.lt.s32.totalorder %s213, 7
          %s215 = scalar_select %p214, %s213, 7
          %s216 = smul.addr %s215, 13
          %s217 = smul.addr %s216, 8
          %s218 = scalar_lea.vmem %s2, %s217
          %s219 = smul.u32 4, %s15
        $region28: #{tpu_custom_call.1} parent=15 // pred_fallthru
          _
        // Predicated region
        $region29: #{tpu_custom_call.1} parent=15 // pred_check
          %p220 = pneg %p113
        $region30: #{tpu_custom_call.1} parent=15 // pred_check_branch
          %222 = sbr.rel (%p220) target = $region32
        $region31: #{tpu_custom_call.1} parent=15 // pred_region
          %s223 = smul.u32 4, %s15
          %p224 = scmp.lt.s32.totalorder %s223, 7
          %s225 = scalar_select %p224, %s223, 7
          %s226 = scalar_lea.vmem %s3, %s225
          %s227 = smul.u32 4, %s15
        $region32: #{tpu_custom_call.1} parent=15 // pred_fallthru
          _
      $region16: #{tpu_custom_call.1} parent=5 // pred_fallthru
        _
      %p228 = scmp.le.s32.totalorder 1, %s15
      %p229 = scmp.lt.s32.totalorder %s15, 3
      %p230 = pnand %p228, %p229
      %p231 = pneg %p230
      // Predicated region
      $region33: #{tpu_custom_call.1} parent=5 // pred_check
        _
      $region34: #{tpu_custom_call.1} parent=5 // pred_check_branch
        %233 = sbr.rel (%p230) target = $region36
      $region35: #{tpu_custom_call.1} parent=5 // pred_region
        %s234 = ssub.s32 %s15, 1
        %s235 = smul.u32 4, %s20
        %p236 = scmp.lt.s32.totalorder %s235, 7
        %s237 = scalar_select %p236, %s235, 7
        %s238 = smul.addr %s237, 13
        %s239 = smul.addr %s238, 8
        %s240 = scalar_lea.vmem %s0, %s239
        %p241 = pneg %p41
        %p242 = pneg %p38
        %s243 = smul.u32 4, %s20
        %p244 = scmp.lt.s32.totalorder %s243, 7
        %s245 = scalar_select %p244, %s243, 7
        %s246 = smul.addr %s245, 13
        %s247 = smul.addr %s246, 4
        %s248 = scalar_lea.vmem %s1, %s247
        %p249 = pneg %p67
        %p250 = pneg %p64
        %s251 = smul.u32 4, %s20
        %p252 = scmp.lt.s32.totalorder %s251, 7
        %s253 = scalar_select %p252, %s251, 7
        %s254 = smul.addr %s253, 13
        %s255 = smul.addr %s254, 8
        %s256 = scalar_lea.vmem %s2, %s255
        %p257 = pneg %p93
        %p258 = pneg %p90
        %s259 = smul.u32 4, %s20
        %p260 = scmp.lt.s32.totalorder %s259, 7
        %s261 = scalar_select %p260, %s259, 7
        %s262 = scalar_lea.vmem %s3, %s261
        %p263 = pneg %p119
        %p264 = pneg %p116
        %p265 = pneg %p145
        %p266 = pneg %p142
        %s267 = sand.u32 %s132, 1
        %s268 = scalar_lea.sflag [#allocation3], %s267
        %s269 = sand.u32 %s132, 1
        %s270 = scalar_lea.vmem [#allocation2], %s269
        %p271 = pneg %p171
        %p272 = pneg %p168
        %s273 = smul.u32 4, %s20
        %p274 = scmp.lt.s32.totalorder %s273, 7
        %s275 = scalar_select %p274, %s273, 7
        %s276 = smul.addr %s275, 13
        %s277 = smul.addr %s276, 8
        %s278 = scalar_lea.vmem %s5, %s277
        %s279 = smul.u32 4, %s20
        %p280 = scmp.lt.s32.totalorder %s279, 7
        %s281 = scalar_select %p280, %s279, 7
        %s282 = smul.addr %s281, 13
        %s283 = smul.addr %s282, 8
        %s284 = scalar_lea.vmem %s0, %s283
        %s285 = smul.u32 4, %s20
        %s286 = smul.u32 4, %s20
        %p287 = scmp.lt.s32.totalorder %s286, 7
        %s288 = scalar_select %p287, %s286, 7
        %s289 = smul.addr %s288, 13
        %s290 = smul.addr %s289, 4
        %s291 = scalar_lea.vmem %s1, %s290
        %s292 = smul.u32 4, %s20
        %s293 = smul.u32 4, %s20
        %p294 = scmp.lt.s32.totalorder %s293, 7
        %s295 = scalar_select %p294, %s293, 7
        %s296 = smul.addr %s295, 13
        %s297 = smul.addr %s296, 8
        %s298 = scalar_lea.vmem %s2, %s297
        %s299 = smul.u32 4, %s20
        %s300 = smul.u32 4, %s20
        %p301 = scmp.lt.s32.totalorder %s300, 7
        %s302 = scalar_select %p301, %s300, 7
        %s303 = scalar_lea.vmem %s3, %s302
        %s304 = smul.u32 4, %s20
        %s305 = smul.u32 4, %s20
        %p306 = scmp.lt.s32.totalorder %s305, 7
        %s307 = scalar_select %p306, %s305, 7
        %s308 = smul.addr %s307, 13
        %s309 = smul.addr %s308, 8
        %s310 = scalar_lea.vmem %s5, %s309
        %s311 = smul.u32 4, %s20
        %v313 = vld [vmem:[%s284] sm:$0xff]
        %v314 = vld [vmem:[%s284 + $0x8] sm:$0xff]
        %v315 = vld [vmem:[%s284 + $0x10] sm:$0xff]
        %v316 = vld [vmem:[%s284 + $0x18] sm:$0xff]
        %v317 = vld [vmem:[%s284 + $0x20] sm:$0xff]
        %v318 = vld [vmem:[%s284 + $0x28] sm:$0xff]
        %v319 = vld [vmem:[%s284 + $0x30] sm:$0xff]
        %v320 = vld [vmem:[%s284 + $0x38] sm:$0xff]
        %v321 = vld [vmem:[%s284 + $0x40] sm:$0xff]
        %v322 = vld [vmem:[%s284 + $0x48] sm:$0xff]
        %v323 = vld [vmem:[%s284 + $0x50] sm:$0xff]
        %v324 = vld [vmem:[%s284 + $0x58] sm:$0xff]
        %v325 = vld [vmem:[%s284 + $0x60] sm:$0x1f]
        %v326 = vld [vmem:[%s284 + $0x68] sm:$0xff]
        %v327 = vld [vmem:[%s284 + $0x70] sm:$0xff]
        %v328 = vld [vmem:[%s284 + $0x78] sm:$0xff]
        %v329 = vld [vmem:[%s284 + $0x80] sm:$0xff]
        %v330 = vld [vmem:[%s284 + $0x88] sm:$0xff]
        %v331 = vld [vmem:[%s284 + $0x90] sm:$0xff]
        %v332 = vld [vmem:[%s284 + $0x98] sm:$0xff]
        %v333 = vld [vmem:[%s284 + $0xa0] sm:$0xff]
        %v334 = vld [vmem:[%s284 + $0xa8] sm:$0xff]
        %v335 = vld [vmem:[%s284 + $0xb0] sm:$0xff]
        %v336 = vld [vmem:[%s284 + $0xb8] sm:$0xff]
        %v337 = vld [vmem:[%s284 + $0xc0] sm:$0xff]
        %v338 = vld [vmem:[%s284 + $0xc8] sm:$0x1f]
        %v339 = vld [vmem:[%s284 + $0xd0] sm:$0xff]
        %v340 = vld [vmem:[%s284 + $0xd8] sm:$0xff]
        %v341 = vld [vmem:[%s284 + $0xe0] sm:$0xff]
        %v342 = vld [vmem:[%s284 + $0xe8] sm:$0xff]
        %v343 = vld [vmem:[%s284 + $0xf0] sm:$0xff]
        %v344 = vld [vmem:[%s284 + $0xf8] sm:$0xff]
        %v345 = vld [vmem:[%s284 + $0x100] sm:$0xff]
        %v346 = vld [vmem:[%s284 + $0x108] sm:$0xff]
        %v347 = vld [vmem:[%s284 + $0x110] sm:$0xff]
        %v348 = vld [vmem:[%s284 + $0x118] sm:$0xff]
        %v349 = vld [vmem:[%s284 + $0x120] sm:$0xff]
        %v350 = vld [vmem:[%s284 + $0x128] sm:$0xff]
        %v351 = vld [vmem:[%s284 + $0x130] sm:$0x1f]
        %v352 = vld [vmem:[%s284 + $0x138] sm:$0xff]
        %v353 = vld [vmem:[%s284 + $0x140] sm:$0xff]
        %v354 = vld [vmem:[%s284 + $0x148] sm:$0xff]
        %v355 = vld [vmem:[%s284 + $0x150] sm:$0xff]
        %v356 = vld [vmem:[%s284 + $0x158] sm:$0xff]
        %v357 = vld [vmem:[%s284 + $0x160] sm:$0xff]
        %v358 = vld [vmem:[%s284 + $0x168] sm:$0xff]
        %v359 = vld [vmem:[%s284 + $0x170] sm:$0xff]
        %v360 = vld [vmem:[%s284 + $0x178] sm:$0xff]
        %v361 = vld [vmem:[%s284 + $0x180] sm:$0xff]
        %v362 = vld [vmem:[%s284 + $0x188] sm:$0xff]
        %v363 = vld [vmem:[%s284 + $0x190] sm:$0xff]
        %v364 = vld [vmem:[%s284 + $0x198] sm:$0x1f]
        %v365 = vld [vmem:[%s291] sm:$0xf]
        %v366 = vld [vmem:[%s291 + $0x4] sm:$0xf]
        %v367 = vld [vmem:[%s291 + $0x8] sm:$0xf]
        %v368 = vld [vmem:[%s291 + $0xc] sm:$0xf]
        %v369 = vld [vmem:[%s291 + $0x10] sm:$0xf]
        %v370 = vld [vmem:[%s291 + $0x14] sm:$0xf]
        %v371 = vld [vmem:[%s291 + $0x18] sm:$0xf]
        %v372 = vld [vmem:[%s291 + $0x1c] sm:$0xf]
        %v373 = vld [vmem:[%s291 + $0x20] sm:$0xf]
        %v374 = vld [vmem:[%s291 + $0x24] sm:$0xf]
        %v375 = vld [vmem:[%s291 + $0x28] sm:$0xf]
        %v376 = vld [vmem:[%s291 + $0x2c] sm:$0xf]
        %v377 = vld [vmem:[%s291 + $0x30] sm:$0x7]
        %v378 = vld [vmem:[%s291 + $0x34] sm:$0xf]
        %v379 = vld [vmem:[%s291 + $0x38] sm:$0xf]
        %v380 = vld [vmem:[%s291 + $0x3c] sm:$0xf]
        %v381 = vld [vmem:[%s291 + $0x40] sm:$0xf]
        %v382 = vld [vmem:[%s291 + $0x44] sm:$0xf]
        %v383 = vld [vmem:[%s291 + $0x48] sm:$0xf]
        %v384 = vld [vmem:[%s291 + $0x4c] sm:$0xf]
        %v385 = vld [vmem:[%s291 + $0x50] sm:$0xf]
        %v386 = vld [vmem:[%s291 + $0x54] sm:$0xf]
        %v387 = vld [vmem:[%s291 + $0x58] sm:$0xf]
        %v388 = vld [vmem:[%s291 + $0x5c] sm:$0xf]
        %v389 = vld [vmem:[%s291 + $0x60] sm:$0xf]
        %v390 = vld [vmem:[%s291 + $0x64] sm:$0x7]
        %v391 = vld [vmem:[%s291 + $0x68] sm:$0xf]
        %v392 = vld [vmem:[%s291 + $0x6c] sm:$0xf]
        %v393 = vld [vmem:[%s291 + $0x70] sm:$0xf]
        %v394 = vld [vmem:[%s291 + $0x74] sm:$0xf]
        %v395 = vld [vmem:[%s291 + $0x78] sm:$0xf]
        %v396 = vld [vmem:[%s291 + $0x7c] sm:$0xf]
        %v397 = vld [vmem:[%s291 + $0x80] sm:$0xf]
        %v398 = vld [vmem:[%s291 + $0x84] sm:$0xf]
        %v399 = vld [vmem:[%s291 + $0x88] sm:$0xf]
        %v400 = vld [vmem:[%s291 + $0x8c] sm:$0xf]
        %v401 = vld [vmem:[%s291 + $0x90] sm:$0xf]
        %v402 = vld [vmem:[%s291 + $0x94] sm:$0xf]
        %v403 = vld [vmem:[%s291 + $0x98] sm:$0x7]
        %v404 = vld [vmem:[%s291 + $0x9c] sm:$0xf]
        %v405 = vld [vmem:[%s291 + $0xa0] sm:$0xf]
        %v406 = vld [vmem:[%s291 + $0xa4] sm:$0xf]
        %v407 = vld [vmem:[%s291 + $0xa8] sm:$0xf]
        %v408 = vld [vmem:[%s291 + $0xac] sm:$0xf]
        %v409 = vld [vmem:[%s291 + $0xb0] sm:$0xf]
        %v410 = vld [vmem:[%s291 + $0xb4] sm:$0xf]
        %v411 = vld [vmem:[%s291 + $0xb8] sm:$0xf]
        %v412 = vld [vmem:[%s291 + $0xbc] sm:$0xf]
        %v413 = vld [vmem:[%s291 + $0xc0] sm:$0xf]
        %v414 = vld [vmem:[%s291 + $0xc4] sm:$0xf]
        %v415 = vld [vmem:[%s291 + $0xc8] sm:$0xf]
        %v416 = vld [vmem:[%s291 + $0xcc] sm:$0x7]
        %v417 = vld [vmem:[%s298] sm:$0xff]
        %v418 = vld [vmem:[%s298 + $0x8] sm:$0xff]
        %v419 = vld [vmem:[%s298 + $0x10] sm:$0xff]
        %v420 = vld [vmem:[%s298 + $0x18] sm:$0xff]
        %v421 = vld [vmem:[%s298 + $0x20] sm:$0xff]
        %v422 = vld [vmem:[%s298 + $0x28] sm:$0xff]
        %v423 = vld [vmem:[%s298 + $0x30] sm:$0xff]
        %v424 = vld [vmem:[%s298 + $0x38] sm:$0xff]
        %v425 = vld [vmem:[%s298 + $0x40] sm:$0xff]
        %v426 = vld [vmem:[%s298 + $0x48] sm:$0xff]
        %v427 = vld [vmem:[%s298 + $0x50] sm:$0xff]
        %v428 = vld [vmem:[%s298 + $0x58] sm:$0xff]
        %v429 = vld [vmem:[%s298 + $0x60] sm:$0x1f]
        %v430 = vld [vmem:[%s298 + $0x68] sm:$0xff]
        %v431 = vld [vmem:[%s298 + $0x70] sm:$0xff]
        %v432 = vld [vmem:[%s298 + $0x78] sm:$0xff]
        %v433 = vld [vmem:[%s298 + $0x80] sm:$0xff]
        %v434 = vld [vmem:[%s298 + $0x88] sm:$0xff]
        %v435 = vld [vmem:[%s298 + $0x90] sm:$0xff]
        %v436 = vld [vmem:[%s298 + $0x98] sm:$0xff]
        %v437 = vld [vmem:[%s298 + $0xa0] sm:$0xff]
        %v438 = vld [vmem:[%s298 + $0xa8] sm:$0xff]
        %v439 = vld [vmem:[%s298 + $0xb0] sm:$0xff]
        %v440 = vld [vmem:[%s298 + $0xb8] sm:$0xff]
        %v441 = vld [vmem:[%s298 + $0xc0] sm:$0xff]
        %v442 = vld [vmem:[%s298 + $0xc8] sm:$0x1f]
        %v443 = vld [vmem:[%s298 + $0xd0] sm:$0xff]
        %v444 = vld [vmem:[%s298 + $0xd8] sm:$0xff]
        %v445 = vld [vmem:[%s298 + $0xe0] sm:$0xff]
        %v446 = vld [vmem:[%s298 + $0xe8] sm:$0xff]
        %v447 = vld [vmem:[%s298 + $0xf0] sm:$0xff]
        %v448 = vld [vmem:[%s298 + $0xf8] sm:$0xff]
        %v449 = vld [vmem:[%s298 + $0x100] sm:$0xff]
        %v450 = vld [vmem:[%s298 + $0x108] sm:$0xff]
        %v451 = vld [vmem:[%s298 + $0x110] sm:$0xff]
        %v452 = vld [vmem:[%s298 + $0x118] sm:$0xff]
        %v453 = vld [vmem:[%s298 + $0x120] sm:$0xff]
        %v454 = vld [vmem:[%s298 + $0x128] sm:$0xff]
        %v455 = vld [vmem:[%s298 + $0x130] sm:$0x1f]
        %v456 = vld [vmem:[%s298 + $0x138] sm:$0xff]
        %v457 = vld [vmem:[%s298 + $0x140] sm:$0xff]
        %v458 = vld [vmem:[%s298 + $0x148] sm:$0xff]
        %v459 = vld [vmem:[%s298 + $0x150] sm:$0xff]
        %v460 = vld [vmem:[%s298 + $0x158] sm:$0xff]
        %v461 = vld [vmem:[%s298 + $0x160] sm:$0xff]
        %v462 = vld [vmem:[%s298 + $0x168] sm:$0xff]
        %v463 = vld [vmem:[%s298 + $0x170] sm:$0xff]
        %v464 = vld [vmem:[%s298 + $0x178] sm:$0xff]
        %v465 = vld [vmem:[%s298 + $0x180] sm:$0xff]
        %v466 = vld [vmem:[%s298 + $0x188] sm:$0xff]
        %v467 = vld [vmem:[%s298 + $0x190] sm:$0xff]
        %v468 = vld [vmem:[%s298 + $0x198] sm:$0x1f]
        %v469 = vld [vmem:[%s303] sm:$0x1]
        %v470 = vld [vmem:[%s303 + $0x1] sm:$0x1]
        %v471 = vld [vmem:[%s303 + $0x2] sm:$0x1]
        %v472 = vld [vmem:[%s303 + $0x3] sm:$0x1]
        %v473 = vlaneseq
        %v474 = vshrl.u32 %v473, 7
        %v475 = vadd.s32 %v474, 8
        %v476 = vadd.s32 %v474, 16
        %v477 = vadd.s32 %v474, 24
        %v478 = vadd.s32 %v474, 32
        %v479 = vadd.s32 %v474, 40
        %v480 = vadd.s32 %v474, 48
        %v481 = vadd.s32 %v474, 56
        %v482 = vadd.s32 %v474, 64
        %v483 = vadd.s32 %v474, 72
        %v484 = vadd.s32 %v474, 80
        %v485 = vadd.s32 %v474, 88
        %v486 = vadd.s32 %v474, 96
        %v487 = vlaneseq
        %v488 = vand.u32 %v487, 127
        %vm489 = vcmp.eq.s32.totalorder %v474, 100
        %vm490 = vcmp.eq.s32.totalorder %v475, 100
        %vm491 = vcmp.eq.s32.totalorder %v476, 100
        %vm492 = vcmp.eq.s32.totalorder %v477, 100
        %vm493 = vcmp.eq.s32.totalorder %v478, 100
        %vm494 = vcmp.eq.s32.totalorder %v479, 100
        %vm495 = vcmp.eq.s32.totalorder %v480, 100
        %vm496 = vcmp.eq.s32.totalorder %v481, 100
        %vm497 = vcmp.eq.s32.totalorder %v482, 100
        %vm498 = vcmp.eq.s32.totalorder %v483, 100
        %vm499 = vcmp.eq.s32.totalorder %v484, 100
        %vm500 = vcmp.eq.s32.totalorder %v485, 100
        %vm501 = vcmp.eq.s32.totalorder %v486, 100
        %v502 = vsel %vm489, 1, 0
        %v503 = vsel %vm490, 1, 0
        %v504 = vsel %vm491, 1, 0
        %v505 = vsel %vm492, 1, 0
        %v506 = vsel %vm493, 1, 0
        %v507 = vsel %vm494, 1, 0
        %v508 = vsel %vm495, 1, 0
        %v509 = vsel %vm496, 1, 0
        %v510 = vsel %vm497, 1, 0
        %v511 = vsel %vm498, 1, 0
        %v512 = vsel %vm499, 1, 0
        %v513 = vsel %vm500, 1, 0
        %v514 = vsel %vm501, 1, 0
        %vm515 = vcmp.eq.s32.totalorder %v502, 1
        %vm516 = vcmp.eq.s32.totalorder %v503, 1
        %vm517 = vcmp.eq.s32.totalorder %v504, 1
        %vm518 = vcmp.eq.s32.totalorder %v505, 1
        %vm519 = vcmp.eq.s32.totalorder %v506, 1
        %vm520 = vcmp.eq.s32.totalorder %v507, 1
        %vm521 = vcmp.eq.s32.totalorder %v508, 1
        %vm522 = vcmp.eq.s32.totalorder %v509, 1
        %vm523 = vcmp.eq.s32.totalorder %v510, 1
        %vm524 = vcmp.eq.s32.totalorder %v511, 1
        %vm525 = vcmp.eq.s32.totalorder %v512, 1
        %vm526 = vcmp.eq.s32.totalorder %v513, 1
        %vm527 = vcmp.eq.s32.totalorder %v514, 1
        %v528 = vsel %vm515, 0.0, %v417
        %v529 = vsel %vm516, 0.0, %v418
        %v530 = vsel %vm517, 0.0, %v419
        %v531 = vsel %vm518, 0.0, %v420
        %v532 = vsel %vm519, 0.0, %v421
        %v533 = vsel %vm520, 0.0, %v422
        %v534 = vsel %vm521, 0.0, %v423
        %v535 = vsel %vm522, 0.0, %v424
        %v536 = vsel %vm523, 0.0, %v425
        %v537 = vsel %vm524, 0.0, %v426
        %v538 = vsel %vm525, 0.0, %v427
        %v539 = vsel %vm526, 0.0, %v428
        %v540 = vsel %vm527, 0.0, %v429
        %v541 = vsel %vm515, 0.0, %v430
        %v542 = vsel %vm516, 0.0, %v431
        %v543 = vsel %vm517, 0.0, %v432
        %v544 = vsel %vm518, 0.0, %v433
        %v545 = vsel %vm519, 0.0, %v434
        %v546 = vsel %vm520, 0.0, %v435
        %v547 = vsel %vm521, 0.0, %v436
        %v548 = vsel %vm522, 0.0, %v437
        %v549 = vsel %vm523, 0.0, %v438
        %v550 = vsel %vm524, 0.0, %v439
        %v551 = vsel %vm525, 0.0, %v440
        %v552 = vsel %vm526, 0.0, %v441
        %v553 = vsel %vm527, 0.0, %v442
        %v554 = vsel %vm515, 0.0, %v443
        %v555 = vsel %vm516, 0.0, %v444
        %v556 = vsel %vm517, 0.0, %v445
        %v557 = vsel %vm518, 0.0, %v446
        %v558 = vsel %vm519, 0.0, %v447
        %v559 = vsel %vm520, 0.0, %v448
        %v560 = vsel %vm521, 0.0, %v449
        %v561 = vsel %vm522, 0.0, %v450
        %v562 = vsel %vm523, 0.0, %v451
        %v563 = vsel %vm524, 0.0, %v452
        %v564 = vsel %vm525, 0.0, %v453
        %v565 = vsel %vm526, 0.0, %v454
        %v566 = vsel %vm527, 0.0, %v455
        %v567 = vsel %vm515, 0.0, %v456
        %v568 = vsel %vm516, 0.0, %v457
        %v569 = vsel %vm517, 0.0, %v458
        %v570 = vsel %vm518, 0.0, %v459
        %v571 = vsel %vm519, 0.0, %v460
        %v572 = vsel %vm520, 0.0, %v461
        %v573 = vsel %vm521, 0.0, %v462
        %v574 = vsel %vm522, 0.0, %v463
        %v575 = vsel %vm523, 0.0, %v464
        %v576 = vsel %vm524, 0.0, %v465
        %v577 = vsel %vm525, 0.0, %v466
        %v578 = vsel %vm526, 0.0, %v467
        %v579 = vsel %vm527, 0.0, %v468
        %vm580 = vcmp.eq.s32.totalorder %v488, 100
        %v581 = vsel %vm580, 1, 0
        %vm582 = vcmp.eq.s32.totalorder %v581, 1
        %v583 = vsel %vm582, 0.0, %v469
        %v584 = vsel %vm582, 0.0, %v470
        %v585 = vsel %vm582, 0.0, %v471
        %v586 = vsel %vm582, 0.0, %v472
        %v587 = vunpack.c.l.bf16 %v365
        %v588 = vunpack.c.l.bf16 %v366
        %v589 = vunpack.c.l.bf16 %v367
        %v590 = vunpack.c.l.bf16 %v368
        %v591 = vunpack.c.l.bf16 %v369
        %v592 = vunpack.c.l.bf16 %v370
        %v593 = vunpack.c.l.bf16 %v371
        %v594 = vunpack.c.l.bf16 %v372
        %v595 = vunpack.c.l.bf16 %v373
        %v596 = vunpack.c.l.bf16 %v374
        %v597 = vunpack.c.l.bf16 %v375
        %v598 = vunpack.c.l.bf16 %v376
        %v599 = vunpack.c.l.bf16 %v377
        %v600 = vunpack.c.l.bf16 %v378
        %v601 = vunpack.c.l.bf16 %v379
        %v602 = vunpack.c.l.bf16 %v380
        %v603 = vunpack.c.l.bf16 %v381
        %v604 = vunpack.c.l.bf16 %v382
        %v605 = vunpack.c.l.bf16 %v383
        %v606 = vunpack.c.l.bf16 %v384
        %v607 = vunpack.c.l.bf16 %v385
        %v608 = vunpack.c.l.bf16 %v386
        %v609 = vunpack.c.l.bf16 %v387
        %v610 = vunpack.c.l.bf16 %v388
        %v611 = vunpack.c.l.bf16 %v389
        %v612 = vunpack.c.l.bf16 %v390
        %v613 = vunpack.c.l.bf16 %v391
        %v614 = vunpack.c.l.bf16 %v392
        %v615 = vunpack.c.l.bf16 %v393
        %v616 = vunpack.c.l.bf16 %v394
        %v617 = vunpack.c.l.bf16 %v395
        %v618 = vunpack.c.l.bf16 %v396
        %v619 = vunpack.c.l.bf16 %v397
        %v620 = vunpack.c.l.bf16 %v398
        %v621 = vunpack.c.l.bf16 %v399
        %v622 = vunpack.c.l.bf16 %v400
        %v623 = vunpack.c.l.bf16 %v401
        %v624 = vunpack.c.l.bf16 %v402
        %v625 = vunpack.c.l.bf16 %v403
        %v626 = vunpack.c.l.bf16 %v404
        %v627 = vunpack.c.l.bf16 %v405
        %v628 = vunpack.c.l.bf16 %v406
        %v629 = vunpack.c.l.bf16 %v407
        %v630 = vunpack.c.l.bf16 %v408
        %v631 = vunpack.c.l.bf16 %v409
        %v632 = vunpack.c.l.bf16 %v410
        %v633 = vunpack.c.l.bf16 %v411
        %v634 = vunpack.c.l.bf16 %v412
        %v635 = vunpack.c.l.bf16 %v413
        %v636 = vunpack.c.l.bf16 %v414
        %v637 = vunpack.c.l.bf16 %v415
        %v638 = vunpack.c.l.bf16 %v416
        %v643 = vlaneseq
        %v644 = vshrl.u32 %v643, 7
        %v645 = vsub.s32 0, %v644
        %v646 = vrot.slane %v469, %v645
        %v647 = vlaneseq
        %v648 = vshrl.u32 %v647, 7
        %v649 = vsub.s32 0, %v648
        %v650 = vrot.slane %v470, %v649
        %v651 = vlaneseq
        %v652 = vshrl.u32 %v651, 7
        %v653 = vsub.s32 0, %v652
        %v654 = vrot.slane %v471, %v653
        %v655 = vlaneseq
        %v656 = vshrl.u32 %v655, 7
        %v657 = vsub.s32 0, %v656
        %v658 = vrot.slane %v472, %v657
        %v663 = vmul.f32 %v646, %v587
        %v664 = vmul.f32 %v646, %v588
        %v665 = vmul.f32 %v646, %v589
        %v666 = vmul.f32 %v646, %v590
        %v667 = vmul.f32 %v646, %v591
        %v668 = vmul.f32 %v646, %v592
        %v669 = vmul.f32 %v646, %v593
        %v670 = vmul.f32 %v646, %v594
        %v671 = vmul.f32 %v646, %v595
        %v672 = vmul.f32 %v646, %v596
        %v673 = vmul.f32 %v646, %v597
        %v674 = vmul.f32 %v646, %v598
        %v675 = vmul.f32 %v646, %v599
        %v676 = vmul.f32 %v650, %v600
        %v677 = vmul.f32 %v650, %v601
        %v678 = vmul.f32 %v650, %v602
        %v679 = vmul.f32 %v650, %v603
        %v680 = vmul.f32 %v650, %v604
        %v681 = vmul.f32 %v650, %v605
        %v682 = vmul.f32 %v650, %v606
        %v683 = vmul.f32 %v650, %v607
        %v684 = vmul.f32 %v650, %v608
        %v685 = vmul.f32 %v650, %v609
        %v686 = vmul.f32 %v650, %v610
        %v687 = vmul.f32 %v650, %v611
        %v688 = vmul.f32 %v650, %v612
        %v689 = vmul.f32 %v654, %v613
        %v690 = vmul.f32 %v654, %v614
        %v691 = vmul.f32 %v654, %v615
        %v692 = vmul.f32 %v654, %v616
        %v693 = vmul.f32 %v654, %v617
        %v694 = vmul.f32 %v654, %v618
        %v695 = vmul.f32 %v654, %v619
        %v696 = vmul.f32 %v654, %v620
        %v697 = vmul.f32 %v654, %v621
        %v698 = vmul.f32 %v654, %v622
        %v699 = vmul.f32 %v654, %v623
        %v700 = vmul.f32 %v654, %v624
        %v701 = vmul.f32 %v654, %v625
        %v702 = vmul.f32 %v658, %v626
        %v703 = vmul.f32 %v658, %v627
        %v704 = vmul.f32 %v658, %v628
        %v705 = vmul.f32 %v658, %v629
        %v706 = vmul.f32 %v658, %v630
        %v707 = vmul.f32 %v658, %v631
        %v708 = vmul.f32 %v658, %v632
        %v709 = vmul.f32 %v658, %v633
        %v710 = vmul.f32 %v658, %v634
        %v711 = vmul.f32 %v658, %v635
        %v712 = vmul.f32 %v658, %v636
        %v713 = vmul.f32 %v658, %v637
        %v714 = vmul.f32 %v658, %v638
        %v715 = vlaneseq
        %v716 = vshrl.u32 %v715, 7
        %v717 = vsub.s32 0, %v716
        %v718 = vrot.slane %v583, %v717
        %v719 = vlaneseq
        %v720 = vshrl.u32 %v719, 7
        %v721 = vsub.s32 0, %v720
        %v722 = vrot.slane %v584, %v721
        %v723 = vlaneseq
        %v724 = vshrl.u32 %v723, 7
        %v725 = vsub.s32 0, %v724
        %v726 = vrot.slane %v585, %v725
        %v727 = vlaneseq
        %v728 = vshrl.u32 %v727, 7
        %v729 = vsub.s32 0, %v728
        %v730 = vrot.slane %v586, %v729
        %v731 = vmul.f32 %v718, %v587
        %v732 = vmul.f32 %v718, %v588
        %v733 = vmul.f32 %v718, %v589
        %v734 = vmul.f32 %v718, %v590
        %v735 = vmul.f32 %v718, %v591
        %v736 = vmul.f32 %v718, %v592
        %v737 = vmul.f32 %v718, %v593
        %v738 = vmul.f32 %v718, %v594
        %v739 = vmul.f32 %v718, %v595
        %v740 = vmul.f32 %v718, %v596
        %v741 = vmul.f32 %v718, %v597
        %v742 = vmul.f32 %v718, %v598
        %v743 = vmul.f32 %v718, %v599
        %v744 = vmul.f32 %v722, %v600
        %v745 = vmul.f32 %v722, %v601
        %v746 = vmul.f32 %v722, %v602
        %v747 = vmul.f32 %v722, %v603
        %v748 = vmul.f32 %v722, %v604
        %v749 = vmul.f32 %v722, %v605
        %v750 = vmul.f32 %v722, %v606
        %v751 = vmul.f32 %v722, %v607
        %v752 = vmul.f32 %v722, %v608
        %v753 = vmul.f32 %v722, %v609
        %v754 = vmul.f32 %v722, %v610
        %v755 = vmul.f32 %v722, %v611
        %v756 = vmul.f32 %v722, %v612
        %v757 = vmul.f32 %v726, %v613
        %v758 = vmul.f32 %v726, %v614
        %v759 = vmul.f32 %v726, %v615
        %v760 = vmul.f32 %v726, %v616
        %v761 = vmul.f32 %v726, %v617
        %v762 = vmul.f32 %v726, %v618
        %v763 = vmul.f32 %v726, %v619
        %v764 = vmul.f32 %v726, %v620
        %v765 = vmul.f32 %v726, %v621
        %v766 = vmul.f32 %v726, %v622
        %v767 = vmul.f32 %v726, %v623
        %v768 = vmul.f32 %v726, %v624
        %v769 = vmul.f32 %v726, %v625
        %v770 = vmul.f32 %v730, %v626
        %v771 = vmul.f32 %v730, %v627
        %v772 = vmul.f32 %v730, %v628
        %v773 = vmul.f32 %v730, %v629
        %v774 = vmul.f32 %v730, %v630
        %v775 = vmul.f32 %v730, %v631
        %v776 = vmul.f32 %v730, %v632
        %v777 = vmul.f32 %v730, %v633
        %v778 = vmul.f32 %v730, %v634
        %v779 = vmul.f32 %v730, %v635
        %v780 = vmul.f32 %v730, %v636
        %v781 = vmul.f32 %v730, %v637
        %v782 = vmul.f32 %v730, %v638
        %vm783 = vcmp.eq.s32.totalorder %v474, 0
        %vm784 = vcmp.eq.s32.totalorder %v474, 1
        %vm785 = vcmp.eq.s32.totalorder %v474, 2
        %v786 = vsel %vm785, 1, 0
        %vm787 = vcmp.eq.s32.totalorder %v786, 1
        %v788 = vsel %vm787, %v718, 0.0
        %v789 = vsel %vm787, %v722, 0.0
        %v790 = vsel %vm787, %v726, 0.0
        %v791 = vsel %vm787, %v730, 0.0
        %v792 = vsel %vm784, 1, 0
        %vm793 = vcmp.eq.s32.totalorder %v792, 1
        %v794 = vsel %vm793, %v646, %v788
        %v795 = vsel %vm793, %v650, %v789
        %v796 = vsel %vm793, %v654, %v790
        %v797 = vsel %vm793, %v658, %v791
        %v798 = vsel %vm783, 1, 0
        %vm799 = vcmp.eq.s32.totalorder %v798, 1
        %v800 = vsel %vm799, 1.0, %v794
        %v801 = vsel %vm799, 1.0, %v795
        %v802 = vsel %vm799, 1.0, %v796
        %v803 = vsel %vm799, 1.0, %v797
        %v804 = vpack.c.bf16 %v800, %v800
        %v805 = vpack.c.bf16 %v801, %v801
        %v806 = vpack.c.bf16 %v802, %v802
        %v807 = vpack.c.bf16 %v803, %v803
        %v821 = vunpack.c.l.b16 %v365
        %v822 = vunpack.c.l.b16 %v366
        %v823 = vunpack.c.l.b16 %v367
        %v824 = vunpack.c.l.b16 %v368
        %v825 = vunpack.c.l.b16 %v369
        %v826 = vunpack.c.l.b16 %v370
        %v827 = vunpack.c.l.b16 %v371
        %v828 = vunpack.c.l.b16 %v372
        %v829 = vunpack.c.l.b16 %v373
        %v830 = vunpack.c.l.b16 %v374
        %v831 = vunpack.c.l.b16 %v375
        %v832 = vunpack.c.l.b16 %v376
        %v833 = vunpack.c.l.b16 %v377
        %v834 = vpack.c.b16 %v822, %v821
        %v835 = vpack.c.b16 %v824, %v823
        %v836 = vpack.c.b16 %v826, %v825
        %v837 = vpack.c.b16 %v828, %v827
        %v838 = vpack.c.b16 %v830, %v829
        %v839 = vpack.c.b16 %v832, %v831
        %v840 = vpack.c.b16 %v833, %v833
        %vm841 = vcmask 826368
        %v843 = vsel %vm841, %v834, 0
        %v846 = vsel %vm841, %v835, 0
        %v849 = vsel %vm841, %v836, 0
        %v852 = vsel %vm841, %v837, 0
        %v855 = vsel %vm841, %v838, 0
        %v858 = vsel %vm841, %v839, 0
        %v861 = vsel %vm841, %v840, 0
        %v864 = vsel %vm841, %v804, 0
        %866 = vmatprep.subr.bf16.mxu0 0
        %867 = vmatpush1.bf16.xpose.msra.mxu0 0
        %868 = vmatprep.subr.bf16.mxu0 0
        %869 = vmatpush1.bf16.xpose.msra.mxu0 0
        %870 = vmatprep.subr.bf16.mxu0 0
        %871 = vmatpush1.bf16.xpose.msra.mxu0 0
        %872 = vmatprep.subr.bf16.mxu0 0
        %873 = vmatpush1.bf16.xpose.msra.mxu0 0
        %874 = vmatprep.subr.bf16.mxu0 0
        %875 = vmatpush1.bf16.xpose.msra.mxu0 0
        %876 = vmatprep.subr.bf16.mxu0 0
        %877 = vmatpush1.bf16.xpose.msra.mxu0 0
        %878 = vmatprep.subr.bf16.mxu0 0
        %879 = vmatpush1.bf16.xpose.msra.mxu0 0
        %880 = vmatprep.subr.bf16.mxu0 0
        %881 = vmatpush1.bf16.xpose.msra.mxu0 %v864
        %882 = vmatprep.subr.bf16.mxu0 0
        %883 = vmatpush2.bf16.xpose.msra.mxu0 0
        %884 = vmatprep.subr.bf16.mxu0 0
        %885 = vmatpush2.bf16.xpose.msra.mxu0 0
        %886 = vmatprep.subr.bf16.mxu0 0
        %887 = vmatpush2.bf16.xpose.msra.mxu0 0
        %888 = vmatprep.subr.bf16.mxu0 0
        %889 = vmatpush2.bf16.xpose.msra.mxu0 0
        %890 = vmatprep.subr.bf16.mxu0 0
        %891 = vmatpush2.bf16.xpose.msra.mxu0 0
        %892 = vmatprep.subr.bf16.mxu0 0
        %893 = vmatpush2.bf16.xpose.msra.mxu0 0
        %894 = vmatprep.subr.bf16.mxu0 0
        %895 = vmatpush2.bf16.xpose.msra.mxu0 0
        %896 = vmatprep.subr.bf16.mxu0 0
        %897 = vmatpush2.bf16.xpose.msra.mxu0 0
        %898 = vmatprep.mubr.bf16.mxu0 0
        %899 = vmatmul.mubr.bf16.gmra.mxu0 %v843
        %v900 = vpop.f32.mrf.mxu0
        %v901 = vadd.f32 0.0, %v900
        %v902 = vpop.f32.mrf.mxu0
        %v903 = vpop.f32.mrf.mxu0
        %v904 = vadd.f32 0.0, %v903
        %v905 = vpop.f32.mrf.mxu0
        %906 = vmatprep.mubr.bf16.mxu0 0
        %907 = vmatmul.mubr.bf16.gmra.mxu0 %v846
        %v908 = vpop.f32.mrf.mxu0
        %v909 = vadd.f32 0.0, %v908
        %v910 = vpop.f32.mrf.mxu0
        %v911 = vpop.f32.mrf.mxu0
        %v912 = vadd.f32 0.0, %v911
        %v913 = vpop.f32.mrf.mxu0
        %914 = vmatprep.mubr.bf16.mxu0 0
        %915 = vmatmul.mubr.bf16.gmra.mxu0 %v849
        %v916 = vpop.f32.mrf.mxu0
        %v917 = vadd.f32 0.0, %v916
        %v918 = vpop.f32.mrf.mxu0
        %v919 = vpop.f32.mrf.mxu0
        %v920 = vadd.f32 0.0, %v919
        %v921 = vpop.f32.mrf.mxu0
        %922 = vmatprep.mubr.bf16.mxu0 0
        %923 = vmatmul.mubr.bf16.gmra.mxu0 %v852
        %v924 = vpop.f32.mrf.mxu0
        %v925 = vadd.f32 0.0, %v924
        %v926 = vpop.f32.mrf.mxu0
        %v927 = vpop.f32.mrf.mxu0
        %v928 = vadd.f32 0.0, %v927
        %v929 = vpop.f32.mrf.mxu0
        %930 = vmatprep.mubr.bf16.mxu0 0
        %931 = vmatmul.mubr.bf16.gmra.mxu0 %v855
        %v932 = vpop.f32.mrf.mxu0
        %v933 = vadd.f32 0.0, %v932
        %v934 = vpop.f32.mrf.mxu0
        %v935 = vpop.f32.mrf.mxu0
        %v936 = vadd.f32 0.0, %v935
        %v937 = vpop.f32.mrf.mxu0
        %938 = vmatprep.mubr.bf16.mxu0 0
        %939 = vmatmul.mubr.bf16.gmra.mxu0 %v858
        %v940 = vpop.f32.mrf.mxu0
        %v941 = vadd.f32 0.0, %v940
        %v942 = vpop.f32.mrf.mxu0
        %v943 = vpop.f32.mrf.mxu0
        %v944 = vadd.f32 0.0, %v943
        %v945 = vpop.f32.mrf.mxu0
        %946 = vmatprep.mubr.bf16.mxu0 0
        %947 = vmatmul.mubr.bf16.gmra.mxu0 %v861
        %v948 = vpop.f32.mrf.mxu0
        %v949 = vadd.f32 0.0, %v948
        %v950 = vpop.f32.mrf.mxu0
        %v951 = vpop.f32.mrf.mxu0
        %v952 = vpop.f32.mrf.mxu0
        %953 = vdwg.mxu0
        %v967 = vunpack.c.l.b16 %v378
        %v968 = vunpack.c.l.b16 %v379
        %v969 = vunpack.c.l.b16 %v380
        %v970 = vunpack.c.l.b16 %v381
        %v971 = vunpack.c.l.b16 %v382
        %v972 = vunpack.c.l.b16 %v383
        %v973 = vunpack.c.l.b16 %v384
        %v974 = vunpack.c.l.b16 %v385
        %v975 = vunpack.c.l.b16 %v386
        %v976 = vunpack.c.l.b16 %v387
        %v977 = vunpack.c.l.b16 %v388
        %v978 = vunpack.c.l.b16 %v389
        %v979 = vunpack.c.l.b16 %v390
        %v980 = vpack.c.b16 %v968, %v967
        %v981 = vpack.c.b16 %v970, %v969
        %v982 = vpack.c.b16 %v972, %v971
        %v983 = vpack.c.b16 %v974, %v973
        %v984 = vpack.c.b16 %v976, %v975
        %v985 = vpack.c.b16 %v978, %v977
        %v986 = vpack.c.b16 %v979, %v979
        %v988 = vsel %vm841, %v980, 0
        %v991 = vsel %vm841, %v981, 0
        %v994 = vsel %vm841, %v982, 0
        %v997 = vsel %vm841, %v983, 0
        %v1000 = vsel %vm841, %v984, 0
        %v1003 = vsel %vm841, %v985, 0
        %v1006 = vsel %vm841, %v986, 0
        %v1009 = vsel %vm841, %v805, 0
        %1011 = vmatprep.subr.bf16.mxu0 0
        %1012 = vmatpush1.bf16.xpose.msra.mxu0 0
        %1013 = vmatprep.subr.bf16.mxu0 0
        %1014 = vmatpush1.bf16.xpose.msra.mxu0 0
        %1015 = vmatprep.subr.bf16.mxu0 0
        %1016 = vmatpush1.bf16.xpose.msra.mxu0 0
        %1017 = vmatprep.subr.bf16.mxu0 0
        %1018 = vmatpush1.bf16.xpose.msra.mxu0 0
        %1019 = vmatprep.subr.bf16.mxu0 0
        %1020 = vmatpush1.bf16.xpose.msra.mxu0 0
        %1021 = vmatprep.subr.bf16.mxu0 0
        %1022 = vmatpush1.bf16.xpose.msra.mxu0 0
        %1023 = vmatprep.subr.bf16.mxu0 0
        %1024 = vmatpush1.bf16.xpose.msra.mxu0 0
        %1025 = vmatprep.subr.bf16.mxu0 0
        %1026 = vmatpush1.bf16.xpose.msra.mxu0 %v1009
        %1027 = vmatprep.subr.bf16.mxu0 0
        %1028 = vmatpush2.bf16.xpose.msra.mxu0 0
        %1029 = vmatprep.subr.bf16.mxu0 0
        %1030 = vmatpush2.bf16.xpose.msra.mxu0 0
        %1031 = vmatprep.subr.bf16.mxu0 0
        %1032 = vmatpush2.bf16.xpose.msra.mxu0 0
        %1033 = vmatprep.subr.bf16.mxu0 0
        %1034 = vmatpush2.bf16.xpose.msra.mxu0 0
        %1035 = vmatprep.subr.bf16.mxu0 0
        %1036 = vmatpush2.bf16.xpose.msra.mxu0 0
        %1037 = vmatprep.subr.bf16.mxu0 0
        %1038 = vmatpush2.bf16.xpose.msra.mxu0 0
        %1039 = vmatprep.subr.bf16.mxu0 0
        %1040 = vmatpush2.bf16.xpose.msra.mxu0 0
        %1041 = vmatprep.subr.bf16.mxu0 0
        %1042 = vmatpush2.bf16.xpose.msra.mxu0 0
        %1043 = vmatprep.mubr.bf16.mxu0 0
        %1044 = vmatmul.mubr.bf16.gmra.mxu0 %v988
        %v1045 = vpop.f32.mrf.mxu0
        %v1046 = vadd.f32 0.0, %v1045
        %v1047 = vpop.f32.mrf.mxu0
        %v1048 = vpop.f32.mrf.mxu0
        %v1049 = vadd.f32 0.0, %v1048
        %v1050 = vpop.f32.mrf.mxu0
        %1051 = vmatprep.mubr.bf16.mxu0 0
        %1052 = vmatmul.mubr.bf16.gmra.mxu0 %v991
        %v1053 = vpop.f32.mrf.mxu0
        %v1054 = vadd.f32 0.0, %v1053
        %v1055 = vpop.f32.mrf.mxu0
        %v1056 = vpop.f32.mrf.mxu0
        %v1057 = vadd.f32 0.0, %v1056
        %v1058 = vpop.f32.mrf.mxu0
        %1059 = vmatprep.mubr.bf16.mxu0 0
        %1060 = vmatmul.mubr.bf16.gmra.mxu0 %v994
        %v1061 = vpop.f32.mrf.mxu0
        %v1062 = vadd.f32 0.0, %v1061
        %v1063 = vpop.f32.mrf.mxu0
        %v1064 = vpop.f32.mrf.mxu0
        %v1065 = vadd.f32 0.0, %v1064
        %v1066 = vpop.f32.mrf.mxu0
        %1067 = vmatprep.mubr.bf16.mxu0 0
        %1068 = vmatmul.mubr.bf16.gmra.mxu0 %v997
        %v1069 = vpop.f32.mrf.mxu0
        %v1070 = vadd.f32 0.0, %v1069
        %v1071 = vpop.f32.mrf.mxu0
        %v1072 = vpop.f32.mrf.mxu0
        %v1073 = vadd.f32 0.0, %v1072
        %v1074 = vpop.f32.mrf.mxu0
        %1075 = vmatprep.mubr.bf16.mxu0 0
        %1076 = vmatmul.mubr.bf16.gmra.mxu0 %v1000
        %v1077 = vpop.f32.mrf.mxu0
        %v1078 = vadd.f32 0.0, %v1077
        %v1079 = vpop.f32.mrf.mxu0
        %v1080 = vpop.f32.mrf.mxu0
        %v1081 = vadd.f32 0.0, %v1080
        %v1082 = vpop.f32.mrf.mxu0
        %1083 = vmatprep.mubr.bf16.mxu0 0
        %1084 = vmatmul.mubr.bf16.gmra.mxu0 %v1003
        %v1085 = vpop.f32.mrf.mxu0
        %v1086 = vadd.f32 0.0, %v1085
        %v1087 = vpop.f32.mrf.mxu0
        %v1088 = vpop.f32.mrf.mxu0
        %v1089 = vadd.f32 0.0, %v1088
        %v1090 = vpop.f32.mrf.mxu0
        %1091 = vmatprep.mubr.bf16.mxu0 0
        %1092 = vmatmul.mubr.bf16.gmra.mxu0 %v1006
        %v1093 = vpop.f32.mrf.mxu0
        %v1094 = vadd.f32 0.0, %v1093
        %v1095 = vpop.f32.mrf.mxu0
        %v1096 = vpop.f32.mrf.mxu0
        %v1097 = vpop.f32.mrf.mxu0
        %1098 = vdwg.mxu0
        %v1112 = vunpack.c.l.b16 %v391
        %v1113 = vunpack.c.l.b16 %v392
        %v1114 = vunpack.c.l.b16 %v393
        %v1115 = vunpack.c.l.b16 %v394
        %v1116 = vunpack.c.l.b16 %v395
        %v1117 = vunpack.c.l.b16 %v396
        %v1118 = vunpack.c.l.b16 %v397
        %v1119 = vunpack.c.l.b16 %v398
        %v1120 = vunpack.c.l.b16 %v399
        %v1121 = vunpack.c.l.b16 %v400
        %v1122 = vunpack.c.l.b16 %v401
        %v1123 = vunpack.c.l.b16 %v402
        %v1124 = vunpack.c.l.b16 %v403
        %v1125 = vpack.c.b16 %v1113, %v1112
        %v1126 = vpack.c.b16 %v1115, %v1114
        %v1127 = vpack.c.b16 %v1117, %v1116
        %v1128 = vpack.c.b16 %v1119, %v1118
        %v1129 = vpack.c.b16 %v1121, %v1120
        %v1130 = vpack.c.b16 %v1123, %v1122
        %v1131 = vpack.c.b16 %v1124, %v1124
        %v1133 = vsel %vm841, %v1125, 0
        %v1136 = vsel %vm841, %v1126, 0
        %v1139 = vsel %vm841, %v1127, 0
        %v1142 = vsel %vm841, %v1128, 0
        %v1145 = vsel %vm841, %v1129, 0
        %v1148 = vsel %vm841, %v1130, 0
        %v1151 = vsel %vm841, %v1131, 0
        %v1154 = vsel %vm841, %v806, 0
        %1156 = vmatprep.subr.bf16.mxu0 0
        %1157 = vmatpush1.bf16.xpose.msra.mxu0 0
        %1158 = vmatprep.subr.bf16.mxu0 0
        %1159 = vmatpush1.bf16.xpose.msra.mxu0 0
        %1160 = vmatprep.subr.bf16.mxu0 0
        %1161 = vmatpush1.bf16.xpose.msra.mxu0 0
        %1162 = vmatprep.subr.bf16.mxu0 0
        %1163 = vmatpush1.bf16.xpose.msra.mxu0 0
        %1164 = vmatprep.subr.bf16.mxu0 0
        %1165 = vmatpush1.bf16.xpose.msra.mxu0 0
        %1166 = vmatprep.subr.bf16.mxu0 0
        %1167 = vmatpush1.bf16.xpose.msra.mxu0 0
        %1168 = vmatprep.subr.bf16.mxu0 0
        %1169 = vmatpush1.bf16.xpose.msra.mxu0 0
        %1170 = vmatprep.subr.bf16.mxu0 0
        %1171 = vmatpush1.bf16.xpose.msra.mxu0 %v1154
        %1172 = vmatprep.subr.bf16.mxu0 0
        %1173 = vmatpush2.bf16.xpose.msra.mxu0 0
        %1174 = vmatprep.subr.bf16.mxu0 0
        %1175 = vmatpush2.bf16.xpose.msra.mxu0 0
        %1176 = vmatprep.subr.bf16.mxu0 0
        %1177 = vmatpush2.bf16.xpose.msra.mxu0 0
        %1178 = vmatprep.subr.bf16.mxu0 0
        %1179 = vmatpush2.bf16.xpose.msra.mxu0 0
        %1180 = vmatprep.subr.bf16.mxu0 0
        %1181 = vmatpush2.bf16.xpose.msra.mxu0 0
        %1182 = vmatprep.subr.bf16.mxu0 0
        %1183 = vmatpush2.bf16.xpose.msra.mxu0 0
        %1184 = vmatprep.subr.bf16.mxu0 0
        %1185 = vmatpush2.bf16.xpose.msra.mxu0 0
        %1186 = vmatprep.subr.bf16.mxu0 0
        %1187 = vmatpush2.bf16.xpose.msra.mxu0 0
        %1188 = vmatprep.mubr.bf16.mxu0 0
        %1189 = vmatmul.mubr.bf16.gmra.mxu0 %v1133
        %v1190 = vpop.f32.mrf.mxu0
        %v1191 = vadd.f32 0.0, %v1190
        %v1192 = vpop.f32.mrf.mxu0
        %v1193 = vpop.f32.mrf.mxu0
        %v1194 = vadd.f32 0.0, %v1193
        %v1195 = vpop.f32.mrf.mxu0
        %1196 = vmatprep.mubr.bf16.mxu0 0
        %1197 = vmatmul.mubr.bf16.gmra.mxu0 %v1136
        %v1198 = vpop.f32.mrf.mxu0
        %v1199 = vadd.f32 0.0, %v1198
        %v1200 = vpop.f32.mrf.mxu0
        %v1201 = vpop.f32.mrf.mxu0
        %v1202 = vadd.f32 0.0, %v1201
        %v1203 = vpop.f32.mrf.mxu0
        %1204 = vmatprep.mubr.bf16.mxu0 0
        %1205 = vmatmul.mubr.bf16.gmra.mxu0 %v1139
        %v1206 = vpop.f32.mrf.mxu0
        %v1207 = vadd.f32 0.0, %v1206
        %v1208 = vpop.f32.mrf.mxu0
        %v1209 = vpop.f32.mrf.mxu0
        %v1210 = vadd.f32 0.0, %v1209
        %v1211 = vpop.f32.mrf.mxu0
        %1212 = vmatprep.mubr.bf16.mxu0 0
        %1213 = vmatmul.mubr.bf16.gmra.mxu0 %v1142
        %v1214 = vpop.f32.mrf.mxu0
        %v1215 = vadd.f32 0.0, %v1214
        %v1216 = vpop.f32.mrf.mxu0
        %v1217 = vpop.f32.mrf.mxu0
        %v1218 = vadd.f32 0.0, %v1217
        %v1219 = vpop.f32.mrf.mxu0
        %1220 = vmatprep.mubr.bf16.mxu0 0
        %1221 = vmatmul.mubr.bf16.gmra.mxu0 %v1145
        %v1222 = vpop.f32.mrf.mxu0
        %v1223 = vadd.f32 0.0, %v1222
        %v1224 = vpop.f32.mrf.mxu0
        %v1225 = vpop.f32.mrf.mxu0
        %v1226 = vadd.f32 0.0, %v1225
        %v1227 = vpop.f32.mrf.mxu0
        %1228 = vmatprep.mubr.bf16.mxu0 0
        %1229 = vmatmul.mubr.bf16.gmra.mxu0 %v1148
        %v1230 = vpop.f32.mrf.mxu0
        %v1231 = vadd.f32 0.0, %v1230
        %v1232 = vpop.f32.mrf.mxu0
        %v1233 = vpop.f32.mrf.mxu0
        %v1234 = vadd.f32 0.0, %v1233
        %v1235 = vpop.f32.mrf.mxu0
        %1236 = vmatprep.mubr.bf16.mxu0 0
        %1237 = vmatmul.mubr.bf16.gmra.mxu0 %v1151
        %v1238 = vpop.f32.mrf.mxu0
        %v1239 = vadd.f32 0.0, %v1238
        %v1240 = vpop.f32.mrf.mxu0
        %v1241 = vpop.f32.mrf.mxu0
        %v1242 = vpop.f32.mrf.mxu0
        %1243 = vdwg.mxu0
        %v1257 = vunpack.c.l.b16 %v404
        %v1258 = vunpack.c.l.b16 %v405
        %v1259 = vunpack.c.l.b16 %v406
        %v1260 = vunpack.c.l.b16 %v407
        %v1261 = vunpack.c.l.b16 %v408
        %v1262 = vunpack.c.l.b16 %v409
        %v1263 = vunpack.c.l.b16 %v410
        %v1264 = vunpack.c.l.b16 %v411
        %v1265 = vunpack.c.l.b16 %v412
        %v1266 = vunpack.c.l.b16 %v413
        %v1267 = vunpack.c.l.b16 %v414
        %v1268 = vunpack.c.l.b16 %v415
        %v1269 = vunpack.c.l.b16 %v416
        %v1270 = vpack.c.b16 %v1258, %v1257
        %v1271 = vpack.c.b16 %v1260, %v1259
        %v1272 = vpack.c.b16 %v1262, %v1261
        %v1273 = vpack.c.b16 %v1264, %v1263
        %v1274 = vpack.c.b16 %v1266, %v1265
        %v1275 = vpack.c.b16 %v1268, %v1267
        %v1276 = vpack.c.b16 %v1269, %v1269
        %v1278 = vsel %vm841, %v1270, 0
        %v1281 = vsel %vm841, %v1271, 0
        %v1284 = vsel %vm841, %v1272, 0
        %v1287 = vsel %vm841, %v1273, 0
        %v1290 = vsel %vm841, %v1274, 0
        %v1293 = vsel %vm841, %v1275, 0
        %v1296 = vsel %vm841, %v1276, 0
        %v1299 = vsel %vm841, %v807, 0
        %1301 = vmatprep.subr.bf16.mxu0 0
        %1302 = vmatpush1.bf16.xpose.msra.mxu0 0
        %1303 = vmatprep.subr.bf16.mxu0 0
        %1304 = vmatpush1.bf16.xpose.msra.mxu0 0
        %1305 = vmatprep.subr.bf16.mxu0 0
        %1306 = vmatpush1.bf16.xpose.msra.mxu0 0
        %1307 = vmatprep.subr.bf16.mxu0 0
        %1308 = vmatpush1.bf16.xpose.msra.mxu0 0
        %1309 = vmatprep.subr.bf16.mxu0 0
        %1310 = vmatpush1.bf16.xpose.msra.mxu0 0
        %1311 = vmatprep.subr.bf16.mxu0 0
        %1312 = vmatpush1.bf16.xpose.msra.mxu0 0
        %1313 = vmatprep.subr.bf16.mxu0 0
        %1314 = vmatpush1.bf16.xpose.msra.mxu0 0
        %1315 = vmatprep.subr.bf16.mxu0 0
        %1316 = vmatpush1.bf16.xpose.msra.mxu0 %v1299
        %1317 = vmatprep.subr.bf16.mxu0 0
        %1318 = vmatpush2.bf16.xpose.msra.mxu0 0
        %1319 = vmatprep.subr.bf16.mxu0 0
        %1320 = vmatpush2.bf16.xpose.msra.mxu0 0
        %1321 = vmatprep.subr.bf16.mxu0 0
        %1322 = vmatpush2.bf16.xpose.msra.mxu0 0
        %1323 = vmatprep.subr.bf16.mxu0 0
        %1324 = vmatpush2.bf16.xpose.msra.mxu0 0
        %1325 = vmatprep.subr.bf16.mxu0 0
        %1326 = vmatpush2.bf16.xpose.msra.mxu0 0
        %1327 = vmatprep.subr.bf16.mxu0 0
        %1328 = vmatpush2.bf16.xpose.msra.mxu0 0
        %1329 = vmatprep.subr.bf16.mxu0 0
        %1330 = vmatpush2.bf16.xpose.msra.mxu0 0
        %1331 = vmatprep.subr.bf16.mxu0 0
        %1332 = vmatpush2.bf16.xpose.msra.mxu0 0
        %1333 = vmatprep.mubr.bf16.mxu0 0
        %1334 = vmatmul.mubr.bf16.gmra.mxu0 %v1278
        %v1335 = vpop.f32.mrf.mxu0
        %v1336 = vadd.f32 0.0, %v1335
        %v1337 = vpop.f32.mrf.mxu0
        %v1338 = vpop.f32.mrf.mxu0
        %v1339 = vadd.f32 0.0, %v1338
        %v1340 = vpop.f32.mrf.mxu0
        %1341 = vmatprep.mubr.bf16.mxu0 0
        %1342 = vmatmul.mubr.bf16.gmra.mxu0 %v1281
        %v1343 = vpop.f32.mrf.mxu0
        %v1344 = vadd.f32 0.0, %v1343
        %v1345 = vpop.f32.mrf.mxu0
        %v1346 = vpop.f32.mrf.mxu0
        %v1347 = vadd.f32 0.0, %v1346
        %v1348 = vpop.f32.mrf.mxu0
        %1349 = vmatprep.mubr.bf16.mxu0 0
        %1350 = vmatmul.mubr.bf16.gmra.mxu0 %v1284
        %v1351 = vpop.f32.mrf.mxu0
        %v1352 = vadd.f32 0.0, %v1351
        %v1353 = vpop.f32.mrf.mxu0
        %v1354 = vpop.f32.mrf.mxu0
        %v1355 = vadd.f32 0.0, %v1354
        %v1356 = vpop.f32.mrf.mxu0
        %1357 = vmatprep.mubr.bf16.mxu0 0
        %1358 = vmatmul.mubr.bf16.gmra.mxu0 %v1287
        %v1359 = vpop.f32.mrf.mxu0
        %v1360 = vadd.f32 0.0, %v1359
        %v1361 = vpop.f32.mrf.mxu0
        %v1362 = vpop.f32.mrf.mxu0
        %v1363 = vadd.f32 0.0, %v1362
        %v1364 = vpop.f32.mrf.mxu0
        %1365 = vmatprep.mubr.bf16.mxu0 0
        %1366 = vmatmul.mubr.bf16.gmra.mxu0 %v1290
        %v1367 = vpop.f32.mrf.mxu0
        %v1368 = vadd.f32 0.0, %v1367
        %v1369 = vpop.f32.mrf.mxu0
        %v1370 = vpop.f32.mrf.mxu0
        %v1371 = vadd.f32 0.0, %v1370
        %v1372 = vpop.f32.mrf.mxu0
        %1373 = vmatprep.mubr.bf16.mxu0 0
        %1374 = vmatmul.mubr.bf16.gmra.mxu0 %v1293
        %v1375 = vpop.f32.mrf.mxu0
        %v1376 = vadd.f32 0.0, %v1375
        %v1377 = vpop.f32.mrf.mxu0
        %v1378 = vpop.f32.mrf.mxu0
        %v1379 = vadd.f32 0.0, %v1378
        %v1380 = vpop.f32.mrf.mxu0
        %1381 = vmatprep.mubr.bf16.mxu0 0
        %1382 = vmatmul.mubr.bf16.gmra.mxu0 %v1296
        %v1383 = vpop.f32.mrf.mxu0
        %v1384 = vadd.f32 0.0, %v1383
        %v1385 = vpop.f32.mrf.mxu0
        %v1386 = vpop.f32.mrf.mxu0
        %v1387 = vpop.f32.mrf.mxu0
        %1388 = vdwg.mxu0
        %vm1389 = vcmask 7168
        %v1390 = vsel %vm1389, %v901, 0.0
        %v1391 = vsel %vm1389, %v904, 0.0
        %v1392 = vadd.f32 %v1390, %v1391
        %v1393 = vsel %vm1389, %v909, 0.0
        %v1394 = vadd.f32 %v1392, %v1393
        %v1395 = vsel %vm1389, %v912, 0.0
        %v1396 = vadd.f32 %v1394, %v1395
        %v1397 = vsel %vm1389, %v917, 0.0
        %v1398 = vadd.f32 %v1396, %v1397
        %v1399 = vsel %vm1389, %v920, 0.0
        %v1400 = vadd.f32 %v1398, %v1399
        %v1401 = vsel %vm1389, %v925, 0.0
        %v1402 = vadd.f32 %v1400, %v1401
        %v1403 = vsel %vm1389, %v928, 0.0
        %v1404 = vadd.f32 %v1402, %v1403
        %v1405 = vsel %vm1389, %v933, 0.0
        %v1406 = vadd.f32 %v1404, %v1405
        %v1407 = vsel %vm1389, %v936, 0.0
        %v1408 = vadd.f32 %v1406, %v1407
        %v1409 = vsel %vm1389, %v941, 0.0
        %v1410 = vadd.f32 %v1408, %v1409
        %v1411 = vsel %vm1389, %v944, 0.0
        %v1412 = vadd.f32 %v1410, %v1411
        %vm1413 = vcmask 4096
        %v1414 = vsel %vm1413, %v949, 0.0
        %v1415 = vadd.f32 %v1412, %v1414
        %v1416 = vsel %vm1389, %v1046, 0.0
        %v1417 = vadd.f32 %v1415, %v1416
        %v1418 = vsel %vm1389, %v1049, 0.0
        %v1419 = vadd.f32 %v1417, %v1418
        %v1420 = vsel %vm1389, %v1054, 0.0
        %v1421 = vadd.f32 %v1419, %v1420
        %v1422 = vsel %vm1389, %v1057, 0.0
        %v1423 = vadd.f32 %v1421, %v1422
        %v1424 = vsel %vm1389, %v1062, 0.0
        %v1425 = vadd.f32 %v1423, %v1424
        %v1426 = vsel %vm1389, %v1065, 0.0
        %v1427 = vadd.f32 %v1425, %v1426
        %v1428 = vsel %vm1389, %v1070, 0.0
        %v1429 = vadd.f32 %v1427, %v1428
        %v1430 = vsel %vm1389, %v1073, 0.0
        %v1431 = vadd.f32 %v1429, %v1430
        %v1432 = vsel %vm1389, %v1078, 0.0
        %v1433 = vadd.f32 %v1431, %v1432
        %v1434 = vsel %vm1389, %v1081, 0.0
        %v1435 = vadd.f32 %v1433, %v1434
        %v1436 = vsel %vm1389, %v1086, 0.0
        %v1437 = vadd.f32 %v1435, %v1436
        %v1438 = vsel %vm1389, %v1089, 0.0
        %v1439 = vadd.f32 %v1437, %v1438
        %v1440 = vsel %vm1413, %v1094, 0.0
        %v1441 = vadd.f32 %v1439, %v1440
        %v1442 = vsel %vm1389, %v1191, 0.0
        %v1443 = vadd.f32 %v1441, %v1442
        %v1444 = vsel %vm1389, %v1194, 0.0
        %v1445 = vadd.f32 %v1443, %v1444
        %v1446 = vsel %vm1389, %v1199, 0.0
        %v1447 = vadd.f32 %v1445, %v1446
        %v1448 = vsel %vm1389, %v1202, 0.0
        %v1449 = vadd.f32 %v1447, %v1448
        %v1450 = vsel %vm1389, %v1207, 0.0
        %v1451 = vadd.f32 %v1449, %v1450
        %v1452 = vsel %vm1389, %v1210, 0.0
        %v1453 = vadd.f32 %v1451, %v1452
        %v1454 = vsel %vm1389, %v1215, 0.0
        %v1455 = vadd.f32 %v1453, %v1454
        %v1456 = vsel %vm1389, %v1218, 0.0
        %v1457 = vadd.f32 %v1455, %v1456
        %v1458 = vsel %vm1389, %v1223, 0.0
        %v1459 = vadd.f32 %v1457, %v1458
        %v1460 = vsel %vm1389, %v1226, 0.0
        %v1461 = vadd.f32 %v1459, %v1460
        %v1462 = vsel %vm1389, %v1231, 0.0
        %v1463 = vadd.f32 %v1461, %v1462
        %v1464 = vsel %vm1389, %v1234, 0.0
        %v1465 = vadd.f32 %v1463, %v1464
        %v1466 = vsel %vm1413, %v1239, 0.0
        %v1467 = vadd.f32 %v1465, %v1466
        %v1468 = vsel %vm1389, %v1336, 0.0
        %v1469 = vadd.f32 %v1467, %v1468
        %v1470 = vsel %vm1389, %v1339, 0.0
        %v1471 = vadd.f32 %v1469, %v1470
        %v1472 = vsel %vm1389, %v1344, 0.0
        %v1473 = vadd.f32 %v1471, %v1472
        %v1474 = vsel %vm1389, %v1347, 0.0
        %v1475 = vadd.f32 %v1473, %v1474
        %v1476 = vsel %vm1389, %v1352, 0.0
        %v1477 = vadd.f32 %v1475, %v1476
        %v1478 = vsel %vm1389, %v1355, 0.0
        %v1479 = vadd.f32 %v1477, %v1478
        %v1480 = vsel %vm1389, %v1360, 0.0
        %v1481 = vadd.f32 %v1479, %v1480
        %v1482 = vsel %vm1389, %v1363, 0.0
        %v1483 = vadd.f32 %v1481, %v1482
        %v1484 = vsel %vm1389, %v1368, 0.0
        %v1485 = vadd.f32 %v1483, %v1484
        %v1486 = vsel %vm1389, %v1371, 0.0
        %v1487 = vadd.f32 %v1485, %v1486
        %v1488 = vsel %vm1389, %v1376, 0.0
        %v1489 = vadd.f32 %v1487, %v1488
        %v1490 = vsel %vm1389, %v1379, 0.0
        %v1491 = vadd.f32 %v1489, %v1490
        %v1492 = vsel %vm1413, %v1384, 0.0
        %v1493 = vadd.f32 %v1491, %v1492
        %1494 = vadd.xlane.f32.xlu0 %v1493
        %v1495 = vpop.xlane.xlu0 %1494
        %v1496 = vrot.slane %v1495, 4
        %v1497 = vadd.f32 %v1495, %v1496
        %v1498 = vrot.slane %v1497, 2
        %v1499 = vadd.f32 %v1497, %v1498
        %v1500 = vrot.slane %v1499, 1
        %v1501 = vadd.f32 %v1499, %v1500
        %s1502 = vtos %v1501
        %1555 = vrot.lane.b32.xlu0 %v901, 127
        %v1556 = vpop.permute.xlu0 %1555
        %1557 = vrot.lane.b32.xlu0 %v904, 127
        %v1558 = vpop.permute.xlu0 %1557
        %1559 = vrot.lane.b32.xlu0 %v909, 127
        %v1560 = vpop.permute.xlu0 %1559
        %1561 = vrot.lane.b32.xlu0 %v912, 127
        %v1562 = vpop.permute.xlu0 %1561
        %1563 = vrot.lane.b32.xlu0 %v917, 127
        %v1564 = vpop.permute.xlu0 %1563
        %1565 = vrot.lane.b32.xlu0 %v920, 127
        %v1566 = vpop.permute.xlu0 %1565
        %1567 = vrot.lane.b32.xlu0 %v925, 127
        %v1568 = vpop.permute.xlu0 %1567
        %1569 = vrot.lane.b32.xlu0 %v928, 127
        %v1570 = vpop.permute.xlu0 %1569
        %1571 = vrot.lane.b32.xlu0 %v933, 127
        %v1572 = vpop.permute.xlu0 %1571
        %1573 = vrot.lane.b32.xlu0 %v936, 127
        %v1574 = vpop.permute.xlu0 %1573
        %1575 = vrot.lane.b32.xlu0 %v941, 127
        %v1576 = vpop.permute.xlu0 %1575
        %1577 = vrot.lane.b32.xlu0 %v944, 127
        %v1578 = vpop.permute.xlu0 %1577
        %1579 = vrot.lane.b32.xlu0 %v949, 127
        %v1580 = vpop.permute.xlu0 %1579
        %1581 = vrot.lane.b32.xlu0 %v1046, 127
        %v1582 = vpop.permute.xlu0 %1581
        %1583 = vrot.lane.b32.xlu0 %v1049, 127
        %v1584 = vpop.permute.xlu0 %1583
        %1585 = vrot.lane.b32.xlu0 %v1054, 127
        %v1586 = vpop.permute.xlu0 %1585
        %1587 = vrot.lane.b32.xlu0 %v1057, 127
        %v1588 = vpop.permute.xlu0 %1587
        %1589 = vrot.lane.b32.xlu0 %v1062, 127
        %v1590 = vpop.permute.xlu0 %1589
        %1591 = vrot.lane.b32.xlu0 %v1065, 127
        %v1592 = vpop.permute.xlu0 %1591
        %1593 = vrot.lane.b32.xlu0 %v1070, 127
        %v1594 = vpop.permute.xlu0 %1593
        %1595 = vrot.lane.b32.xlu0 %v1073, 127
        %v1596 = vpop.permute.xlu0 %1595
        %1597 = vrot.lane.b32.xlu0 %v1078, 127
        %v1598 = vpop.permute.xlu0 %1597
        %1599 = vrot.lane.b32.xlu0 %v1081, 127
        %v1600 = vpop.permute.xlu0 %1599
        %1601 = vrot.lane.b32.xlu0 %v1086, 127
        %v1602 = vpop.permute.xlu0 %1601
        %1603 = vrot.lane.b32.xlu0 %v1089, 127
        %v1604 = vpop.permute.xlu0 %1603
        %1605 = vrot.lane.b32.xlu0 %v1094, 127
        %v1606 = vpop.permute.xlu0 %1605
        %1607 = vrot.lane.b32.xlu0 %v1191, 127
        %v1608 = vpop.permute.xlu0 %1607
        %1609 = vrot.lane.b32.xlu0 %v1194, 127
        %v1610 = vpop.permute.xlu0 %1609
        %1611 = vrot.lane.b32.xlu0 %v1199, 127
        %v1612 = vpop.permute.xlu0 %1611
        %1613 = vrot.lane.b32.xlu0 %v1202, 127
        %v1614 = vpop.permute.xlu0 %1613
        %1615 = vrot.lane.b32.xlu0 %v1207, 127
        %v1616 = vpop.permute.xlu0 %1615
        %1617 = vrot.lane.b32.xlu0 %v1210, 127
        %v1618 = vpop.permute.xlu0 %1617
        %1619 = vrot.lane.b32.xlu0 %v1215, 127
        %v1620 = vpop.permute.xlu0 %1619
        %1621 = vrot.lane.b32.xlu0 %v1218, 127
        %v1622 = vpop.permute.xlu0 %1621
        %1623 = vrot.lane.b32.xlu0 %v1223, 127
        %v1624 = vpop.permute.xlu0 %1623
        %1625 = vrot.lane.b32.xlu0 %v1226, 127
        %v1626 = vpop.permute.xlu0 %1625
        %1627 = vrot.lane.b32.xlu0 %v1231, 127
        %v1628 = vpop.permute.xlu0 %1627
        %1629 = vrot.lane.b32.xlu0 %v1234, 127
        %v1630 = vpop.permute.xlu0 %1629
        %1631 = vrot.lane.b32.xlu0 %v1239, 127
        %v1632 = vpop.permute.xlu0 %1631
        %1633 = vrot.lane.b32.xlu0 %v1336, 127
        %v1634 = vpop.permute.xlu0 %1633
        %1635 = vrot.lane.b32.xlu0 %v1339, 127
        %v1636 = vpop.permute.xlu0 %1635
        %1637 = vrot.lane.b32.xlu0 %v1344, 127
        %v1638 = vpop.permute.xlu0 %1637
        %1639 = vrot.lane.b32.xlu0 %v1347, 127
        %v1640 = vpop.permute.xlu0 %1639
        %1641 = vrot.lane.b32.xlu0 %v1352, 127
        %v1642 = vpop.permute.xlu0 %1641
        %1643 = vrot.lane.b32.xlu0 %v1355, 127
        %v1644 = vpop.permute.xlu0 %1643
        %1645 = vrot.lane.b32.xlu0 %v1360, 127
        %v1646 = vpop.permute.xlu0 %1645
        %1647 = vrot.lane.b32.xlu0 %v1363, 127
        %v1648 = vpop.permute.xlu0 %1647
        %1649 = vrot.lane.b32.xlu0 %v1368, 127
        %v1650 = vpop.permute.xlu0 %1649
        %1651 = vrot.lane.b32.xlu0 %v1371, 127
        %v1652 = vpop.permute.xlu0 %1651
        %1653 = vrot.lane.b32.xlu0 %v1376, 127
        %v1654 = vpop.permute.xlu0 %1653
        %1655 = vrot.lane.b32.xlu0 %v1379, 127
        %v1656 = vpop.permute.xlu0 %1655
        %1657 = vrot.lane.b32.xlu0 %v1384, 127
        %v1658 = vpop.permute.xlu0 %1657
        %v1711 = vmul.f32 %v528, %v1556
        %v1712 = vmul.f32 %v529, %v1558
        %v1713 = vmul.f32 %v530, %v1560
        %v1714 = vmul.f32 %v531, %v1562
        %v1715 = vmul.f32 %v532, %v1564
        %v1716 = vmul.f32 %v533, %v1566
        %v1717 = vmul.f32 %v534, %v1568
        %v1718 = vmul.f32 %v535, %v1570
        %v1719 = vmul.f32 %v536, %v1572
        %v1720 = vmul.f32 %v537, %v1574
        %v1721 = vmul.f32 %v538, %v1576
        %v1722 = vmul.f32 %v539, %v1578
        %v1723 = vmul.f32 %v540, %v1580
        %v1724 = vmul.f32 %v541, %v1582
        %v1725 = vmul.f32 %v542, %v1584
        %v1726 = vmul.f32 %v543, %v1586
        %v1727 = vmul.f32 %v544, %v1588
        %v1728 = vmul.f32 %v545, %v1590
        %v1729 = vmul.f32 %v546, %v1592
        %v1730 = vmul.f32 %v547, %v1594
        %v1731 = vmul.f32 %v548, %v1596
        %v1732 = vmul.f32 %v549, %v1598
        %v1733 = vmul.f32 %v550, %v1600
        %v1734 = vmul.f32 %v551, %v1602
        %v1735 = vmul.f32 %v552, %v1604
        %v1736 = vmul.f32 %v553, %v1606
        %v1737 = vmul.f32 %v554, %v1608
        %v1738 = vmul.f32 %v555, %v1610
        %v1739 = vmul.f32 %v556, %v1612
        %v1740 = vmul.f32 %v557, %v1614
        %v1741 = vmul.f32 %v558, %v1616
        %v1742 = vmul.f32 %v559, %v1618
        %v1743 = vmul.f32 %v560, %v1620
        %v1744 = vmul.f32 %v561, %v1622
        %v1745 = vmul.f32 %v562, %v1624
        %v1746 = vmul.f32 %v563, %v1626
        %v1747 = vmul.f32 %v564, %v1628
        %v1748 = vmul.f32 %v565, %v1630
        %v1749 = vmul.f32 %v566, %v1632
        %v1750 = vmul.f32 %v567, %v1634
        %v1751 = vmul.f32 %v568, %v1636
        %v1752 = vmul.f32 %v569, %v1638
        %v1753 = vmul.f32 %v570, %v1640
        %v1754 = vmul.f32 %v571, %v1642
        %v1755 = vmul.f32 %v572, %v1644
        %v1756 = vmul.f32 %v573, %v1646
        %v1757 = vmul.f32 %v574, %v1648
        %v1758 = vmul.f32 %v575, %v1650
        %v1759 = vmul.f32 %v576, %v1652
        %v1760 = vmul.f32 %v577, %v1654
        %v1761 = vmul.f32 %v578, %v1656
        %v1762 = vmul.f32 %v579, %v1658
        %v1763 = vsel %vm1389, %v1711, 0.0
        %v1764 = vsel %vm1389, %v1712, 0.0
        %v1765 = vadd.f32 %v1763, %v1764
        %v1766 = vsel %vm1389, %v1713, 0.0
        %v1767 = vadd.f32 %v1765, %v1766
        %v1768 = vsel %vm1389, %v1714, 0.0
        %v1769 = vadd.f32 %v1767, %v1768
        %v1770 = vsel %vm1389, %v1715, 0.0
        %v1771 = vadd.f32 %v1769, %v1770
        %v1772 = vsel %vm1389, %v1716, 0.0
        %v1773 = vadd.f32 %v1771, %v1772
        %v1774 = vsel %vm1389, %v1717, 0.0
        %v1775 = vadd.f32 %v1773, %v1774
        %v1776 = vsel %vm1389, %v1718, 0.0
        %v1777 = vadd.f32 %v1775, %v1776
        %v1778 = vsel %vm1389, %v1719, 0.0
        %v1779 = vadd.f32 %v1777, %v1778
        %v1780 = vsel %vm1389, %v1720, 0.0
        %v1781 = vadd.f32 %v1779, %v1780
        %v1782 = vsel %vm1389, %v1721, 0.0
        %v1783 = vadd.f32 %v1781, %v1782
        %v1784 = vsel %vm1389, %v1722, 0.0
        %v1785 = vadd.f32 %v1783, %v1784
        %v1786 = vsel %vm1413, %v1723, 0.0
        %v1787 = vadd.f32 %v1785, %v1786
        %v1788 = vsel %vm1389, %v1724, 0.0
        %v1789 = vadd.f32 %v1787, %v1788
        %v1790 = vsel %vm1389, %v1725, 0.0
        %v1791 = vadd.f32 %v1789, %v1790
        %v1792 = vsel %vm1389, %v1726, 0.0
        %v1793 = vadd.f32 %v1791, %v1792
        %v1794 = vsel %vm1389, %v1727, 0.0
        %v1795 = vadd.f32 %v1793, %v1794
        %v1796 = vsel %vm1389, %v1728, 0.0
        %v1797 = vadd.f32 %v1795, %v1796
        %v1798 = vsel %vm1389, %v1729, 0.0
        %v1799 = vadd.f32 %v1797, %v1798
        %v1800 = vsel %vm1389, %v1730, 0.0
        %v1801 = vadd.f32 %v1799, %v1800
        %v1802 = vsel %vm1389, %v1731, 0.0
        %v1803 = vadd.f32 %v1801, %v1802
        %v1804 = vsel %vm1389, %v1732, 0.0
        %v1805 = vadd.f32 %v1803, %v1804
        %v1806 = vsel %vm1389, %v1733, 0.0
        %v1807 = vadd.f32 %v1805, %v1806
        %v1808 = vsel %vm1389, %v1734, 0.0
        %v1809 = vadd.f32 %v1807, %v1808
        %v1810 = vsel %vm1389, %v1735, 0.0
        %v1811 = vadd.f32 %v1809, %v1810
        %v1812 = vsel %vm1413, %v1736, 0.0
        %v1813 = vadd.f32 %v1811, %v1812
        %v1814 = vsel %vm1389, %v1737, 0.0
        %v1815 = vadd.f32 %v1813, %v1814
        %v1816 = vsel %vm1389, %v1738, 0.0
        %v1817 = vadd.f32 %v1815, %v1816
        %v1818 = vsel %vm1389, %v1739, 0.0
        %v1819 = vadd.f32 %v1817, %v1818
        %v1820 = vsel %vm1389, %v1740, 0.0
        %v1821 = vadd.f32 %v1819, %v1820
        %v1822 = vsel %vm1389, %v1741, 0.0
        %v1823 = vadd.f32 %v1821, %v1822
        %v1824 = vsel %vm1389, %v1742, 0.0
        %v1825 = vadd.f32 %v1823, %v1824
        %v1826 = vsel %vm1389, %v1743, 0.0
        %v1827 = vadd.f32 %v1825, %v1826
        %v1828 = vsel %vm1389, %v1744, 0.0
        %v1829 = vadd.f32 %v1827, %v1828
        %v1830 = vsel %vm1389, %v1745, 0.0
        %v1831 = vadd.f32 %v1829, %v1830
        %v1832 = vsel %vm1389, %v1746, 0.0
        %v1833 = vadd.f32 %v1831, %v1832
        %v1834 = vsel %vm1389, %v1747, 0.0
        %v1835 = vadd.f32 %v1833, %v1834
        %v1836 = vsel %vm1389, %v1748, 0.0
        %v1837 = vadd.f32 %v1835, %v1836
        %v1838 = vsel %vm1413, %v1749, 0.0
        %v1839 = vadd.f32 %v1837, %v1838
        %v1840 = vsel %vm1389, %v1750, 0.0
        %v1841 = vadd.f32 %v1839, %v1840
        %v1842 = vsel %vm1389, %v1751, 0.0
        %v1843 = vadd.f32 %v1841, %v1842
        %v1844 = vsel %vm1389, %v1752, 0.0
        %v1845 = vadd.f32 %v1843, %v1844
        %v1846 = vsel %vm1389, %v1753, 0.0
        %v1847 = vadd.f32 %v1845, %v1846
        %v1848 = vsel %vm1389, %v1754, 0.0
        %v1849 = vadd.f32 %v1847, %v1848
        %v1850 = vsel %vm1389, %v1755, 0.0
        %v1851 = vadd.f32 %v1849, %v1850
        %v1852 = vsel %vm1389, %v1756, 0.0
        %v1853 = vadd.f32 %v1851, %v1852
        %v1854 = vsel %vm1389, %v1757, 0.0
        %v1855 = vadd.f32 %v1853, %v1854
        %v1856 = vsel %vm1389, %v1758, 0.0
        %v1857 = vadd.f32 %v1855, %v1856
        %v1858 = vsel %vm1389, %v1759, 0.0
        %v1859 = vadd.f32 %v1857, %v1858
        %v1860 = vsel %vm1389, %v1760, 0.0
        %v1861 = vadd.f32 %v1859, %v1860
        %v1862 = vsel %vm1389, %v1761, 0.0
        %v1863 = vadd.f32 %v1861, %v1862
        %v1864 = vsel %vm1413, %v1762, 0.0
        %v1865 = vadd.f32 %v1863, %v1864
        %1866 = vadd.xlane.f32.xlu0 %v1865
        %v1867 = vpop.xlane.xlu0 %1866
        %v1868 = vrot.slane %v1867, 4
        %v1869 = vadd.f32 %v1867, %v1868
        %v1870 = vrot.slane %v1869, 2
        %v1871 = vadd.f32 %v1869, %v1870
        %v1872 = vrot.slane %v1871, 1
        %v1873 = vadd.f32 %v1871, %v1872
        %s1874 = vtos %v1873
        %1875 = vrot.lane.b32.xlu0 %v901, 126
        %v1876 = vpop.permute.xlu0 %1875
        %1877 = vrot.lane.b32.xlu0 %v904, 126
        %v1878 = vpop.permute.xlu0 %1877
        %1879 = vrot.lane.b32.xlu0 %v909, 126
        %v1880 = vpop.permute.xlu0 %1879
        %1881 = vrot.lane.b32.xlu0 %v912, 126
        %v1882 = vpop.permute.xlu0 %1881
        %1883 = vrot.lane.b32.xlu0 %v917, 126
        %v1884 = vpop.permute.xlu0 %1883
        %1885 = vrot.lane.b32.xlu0 %v920, 126
        %v1886 = vpop.permute.xlu0 %1885
        %1887 = vrot.lane.b32.xlu0 %v925, 126
        %v1888 = vpop.permute.xlu0 %1887
        %1889 = vrot.lane.b32.xlu0 %v928, 126
        %v1890 = vpop.permute.xlu0 %1889
        %1891 = vrot.lane.b32.xlu0 %v933, 126
        %v1892 = vpop.permute.xlu0 %1891
        %1893 = vrot.lane.b32.xlu0 %v936, 126
        %v1894 = vpop.permute.xlu0 %1893
        %1895 = vrot.lane.b32.xlu0 %v941, 126
        %v1896 = vpop.permute.xlu0 %1895
        %1897 = vrot.lane.b32.xlu0 %v944, 126
        %v1898 = vpop.permute.xlu0 %1897
        %1899 = vrot.lane.b32.xlu0 %v949, 126
        %v1900 = vpop.permute.xlu0 %1899
        %1901 = vrot.lane.b32.xlu0 %v1046, 126
        %v1902 = vpop.permute.xlu0 %1901
        %1903 = vrot.lane.b32.xlu0 %v1049, 126
        %v1904 = vpop.permute.xlu0 %1903
        %1905 = vrot.lane.b32.xlu0 %v1054, 126
        %v1906 = vpop.permute.xlu0 %1905
        %1907 = vrot.lane.b32.xlu0 %v1057, 126
        %v1908 = vpop.permute.xlu0 %1907
        %1909 = vrot.lane.b32.xlu0 %v1062, 126
        %v1910 = vpop.permute.xlu0 %1909
        %1911 = vrot.lane.b32.xlu0 %v1065, 126
        %v1912 = vpop.permute.xlu0 %1911
        %1913 = vrot.lane.b32.xlu0 %v1070, 126
        %v1914 = vpop.permute.xlu0 %1913
        %1915 = vrot.lane.b32.xlu0 %v1073, 126
        %v1916 = vpop.permute.xlu0 %1915
        %1917 = vrot.lane.b32.xlu0 %v1078, 126
        %v1918 = vpop.permute.xlu0 %1917
        %1919 = vrot.lane.b32.xlu0 %v1081, 126
        %v1920 = vpop.permute.xlu0 %1919
        %1921 = vrot.lane.b32.xlu0 %v1086, 126
        %v1922 = vpop.permute.xlu0 %1921
        %1923 = vrot.lane.b32.xlu0 %v1089, 126
        %v1924 = vpop.permute.xlu0 %1923
        %1925 = vrot.lane.b32.xlu0 %v1094, 126
        %v1926 = vpop.permute.xlu0 %1925
        %1927 = vrot.lane.b32.xlu0 %v1191, 126
        %v1928 = vpop.permute.xlu0 %1927
        %1929 = vrot.lane.b32.xlu0 %v1194, 126
        %v1930 = vpop.permute.xlu0 %1929
        %1931 = vrot.lane.b32.xlu0 %v1199, 126
        %v1932 = vpop.permute.xlu0 %1931
        %1933 = vrot.lane.b32.xlu0 %v1202, 126
        %v1934 = vpop.permute.xlu0 %1933
        %1935 = vrot.lane.b32.xlu0 %v1207, 126
        %v1936 = vpop.permute.xlu0 %1935
        %1937 = vrot.lane.b32.xlu0 %v1210, 126
        %v1938 = vpop.permute.xlu0 %1937
        %1939 = vrot.lane.b32.xlu0 %v1215, 126
        %v1940 = vpop.permute.xlu0 %1939
        %1941 = vrot.lane.b32.xlu0 %v1218, 126
        %v1942 = vpop.permute.xlu0 %1941
        %1943 = vrot.lane.b32.xlu0 %v1223, 126
        %v1944 = vpop.permute.xlu0 %1943
        %1945 = vrot.lane.b32.xlu0 %v1226, 126
        %v1946 = vpop.permute.xlu0 %1945
        %1947 = vrot.lane.b32.xlu0 %v1231, 126
        %v1948 = vpop.permute.xlu0 %1947
        %1949 = vrot.lane.b32.xlu0 %v1234, 126
        %v1950 = vpop.permute.xlu0 %1949
        %1951 = vrot.lane.b32.xlu0 %v1239, 126
        %v1952 = vpop.permute.xlu0 %1951
        %1953 = vrot.lane.b32.xlu0 %v1336, 126
        %v1954 = vpop.permute.xlu0 %1953
        %1955 = vrot.lane.b32.xlu0 %v1339, 126
        %v1956 = vpop.permute.xlu0 %1955
        %1957 = vrot.lane.b32.xlu0 %v1344, 126
        %v1958 = vpop.permute.xlu0 %1957
        %1959 = vrot.lane.b32.xlu0 %v1347, 126
        %v1960 = vpop.permute.xlu0 %1959
        %1961 = vrot.lane.b32.xlu0 %v1352, 126
        %v1962 = vpop.permute.xlu0 %1961
        %1963 = vrot.lane.b32.xlu0 %v1355, 126
        %v1964 = vpop.permute.xlu0 %1963
        %1965 = vrot.lane.b32.xlu0 %v1360, 126
        %v1966 = vpop.permute.xlu0 %1965
        %1967 = vrot.lane.b32.xlu0 %v1363, 126
        %v1968 = vpop.permute.xlu0 %1967
        %1969 = vrot.lane.b32.xlu0 %v1368, 126
        %v1970 = vpop.permute.xlu0 %1969
        %1971 = vrot.lane.b32.xlu0 %v1371, 126
        %v1972 = vpop.permute.xlu0 %1971
        %1973 = vrot.lane.b32.xlu0 %v1376, 126
        %v1974 = vpop.permute.xlu0 %1973
        %1975 = vrot.lane.b32.xlu0 %v1379, 126
        %v1976 = vpop.permute.xlu0 %1975
        %1977 = vrot.lane.b32.xlu0 %v1384, 126
        %v1978 = vpop.permute.xlu0 %1977
        %v2031 = vmul.f32 %v417, %v1876
        %v2032 = vmul.f32 %v418, %v1878
        %v2033 = vmul.f32 %v419, %v1880
        %v2034 = vmul.f32 %v420, %v1882
        %v2035 = vmul.f32 %v421, %v1884
        %v2036 = vmul.f32 %v422, %v1886
        %v2037 = vmul.f32 %v423, %v1888
        %v2038 = vmul.f32 %v424, %v1890
        %v2039 = vmul.f32 %v425, %v1892
        %v2040 = vmul.f32 %v426, %v1894
        %v2041 = vmul.f32 %v427, %v1896
        %v2042 = vmul.f32 %v428, %v1898
        %v2043 = vmul.f32 %v429, %v1900
        %v2044 = vmul.f32 %v430, %v1902
        %v2045 = vmul.f32 %v431, %v1904
        %v2046 = vmul.f32 %v432, %v1906
        %v2047 = vmul.f32 %v433, %v1908
        %v2048 = vmul.f32 %v434, %v1910
        %v2049 = vmul.f32 %v435, %v1912
        %v2050 = vmul.f32 %v436, %v1914
        %v2051 = vmul.f32 %v437, %v1916
        %v2052 = vmul.f32 %v438, %v1918
        %v2053 = vmul.f32 %v439, %v1920
        %v2054 = vmul.f32 %v440, %v1922
        %v2055 = vmul.f32 %v441, %v1924
        %v2056 = vmul.f32 %v442, %v1926
        %v2057 = vmul.f32 %v443, %v1928
        %v2058 = vmul.f32 %v444, %v1930
        %v2059 = vmul.f32 %v445, %v1932
        %v2060 = vmul.f32 %v446, %v1934
        %v2061 = vmul.f32 %v447, %v1936
        %v2062 = vmul.f32 %v448, %v1938
        %v2063 = vmul.f32 %v449, %v1940
        %v2064 = vmul.f32 %v450, %v1942
        %v2065 = vmul.f32 %v451, %v1944
        %v2066 = vmul.f32 %v452, %v1946
        %v2067 = vmul.f32 %v453, %v1948
        %v2068 = vmul.f32 %v454, %v1950
        %v2069 = vmul.f32 %v455, %v1952
        %v2070 = vmul.f32 %v456, %v1954
        %v2071 = vmul.f32 %v457, %v1956
        %v2072 = vmul.f32 %v458, %v1958
        %v2073 = vmul.f32 %v459, %v1960
        %v2074 = vmul.f32 %v460, %v1962
        %v2075 = vmul.f32 %v461, %v1964
        %v2076 = vmul.f32 %v462, %v1966
        %v2077 = vmul.f32 %v463, %v1968
        %v2078 = vmul.f32 %v464, %v1970
        %v2079 = vmul.f32 %v465, %v1972
        %v2080 = vmul.f32 %v466, %v1974
        %v2081 = vmul.f32 %v467, %v1976
        %v2082 = vmul.f32 %v468, %v1978
        %v2083 = vsel %vm1389, %v2031, 0.0
        %v2084 = vsel %vm1389, %v2032, 0.0
        %v2085 = vadd.f32 %v2083, %v2084
        %v2086 = vsel %vm1389, %v2033, 0.0
        %v2087 = vadd.f32 %v2085, %v2086
        %v2088 = vsel %vm1389, %v2034, 0.0
        %v2089 = vadd.f32 %v2087, %v2088
        %v2090 = vsel %vm1389, %v2035, 0.0
        %v2091 = vadd.f32 %v2089, %v2090
        %v2092 = vsel %vm1389, %v2036, 0.0
        %v2093 = vadd.f32 %v2091, %v2092
        %v2094 = vsel %vm1389, %v2037, 0.0
        %v2095 = vadd.f32 %v2093, %v2094
        %v2096 = vsel %vm1389, %v2038, 0.0
        %v2097 = vadd.f32 %v2095, %v2096
        %v2098 = vsel %vm1389, %v2039, 0.0
        %v2099 = vadd.f32 %v2097, %v2098
        %v2100 = vsel %vm1389, %v2040, 0.0
        %v2101 = vadd.f32 %v2099, %v2100
        %v2102 = vsel %vm1389, %v2041, 0.0
        %v2103 = vadd.f32 %v2101, %v2102
        %v2104 = vsel %vm1389, %v2042, 0.0
        %v2105 = vadd.f32 %v2103, %v2104
        %v2106 = vsel %vm1413, %v2043, 0.0
        %v2107 = vadd.f32 %v2105, %v2106
        %v2108 = vsel %vm1389, %v2044, 0.0
        %v2109 = vadd.f32 %v2107, %v2108
        %v2110 = vsel %vm1389, %v2045, 0.0
        %v2111 = vadd.f32 %v2109, %v2110
        %v2112 = vsel %vm1389, %v2046, 0.0
        %v2113 = vadd.f32 %v2111, %v2112
        %v2114 = vsel %vm1389, %v2047, 0.0
        %v2115 = vadd.f32 %v2113, %v2114
        %v2116 = vsel %vm1389, %v2048, 0.0
        %v2117 = vadd.f32 %v2115, %v2116
        %v2118 = vsel %vm1389, %v2049, 0.0
        %v2119 = vadd.f32 %v2117, %v2118
        %v2120 = vsel %vm1389, %v2050, 0.0
        %v2121 = vadd.f32 %v2119, %v2120
        %v2122 = vsel %vm1389, %v2051, 0.0
        %v2123 = vadd.f32 %v2121, %v2122
        %v2124 = vsel %vm1389, %v2052, 0.0
        %v2125 = vadd.f32 %v2123, %v2124
        %v2126 = vsel %vm1389, %v2053, 0.0
        %v2127 = vadd.f32 %v2125, %v2126
        %v2128 = vsel %vm1389, %v2054, 0.0
        %v2129 = vadd.f32 %v2127, %v2128
        %v2130 = vsel %vm1389, %v2055, 0.0
        %v2131 = vadd.f32 %v2129, %v2130
        %v2132 = vsel %vm1413, %v2056, 0.0
        %v2133 = vadd.f32 %v2131, %v2132
        %v2134 = vsel %vm1389, %v2057, 0.0
        %v2135 = vadd.f32 %v2133, %v2134
        %v2136 = vsel %vm1389, %v2058, 0.0
        %v2137 = vadd.f32 %v2135, %v2136
        %v2138 = vsel %vm1389, %v2059, 0.0
        %v2139 = vadd.f32 %v2137, %v2138
        %v2140 = vsel %vm1389, %v2060, 0.0
        %v2141 = vadd.f32 %v2139, %v2140
        %v2142 = vsel %vm1389, %v2061, 0.0
        %v2143 = vadd.f32 %v2141, %v2142
        %v2144 = vsel %vm1389, %v2062, 0.0
        %v2145 = vadd.f32 %v2143, %v2144
        %v2146 = vsel %vm1389, %v2063, 0.0
        %v2147 = vadd.f32 %v2145, %v2146
        %v2148 = vsel %vm1389, %v2064, 0.0
        %v2149 = vadd.f32 %v2147, %v2148
        %v2150 = vsel %vm1389, %v2065, 0.0
        %v2151 = vadd.f32 %v2149, %v2150
        %v2152 = vsel %vm1389, %v2066, 0.0
        %v2153 = vadd.f32 %v2151, %v2152
        %v2154 = vsel %vm1389, %v2067, 0.0
        %v2155 = vadd.f32 %v2153, %v2154
        %v2156 = vsel %vm1389, %v2068, 0.0
        %v2157 = vadd.f32 %v2155, %v2156
        %v2158 = vsel %vm1413, %v2069, 0.0
        %v2159 = vadd.f32 %v2157, %v2158
        %v2160 = vsel %vm1389, %v2070, 0.0
        %v2161 = vadd.f32 %v2159, %v2160
        %v2162 = vsel %vm1389, %v2071, 0.0
        %v2163 = vadd.f32 %v2161, %v2162
        %v2164 = vsel %vm1389, %v2072, 0.0
        %v2165 = vadd.f32 %v2163, %v2164
        %v2166 = vsel %vm1389, %v2073, 0.0
        %v2167 = vadd.f32 %v2165, %v2166
        %v2168 = vsel %vm1389, %v2074, 0.0
        %v2169 = vadd.f32 %v2167, %v2168
        %v2170 = vsel %vm1389, %v2075, 0.0
        %v2171 = vadd.f32 %v2169, %v2170
        %v2172 = vsel %vm1389, %v2076, 0.0
        %v2173 = vadd.f32 %v2171, %v2172
        %v2174 = vsel %vm1389, %v2077, 0.0
        %v2175 = vadd.f32 %v2173, %v2174
        %v2176 = vsel %vm1389, %v2078, 0.0
        %v2177 = vadd.f32 %v2175, %v2176
        %v2178 = vsel %vm1389, %v2079, 0.0
        %v2179 = vadd.f32 %v2177, %v2178
        %v2180 = vsel %vm1389, %v2080, 0.0
        %v2181 = vadd.f32 %v2179, %v2180
        %v2182 = vsel %vm1389, %v2081, 0.0
        %v2183 = vadd.f32 %v2181, %v2182
        %v2184 = vsel %vm1413, %v2082, 0.0
        %v2185 = vadd.f32 %v2183, %v2184
        %2186 = vadd.xlane.f32.xlu0 %v2185
        %v2187 = vpop.xlane.xlu0 %2186
        %v2188 = vrot.slane %v2187, 4
        %v2189 = vadd.f32 %v2187, %v2188
        %v2190 = vrot.slane %v2189, 2
        %v2191 = vadd.f32 %v2189, %v2190
        %v2192 = vrot.slane %v2191, 1
        %v2193 = vadd.f32 %v2191, %v2192
        %s2194 = vtos %v2193
        %v2195 = vmul.f32 %v528, %v1876
        %v2196 = vmul.f32 %v529, %v1878
        %v2197 = vmul.f32 %v530, %v1880
        %v2198 = vmul.f32 %v531, %v1882
        %v2199 = vmul.f32 %v532, %v1884
        %v2200 = vmul.f32 %v533, %v1886
        %v2201 = vmul.f32 %v534, %v1888
        %v2202 = vmul.f32 %v535, %v1890
        %v2203 = vmul.f32 %v536, %v1892
        %v2204 = vmul.f32 %v537, %v1894
        %v2205 = vmul.f32 %v538, %v1896
        %v2206 = vmul.f32 %v539, %v1898
        %v2207 = vmul.f32 %v540, %v1900
        %v2208 = vmul.f32 %v541, %v1902
        %v2209 = vmul.f32 %v542, %v1904
        %v2210 = vmul.f32 %v543, %v1906
        %v2211 = vmul.f32 %v544, %v1908
        %v2212 = vmul.f32 %v545, %v1910
        %v2213 = vmul.f32 %v546, %v1912
        %v2214 = vmul.f32 %v547, %v1914
        %v2215 = vmul.f32 %v548, %v1916
        %v2216 = vmul.f32 %v549, %v1918
        %v2217 = vmul.f32 %v550, %v1920
        %v2218 = vmul.f32 %v551, %v1922
        %v2219 = vmul.f32 %v552, %v1924
        %v2220 = vmul.f32 %v553, %v1926
        %v2221 = vmul.f32 %v554, %v1928
        %v2222 = vmul.f32 %v555, %v1930
        %v2223 = vmul.f32 %v556, %v1932
        %v2224 = vmul.f32 %v557, %v1934
        %v2225 = vmul.f32 %v558, %v1936
        %v2226 = vmul.f32 %v559, %v1938
        %v2227 = vmul.f32 %v560, %v1940
        %v2228 = vmul.f32 %v561, %v1942
        %v2229 = vmul.f32 %v562, %v1944
        %v2230 = vmul.f32 %v563, %v1946
        %v2231 = vmul.f32 %v564, %v1948
        %v2232 = vmul.f32 %v565, %v1950
        %v2233 = vmul.f32 %v566, %v1952
        %v2234 = vmul.f32 %v567, %v1954
        %v2235 = vmul.f32 %v568, %v1956
        %v2236 = vmul.f32 %v569, %v1958
        %v2237 = vmul.f32 %v570, %v1960
        %v2238 = vmul.f32 %v571, %v1962
        %v2239 = vmul.f32 %v572, %v1964
        %v2240 = vmul.f32 %v573, %v1966
        %v2241 = vmul.f32 %v574, %v1968
        %v2242 = vmul.f32 %v575, %v1970
        %v2243 = vmul.f32 %v576, %v1972
        %v2244 = vmul.f32 %v577, %v1974
        %v2245 = vmul.f32 %v578, %v1976
        %v2246 = vmul.f32 %v579, %v1978
        %v2247 = vsel %vm1389, %v2195, 0.0
        %v2248 = vsel %vm1389, %v2196, 0.0
        %v2249 = vadd.f32 %v2247, %v2248
        %v2250 = vsel %vm1389, %v2197, 0.0
        %v2251 = vadd.f32 %v2249, %v2250
        %v2252 = vsel %vm1389, %v2198, 0.0
        %v2253 = vadd.f32 %v2251, %v2252
        %v2254 = vsel %vm1389, %v2199, 0.0
        %v2255 = vadd.f32 %v2253, %v2254
        %v2256 = vsel %vm1389, %v2200, 0.0
        %v2257 = vadd.f32 %v2255, %v2256
        %v2258 = vsel %vm1389, %v2201, 0.0
        %v2259 = vadd.f32 %v2257, %v2258
        %v2260 = vsel %vm1389, %v2202, 0.0
        %v2261 = vadd.f32 %v2259, %v2260
        %v2262 = vsel %vm1389, %v2203, 0.0
        %v2263 = vadd.f32 %v2261, %v2262
        %v2264 = vsel %vm1389, %v2204, 0.0
        %v2265 = vadd.f32 %v2263, %v2264
        %v2266 = vsel %vm1389, %v2205, 0.0
        %v2267 = vadd.f32 %v2265, %v2266
        %v2268 = vsel %vm1389, %v2206, 0.0
        %v2269 = vadd.f32 %v2267, %v2268
        %v2270 = vsel %vm1413, %v2207, 0.0
        %v2271 = vadd.f32 %v2269, %v2270
        %v2272 = vsel %vm1389, %v2208, 0.0
        %v2273 = vadd.f32 %v2271, %v2272
        %v2274 = vsel %vm1389, %v2209, 0.0
        %v2275 = vadd.f32 %v2273, %v2274
        %v2276 = vsel %vm1389, %v2210, 0.0
        %v2277 = vadd.f32 %v2275, %v2276
        %v2278 = vsel %vm1389, %v2211, 0.0
        %v2279 = vadd.f32 %v2277, %v2278
        %v2280 = vsel %vm1389, %v2212, 0.0
        %v2281 = vadd.f32 %v2279, %v2280
        %v2282 = vsel %vm1389, %v2213, 0.0
        %v2283 = vadd.f32 %v2281, %v2282
        %v2284 = vsel %vm1389, %v2214, 0.0
        %v2285 = vadd.f32 %v2283, %v2284
        %v2286 = vsel %vm1389, %v2215, 0.0
        %v2287 = vadd.f32 %v2285, %v2286
        %v2288 = vsel %vm1389, %v2216, 0.0
        %v2289 = vadd.f32 %v2287, %v2288
        %v2290 = vsel %vm1389, %v2217, 0.0
        %v2291 = vadd.f32 %v2289, %v2290
        %v2292 = vsel %vm1389, %v2218, 0.0
        %v2293 = vadd.f32 %v2291, %v2292
        %v2294 = vsel %vm1389, %v2219, 0.0
        %v2295 = vadd.f32 %v2293, %v2294
        %v2296 = vsel %vm1413, %v2220, 0.0
        %v2297 = vadd.f32 %v2295, %v2296
        %v2298 = vsel %vm1389, %v2221, 0.0
        %v2299 = vadd.f32 %v2297, %v2298
        %v2300 = vsel %vm1389, %v2222, 0.0
        %v2301 = vadd.f32 %v2299, %v2300
        %v2302 = vsel %vm1389, %v2223, 0.0
        %v2303 = vadd.f32 %v2301, %v2302
        %v2304 = vsel %vm1389, %v2224, 0.0
        %v2305 = vadd.f32 %v2303, %v2304
        %v2306 = vsel %vm1389, %v2225, 0.0
        %v2307 = vadd.f32 %v2305, %v2306
        %v2308 = vsel %vm1389, %v2226, 0.0
        %v2309 = vadd.f32 %v2307, %v2308
        %v2310 = vsel %vm1389, %v2227, 0.0
        %v2311 = vadd.f32 %v2309, %v2310
        %v2312 = vsel %vm1389, %v2228, 0.0
        %v2313 = vadd.f32 %v2311, %v2312
        %v2314 = vsel %vm1389, %v2229, 0.0
        %v2315 = vadd.f32 %v2313, %v2314
        %v2316 = vsel %vm1389, %v2230, 0.0
        %v2317 = vadd.f32 %v2315, %v2316
        %v2318 = vsel %vm1389, %v2231, 0.0
        %v2319 = vadd.f32 %v2317, %v2318
        %v2320 = vsel %vm1389, %v2232, 0.0
        %v2321 = vadd.f32 %v2319, %v2320
        %v2322 = vsel %vm1413, %v2233, 0.0
        %v2323 = vadd.f32 %v2321, %v2322
        %v2324 = vsel %vm1389, %v2234, 0.0
        %v2325 = vadd.f32 %v2323, %v2324
        %v2326 = vsel %vm1389, %v2235, 0.0
        %v2327 = vadd.f32 %v2325, %v2326
        %v2328 = vsel %vm1389, %v2236, 0.0
        %v2329 = vadd.f32 %v2327, %v2328
        %v2330 = vsel %vm1389, %v2237, 0.0
        %v2331 = vadd.f32 %v2329, %v2330
        %v2332 = vsel %vm1389, %v2238, 0.0
        %v2333 = vadd.f32 %v2331, %v2332
        %v2334 = vsel %vm1389, %v2239, 0.0
        %v2335 = vadd.f32 %v2333, %v2334
        %v2336 = vsel %vm1389, %v2240, 0.0
        %v2337 = vadd.f32 %v2335, %v2336
        %v2338 = vsel %vm1389, %v2241, 0.0
        %v2339 = vadd.f32 %v2337, %v2338
        %v2340 = vsel %vm1389, %v2242, 0.0
        %v2341 = vadd.f32 %v2339, %v2340
        %v2342 = vsel %vm1389, %v2243, 0.0
        %v2343 = vadd.f32 %v2341, %v2342
        %v2344 = vsel %vm1389, %v2244, 0.0
        %v2345 = vadd.f32 %v2343, %v2344
        %v2346 = vsel %vm1389, %v2245, 0.0
        %v2347 = vadd.f32 %v2345, %v2346
        %v2348 = vsel %vm1413, %v2246, 0.0
        %v2349 = vadd.f32 %v2347, %v2348
        %2350 = vadd.xlane.f32.xlu0 %v2349
        %v2351 = vpop.xlane.xlu0 %2350
        %v2352 = vrot.slane %v2351, 4
        %v2353 = vadd.f32 %v2351, %v2352
        %v2354 = vrot.slane %v2353, 2
        %v2355 = vadd.f32 %v2353, %v2354
        %v2356 = vrot.slane %v2355, 1
        %v2357 = vadd.f32 %v2355, %v2356
        %s2358 = vtos %v2357
        %2360 = vset.pattern.permute.xlu0 0
        %2361 = vperm.xlu0 %2360, %v528
        %v2362 = vpop.permute.xlu0 %2361
        %2365 = vset.pattern.permute.xlu0 0
        %2366 = vperm.xlu0 %2365, %v529
        %v2367 = vpop.permute.xlu0 %2366
        %2370 = vset.pattern.permute.xlu0 0
        %2371 = vperm.xlu0 %2370, %v530
        %v2372 = vpop.permute.xlu0 %2371
        %2375 = vset.pattern.permute.xlu0 0
        %2376 = vperm.xlu0 %2375, %v531
        %v2377 = vpop.permute.xlu0 %2376
        %2380 = vset.pattern.permute.xlu0 0
        %2381 = vperm.xlu0 %2380, %v532
        %v2382 = vpop.permute.xlu0 %2381
        %2385 = vset.pattern.permute.xlu0 0
        %2386 = vperm.xlu0 %2385, %v533
        %v2387 = vpop.permute.xlu0 %2386
        %2390 = vset.pattern.permute.xlu0 0
        %2391 = vperm.xlu0 %2390, %v534
        %v2392 = vpop.permute.xlu0 %2391
        %2395 = vset.pattern.permute.xlu0 0
        %2396 = vperm.xlu0 %2395, %v535
        %v2397 = vpop.permute.xlu0 %2396
        %2400 = vset.pattern.permute.xlu0 0
        %2401 = vperm.xlu0 %2400, %v536
        %v2402 = vpop.permute.xlu0 %2401
        %2405 = vset.pattern.permute.xlu0 0
        %2406 = vperm.xlu0 %2405, %v537
        %v2407 = vpop.permute.xlu0 %2406
        %2410 = vset.pattern.permute.xlu0 0
        %2411 = vperm.xlu0 %2410, %v538
        %v2412 = vpop.permute.xlu0 %2411
        %2415 = vset.pattern.permute.xlu0 0
        %2416 = vperm.xlu0 %2415, %v539
        %v2417 = vpop.permute.xlu0 %2416
        %2420 = vset.pattern.permute.xlu0 0
        %2421 = vperm.xlu0 %2420, %v540
        %v2422 = vpop.permute.xlu0 %2421
        %2425 = vset.pattern.permute.xlu0 0
        %2426 = vperm.xlu0 %2425, %v541
        %v2427 = vpop.permute.xlu0 %2426
        %2430 = vset.pattern.permute.xlu0 0
        %2431 = vperm.xlu0 %2430, %v542
        %v2432 = vpop.permute.xlu0 %2431
        %2435 = vset.pattern.permute.xlu0 0
        %2436 = vperm.xlu0 %2435, %v543
        %v2437 = vpop.permute.xlu0 %2436
        %2440 = vset.pattern.permute.xlu0 0
        %2441 = vperm.xlu0 %2440, %v544
        %v2442 = vpop.permute.xlu0 %2441
        %2445 = vset.pattern.permute.xlu0 0
        %2446 = vperm.xlu0 %2445, %v545
        %v2447 = vpop.permute.xlu0 %2446
        %2450 = vset.pattern.permute.xlu0 0
        %2451 = vperm.xlu0 %2450, %v546
        %v2452 = vpop.permute.xlu0 %2451
        %2455 = vset.pattern.permute.xlu0 0
        %2456 = vperm.xlu0 %2455, %v547
        %v2457 = vpop.permute.xlu0 %2456
        %2460 = vset.pattern.permute.xlu0 0
        %2461 = vperm.xlu0 %2460, %v548
        %v2462 = vpop.permute.xlu0 %2461
        %2465 = vset.pattern.permute.xlu0 0
        %2466 = vperm.xlu0 %2465, %v549
        %v2467 = vpop.permute.xlu0 %2466
        %2470 = vset.pattern.permute.xlu0 0
        %2471 = vperm.xlu0 %2470, %v550
        %v2472 = vpop.permute.xlu0 %2471
        %2475 = vset.pattern.permute.xlu0 0
        %2476 = vperm.xlu0 %2475, %v551
        %v2477 = vpop.permute.xlu0 %2476
        %2480 = vset.pattern.permute.xlu0 0
        %2481 = vperm.xlu0 %2480, %v552
        %v2482 = vpop.permute.xlu0 %2481
        %2485 = vset.pattern.permute.xlu0 0
        %2486 = vperm.xlu0 %2485, %v553
        %v2487 = vpop.permute.xlu0 %2486
        %2490 = vset.pattern.permute.xlu0 0
        %2491 = vperm.xlu0 %2490, %v554
        %v2492 = vpop.permute.xlu0 %2491
        %2495 = vset.pattern.permute.xlu0 0
        %2496 = vperm.xlu0 %2495, %v555
        %v2497 = vpop.permute.xlu0 %2496
        %2500 = vset.pattern.permute.xlu0 0
        %2501 = vperm.xlu0 %2500, %v556
        %v2502 = vpop.permute.xlu0 %2501
        %2505 = vset.pattern.permute.xlu0 0
        %2506 = vperm.xlu0 %2505, %v557
        %v2507 = vpop.permute.xlu0 %2506
        %2510 = vset.pattern.permute.xlu0 0
        %2511 = vperm.xlu0 %2510, %v558
        %v2512 = vpop.permute.xlu0 %2511
        %2515 = vset.pattern.permute.xlu0 0
        %2516 = vperm.xlu0 %2515, %v559
        %v2517 = vpop.permute.xlu0 %2516
        %2520 = vset.pattern.permute.xlu0 0
        %2521 = vperm.xlu0 %2520, %v560
        %v2522 = vpop.permute.xlu0 %2521
        %2525 = vset.pattern.permute.xlu0 0
        %2526 = vperm.xlu0 %2525, %v561
        %v2527 = vpop.permute.xlu0 %2526
        %2530 = vset.pattern.permute.xlu0 0
        %2531 = vperm.xlu0 %2530, %v562
        %v2532 = vpop.permute.xlu0 %2531
        %2535 = vset.pattern.permute.xlu0 0
        %2536 = vperm.xlu0 %2535, %v563
        %v2537 = vpop.permute.xlu0 %2536
        %2540 = vset.pattern.permute.xlu0 0
        %2541 = vperm.xlu0 %2540, %v564
        %v2542 = vpop.permute.xlu0 %2541
        %2545 = vset.pattern.permute.xlu0 0
        %2546 = vperm.xlu0 %2545, %v565
        %v2547 = vpop.permute.xlu0 %2546
        %2550 = vset.pattern.permute.xlu0 0
        %2551 = vperm.xlu0 %2550, %v566
        %v2552 = vpop.permute.xlu0 %2551
        %2555 = vset.pattern.permute.xlu0 0
        %2556 = vperm.xlu0 %2555, %v567
        %v2557 = vpop.permute.xlu0 %2556
        %2560 = vset.pattern.permute.xlu0 0
        %2561 = vperm.xlu0 %2560, %v568
        %v2562 = vpop.permute.xlu0 %2561
        %2565 = vset.pattern.permute.xlu0 0
        %2566 = vperm.xlu0 %2565, %v569
        %v2567 = vpop.permute.xlu0 %2566
        %2570 = vset.pattern.permute.xlu0 0
        %2571 = vperm.xlu0 %2570, %v570
        %v2572 = vpop.permute.xlu0 %2571
        %2575 = vset.pattern.permute.xlu0 0
        %2576 = vperm.xlu0 %2575, %v571
        %v2577 = vpop.permute.xlu0 %2576
        %2580 = vset.pattern.permute.xlu0 0
        %2581 = vperm.xlu0 %2580, %v572
        %v2582 = vpop.permute.xlu0 %2581
        %2585 = vset.pattern.permute.xlu0 0
        %2586 = vperm.xlu0 %2585, %v573
        %v2587 = vpop.permute.xlu0 %2586
        %2590 = vset.pattern.permute.xlu0 0
        %2591 = vperm.xlu0 %2590, %v574
        %v2592 = vpop.permute.xlu0 %2591
        %2595 = vset.pattern.permute.xlu0 0
        %2596 = vperm.xlu0 %2595, %v575
        %v2597 = vpop.permute.xlu0 %2596
        %2600 = vset.pattern.permute.xlu0 0
        %2601 = vperm.xlu0 %2600, %v576
        %v2602 = vpop.permute.xlu0 %2601
        %2605 = vset.pattern.permute.xlu0 0
        %2606 = vperm.xlu0 %2605, %v577
        %v2607 = vpop.permute.xlu0 %2606
        %2610 = vset.pattern.permute.xlu0 0
        %2611 = vperm.xlu0 %2610, %v578
        %v2612 = vpop.permute.xlu0 %2611
        %2615 = vset.pattern.permute.xlu0 0
        %2616 = vperm.xlu0 %2615, %v579
        %v2617 = vpop.permute.xlu0 %2616
        %v2619 = vmul.f32 %v2362, %v646
        %v2620 = vmul.f32 %v2367, %v646
        %v2621 = vmul.f32 %v2372, %v646
        %v2622 = vmul.f32 %v2377, %v646
        %v2623 = vmul.f32 %v2382, %v646
        %v2624 = vmul.f32 %v2387, %v646
        %v2625 = vmul.f32 %v2392, %v646
        %v2626 = vmul.f32 %v2397, %v646
        %v2627 = vmul.f32 %v2402, %v646
        %v2628 = vmul.f32 %v2407, %v646
        %v2629 = vmul.f32 %v2412, %v646
        %v2630 = vmul.f32 %v2417, %v646
        %v2631 = vmul.f32 %v2422, %v646
        %v2632 = vmul.f32 %v2427, %v650
        %v2633 = vmul.f32 %v2432, %v650
        %v2634 = vmul.f32 %v2437, %v650
        %v2635 = vmul.f32 %v2442, %v650
        %v2636 = vmul.f32 %v2447, %v650
        %v2637 = vmul.f32 %v2452, %v650
        %v2638 = vmul.f32 %v2457, %v650
        %v2639 = vmul.f32 %v2462, %v650
        %v2640 = vmul.f32 %v2467, %v650
        %v2641 = vmul.f32 %v2472, %v650
        %v2642 = vmul.f32 %v2477, %v650
        %v2643 = vmul.f32 %v2482, %v650
        %v2644 = vmul.f32 %v2487, %v650
        %v2645 = vmul.f32 %v2492, %v654
        %v2646 = vmul.f32 %v2497, %v654
        %v2647 = vmul.f32 %v2502, %v654
        %v2648 = vmul.f32 %v2507, %v654
        %v2649 = vmul.f32 %v2512, %v654
        %v2650 = vmul.f32 %v2517, %v654
        %v2651 = vmul.f32 %v2522, %v654
        %v2652 = vmul.f32 %v2527, %v654
        %v2653 = vmul.f32 %v2532, %v654
        %v2654 = vmul.f32 %v2537, %v654
        %v2655 = vmul.f32 %v2542, %v654
        %v2656 = vmul.f32 %v2547, %v654
        %v2657 = vmul.f32 %v2552, %v654
        %v2658 = vmul.f32 %v2557, %v658
        %v2659 = vmul.f32 %v2562, %v658
        %v2660 = vmul.f32 %v2567, %v658
        %v2661 = vmul.f32 %v2572, %v658
        %v2662 = vmul.f32 %v2577, %v658
        %v2663 = vmul.f32 %v2582, %v658
        %v2664 = vmul.f32 %v2587, %v658
        %v2665 = vmul.f32 %v2592, %v658
        %v2666 = vmul.f32 %v2597, %v658
        %v2667 = vmul.f32 %v2602, %v658
        %v2668 = vmul.f32 %v2607, %v658
        %v2669 = vmul.f32 %v2612, %v658
        %v2670 = vmul.f32 %v2617, %v658
        %v2671 = vmul.f32 %v2619, %v313
        %v2672 = vmul.f32 %v2620, %v314
        %v2673 = vmul.f32 %v2621, %v315
        %v2674 = vmul.f32 %v2622, %v316
        %v2675 = vmul.f32 %v2623, %v317
        %v2676 = vmul.f32 %v2624, %v318
        %v2677 = vmul.f32 %v2625, %v319
        %v2678 = vmul.f32 %v2626, %v320
        %v2679 = vmul.f32 %v2627, %v321
        %v2680 = vmul.f32 %v2628, %v322
        %v2681 = vmul.f32 %v2629, %v323
        %v2682 = vmul.f32 %v2630, %v324
        %v2683 = vmul.f32 %v2631, %v325
        %v2684 = vmul.f32 %v2632, %v326
        %v2685 = vmul.f32 %v2633, %v327
        %v2686 = vmul.f32 %v2634, %v328
        %v2687 = vmul.f32 %v2635, %v329
        %v2688 = vmul.f32 %v2636, %v330
        %v2689 = vmul.f32 %v2637, %v331
        %v2690 = vmul.f32 %v2638, %v332
        %v2691 = vmul.f32 %v2639, %v333
        %v2692 = vmul.f32 %v2640, %v334
        %v2693 = vmul.f32 %v2641, %v335
        %v2694 = vmul.f32 %v2642, %v336
        %v2695 = vmul.f32 %v2643, %v337
        %v2696 = vmul.f32 %v2644, %v338
        %v2697 = vmul.f32 %v2645, %v339
        %v2698 = vmul.f32 %v2646, %v340
        %v2699 = vmul.f32 %v2647, %v341
        %v2700 = vmul.f32 %v2648, %v342
        %v2701 = vmul.f32 %v2649, %v343
        %v2702 = vmul.f32 %v2650, %v344
        %v2703 = vmul.f32 %v2651, %v345
        %v2704 = vmul.f32 %v2652, %v346
        %v2705 = vmul.f32 %v2653, %v347
        %v2706 = vmul.f32 %v2654, %v348
        %v2707 = vmul.f32 %v2655, %v349
        %v2708 = vmul.f32 %v2656, %v350
        %v2709 = vmul.f32 %v2657, %v351
        %v2710 = vmul.f32 %v2658, %v352
        %v2711 = vmul.f32 %v2659, %v353
        %v2712 = vmul.f32 %v2660, %v354
        %v2713 = vmul.f32 %v2661, %v355
        %v2714 = vmul.f32 %v2662, %v356
        %v2715 = vmul.f32 %v2663, %v357
        %v2716 = vmul.f32 %v2664, %v358
        %v2717 = vmul.f32 %v2665, %v359
        %v2718 = vmul.f32 %v2666, %v360
        %v2719 = vmul.f32 %v2667, %v361
        %v2720 = vmul.f32 %v2668, %v362
        %v2721 = vmul.f32 %v2669, %v363
        %v2722 = vmul.f32 %v2670, %v364
        %v2723 = vsel %vm841, %v2671, -inf
        %2724 = vmax.xlane.f32.xlu0 %v2723
        %v2725 = vpop.xlane.xlu0 %2724
        %v2726 = vsel %vm841, %v2672, -inf
        %2727 = vmax.xlane.f32.xlu0 %v2726
        %v2728 = vpop.xlane.xlu0 %2727
        %v2729 = vsel %vm841, %v2673, -inf
        %2730 = vmax.xlane.f32.xlu0 %v2729
        %v2731 = vpop.xlane.xlu0 %2730
        %v2732 = vsel %vm841, %v2674, -inf
        %2733 = vmax.xlane.f32.xlu0 %v2732
        %v2734 = vpop.xlane.xlu0 %2733
        %v2735 = vsel %vm841, %v2675, -inf
        %2736 = vmax.xlane.f32.xlu0 %v2735
        %v2737 = vpop.xlane.xlu0 %2736
        %v2738 = vsel %vm841, %v2676, -inf
        %2739 = vmax.xlane.f32.xlu0 %v2738
        %v2740 = vpop.xlane.xlu0 %2739
        %v2741 = vsel %vm841, %v2677, -inf
        %2742 = vmax.xlane.f32.xlu0 %v2741
        %v2743 = vpop.xlane.xlu0 %2742
        %v2744 = vsel %vm841, %v2678, -inf
        %2745 = vmax.xlane.f32.xlu0 %v2744
        %v2746 = vpop.xlane.xlu0 %2745
        %v2747 = vsel %vm841, %v2679, -inf
        %2748 = vmax.xlane.f32.xlu0 %v2747
        %v2749 = vpop.xlane.xlu0 %2748
        %v2750 = vsel %vm841, %v2680, -inf
        %2751 = vmax.xlane.f32.xlu0 %v2750
        %v2752 = vpop.xlane.xlu0 %2751
        %v2753 = vsel %vm841, %v2681, -inf
        %2754 = vmax.xlane.f32.xlu0 %v2753
        %v2755 = vpop.xlane.xlu0 %2754
        %v2756 = vsel %vm841, %v2682, -inf
        %2757 = vmax.xlane.f32.xlu0 %v2756
        %v2758 = vpop.xlane.xlu0 %2757
        %vm2759 = vcmask 823296
        %v2760 = vsel %vm2759, %v2683, -inf
        %2761 = vmax.xlane.f32.xlu0 %v2760
        %v2762 = vpop.xlane.xlu0 %2761
        %v2763 = vsel %vm841, %v2684, -inf
        %2764 = vmax.xlane.f32.xlu0 %v2763
        %v2765 = vpop.xlane.xlu0 %2764
        %v2766 = vsel %vm841, %v2685, -inf
        %2767 = vmax.xlane.f32.xlu0 %v2766
        %v2768 = vpop.xlane.xlu0 %2767
        %v2769 = vsel %vm841, %v2686, -inf
        %2770 = vmax.xlane.f32.xlu0 %v2769
        %v2771 = vpop.xlane.xlu0 %2770
        %v2772 = vsel %vm841, %v2687, -inf
        %2773 = vmax.xlane.f32.xlu0 %v2772
        %v2774 = vpop.xlane.xlu0 %2773
        %v2775 = vsel %vm841, %v2688, -inf
        %2776 = vmax.xlane.f32.xlu0 %v2775
        %v2777 = vpop.xlane.xlu0 %2776
        %v2778 = vsel %vm841, %v2689, -inf
        %2779 = vmax.xlane.f32.xlu0 %v2778
        %v2780 = vpop.xlane.xlu0 %2779
        %v2781 = vsel %vm841, %v2690, -inf
        %2782 = vmax.xlane.f32.xlu0 %v2781
        %v2783 = vpop.xlane.xlu0 %2782
        %v2784 = vsel %vm841, %v2691, -inf
        %2785 = vmax.xlane.f32.xlu0 %v2784
        %v2786 = vpop.xlane.xlu0 %2785
        %v2787 = vsel %vm841, %v2692, -inf
        %2788 = vmax.xlane.f32.xlu0 %v2787
        %v2789 = vpop.xlane.xlu0 %2788
        %v2790 = vsel %vm841, %v2693, -inf
        %2791 = vmax.xlane.f32.xlu0 %v2790
        %v2792 = vpop.xlane.xlu0 %2791
        %v2793 = vsel %vm841, %v2694, -inf
        %2794 = vmax.xlane.f32.xlu0 %v2793
        %v2795 = vpop.xlane.xlu0 %2794
        %v2796 = vsel %vm841, %v2695, -inf
        %2797 = vmax.xlane.f32.xlu0 %v2796
        %v2798 = vpop.xlane.xlu0 %2797
        %v2799 = vsel %vm2759, %v2696, -inf
        %2800 = vmax.xlane.f32.xlu0 %v2799
        %v2801 = vpop.xlane.xlu0 %2800
        %v2802 = vsel %vm841, %v2697, -inf
        %2803 = vmax.xlane.f32.xlu0 %v2802
        %v2804 = vpop.xlane.xlu0 %2803
        %v2805 = vsel %vm841, %v2698, -inf
        %2806 = vmax.xlane.f32.xlu0 %v2805
        %v2807 = vpop.xlane.xlu0 %2806
        %v2808 = vsel %vm841, %v2699, -inf
        %2809 = vmax.xlane.f32.xlu0 %v2808
        %v2810 = vpop.xlane.xlu0 %2809
        %v2811 = vsel %vm841, %v2700, -inf
        %2812 = vmax.xlane.f32.xlu0 %v2811
        %v2813 = vpop.xlane.xlu0 %2812
        %v2814 = vsel %vm841, %v2701, -inf
        %2815 = vmax.xlane.f32.xlu0 %v2814
        %v2816 = vpop.xlane.xlu0 %2815
        %v2817 = vsel %vm841, %v2702, -inf
        %2818 = vmax.xlane.f32.xlu0 %v2817
        %v2819 = vpop.xlane.xlu0 %2818
        %v2820 = vsel %vm841, %v2703, -inf
        %2821 = vmax.xlane.f32.xlu0 %v2820
        %v2822 = vpop.xlane.xlu0 %2821
        %v2823 = vsel %vm841, %v2704, -inf
        %2824 = vmax.xlane.f32.xlu0 %v2823
        %v2825 = vpop.xlane.xlu0 %2824
        %v2826 = vsel %vm841, %v2705, -inf
        %2827 = vmax.xlane.f32.xlu0 %v2826
        %v2828 = vpop.xlane.xlu0 %2827
        %v2829 = vsel %vm841, %v2706, -inf
        %2830 = vmax.xlane.f32.xlu0 %v2829
        %v2831 = vpop.xlane.xlu0 %2830
        %v2832 = vsel %vm841, %v2707, -inf
        %2833 = vmax.xlane.f32.xlu0 %v2832
        %v2834 = vpop.xlane.xlu0 %2833
        %v2835 = vsel %vm841, %v2708, -inf
        %2836 = vmax.xlane.f32.xlu0 %v2835
        %v2837 = vpop.xlane.xlu0 %2836
        %v2838 = vsel %vm2759, %v2709, -inf
        %2839 = vmax.xlane.f32.xlu0 %v2838
        %v2840 = vpop.xlane.xlu0 %2839
        %v2841 = vsel %vm841, %v2710, -inf
        %2842 = vmax.xlane.f32.xlu0 %v2841
        %v2843 = vpop.xlane.xlu0 %2842
        %v2844 = vsel %vm841, %v2711, -inf
        %2845 = vmax.xlane.f32.xlu0 %v2844
        %v2846 = vpop.xlane.xlu0 %2845
        %v2847 = vsel %vm841, %v2712, -inf
        %2848 = vmax.xlane.f32.xlu0 %v2847
        %v2849 = vpop.xlane.xlu0 %2848
        %v2850 = vsel %vm841, %v2713, -inf
        %2851 = vmax.xlane.f32.xlu0 %v2850
        %v2852 = vpop.xlane.xlu0 %2851
        %v2853 = vsel %vm841, %v2714, -inf
        %2854 = vmax.xlane.f32.xlu0 %v2853
        %v2855 = vpop.xlane.xlu0 %2854
        %v2856 = vsel %vm841, %v2715, -inf
        %2857 = vmax.xlane.f32.xlu0 %v2856
        %v2858 = vpop.xlane.xlu0 %2857
        %v2859 = vsel %vm841, %v2716, -inf
        %2860 = vmax.xlane.f32.xlu0 %v2859
        %v2861 = vpop.xlane.xlu0 %2860
        %v2862 = vsel %vm841, %v2717, -inf
        %2863 = vmax.xlane.f32.xlu0 %v2862
        %v2864 = vpop.xlane.xlu0 %2863
        %v2865 = vsel %vm841, %v2718, -inf
        %2866 = vmax.xlane.f32.xlu0 %v2865
        %v2867 = vpop.xlane.xlu0 %2866
        %v2868 = vsel %vm841, %v2719, -inf
        %2869 = vmax.xlane.f32.xlu0 %v2868
        %v2870 = vpop.xlane.xlu0 %2869
        %v2871 = vsel %vm841, %v2720, -inf
        %2872 = vmax.xlane.f32.xlu0 %v2871
        %v2873 = vpop.xlane.xlu0 %2872
        %v2874 = vsel %vm841, %v2721, -inf
        %2875 = vmax.xlane.f32.xlu0 %v2874
        %v2876 = vpop.xlane.xlu0 %2875
        %v2877 = vsel %vm2759, %v2722, -inf
        %2878 = vmax.xlane.f32.xlu0 %v2877
        %v2879 = vpop.xlane.xlu0 %2878
        %v2880 = vsub.f32 %v2671, %v2725
        %v2881 = vsub.f32 %v2672, %v2728
        %v2882 = vsub.f32 %v2673, %v2731
        %v2883 = vsub.f32 %v2674, %v2734
        %v2884 = vsub.f32 %v2675, %v2737
        %v2885 = vsub.f32 %v2676, %v2740
        %v2886 = vsub.f32 %v2677, %v2743
        %v2887 = vsub.f32 %v2678, %v2746
        %v2888 = vsub.f32 %v2679, %v2749
        %v2889 = vsub.f32 %v2680, %v2752
        %v2890 = vsub.f32 %v2681, %v2755
        %v2891 = vsub.f32 %v2682, %v2758
        %v2892 = vsub.f32 %v2683, %v2762
        %v2893 = vsub.f32 %v2684, %v2765
        %v2894 = vsub.f32 %v2685, %v2768
        %v2895 = vsub.f32 %v2686, %v2771
        %v2896 = vsub.f32 %v2687, %v2774
        %v2897 = vsub.f32 %v2688, %v2777
        %v2898 = vsub.f32 %v2689, %v2780
        %v2899 = vsub.f32 %v2690, %v2783
        %v2900 = vsub.f32 %v2691, %v2786
        %v2901 = vsub.f32 %v2692, %v2789
        %v2902 = vsub.f32 %v2693, %v2792
        %v2903 = vsub.f32 %v2694, %v2795
        %v2904 = vsub.f32 %v2695, %v2798
        %v2905 = vsub.f32 %v2696, %v2801
        %v2906 = vsub.f32 %v2697, %v2804
        %v2907 = vsub.f32 %v2698, %v2807
        %v2908 = vsub.f32 %v2699, %v2810
        %v2909 = vsub.f32 %v2700, %v2813
        %v2910 = vsub.f32 %v2701, %v2816
        %v2911 = vsub.f32 %v2702, %v2819
        %v2912 = vsub.f32 %v2703, %v2822
        %v2913 = vsub.f32 %v2704, %v2825
        %v2914 = vsub.f32 %v2705, %v2828
        %v2915 = vsub.f32 %v2706, %v2831
        %v2916 = vsub.f32 %v2707, %v2834
        %v2917 = vsub.f32 %v2708, %v2837
        %v2918 = vsub.f32 %v2709, %v2840
        %v2919 = vsub.f32 %v2710, %v2843
        %v2920 = vsub.f32 %v2711, %v2846
        %v2921 = vsub.f32 %v2712, %v2849
        %v2922 = vsub.f32 %v2713, %v2852
        %v2923 = vsub.f32 %v2714, %v2855
        %v2924 = vsub.f32 %v2715, %v2858
        %v2925 = vsub.f32 %v2716, %v2861
        %v2926 = vsub.f32 %v2717, %v2864
        %v2927 = vsub.f32 %v2718, %v2867
        %v2928 = vsub.f32 %v2719, %v2870
        %v2929 = vsub.f32 %v2720, %v2873
        %v2930 = vsub.f32 %v2721, %v2876
        %v2931 = vsub.f32 %v2722, %v2879
        %v2932 = vmul.f32 %v2880, 1.442695
        %v2933 = vpow.pop %v2932
        %v2934 = vmul.f32 %v2881, 1.442695
        %v2935 = vpow.pop %v2934
        %v2936 = vmul.f32 %v2882, 1.442695
        %v2937 = vpow.pop %v2936
        %v2938 = vmul.f32 %v2883, 1.442695
        %v2939 = vpow.pop %v2938
        %v2940 = vmul.f32 %v2884, 1.442695
        %v2941 = vpow.pop %v2940
        %v2942 = vmul.f32 %v2885, 1.442695
        %v2943 = vpow.pop %v2942
        %v2944 = vmul.f32 %v2886, 1.442695
        %v2945 = vpow.pop %v2944
        %v2946 = vmul.f32 %v2887, 1.442695
        %v2947 = vpow.pop %v2946
        %v2948 = vmul.f32 %v2888, 1.442695
        %v2949 = vpow.pop %v2948
        %v2950 = vmul.f32 %v2889, 1.442695
        %v2951 = vpow.pop %v2950
        %v2952 = vmul.f32 %v2890, 1.442695
        %v2953 = vpow.pop %v2952
        %v2954 = vmul.f32 %v2891, 1.442695
        %v2955 = vpow.pop %v2954
        %v2956 = vmul.f32 %v2892, 1.442695
        %v2957 = vpow.pop %v2956
        %v2958 = vmul.f32 %v2893, 1.442695
        %v2959 = vpow.pop %v2958
        %v2960 = vmul.f32 %v2894, 1.442695
        %v2961 = vpow.pop %v2960
        %v2962 = vmul.f32 %v2895, 1.442695
        %v2963 = vpow.pop %v2962
        %v2964 = vmul.f32 %v2896, 1.442695
        %v2965 = vpow.pop %v2964
        %v2966 = vmul.f32 %v2897, 1.442695
        %v2967 = vpow.pop %v2966
        %v2968 = vmul.f32 %v2898, 1.442695
        %v2969 = vpow.pop %v2968
        %v2970 = vmul.f32 %v2899, 1.442695
        %v2971 = vpow.pop %v2970
        %v2972 = vmul.f32 %v2900, 1.442695
        %v2973 = vpow.pop %v2972
        %v2974 = vmul.f32 %v2901, 1.442695
        %v2975 = vpow.pop %v2974
        %v2976 = vmul.f32 %v2902, 1.442695
        %v2977 = vpow.pop %v2976
        %v2978 = vmul.f32 %v2903, 1.442695
        %v2979 = vpow.pop %v2978
        %v2980 = vmul.f32 %v2904, 1.442695
        %v2981 = vpow.pop %v2980
        %v2982 = vmul.f32 %v2905, 1.442695
        %v2983 = vpow.pop %v2982
        %v2984 = vmul.f32 %v2906, 1.442695
        %v2985 = vpow.pop %v2984
        %v2986 = vmul.f32 %v2907, 1.442695
        %v2987 = vpow.pop %v2986
        %v2988 = vmul.f32 %v2908, 1.442695
        %v2989 = vpow.pop %v2988
        %v2990 = vmul.f32 %v2909, 1.442695
        %v2991 = vpow.pop %v2990
        %v2992 = vmul.f32 %v2910, 1.442695
        %v2993 = vpow.pop %v2992
        %v2994 = vmul.f32 %v2911, 1.442695
        %v2995 = vpow.pop %v2994
        %v2996 = vmul.f32 %v2912, 1.442695
        %v2997 = vpow.pop %v2996
        %v2998 = vmul.f32 %v2913, 1.442695
        %v2999 = vpow.pop %v2998
        %v3000 = vmul.f32 %v2914, 1.442695
        %v3001 = vpow.pop %v3000
        %v3002 = vmul.f32 %v2915, 1.442695
        %v3003 = vpow.pop %v3002
        %v3004 = vmul.f32 %v2916, 1.442695
        %v3005 = vpow.pop %v3004
        %v3006 = vmul.f32 %v2917, 1.442695
        %v3007 = vpow.pop %v3006
        %v3008 = vmul.f32 %v2918, 1.442695
        %v3009 = vpow.pop %v3008
        %v3010 = vmul.f32 %v2919, 1.442695
        %v3011 = vpow.pop %v3010
        %v3012 = vmul.f32 %v2920, 1.442695
        %v3013 = vpow.pop %v3012
        %v3014 = vmul.f32 %v2921, 1.442695
        %v3015 = vpow.pop %v3014
        %v3016 = vmul.f32 %v2922, 1.442695
        %v3017 = vpow.pop %v3016
        %v3018 = vmul.f32 %v2923, 1.442695
        %v3019 = vpow.pop %v3018
        %v3020 = vmul.f32 %v2924, 1.442695
        %v3021 = vpow.pop %v3020
        %v3022 = vmul.f32 %v2925, 1.442695
        %v3023 = vpow.pop %v3022
        %v3024 = vmul.f32 %v2926, 1.442695
        %v3025 = vpow.pop %v3024
        %v3026 = vmul.f32 %v2927, 1.442695
        %v3027 = vpow.pop %v3026
        %v3028 = vmul.f32 %v2928, 1.442695
        %v3029 = vpow.pop %v3028
        %v3030 = vmul.f32 %v2929, 1.442695
        %v3031 = vpow.pop %v3030
        %v3032 = vmul.f32 %v2930, 1.442695
        %v3033 = vpow.pop %v3032
        %v3034 = vmul.f32 %v2931, 1.442695
        %v3035 = vpow.pop %v3034
        %v3036 = vsel %vm841, %v2933, 0.0
        %3037 = vadd.xlane.f32.xlu0 %v3036
        %v3038 = vpop.xlane.xlu0 %3037
        %v3039 = vsel %vm841, %v2935, 0.0
        %3040 = vadd.xlane.f32.xlu0 %v3039
        %v3041 = vpop.xlane.xlu0 %3040
        %v3042 = vsel %vm841, %v2937, 0.0
        %3043 = vadd.xlane.f32.xlu0 %v3042
        %v3044 = vpop.xlane.xlu0 %3043
        %v3045 = vsel %vm841, %v2939, 0.0
        %3046 = vadd.xlane.f32.xlu0 %v3045
        %v3047 = vpop.xlane.xlu0 %3046
        %v3048 = vsel %vm841, %v2941, 0.0
        %3049 = vadd.xlane.f32.xlu0 %v3048
        %v3050 = vpop.xlane.xlu0 %3049
        %v3051 = vsel %vm841, %v2943, 0.0
        %3052 = vadd.xlane.f32.xlu0 %v3051
        %v3053 = vpop.xlane.xlu0 %3052
        %v3054 = vsel %vm841, %v2945, 0.0
        %3055 = vadd.xlane.f32.xlu0 %v3054
        %v3056 = vpop.xlane.xlu0 %3055
        %v3057 = vsel %vm841, %v2947, 0.0
        %3058 = vadd.xlane.f32.xlu0 %v3057
        %v3059 = vpop.xlane.xlu0 %3058
        %v3060 = vsel %vm841, %v2949, 0.0
        %3061 = vadd.xlane.f32.xlu0 %v3060
        %v3062 = vpop.xlane.xlu0 %3061
        %v3063 = vsel %vm841, %v2951, 0.0
        %3064 = vadd.xlane.f32.xlu0 %v3063
        %v3065 = vpop.xlane.xlu0 %3064
        %v3066 = vsel %vm841, %v2953, 0.0
        %3067 = vadd.xlane.f32.xlu0 %v3066
        %v3068 = vpop.xlane.xlu0 %3067
        %v3069 = vsel %vm841, %v2955, 0.0
        %3070 = vadd.xlane.f32.xlu0 %v3069
        %v3071 = vpop.xlane.xlu0 %3070
        %v3072 = vsel %vm2759, %v2957, 0.0
        %3073 = vadd.xlane.f32.xlu0 %v3072
        %v3074 = vpop.xlane.xlu0 %3073
        %v3075 = vsel %vm841, %v2959, 0.0
        %3076 = vadd.xlane.f32.xlu0 %v3075
        %v3077 = vpop.xlane.xlu0 %3076
        %v3078 = vsel %vm841, %v2961, 0.0
        %3079 = vadd.xlane.f32.xlu0 %v3078
        %v3080 = vpop.xlane.xlu0 %3079
        %v3081 = vsel %vm841, %v2963, 0.0
        %3082 = vadd.xlane.f32.xlu0 %v3081
        %v3083 = vpop.xlane.xlu0 %3082
        %v3084 = vsel %vm841, %v2965, 0.0
        %3085 = vadd.xlane.f32.xlu0 %v3084
        %v3086 = vpop.xlane.xlu0 %3085
        %v3087 = vsel %vm841, %v2967, 0.0
        %3088 = vadd.xlane.f32.xlu0 %v3087
        %v3089 = vpop.xlane.xlu0 %3088
        %v3090 = vsel %vm841, %v2969, 0.0
        %3091 = vadd.xlane.f32.xlu0 %v3090
        %v3092 = vpop.xlane.xlu0 %3091
        %v3093 = vsel %vm841, %v2971, 0.0
        %3094 = vadd.xlane.f32.xlu0 %v3093
        %v3095 = vpop.xlane.xlu0 %3094
        %v3096 = vsel %vm841, %v2973, 0.0
        %3097 = vadd.xlane.f32.xlu0 %v3096
        %v3098 = vpop.xlane.xlu0 %3097
        %v3099 = vsel %vm841, %v2975, 0.0
        %3100 = vadd.xlane.f32.xlu0 %v3099
        %v3101 = vpop.xlane.xlu0 %3100
        %v3102 = vsel %vm841, %v2977, 0.0
        %3103 = vadd.xlane.f32.xlu0 %v3102
        %v3104 = vpop.xlane.xlu0 %3103
        %v3105 = vsel %vm841, %v2979, 0.0
        %3106 = vadd.xlane.f32.xlu0 %v3105
        %v3107 = vpop.xlane.xlu0 %3106
        %v3108 = vsel %vm841, %v2981, 0.0
        %3109 = vadd.xlane.f32.xlu0 %v3108
        %v3110 = vpop.xlane.xlu0 %3109
        %v3111 = vsel %vm2759, %v2983, 0.0
        %3112 = vadd.xlane.f32.xlu0 %v3111
        %v3113 = vpop.xlane.xlu0 %3112
        %v3114 = vsel %vm841, %v2985, 0.0
        %3115 = vadd.xlane.f32.xlu0 %v3114
        %v3116 = vpop.xlane.xlu0 %3115
        %v3117 = vsel %vm841, %v2987, 0.0
        %3118 = vadd.xlane.f32.xlu0 %v3117
        %v3119 = vpop.xlane.xlu0 %3118
        %v3120 = vsel %vm841, %v2989, 0.0
        %3121 = vadd.xlane.f32.xlu0 %v3120
        %v3122 = vpop.xlane.xlu0 %3121
        %v3123 = vsel %vm841, %v2991, 0.0
        %3124 = vadd.xlane.f32.xlu0 %v3123
        %v3125 = vpop.xlane.xlu0 %3124
        %v3126 = vsel %vm841, %v2993, 0.0
        %3127 = vadd.xlane.f32.xlu0 %v3126
        %v3128 = vpop.xlane.xlu0 %3127
        %v3129 = vsel %vm841, %v2995, 0.0
        %3130 = vadd.xlane.f32.xlu0 %v3129
        %v3131 = vpop.xlane.xlu0 %3130
        %v3132 = vsel %vm841, %v2997, 0.0
        %3133 = vadd.xlane.f32.xlu0 %v3132
        %v3134 = vpop.xlane.xlu0 %3133
        %v3135 = vsel %vm841, %v2999, 0.0
        %3136 = vadd.xlane.f32.xlu0 %v3135
        %v3137 = vpop.xlane.xlu0 %3136
        %v3138 = vsel %vm841, %v3001, 0.0
        %3139 = vadd.xlane.f32.xlu0 %v3138
        %v3140 = vpop.xlane.xlu0 %3139
        %v3141 = vsel %vm841, %v3003, 0.0
        %3142 = vadd.xlane.f32.xlu0 %v3141
        %v3143 = vpop.xlane.xlu0 %3142
        %v3144 = vsel %vm841, %v3005, 0.0
        %3145 = vadd.xlane.f32.xlu0 %v3144
        %v3146 = vpop.xlane.xlu0 %3145
        %v3147 = vsel %vm841, %v3007, 0.0
        %3148 = vadd.xlane.f32.xlu0 %v3147
        %v3149 = vpop.xlane.xlu0 %3148
        %v3150 = vsel %vm2759, %v3009, 0.0
        %3151 = vadd.xlane.f32.xlu0 %v3150
        %v3152 = vpop.xlane.xlu0 %3151
        %v3153 = vsel %vm841, %v3011, 0.0
        %3154 = vadd.xlane.f32.xlu0 %v3153
        %v3155 = vpop.xlane.xlu0 %3154
        %v3156 = vsel %vm841, %v3013, 0.0
        %3157 = vadd.xlane.f32.xlu0 %v3156
        %v3158 = vpop.xlane.xlu0 %3157
        %v3159 = vsel %vm841, %v3015, 0.0
        %3160 = vadd.xlane.f32.xlu0 %v3159
        %v3161 = vpop.xlane.xlu0 %3160
        %v3162 = vsel %vm841, %v3017, 0.0
        %3163 = vadd.xlane.f32.xlu0 %v3162
        %v3164 = vpop.xlane.xlu0 %3163
        %v3165 = vsel %vm841, %v3019, 0.0
        %3166 = vadd.xlane.f32.xlu0 %v3165
        %v3167 = vpop.xlane.xlu0 %3166
        %v3168 = vsel %vm841, %v3021, 0.0
        %3169 = vadd.xlane.f32.xlu0 %v3168
        %v3170 = vpop.xlane.xlu0 %3169
        %v3171 = vsel %vm841, %v3023, 0.0
        %3172 = vadd.xlane.f32.xlu0 %v3171
        %v3173 = vpop.xlane.xlu0 %3172
        %v3174 = vsel %vm841, %v3025, 0.0
        %3175 = vadd.xlane.f32.xlu0 %v3174
        %v3176 = vpop.xlane.xlu0 %3175
        %v3177 = vsel %vm841, %v3027, 0.0
        %3178 = vadd.xlane.f32.xlu0 %v3177
        %v3179 = vpop.xlane.xlu0 %3178
        %v3180 = vsel %vm841, %v3029, 0.0
        %3181 = vadd.xlane.f32.xlu0 %v3180
        %v3182 = vpop.xlane.xlu0 %3181
        %v3183 = vsel %vm841, %v3031, 0.0
        %3184 = vadd.xlane.f32.xlu0 %v3183
        %v3185 = vpop.xlane.xlu0 %3184
        %v3186 = vsel %vm841, %v3033, 0.0
        %3187 = vadd.xlane.f32.xlu0 %v3186
        %v3188 = vpop.xlane.xlu0 %3187
        %v3189 = vsel %vm2759, %v3035, 0.0
        %3190 = vadd.xlane.f32.xlu0 %v3189
        %v3191 = vpop.xlane.xlu0 %3190
        %v3192 = vlog2.pop %v3038
        %v3193 = vmul.f32 %v3192, 0.6931472
        %v3194 = vlog2.pop %v3041
        %v3195 = vmul.f32 %v3194, 0.6931472
        %v3196 = vlog2.pop %v3044
        %v3197 = vmul.f32 %v3196, 0.6931472
        %v3198 = vlog2.pop %v3047
        %v3199 = vmul.f32 %v3198, 0.6931472
        %v3200 = vlog2.pop %v3050
        %v3201 = vmul.f32 %v3200, 0.6931472
        %v3202 = vlog2.pop %v3053
        %v3203 = vmul.f32 %v3202, 0.6931472
        %v3204 = vlog2.pop %v3056
        %v3205 = vmul.f32 %v3204, 0.6931472
        %v3206 = vlog2.pop %v3059
        %v3207 = vmul.f32 %v3206, 0.6931472
        %v3208 = vlog2.pop %v3062
        %v3209 = vmul.f32 %v3208, 0.6931472
        %v3210 = vlog2.pop %v3065
        %v3211 = vmul.f32 %v3210, 0.6931472
        %v3212 = vlog2.pop %v3068
        %v3213 = vmul.f32 %v3212, 0.6931472
        %v3214 = vlog2.pop %v3071
        %v3215 = vmul.f32 %v3214, 0.6931472
        %v3216 = vlog2.pop %v3074
        %v3217 = vmul.f32 %v3216, 0.6931472
        %v3218 = vlog2.pop %v3077
        %v3219 = vmul.f32 %v3218, 0.6931472
        %v3220 = vlog2.pop %v3080
        %v3221 = vmul.f32 %v3220, 0.6931472
        %v3222 = vlog2.pop %v3083
        %v3223 = vmul.f32 %v3222, 0.6931472
        %v3224 = vlog2.pop %v3086
        %v3225 = vmul.f32 %v3224, 0.6931472
        %v3226 = vlog2.pop %v3089
        %v3227 = vmul.f32 %v3226, 0.6931472
        %v3228 = vlog2.pop %v3092
        %v3229 = vmul.f32 %v3228, 0.6931472
        %v3230 = vlog2.pop %v3095
        %v3231 = vmul.f32 %v3230, 0.6931472
        %v3232 = vlog2.pop %v3098
        %v3233 = vmul.f32 %v3232, 0.6931472
        %v3234 = vlog2.pop %v3101
        %v3235 = vmul.f32 %v3234, 0.6931472
        %v3236 = vlog2.pop %v3104
        %v3237 = vmul.f32 %v3236, 0.6931472
        %v3238 = vlog2.pop %v3107
        %v3239 = vmul.f32 %v3238, 0.6931472
        %v3240 = vlog2.pop %v3110
        %v3241 = vmul.f32 %v3240, 0.6931472
        %v3242 = vlog2.pop %v3113
        %v3243 = vmul.f32 %v3242, 0.6931472
        %v3244 = vlog2.pop %v3116
        %v3245 = vmul.f32 %v3244, 0.6931472
        %v3246 = vlog2.pop %v3119
        %v3247 = vmul.f32 %v3246, 0.6931472
        %v3248 = vlog2.pop %v3122
        %v3249 = vmul.f32 %v3248, 0.6931472
        %v3250 = vlog2.pop %v3125
        %v3251 = vmul.f32 %v3250, 0.6931472
        %v3252 = vlog2.pop %v3128
        %v3253 = vmul.f32 %v3252, 0.6931472
        %v3254 = vlog2.pop %v3131
        %v3255 = vmul.f32 %v3254, 0.6931472
        %v3256 = vlog2.pop %v3134
        %v3257 = vmul.f32 %v3256, 0.6931472
        %v3258 = vlog2.pop %v3137
        %v3259 = vmul.f32 %v3258, 0.6931472
        %v3260 = vlog2.pop %v3140
        %v3261 = vmul.f32 %v3260, 0.6931472
        %v3262 = vlog2.pop %v3143
        %v3263 = vmul.f32 %v3262, 0.6931472
        %v3264 = vlog2.pop %v3146
        %v3265 = vmul.f32 %v3264, 0.6931472
        %v3266 = vlog2.pop %v3149
        %v3267 = vmul.f32 %v3266, 0.6931472
        %v3268 = vlog2.pop %v3152
        %v3269 = vmul.f32 %v3268, 0.6931472
        %v3270 = vlog2.pop %v3155
        %v3271 = vmul.f32 %v3270, 0.6931472
        %v3272 = vlog2.pop %v3158
        %v3273 = vmul.f32 %v3272, 0.6931472
        %v3274 = vlog2.pop %v3161
        %v3275 = vmul.f32 %v3274, 0.6931472
        %v3276 = vlog2.pop %v3164
        %v3277 = vmul.f32 %v3276, 0.6931472
        %v3278 = vlog2.pop %v3167
        %v3279 = vmul.f32 %v3278, 0.6931472
        %v3280 = vlog2.pop %v3170
        %v3281 = vmul.f32 %v3280, 0.6931472
        %v3282 = vlog2.pop %v3173
        %v3283 = vmul.f32 %v3282, 0.6931472
        %v3284 = vlog2.pop %v3176
        %v3285 = vmul.f32 %v3284, 0.6931472
        %v3286 = vlog2.pop %v3179
        %v3287 = vmul.f32 %v3286, 0.6931472
        %v3288 = vlog2.pop %v3182
        %v3289 = vmul.f32 %v3288, 0.6931472
        %v3290 = vlog2.pop %v3185
        %v3291 = vmul.f32 %v3290, 0.6931472
        %v3292 = vlog2.pop %v3188
        %v3293 = vmul.f32 %v3292, 0.6931472
        %v3294 = vlog2.pop %v3191
        %v3295 = vmul.f32 %v3294, 0.6931472
        %v3296 = vsub.f32 %v2880, %v3193
        %v3297 = vsub.f32 %v2881, %v3195
        %v3298 = vsub.f32 %v2882, %v3197
        %v3299 = vsub.f32 %v2883, %v3199
        %v3300 = vsub.f32 %v2884, %v3201
        %v3301 = vsub.f32 %v2885, %v3203
        %v3302 = vsub.f32 %v2886, %v3205
        %v3303 = vsub.f32 %v2887, %v3207
        %v3304 = vsub.f32 %v2888, %v3209
        %v3305 = vsub.f32 %v2889, %v3211
        %v3306 = vsub.f32 %v2890, %v3213
        %v3307 = vsub.f32 %v2891, %v3215
        %v3308 = vsub.f32 %v2892, %v3217
        %v3309 = vsub.f32 %v2893, %v3219
        %v3310 = vsub.f32 %v2894, %v3221
        %v3311 = vsub.f32 %v2895, %v3223
        %v3312 = vsub.f32 %v2896, %v3225
        %v3313 = vsub.f32 %v2897, %v3227
        %v3314 = vsub.f32 %v2898, %v3229
        %v3315 = vsub.f32 %v2899, %v3231
        %v3316 = vsub.f32 %v2900, %v3233
        %v3317 = vsub.f32 %v2901, %v3235
        %v3318 = vsub.f32 %v2902, %v3237
        %v3319 = vsub.f32 %v2903, %v3239
        %v3320 = vsub.f32 %v2904, %v3241
        %v3321 = vsub.f32 %v2905, %v3243
        %v3322 = vsub.f32 %v2906, %v3245
        %v3323 = vsub.f32 %v2907, %v3247
        %v3324 = vsub.f32 %v2908, %v3249
        %v3325 = vsub.f32 %v2909, %v3251
        %v3326 = vsub.f32 %v2910, %v3253
        %v3327 = vsub.f32 %v2911, %v3255
        %v3328 = vsub.f32 %v2912, %v3257
        %v3329 = vsub.f32 %v2913, %v3259
        %v3330 = vsub.f32 %v2914, %v3261
        %v3331 = vsub.f32 %v2915, %v3263
        %v3332 = vsub.f32 %v2916, %v3265
        %v3333 = vsub.f32 %v2917, %v3267
        %v3334 = vsub.f32 %v2918, %v3269
        %v3335 = vsub.f32 %v2919, %v3271
        %v3336 = vsub.f32 %v2920, %v3273
        %v3337 = vsub.f32 %v2921, %v3275
        %v3338 = vsub.f32 %v2922, %v3277
        %v3339 = vsub.f32 %v2923, %v3279
        %v3340 = vsub.f32 %v2924, %v3281
        %v3341 = vsub.f32 %v2925, %v3283
        %v3342 = vsub.f32 %v2926, %v3285
        %v3343 = vsub.f32 %v2927, %v3287
        %v3344 = vsub.f32 %v2928, %v3289
        %v3345 = vsub.f32 %v2929, %v3291
        %v3346 = vsub.f32 %v2930, %v3293
        %v3347 = vsub.f32 %v2931, %v3295
        %v3348 = vrcp.pop %v3038
        %v3349 = vrcp.pop %v3041
        %v3350 = vrcp.pop %v3044
        %v3351 = vrcp.pop %v3047
        %v3352 = vrcp.pop %v3050
        %v3353 = vrcp.pop %v3053
        %v3354 = vrcp.pop %v3056
        %v3355 = vrcp.pop %v3059
        %v3356 = vrcp.pop %v3062
        %v3357 = vrcp.pop %v3065
        %v3358 = vrcp.pop %v3068
        %v3359 = vrcp.pop %v3071
        %v3360 = vrcp.pop %v3074
        %v3361 = vrcp.pop %v3077
        %v3362 = vrcp.pop %v3080
        %v3363 = vrcp.pop %v3083
        %v3364 = vrcp.pop %v3086
        %v3365 = vrcp.pop %v3089
        %v3366 = vrcp.pop %v3092
        %v3367 = vrcp.pop %v3095
        %v3368 = vrcp.pop %v3098
        %v3369 = vrcp.pop %v3101
        %v3370 = vrcp.pop %v3104
        %v3371 = vrcp.pop %v3107
        %v3372 = vrcp.pop %v3110
        %v3373 = vrcp.pop %v3113
        %v3374 = vrcp.pop %v3116
        %v3375 = vrcp.pop %v3119
        %v3376 = vrcp.pop %v3122
        %v3377 = vrcp.pop %v3125
        %v3378 = vrcp.pop %v3128
        %v3379 = vrcp.pop %v3131
        %v3380 = vrcp.pop %v3134
        %v3381 = vrcp.pop %v3137
        %v3382 = vrcp.pop %v3140
        %v3383 = vrcp.pop %v3143
        %v3384 = vrcp.pop %v3146
        %v3385 = vrcp.pop %v3149
        %v3386 = vrcp.pop %v3152
        %v3387 = vrcp.pop %v3155
        %v3388 = vrcp.pop %v3158
        %v3389 = vrcp.pop %v3161
        %v3390 = vrcp.pop %v3164
        %v3391 = vrcp.pop %v3167
        %v3392 = vrcp.pop %v3170
        %v3393 = vrcp.pop %v3173
        %v3394 = vrcp.pop %v3176
        %v3395 = vrcp.pop %v3179
        %v3396 = vrcp.pop %v3182
        %v3397 = vrcp.pop %v3185
        %v3398 = vrcp.pop %v3188
        %v3399 = vrcp.pop %v3191
        %v3400 = vmul.f32 %v2933, %v3348
        %v3401 = vmul.f32 %v2935, %v3349
        %v3402 = vmul.f32 %v2937, %v3350
        %v3403 = vmul.f32 %v2939, %v3351
        %v3404 = vmul.f32 %v2941, %v3352
        %v3405 = vmul.f32 %v2943, %v3353
        %v3406 = vmul.f32 %v2945, %v3354
        %v3407 = vmul.f32 %v2947, %v3355
        %v3408 = vmul.f32 %v2949, %v3356
        %v3409 = vmul.f32 %v2951, %v3357
        %v3410 = vmul.f32 %v2953, %v3358
        %v3411 = vmul.f32 %v2955, %v3359
        %v3412 = vmul.f32 %v2957, %v3360
        %v3413 = vmul.f32 %v2959, %v3361
        %v3414 = vmul.f32 %v2961, %v3362
        %v3415 = vmul.f32 %v2963, %v3363
        %v3416 = vmul.f32 %v2965, %v3364
        %v3417 = vmul.f32 %v2967, %v3365
        %v3418 = vmul.f32 %v2969, %v3366
        %v3419 = vmul.f32 %v2971, %v3367
        %v3420 = vmul.f32 %v2973, %v3368
        %v3421 = vmul.f32 %v2975, %v3369
        %v3422 = vmul.f32 %v2977, %v3370
        %v3423 = vmul.f32 %v2979, %v3371
        %v3424 = vmul.f32 %v2981, %v3372
        %v3425 = vmul.f32 %v2983, %v3373
        %v3426 = vmul.f32 %v2985, %v3374
        %v3427 = vmul.f32 %v2987, %v3375
        %v3428 = vmul.f32 %v2989, %v3376
        %v3429 = vmul.f32 %v2991, %v3377
        %v3430 = vmul.f32 %v2993, %v3378
        %v3431 = vmul.f32 %v2995, %v3379
        %v3432 = vmul.f32 %v2997, %v3380
        %v3433 = vmul.f32 %v2999, %v3381
        %v3434 = vmul.f32 %v3001, %v3382
        %v3435 = vmul.f32 %v3003, %v3383
        %v3436 = vmul.f32 %v3005, %v3384
        %v3437 = vmul.f32 %v3007, %v3385
        %v3438 = vmul.f32 %v3009, %v3386
        %v3439 = vmul.f32 %v3011, %v3387
        %v3440 = vmul.f32 %v3013, %v3388
        %v3441 = vmul.f32 %v3015, %v3389
        %v3442 = vmul.f32 %v3017, %v3390
        %v3443 = vmul.f32 %v3019, %v3391
        %v3444 = vmul.f32 %v3021, %v3392
        %v3445 = vmul.f32 %v3023, %v3393
        %v3446 = vmul.f32 %v3025, %v3394
        %v3447 = vmul.f32 %v3027, %v3395
        %v3448 = vmul.f32 %v3029, %v3396
        %v3449 = vmul.f32 %v3031, %v3397
        %v3450 = vmul.f32 %v3033, %v3398
        %v3451 = vmul.f32 %v3035, %v3399
        %3453 = vset.pattern.permute.xlu0 0
        %3454 = vperm.xlu0 %3453, %v417
        %v3455 = vpop.permute.xlu0 %3454
        %3458 = vset.pattern.permute.xlu0 0
        %3459 = vperm.xlu0 %3458, %v418
        %v3460 = vpop.permute.xlu0 %3459
        %3463 = vset.pattern.permute.xlu0 0
        %3464 = vperm.xlu0 %3463, %v419
        %v3465 = vpop.permute.xlu0 %3464
        %3468 = vset.pattern.permute.xlu0 0
        %3469 = vperm.xlu0 %3468, %v420
        %v3470 = vpop.permute.xlu0 %3469
        %3473 = vset.pattern.permute.xlu0 0
        %3474 = vperm.xlu0 %3473, %v421
        %v3475 = vpop.permute.xlu0 %3474
        %3478 = vset.pattern.permute.xlu0 0
        %3479 = vperm.xlu0 %3478, %v422
        %v3480 = vpop.permute.xlu0 %3479
        %3483 = vset.pattern.permute.xlu0 0
        %3484 = vperm.xlu0 %3483, %v423
        %v3485 = vpop.permute.xlu0 %3484
        %3488 = vset.pattern.permute.xlu0 0
        %3489 = vperm.xlu0 %3488, %v424
        %v3490 = vpop.permute.xlu0 %3489
        %3493 = vset.pattern.permute.xlu0 0
        %3494 = vperm.xlu0 %3493, %v425
        %v3495 = vpop.permute.xlu0 %3494
        %3498 = vset.pattern.permute.xlu0 0
        %3499 = vperm.xlu0 %3498, %v426
        %v3500 = vpop.permute.xlu0 %3499
        %3503 = vset.pattern.permute.xlu0 0
        %3504 = vperm.xlu0 %3503, %v427
        %v3505 = vpop.permute.xlu0 %3504
        %3508 = vset.pattern.permute.xlu0 0
        %3509 = vperm.xlu0 %3508, %v428
        %v3510 = vpop.permute.xlu0 %3509
        %3513 = vset.pattern.permute.xlu0 0
        %3514 = vperm.xlu0 %3513, %v429
        %v3515 = vpop.permute.xlu0 %3514
        %3518 = vset.pattern.permute.xlu0 0
        %3519 = vperm.xlu0 %3518, %v430
        %v3520 = vpop.permute.xlu0 %3519
        %3523 = vset.pattern.permute.xlu0 0
        %3524 = vperm.xlu0 %3523, %v431
        %v3525 = vpop.permute.xlu0 %3524
        %3528 = vset.pattern.permute.xlu0 0
        %3529 = vperm.xlu0 %3528, %v432
        %v3530 = vpop.permute.xlu0 %3529
        %3533 = vset.pattern.permute.xlu0 0
        %3534 = vperm.xlu0 %3533, %v433
        %v3535 = vpop.permute.xlu0 %3534
        %3538 = vset.pattern.permute.xlu0 0
        %3539 = vperm.xlu0 %3538, %v434
        %v3540 = vpop.permute.xlu0 %3539
        %3543 = vset.pattern.permute.xlu0 0
        %3544 = vperm.xlu0 %3543, %v435
        %v3545 = vpop.permute.xlu0 %3544
        %3548 = vset.pattern.permute.xlu0 0
        %3549 = vperm.xlu0 %3548, %v436
        %v3550 = vpop.permute.xlu0 %3549
        %3553 = vset.pattern.permute.xlu0 0
        %3554 = vperm.xlu0 %3553, %v437
        %v3555 = vpop.permute.xlu0 %3554
        %3558 = vset.pattern.permute.xlu0 0
        %3559 = vperm.xlu0 %3558, %v438
        %v3560 = vpop.permute.xlu0 %3559
        %3563 = vset.pattern.permute.xlu0 0
        %3564 = vperm.xlu0 %3563, %v439
        %v3565 = vpop.permute.xlu0 %3564
        %3568 = vset.pattern.permute.xlu0 0
        %3569 = vperm.xlu0 %3568, %v440
        %v3570 = vpop.permute.xlu0 %3569
        %3573 = vset.pattern.permute.xlu0 0
        %3574 = vperm.xlu0 %3573, %v441
        %v3575 = vpop.permute.xlu0 %3574
        %3578 = vset.pattern.permute.xlu0 0
        %3579 = vperm.xlu0 %3578, %v442
        %v3580 = vpop.permute.xlu0 %3579
        %3583 = vset.pattern.permute.xlu0 0
        %3584 = vperm.xlu0 %3583, %v443
        %v3585 = vpop.permute.xlu0 %3584
        %3588 = vset.pattern.permute.xlu0 0
        %3589 = vperm.xlu0 %3588, %v444
        %v3590 = vpop.permute.xlu0 %3589
        %3593 = vset.pattern.permute.xlu0 0
        %3594 = vperm.xlu0 %3593, %v445
        %v3595 = vpop.permute.xlu0 %3594
        %3598 = vset.pattern.permute.xlu0 0
        %3599 = vperm.xlu0 %3598, %v446
        %v3600 = vpop.permute.xlu0 %3599
        %3603 = vset.pattern.permute.xlu0 0
        %3604 = vperm.xlu0 %3603, %v447
        %v3605 = vpop.permute.xlu0 %3604
        %3608 = vset.pattern.permute.xlu0 0
        %3609 = vperm.xlu0 %3608, %v448
        %v3610 = vpop.permute.xlu0 %3609
        %3613 = vset.pattern.permute.xlu0 0
        %3614 = vperm.xlu0 %3613, %v449
        %v3615 = vpop.permute.xlu0 %3614
        %3618 = vset.pattern.permute.xlu0 0
        %3619 = vperm.xlu0 %3618, %v450
        %v3620 = vpop.permute.xlu0 %3619
        %3623 = vset.pattern.permute.xlu0 0
        %3624 = vperm.xlu0 %3623, %v451
        %v3625 = vpop.permute.xlu0 %3624
        %3628 = vset.pattern.permute.xlu0 0
        %3629 = vperm.xlu0 %3628, %v452
        %v3630 = vpop.permute.xlu0 %3629
        %3633 = vset.pattern.permute.xlu0 0
        %3634 = vperm.xlu0 %3633, %v453
        %v3635 = vpop.permute.xlu0 %3634
        %3638 = vset.pattern.permute.xlu0 0
        %3639 = vperm.xlu0 %3638, %v454
        %v3640 = vpop.permute.xlu0 %3639
        %3643 = vset.pattern.permute.xlu0 0
        %3644 = vperm.xlu0 %3643, %v455
        %v3645 = vpop.permute.xlu0 %3644
        %3648 = vset.pattern.permute.xlu0 0
        %3649 = vperm.xlu0 %3648, %v456
        %v3650 = vpop.permute.xlu0 %3649
        %3653 = vset.pattern.permute.xlu0 0
        %3654 = vperm.xlu0 %3653, %v457
        %v3655 = vpop.permute.xlu0 %3654
        %3658 = vset.pattern.permute.xlu0 0
        %3659 = vperm.xlu0 %3658, %v458
        %v3660 = vpop.permute.xlu0 %3659
        %3663 = vset.pattern.permute.xlu0 0
        %3664 = vperm.xlu0 %3663, %v459
        %v3665 = vpop.permute.xlu0 %3664
        %3668 = vset.pattern.permute.xlu0 0
        %3669 = vperm.xlu0 %3668, %v460
        %v3670 = vpop.permute.xlu0 %3669
        %3673 = vset.pattern.permute.xlu0 0
        %3674 = vperm.xlu0 %3673, %v461
        %v3675 = vpop.permute.xlu0 %3674
        %3678 = vset.pattern.permute.xlu0 0
        %3679 = vperm.xlu0 %3678, %v462
        %v3680 = vpop.permute.xlu0 %3679
        %3683 = vset.pattern.permute.xlu0 0
        %3684 = vperm.xlu0 %3683, %v463
        %v3685 = vpop.permute.xlu0 %3684
        %3688 = vset.pattern.permute.xlu0 0
        %3689 = vperm.xlu0 %3688, %v464
        %v3690 = vpop.permute.xlu0 %3689
        %3693 = vset.pattern.permute.xlu0 0
        %3694 = vperm.xlu0 %3693, %v465
        %v3695 = vpop.permute.xlu0 %3694
        %3698 = vset.pattern.permute.xlu0 0
        %3699 = vperm.xlu0 %3698, %v466
        %v3700 = vpop.permute.xlu0 %3699
        %3703 = vset.pattern.permute.xlu0 0
        %3704 = vperm.xlu0 %3703, %v467
        %v3705 = vpop.permute.xlu0 %3704
        %3708 = vset.pattern.permute.xlu0 0
        %3709 = vperm.xlu0 %3708, %v468
        %v3710 = vpop.permute.xlu0 %3709
        %v3712 = vmul.f32 %v3455, %v718
        %v3713 = vmul.f32 %v3460, %v718
        %v3714 = vmul.f32 %v3465, %v718
        %v3715 = vmul.f32 %v3470, %v718
        %v3716 = vmul.f32 %v3475, %v718
        %v3717 = vmul.f32 %v3480, %v718
        %v3718 = vmul.f32 %v3485, %v718
        %v3719 = vmul.f32 %v3490, %v718
        %v3720 = vmul.f32 %v3495, %v718
        %v3721 = vmul.f32 %v3500, %v718
        %v3722 = vmul.f32 %v3505, %v718
        %v3723 = vmul.f32 %v3510, %v718
        %v3724 = vmul.f32 %v3515, %v718
        %v3725 = vmul.f32 %v3520, %v722
        %v3726 = vmul.f32 %v3525, %v722
        %v3727 = vmul.f32 %v3530, %v722
        %v3728 = vmul.f32 %v3535, %v722
        %v3729 = vmul.f32 %v3540, %v722
        %v3730 = vmul.f32 %v3545, %v722
        %v3731 = vmul.f32 %v3550, %v722
        %v3732 = vmul.f32 %v3555, %v722
        %v3733 = vmul.f32 %v3560, %v722
        %v3734 = vmul.f32 %v3565, %v722
        %v3735 = vmul.f32 %v3570, %v722
        %v3736 = vmul.f32 %v3575, %v722
        %v3737 = vmul.f32 %v3580, %v722
        %v3738 = vmul.f32 %v3585, %v726
        %v3739 = vmul.f32 %v3590, %v726
        %v3740 = vmul.f32 %v3595, %v726
        %v3741 = vmul.f32 %v3600, %v726
        %v3742 = vmul.f32 %v3605, %v726
        %v3743 = vmul.f32 %v3610, %v726
        %v3744 = vmul.f32 %v3615, %v726
        %v3745 = vmul.f32 %v3620, %v726
        %v3746 = vmul.f32 %v3625, %v726
        %v3747 = vmul.f32 %v3630, %v726
        %v3748 = vmul.f32 %v3635, %v726
        %v3749 = vmul.f32 %v3640, %v726
        %v3750 = vmul.f32 %v3645, %v726
        %v3751 = vmul.f32 %v3650, %v730
        %v3752 = vmul.f32 %v3655, %v730
        %v3753 = vmul.f32 %v3660, %v730
        %v3754 = vmul.f32 %v3665, %v730
        %v3755 = vmul.f32 %v3670, %v730
        %v3756 = vmul.f32 %v3675, %v730
        %v3757 = vmul.f32 %v3680, %v730
        %v3758 = vmul.f32 %v3685, %v730
        %v3759 = vmul.f32 %v3690, %v730
        %v3760 = vmul.f32 %v3695, %v730
        %v3761 = vmul.f32 %v3700, %v730
        %v3762 = vmul.f32 %v3705, %v730
        %v3763 = vmul.f32 %v3710, %v730
        %v3764 = vmul.f32 %v3712, %v313
        %v3765 = vmul.f32 %v3713, %v314
        %v3766 = vmul.f32 %v3714, %v315
        %v3767 = vmul.f32 %v3715, %v316
        %v3768 = vmul.f32 %v3716, %v317
        %v3769 = vmul.f32 %v3717, %v318
        %v3770 = vmul.f32 %v3718, %v319
        %v3771 = vmul.f32 %v3719, %v320
        %v3772 = vmul.f32 %v3720, %v321
        %v3773 = vmul.f32 %v3721, %v322
        %v3774 = vmul.f32 %v3722, %v323
        %v3775 = vmul.f32 %v3723, %v324
        %v3776 = vmul.f32 %v3724, %v325
        %v3777 = vmul.f32 %v3725, %v326
        %v3778 = vmul.f32 %v3726, %v327
        %v3779 = vmul.f32 %v3727, %v328
        %v3780 = vmul.f32 %v3728, %v329
        %v3781 = vmul.f32 %v3729, %v330
        %v3782 = vmul.f32 %v3730, %v331
        %v3783 = vmul.f32 %v3731, %v332
        %v3784 = vmul.f32 %v3732, %v333
        %v3785 = vmul.f32 %v3733, %v334
        %v3786 = vmul.f32 %v3734, %v335
        %v3787 = vmul.f32 %v3735, %v336
        %v3788 = vmul.f32 %v3736, %v337
        %v3789 = vmul.f32 %v3737, %v338
        %v3790 = vmul.f32 %v3738, %v339
        %v3791 = vmul.f32 %v3739, %v340
        %v3792 = vmul.f32 %v3740, %v341
        %v3793 = vmul.f32 %v3741, %v342
        %v3794 = vmul.f32 %v3742, %v343
        %v3795 = vmul.f32 %v3743, %v344
        %v3796 = vmul.f32 %v3744, %v345
        %v3797 = vmul.f32 %v3745, %v346
        %v3798 = vmul.f32 %v3746, %v347
        %v3799 = vmul.f32 %v3747, %v348
        %v3800 = vmul.f32 %v3748, %v349
        %v3801 = vmul.f32 %v3749, %v350
        %v3802 = vmul.f32 %v3750, %v351
        %v3803 = vmul.f32 %v3751, %v352
        %v3804 = vmul.f32 %v3752, %v353
        %v3805 = vmul.f32 %v3753, %v354
        %v3806 = vmul.f32 %v3754, %v355
        %v3807 = vmul.f32 %v3755, %v356
        %v3808 = vmul.f32 %v3756, %v357
        %v3809 = vmul.f32 %v3757, %v358
        %v3810 = vmul.f32 %v3758, %v359
        %v3811 = vmul.f32 %v3759, %v360
        %v3812 = vmul.f32 %v3760, %v361
        %v3813 = vmul.f32 %v3761, %v362
        %v3814 = vmul.f32 %v3762, %v363
        %v3815 = vmul.f32 %v3763, %v364
        %v3816 = vsel %vm841, %v3764, -inf
        %v3817 = vsel %vm841, %v3765, -inf
        %v3818 = vmax.f32 %v3816, %v3817
        %v3819 = vsel %vm841, %v3766, -inf
        %v3820 = vmax.f32 %v3818, %v3819
        %v3821 = vsel %vm841, %v3767, -inf
        %v3822 = vmax.f32 %v3820, %v3821
        %v3823 = vsel %vm841, %v3768, -inf
        %v3824 = vmax.f32 %v3822, %v3823
        %v3825 = vsel %vm841, %v3769, -inf
        %v3826 = vmax.f32 %v3824, %v3825
        %v3827 = vsel %vm841, %v3770, -inf
        %v3828 = vmax.f32 %v3826, %v3827
        %v3829 = vsel %vm841, %v3771, -inf
        %v3830 = vmax.f32 %v3828, %v3829
        %v3831 = vsel %vm841, %v3772, -inf
        %v3832 = vmax.f32 %v3830, %v3831
        %v3833 = vsel %vm841, %v3773, -inf
        %v3834 = vmax.f32 %v3832, %v3833
        %v3835 = vsel %vm841, %v3774, -inf
        %v3836 = vmax.f32 %v3834, %v3835
        %v3837 = vsel %vm841, %v3775, -inf
        %v3838 = vmax.f32 %v3836, %v3837
        %v3839 = vsel %vm2759, %v3776, -inf
        %v3840 = vmax.f32 %v3838, %v3839
        %v3841 = vrot.slane %v3840, 4
        %v3842 = vmax.f32 %v3840, %v3841
        %v3843 = vrot.slane %v3842, 2
        %v3844 = vmax.f32 %v3842, %v3843
        %v3845 = vrot.slane %v3844, 1
        %v3846 = vmax.f32 %v3844, %v3845
        %v3847 = vsel %vm841, %v3777, -inf
        %v3848 = vsel %vm841, %v3778, -inf
        %v3849 = vmax.f32 %v3847, %v3848
        %v3850 = vsel %vm841, %v3779, -inf
        %v3851 = vmax.f32 %v3849, %v3850
        %v3852 = vsel %vm841, %v3780, -inf
        %v3853 = vmax.f32 %v3851, %v3852
        %v3854 = vsel %vm841, %v3781, -inf
        %v3855 = vmax.f32 %v3853, %v3854
        %v3856 = vsel %vm841, %v3782, -inf
        %v3857 = vmax.f32 %v3855, %v3856
        %v3858 = vsel %vm841, %v3783, -inf
        %v3859 = vmax.f32 %v3857, %v3858
        %v3860 = vsel %vm841, %v3784, -inf
        %v3861 = vmax.f32 %v3859, %v3860
        %v3862 = vsel %vm841, %v3785, -inf
        %v3863 = vmax.f32 %v3861, %v3862
        %v3864 = vsel %vm841, %v3786, -inf
        %v3865 = vmax.f32 %v3863, %v3864
        %v3866 = vsel %vm841, %v3787, -inf
        %v3867 = vmax.f32 %v3865, %v3866
        %v3868 = vsel %vm841, %v3788, -inf
        %v3869 = vmax.f32 %v3867, %v3868
        %v3870 = vsel %vm2759, %v3789, -inf
        %v3871 = vmax.f32 %v3869, %v3870
        %v3872 = vrot.slane %v3871, 4
        %v3873 = vmax.f32 %v3871, %v3872
        %v3874 = vrot.slane %v3873, 2
        %v3875 = vmax.f32 %v3873, %v3874
        %v3876 = vrot.slane %v3875, 1
        %v3877 = vmax.f32 %v3875, %v3876
        %v3878 = vsel %vm841, %v3790, -inf
        %v3879 = vsel %vm841, %v3791, -inf
        %v3880 = vmax.f32 %v3878, %v3879
        %v3881 = vsel %vm841, %v3792, -inf
        %v3882 = vmax.f32 %v3880, %v3881
        %v3883 = vsel %vm841, %v3793, -inf
        %v3884 = vmax.f32 %v3882, %v3883
        %v3885 = vsel %vm841, %v3794, -inf
        %v3886 = vmax.f32 %v3884, %v3885
        %v3887 = vsel %vm841, %v3795, -inf
        %v3888 = vmax.f32 %v3886, %v3887
        %v3889 = vsel %vm841, %v3796, -inf
        %v3890 = vmax.f32 %v3888, %v3889
        %v3891 = vsel %vm841, %v3797, -inf
        %v3892 = vmax.f32 %v3890, %v3891
        %v3893 = vsel %vm841, %v3798, -inf
        %v3894 = vmax.f32 %v3892, %v3893
        %v3895 = vsel %vm841, %v3799, -inf
        %v3896 = vmax.f32 %v3894, %v3895
        %v3897 = vsel %vm841, %v3800, -inf
        %v3898 = vmax.f32 %v3896, %v3897
        %v3899 = vsel %vm841, %v3801, -inf
        %v3900 = vmax.f32 %v3898, %v3899
        %v3901 = vsel %vm2759, %v3802, -inf
        %v3902 = vmax.f32 %v3900, %v3901
        %v3903 = vrot.slane %v3902, 4
        %v3904 = vmax.f32 %v3902, %v3903
        %v3905 = vrot.slane %v3904, 2
        %v3906 = vmax.f32 %v3904, %v3905
        %v3907 = vrot.slane %v3906, 1
        %v3908 = vmax.f32 %v3906, %v3907
        %v3909 = vsel %vm841, %v3803, -inf
        %v3910 = vsel %vm841, %v3804, -inf
        %v3911 = vmax.f32 %v3909, %v3910
        %v3912 = vsel %vm841, %v3805, -inf
        %v3913 = vmax.f32 %v3911, %v3912
        %v3914 = vsel %vm841, %v3806, -inf
        %v3915 = vmax.f32 %v3913, %v3914
        %v3916 = vsel %vm841, %v3807, -inf
        %v3917 = vmax.f32 %v3915, %v3916
        %v3918 = vsel %vm841, %v3808, -inf
        %v3919 = vmax.f32 %v3917, %v3918
        %v3920 = vsel %vm841, %v3809, -inf
        %v3921 = vmax.f32 %v3919, %v3920
        %v3922 = vsel %vm841, %v3810, -inf
        %v3923 = vmax.f32 %v3921, %v3922
        %v3924 = vsel %vm841, %v3811, -inf
        %v3925 = vmax.f32 %v3923, %v3924
        %v3926 = vsel %vm841, %v3812, -inf
        %v3927 = vmax.f32 %v3925, %v3926
        %v3928 = vsel %vm841, %v3813, -inf
        %v3929 = vmax.f32 %v3927, %v3928
        %v3930 = vsel %vm841, %v3814, -inf
        %v3931 = vmax.f32 %v3929, %v3930
        %v3932 = vsel %vm2759, %v3815, -inf
        %v3933 = vmax.f32 %v3931, %v3932
        %v3934 = vrot.slane %v3933, 4
        %v3935 = vmax.f32 %v3933, %v3934
        %v3936 = vrot.slane %v3935, 2
        %v3937 = vmax.f32 %v3935, %v3936
        %v3938 = vrot.slane %v3937, 1
        %v3939 = vmax.f32 %v3937, %v3938
        %v3940 = vsub.f32 %v3764, %v3846
        %v3941 = vsub.f32 %v3765, %v3846
        %v3942 = vsub.f32 %v3766, %v3846
        %v3943 = vsub.f32 %v3767, %v3846
        %v3944 = vsub.f32 %v3768, %v3846
        %v3945 = vsub.f32 %v3769, %v3846
        %v3946 = vsub.f32 %v3770, %v3846
        %v3947 = vsub.f32 %v3771, %v3846
        %v3948 = vsub.f32 %v3772, %v3846
        %v3949 = vsub.f32 %v3773, %v3846
        %v3950 = vsub.f32 %v3774, %v3846
        %v3951 = vsub.f32 %v3775, %v3846
        %v3952 = vsub.f32 %v3776, %v3846
        %v3953 = vsub.f32 %v3777, %v3877
        %v3954 = vsub.f32 %v3778, %v3877
        %v3955 = vsub.f32 %v3779, %v3877
        %v3956 = vsub.f32 %v3780, %v3877
        %v3957 = vsub.f32 %v3781, %v3877
        %v3958 = vsub.f32 %v3782, %v3877
        %v3959 = vsub.f32 %v3783, %v3877
        %v3960 = vsub.f32 %v3784, %v3877
        %v3961 = vsub.f32 %v3785, %v3877
        %v3962 = vsub.f32 %v3786, %v3877
        %v3963 = vsub.f32 %v3787, %v3877
        %v3964 = vsub.f32 %v3788, %v3877
        %v3965 = vsub.f32 %v3789, %v3877
        %v3966 = vsub.f32 %v3790, %v3908
        %v3967 = vsub.f32 %v3791, %v3908
        %v3968 = vsub.f32 %v3792, %v3908
        %v3969 = vsub.f32 %v3793, %v3908
        %v3970 = vsub.f32 %v3794, %v3908
        %v3971 = vsub.f32 %v3795, %v3908
        %v3972 = vsub.f32 %v3796, %v3908
        %v3973 = vsub.f32 %v3797, %v3908
        %v3974 = vsub.f32 %v3798, %v3908
        %v3975 = vsub.f32 %v3799, %v3908
        %v3976 = vsub.f32 %v3800, %v3908
        %v3977 = vsub.f32 %v3801, %v3908
        %v3978 = vsub.f32 %v3802, %v3908
        %v3979 = vsub.f32 %v3803, %v3939
        %v3980 = vsub.f32 %v3804, %v3939
        %v3981 = vsub.f32 %v3805, %v3939
        %v3982 = vsub.f32 %v3806, %v3939
        %v3983 = vsub.f32 %v3807, %v3939
        %v3984 = vsub.f32 %v3808, %v3939
        %v3985 = vsub.f32 %v3809, %v3939
        %v3986 = vsub.f32 %v3810, %v3939
        %v3987 = vsub.f32 %v3811, %v3939
        %v3988 = vsub.f32 %v3812, %v3939
        %v3989 = vsub.f32 %v3813, %v3939
        %v3990 = vsub.f32 %v3814, %v3939
        %v3991 = vsub.f32 %v3815, %v3939
        %v3992 = vmul.f32 %v3940, 1.442695
        %v3993 = vpow.pop %v3992
        %v3994 = vmul.f32 %v3941, 1.442695
        %v3995 = vpow.pop %v3994
        %v3996 = vmul.f32 %v3942, 1.442695
        %v3997 = vpow.pop %v3996
        %v3998 = vmul.f32 %v3943, 1.442695
        %v3999 = vpow.pop %v3998
        %v4000 = vmul.f32 %v3944, 1.442695
        %v4001 = vpow.pop %v4000
        %v4002 = vmul.f32 %v3945, 1.442695
        %v4003 = vpow.pop %v4002
        %v4004 = vmul.f32 %v3946, 1.442695
        %v4005 = vpow.pop %v4004
        %v4006 = vmul.f32 %v3947, 1.442695
        %v4007 = vpow.pop %v4006
        %v4008 = vmul.f32 %v3948, 1.442695
        %v4009 = vpow.pop %v4008
        %v4010 = vmul.f32 %v3949, 1.442695
        %v4011 = vpow.pop %v4010
        %v4012 = vmul.f32 %v3950, 1.442695
        %v4013 = vpow.pop %v4012
        %v4014 = vmul.f32 %v3951, 1.442695
        %v4015 = vpow.pop %v4014
        %v4016 = vmul.f32 %v3952, 1.442695
        %v4017 = vpow.pop %v4016
        %v4018 = vmul.f32 %v3953, 1.442695
        %v4019 = vpow.pop %v4018
        %v4020 = vmul.f32 %v3954, 1.442695
        %v4021 = vpow.pop %v4020
        %v4022 = vmul.f32 %v3955, 1.442695
        %v4023 = vpow.pop %v4022
        %v4024 = vmul.f32 %v3956, 1.442695
        %v4025 = vpow.pop %v4024
        %v4026 = vmul.f32 %v3957, 1.442695
        %v4027 = vpow.pop %v4026
        %v4028 = vmul.f32 %v3958, 1.442695
        %v4029 = vpow.pop %v4028
        %v4030 = vmul.f32 %v3959, 1.442695
        %v4031 = vpow.pop %v4030
        %v4032 = vmul.f32 %v3960, 1.442695
        %v4033 = vpow.pop %v4032
        %v4034 = vmul.f32 %v3961, 1.442695
        %v4035 = vpow.pop %v4034
        %v4036 = vmul.f32 %v3962, 1.442695
        %v4037 = vpow.pop %v4036
        %v4038 = vmul.f32 %v3963, 1.442695
        %v4039 = vpow.pop %v4038
        %v4040 = vmul.f32 %v3964, 1.442695
        %v4041 = vpow.pop %v4040
        %v4042 = vmul.f32 %v3965, 1.442695
        %v4043 = vpow.pop %v4042
        %v4044 = vmul.f32 %v3966, 1.442695
        %v4045 = vpow.pop %v4044
        %v4046 = vmul.f32 %v3967, 1.442695
        %v4047 = vpow.pop %v4046
        %v4048 = vmul.f32 %v3968, 1.442695
        %v4049 = vpow.pop %v4048
        %v4050 = vmul.f32 %v3969, 1.442695
        %v4051 = vpow.pop %v4050
        %v4052 = vmul.f32 %v3970, 1.442695
        %v4053 = vpow.pop %v4052
        %v4054 = vmul.f32 %v3971, 1.442695
        %v4055 = vpow.pop %v4054
        %v4056 = vmul.f32 %v3972, 1.442695
        %v4057 = vpow.pop %v4056
        %v4058 = vmul.f32 %v3973, 1.442695
        %v4059 = vpow.pop %v4058
        %v4060 = vmul.f32 %v3974, 1.442695
        %v4061 = vpow.pop %v4060
        %v4062 = vmul.f32 %v3975, 1.442695
        %v4063 = vpow.pop %v4062
        %v4064 = vmul.f32 %v3976, 1.442695
        %v4065 = vpow.pop %v4064
        %v4066 = vmul.f32 %v3977, 1.442695
        %v4067 = vpow.pop %v4066
        %v4068 = vmul.f32 %v3978, 1.442695
        %v4069 = vpow.pop %v4068
        %v4070 = vmul.f32 %v3979, 1.442695
        %v4071 = vpow.pop %v4070
        %v4072 = vmul.f32 %v3980, 1.442695
        %v4073 = vpow.pop %v4072
        %v4074 = vmul.f32 %v3981, 1.442695
        %v4075 = vpow.pop %v4074
        %v4076 = vmul.f32 %v3982, 1.442695
        %v4077 = vpow.pop %v4076
        %v4078 = vmul.f32 %v3983, 1.442695
        %v4079 = vpow.pop %v4078
        %v4080 = vmul.f32 %v3984, 1.442695
        %v4081 = vpow.pop %v4080
        %v4082 = vmul.f32 %v3985, 1.442695
        %v4083 = vpow.pop %v4082
        %v4084 = vmul.f32 %v3986, 1.442695
        %v4085 = vpow.pop %v4084
        %v4086 = vmul.f32 %v3987, 1.442695
        %v4087 = vpow.pop %v4086
        %v4088 = vmul.f32 %v3988, 1.442695
        %v4089 = vpow.pop %v4088
        %v4090 = vmul.f32 %v3989, 1.442695
        %v4091 = vpow.pop %v4090
        %v4092 = vmul.f32 %v3990, 1.442695
        %v4093 = vpow.pop %v4092
        %v4094 = vmul.f32 %v3991, 1.442695
        %v4095 = vpow.pop %v4094
        %v4096 = vsel %vm841, %v3993, 0.0
        %v4097 = vsel %vm841, %v3995, 0.0
        %v4098 = vadd.f32 %v4096, %v4097
        %v4099 = vsel %vm841, %v3997, 0.0
        %v4100 = vadd.f32 %v4098, %v4099
        %v4101 = vsel %vm841, %v3999, 0.0
        %v4102 = vadd.f32 %v4100, %v4101
        %v4103 = vsel %vm841, %v4001, 0.0
        %v4104 = vadd.f32 %v4102, %v4103
        %v4105 = vsel %vm841, %v4003, 0.0
        %v4106 = vadd.f32 %v4104, %v4105
        %v4107 = vsel %vm841, %v4005, 0.0
        %v4108 = vadd.f32 %v4106, %v4107
        %v4109 = vsel %vm841, %v4007, 0.0
        %v4110 = vadd.f32 %v4108, %v4109
        %v4111 = vsel %vm841, %v4009, 0.0
        %v4112 = vadd.f32 %v4110, %v4111
        %v4113 = vsel %vm841, %v4011, 0.0
        %v4114 = vadd.f32 %v4112, %v4113
        %v4115 = vsel %vm841, %v4013, 0.0
        %v4116 = vadd.f32 %v4114, %v4115
        %v4117 = vsel %vm841, %v4015, 0.0
        %v4118 = vadd.f32 %v4116, %v4117
        %v4119 = vsel %vm2759, %v4017, 0.0
        %v4120 = vadd.f32 %v4118, %v4119
        %v4121 = vrot.slane %v4120, 4
        %v4122 = vadd.f32 %v4120, %v4121
        %v4123 = vrot.slane %v4122, 2
        %v4124 = vadd.f32 %v4122, %v4123
        %v4125 = vrot.slane %v4124, 1
        %v4126 = vadd.f32 %v4124, %v4125
        %v4127 = vsel %vm841, %v4019, 0.0
        %v4128 = vsel %vm841, %v4021, 0.0
        %v4129 = vadd.f32 %v4127, %v4128
        %v4130 = vsel %vm841, %v4023, 0.0
        %v4131 = vadd.f32 %v4129, %v4130
        %v4132 = vsel %vm841, %v4025, 0.0
        %v4133 = vadd.f32 %v4131, %v4132
        %v4134 = vsel %vm841, %v4027, 0.0
        %v4135 = vadd.f32 %v4133, %v4134
        %v4136 = vsel %vm841, %v4029, 0.0
        %v4137 = vadd.f32 %v4135, %v4136
        %v4138 = vsel %vm841, %v4031, 0.0
        %v4139 = vadd.f32 %v4137, %v4138
        %v4140 = vsel %vm841, %v4033, 0.0
        %v4141 = vadd.f32 %v4139, %v4140
        %v4142 = vsel %vm841, %v4035, 0.0
        %v4143 = vadd.f32 %v4141, %v4142
        %v4144 = vsel %vm841, %v4037, 0.0
        %v4145 = vadd.f32 %v4143, %v4144
        %v4146 = vsel %vm841, %v4039, 0.0
        %v4147 = vadd.f32 %v4145, %v4146
        %v4148 = vsel %vm841, %v4041, 0.0
        %v4149 = vadd.f32 %v4147, %v4148
        %v4150 = vsel %vm2759, %v4043, 0.0
        %v4151 = vadd.f32 %v4149, %v4150
        %v4152 = vrot.slane %v4151, 4
        %v4153 = vadd.f32 %v4151, %v4152
        %v4154 = vrot.slane %v4153, 2
        %v4155 = vadd.f32 %v4153, %v4154
        %v4156 = vrot.slane %v4155, 1
        %v4157 = vadd.f32 %v4155, %v4156
        %v4158 = vsel %vm841, %v4045, 0.0
        %v4159 = vsel %vm841, %v4047, 0.0
        %v4160 = vadd.f32 %v4158, %v4159
        %v4161 = vsel %vm841, %v4049, 0.0
        %v4162 = vadd.f32 %v4160, %v4161
        %v4163 = vsel %vm841, %v4051, 0.0
        %v4164 = vadd.f32 %v4162, %v4163
        %v4165 = vsel %vm841, %v4053, 0.0
        %v4166 = vadd.f32 %v4164, %v4165
        %v4167 = vsel %vm841, %v4055, 0.0
        %v4168 = vadd.f32 %v4166, %v4167
        %v4169 = vsel %vm841, %v4057, 0.0
        %v4170 = vadd.f32 %v4168, %v4169
        %v4171 = vsel %vm841, %v4059, 0.0
        %v4172 = vadd.f32 %v4170, %v4171
        %v4173 = vsel %vm841, %v4061, 0.0
        %v4174 = vadd.f32 %v4172, %v4173
        %v4175 = vsel %vm841, %v4063, 0.0
        %v4176 = vadd.f32 %v4174, %v4175
        %v4177 = vsel %vm841, %v4065, 0.0
        %v4178 = vadd.f32 %v4176, %v4177
        %v4179 = vsel %vm841, %v4067, 0.0
        %v4180 = vadd.f32 %v4178, %v4179
        %v4181 = vsel %vm2759, %v4069, 0.0
        %v4182 = vadd.f32 %v4180, %v4181
        %v4183 = vrot.slane %v4182, 4
        %v4184 = vadd.f32 %v4182, %v4183
        %v4185 = vrot.slane %v4184, 2
        %v4186 = vadd.f32 %v4184, %v4185
        %v4187 = vrot.slane %v4186, 1
        %v4188 = vadd.f32 %v4186, %v4187
        %v4189 = vsel %vm841, %v4071, 0.0
        %v4190 = vsel %vm841, %v4073, 0.0
        %v4191 = vadd.f32 %v4189, %v4190
        %v4192 = vsel %vm841, %v4075, 0.0
        %v4193 = vadd.f32 %v4191, %v4192
        %v4194 = vsel %vm841, %v4077, 0.0
        %v4195 = vadd.f32 %v4193, %v4194
        %v4196 = vsel %vm841, %v4079, 0.0
        %v4197 = vadd.f32 %v4195, %v4196
        %v4198 = vsel %vm841, %v4081, 0.0
        %v4199 = vadd.f32 %v4197, %v4198
        %v4200 = vsel %vm841, %v4083, 0.0
        %v4201 = vadd.f32 %v4199, %v4200
        %v4202 = vsel %vm841, %v4085, 0.0
        %v4203 = vadd.f32 %v4201, %v4202
        %v4204 = vsel %vm841, %v4087, 0.0
        %v4205 = vadd.f32 %v4203, %v4204
        %v4206 = vsel %vm841, %v4089, 0.0
        %v4207 = vadd.f32 %v4205, %v4206
        %v4208 = vsel %vm841, %v4091, 0.0
        %v4209 = vadd.f32 %v4207, %v4208
        %v4210 = vsel %vm841, %v4093, 0.0
        %v4211 = vadd.f32 %v4209, %v4210
        %v4212 = vsel %vm2759, %v4095, 0.0
        %v4213 = vadd.f32 %v4211, %v4212
        %v4214 = vrot.slane %v4213, 4
        %v4215 = vadd.f32 %v4213, %v4214
        %v4216 = vrot.slane %v4215, 2
        %v4217 = vadd.f32 %v4215, %v4216
        %v4218 = vrot.slane %v4217, 1
        %v4219 = vadd.f32 %v4217, %v4218
        %v4220 = vlog2.pop %v4126
        %v4221 = vmul.f32 %v4220, 0.6931472
        %v4222 = vlog2.pop %v4157
        %v4223 = vmul.f32 %v4222, 0.6931472
        %v4224 = vlog2.pop %v4188
        %v4225 = vmul.f32 %v4224, 0.6931472
        %v4226 = vlog2.pop %v4219
        %v4227 = vmul.f32 %v4226, 0.6931472
        %v4228 = vsub.f32 %v3940, %v4221
        %v4229 = vsub.f32 %v3941, %v4221
        %v4230 = vsub.f32 %v3942, %v4221
        %v4231 = vsub.f32 %v3943, %v4221
        %v4232 = vsub.f32 %v3944, %v4221
        %v4233 = vsub.f32 %v3945, %v4221
        %v4234 = vsub.f32 %v3946, %v4221
        %v4235 = vsub.f32 %v3947, %v4221
        %v4236 = vsub.f32 %v3948, %v4221
        %v4237 = vsub.f32 %v3949, %v4221
        %v4238 = vsub.f32 %v3950, %v4221
        %v4239 = vsub.f32 %v3951, %v4221
        %v4240 = vsub.f32 %v3952, %v4221
        %v4241 = vsub.f32 %v3953, %v4223
        %v4242 = vsub.f32 %v3954, %v4223
        %v4243 = vsub.f32 %v3955, %v4223
        %v4244 = vsub.f32 %v3956, %v4223
        %v4245 = vsub.f32 %v3957, %v4223
        %v4246 = vsub.f32 %v3958, %v4223
        %v4247 = vsub.f32 %v3959, %v4223
        %v4248 = vsub.f32 %v3960, %v4223
        %v4249 = vsub.f32 %v3961, %v4223
        %v4250 = vsub.f32 %v3962, %v4223
        %v4251 = vsub.f32 %v3963, %v4223
        %v4252 = vsub.f32 %v3964, %v4223
        %v4253 = vsub.f32 %v3965, %v4223
        %v4254 = vsub.f32 %v3966, %v4225
        %v4255 = vsub.f32 %v3967, %v4225
        %v4256 = vsub.f32 %v3968, %v4225
        %v4257 = vsub.f32 %v3969, %v4225
        %v4258 = vsub.f32 %v3970, %v4225
        %v4259 = vsub.f32 %v3971, %v4225
        %v4260 = vsub.f32 %v3972, %v4225
        %v4261 = vsub.f32 %v3973, %v4225
        %v4262 = vsub.f32 %v3974, %v4225
        %v4263 = vsub.f32 %v3975, %v4225
        %v4264 = vsub.f32 %v3976, %v4225
        %v4265 = vsub.f32 %v3977, %v4225
        %v4266 = vsub.f32 %v3978, %v4225
        %v4267 = vsub.f32 %v3979, %v4227
        %v4268 = vsub.f32 %v3980, %v4227
        %v4269 = vsub.f32 %v3981, %v4227
        %v4270 = vsub.f32 %v3982, %v4227
        %v4271 = vsub.f32 %v3983, %v4227
        %v4272 = vsub.f32 %v3984, %v4227
        %v4273 = vsub.f32 %v3985, %v4227
        %v4274 = vsub.f32 %v3986, %v4227
        %v4275 = vsub.f32 %v3987, %v4227
        %v4276 = vsub.f32 %v3988, %v4227
        %v4277 = vsub.f32 %v3989, %v4227
        %v4278 = vsub.f32 %v3990, %v4227
        %v4279 = vsub.f32 %v3991, %v4227
        %v4280 = vrcp.pop %v4126
        %v4281 = vrcp.pop %v4157
        %v4282 = vrcp.pop %v4188
        %v4283 = vrcp.pop %v4219
        %v4284 = vmul.f32 %v3993, %v4280
        %v4285 = vmul.f32 %v3995, %v4280
        %v4286 = vmul.f32 %v3997, %v4280
        %v4287 = vmul.f32 %v3999, %v4280
        %v4288 = vmul.f32 %v4001, %v4280
        %v4289 = vmul.f32 %v4003, %v4280
        %v4290 = vmul.f32 %v4005, %v4280
        %v4291 = vmul.f32 %v4007, %v4280
        %v4292 = vmul.f32 %v4009, %v4280
        %v4293 = vmul.f32 %v4011, %v4280
        %v4294 = vmul.f32 %v4013, %v4280
        %v4295 = vmul.f32 %v4015, %v4280
        %v4296 = vmul.f32 %v4017, %v4280
        %v4297 = vmul.f32 %v4019, %v4281
        %v4298 = vmul.f32 %v4021, %v4281
        %v4299 = vmul.f32 %v4023, %v4281
        %v4300 = vmul.f32 %v4025, %v4281
        %v4301 = vmul.f32 %v4027, %v4281
        %v4302 = vmul.f32 %v4029, %v4281
        %v4303 = vmul.f32 %v4031, %v4281
        %v4304 = vmul.f32 %v4033, %v4281
        %v4305 = vmul.f32 %v4035, %v4281
        %v4306 = vmul.f32 %v4037, %v4281
        %v4307 = vmul.f32 %v4039, %v4281
        %v4308 = vmul.f32 %v4041, %v4281
        %v4309 = vmul.f32 %v4043, %v4281
        %v4310 = vmul.f32 %v4045, %v4282
        %v4311 = vmul.f32 %v4047, %v4282
        %v4312 = vmul.f32 %v4049, %v4282
        %v4313 = vmul.f32 %v4051, %v4282
        %v4314 = vmul.f32 %v4053, %v4282
        %v4315 = vmul.f32 %v4055, %v4282
        %v4316 = vmul.f32 %v4057, %v4282
        %v4317 = vmul.f32 %v4059, %v4282
        %v4318 = vmul.f32 %v4061, %v4282
        %v4319 = vmul.f32 %v4063, %v4282
        %v4320 = vmul.f32 %v4065, %v4282
        %v4321 = vmul.f32 %v4067, %v4282
        %v4322 = vmul.f32 %v4069, %v4282
        %v4323 = vmul.f32 %v4071, %v4283
        %v4324 = vmul.f32 %v4073, %v4283
        %v4325 = vmul.f32 %v4075, %v4283
        %v4326 = vmul.f32 %v4077, %v4283
        %v4327 = vmul.f32 %v4079, %v4283
        %v4328 = vmul.f32 %v4081, %v4283
        %v4329 = vmul.f32 %v4083, %v4283
        %v4330 = vmul.f32 %v4085, %v4283
        %v4331 = vmul.f32 %v4087, %v4283
        %v4332 = vmul.f32 %v4089, %v4283
        %v4333 = vmul.f32 %v4091, %v4283
        %v4334 = vmul.f32 %v4093, %v4283
        %v4335 = vmul.f32 %v4095, %v4283
        %v4336 = vmul.f32 %v663, %v3296
        %v4337 = vmul.f32 %v664, %v3297
        %v4338 = vmul.f32 %v665, %v3298
        %v4339 = vmul.f32 %v666, %v3299
        %v4340 = vmul.f32 %v667, %v3300
        %v4341 = vmul.f32 %v668, %v3301
        %v4342 = vmul.f32 %v669, %v3302
        %v4343 = vmul.f32 %v670, %v3303
        %v4344 = vmul.f32 %v671, %v3304
        %v4345 = vmul.f32 %v672, %v3305
        %v4346 = vmul.f32 %v673, %v3306
        %v4347 = vmul.f32 %v674, %v3307
        %v4348 = vmul.f32 %v675, %v3308
        %v4349 = vmul.f32 %v676, %v3309
        %v4350 = vmul.f32 %v677, %v3310
        %v4351 = vmul.f32 %v678, %v3311
        %v4352 = vmul.f32 %v679, %v3312
        %v4353 = vmul.f32 %v680, %v3313
        %v4354 = vmul.f32 %v681, %v3314
        %v4355 = vmul.f32 %v682, %v3315
        %v4356 = vmul.f32 %v683, %v3316
        %v4357 = vmul.f32 %v684, %v3317
        %v4358 = vmul.f32 %v685, %v3318
        %v4359 = vmul.f32 %v686, %v3319
        %v4360 = vmul.f32 %v687, %v3320
        %v4361 = vmul.f32 %v688, %v3321
        %v4362 = vmul.f32 %v689, %v3322
        %v4363 = vmul.f32 %v690, %v3323
        %v4364 = vmul.f32 %v691, %v3324
        %v4365 = vmul.f32 %v692, %v3325
        %v4366 = vmul.f32 %v693, %v3326
        %v4367 = vmul.f32 %v694, %v3327
        %v4368 = vmul.f32 %v695, %v3328
        %v4369 = vmul.f32 %v696, %v3329
        %v4370 = vmul.f32 %v697, %v3330
        %v4371 = vmul.f32 %v698, %v3331
        %v4372 = vmul.f32 %v699, %v3332
        %v4373 = vmul.f32 %v700, %v3333
        %v4374 = vmul.f32 %v701, %v3334
        %v4375 = vmul.f32 %v702, %v3335
        %v4376 = vmul.f32 %v703, %v3336
        %v4377 = vmul.f32 %v704, %v3337
        %v4378 = vmul.f32 %v705, %v3338
        %v4379 = vmul.f32 %v706, %v3339
        %v4380 = vmul.f32 %v707, %v3340
        %v4381 = vmul.f32 %v708, %v3341
        %v4382 = vmul.f32 %v709, %v3342
        %v4383 = vmul.f32 %v710, %v3343
        %v4384 = vmul.f32 %v711, %v3344
        %v4385 = vmul.f32 %v712, %v3345
        %v4386 = vmul.f32 %v713, %v3346
        %v4387 = vmul.f32 %v714, %v3347
        %v4388 = vsel %vm841, %v4336, 0.0
        %4389 = vadd.xlane.f32.xlu0 %v4388
        %v4390 = vpop.xlane.xlu0 %4389
        %v4391 = vsel %vm841, %v4337, 0.0
        %4392 = vadd.xlane.f32.xlu0 %v4391
        %v4393 = vpop.xlane.xlu0 %4392
        %v4394 = vsel %vm841, %v4338, 0.0
        %4395 = vadd.xlane.f32.xlu0 %v4394
        %v4396 = vpop.xlane.xlu0 %4395
        %v4397 = vsel %vm841, %v4339, 0.0
        %4398 = vadd.xlane.f32.xlu0 %v4397
        %v4399 = vpop.xlane.xlu0 %4398
        %v4400 = vsel %vm841, %v4340, 0.0
        %4401 = vadd.xlane.f32.xlu0 %v4400
        %v4402 = vpop.xlane.xlu0 %4401
        %v4403 = vsel %vm841, %v4341, 0.0
        %4404 = vadd.xlane.f32.xlu0 %v4403
        %v4405 = vpop.xlane.xlu0 %4404
        %v4406 = vsel %vm841, %v4342, 0.0
        %4407 = vadd.xlane.f32.xlu0 %v4406
        %v4408 = vpop.xlane.xlu0 %4407
        %v4409 = vsel %vm841, %v4343, 0.0
        %4410 = vadd.xlane.f32.xlu0 %v4409
        %v4411 = vpop.xlane.xlu0 %4410
        %v4412 = vsel %vm841, %v4344, 0.0
        %4413 = vadd.xlane.f32.xlu0 %v4412
        %v4414 = vpop.xlane.xlu0 %4413
        %v4415 = vsel %vm841, %v4345, 0.0
        %4416 = vadd.xlane.f32.xlu0 %v4415
        %v4417 = vpop.xlane.xlu0 %4416
        %v4418 = vsel %vm841, %v4346, 0.0
        %4419 = vadd.xlane.f32.xlu0 %v4418
        %v4420 = vpop.xlane.xlu0 %4419
        %v4421 = vsel %vm841, %v4347, 0.0
        %4422 = vadd.xlane.f32.xlu0 %v4421
        %v4423 = vpop.xlane.xlu0 %4422
        %v4424 = vsel %vm2759, %v4348, 0.0
        %4425 = vadd.xlane.f32.xlu0 %v4424
        %v4426 = vpop.xlane.xlu0 %4425
        %v4427 = vsel %vm841, %v4349, 0.0
        %4428 = vadd.xlane.f32.xlu0 %v4427
        %v4429 = vpop.xlane.xlu0 %4428
        %v4430 = vsel %vm841, %v4350, 0.0
        %4431 = vadd.xlane.f32.xlu0 %v4430
        %v4432 = vpop.xlane.xlu0 %4431
        %v4433 = vsel %vm841, %v4351, 0.0
        %4434 = vadd.xlane.f32.xlu0 %v4433
        %v4435 = vpop.xlane.xlu0 %4434
        %v4436 = vsel %vm841, %v4352, 0.0
        %4437 = vadd.xlane.f32.xlu0 %v4436
        %v4438 = vpop.xlane.xlu0 %4437
        %v4439 = vsel %vm841, %v4353, 0.0
        %4440 = vadd.xlane.f32.xlu0 %v4439
        %v4441 = vpop.xlane.xlu0 %4440
        %v4442 = vsel %vm841, %v4354, 0.0
        %4443 = vadd.xlane.f32.xlu0 %v4442
        %v4444 = vpop.xlane.xlu0 %4443
        %v4445 = vsel %vm841, %v4355, 0.0
        %4446 = vadd.xlane.f32.xlu0 %v4445
        %v4447 = vpop.xlane.xlu0 %4446
        %v4448 = vsel %vm841, %v4356, 0.0
        %4449 = vadd.xlane.f32.xlu0 %v4448
        %v4450 = vpop.xlane.xlu0 %4449
        %v4451 = vsel %vm841, %v4357, 0.0
        %4452 = vadd.xlane.f32.xlu0 %v4451
        %v4453 = vpop.xlane.xlu0 %4452
        %v4454 = vsel %vm841, %v4358, 0.0
        %4455 = vadd.xlane.f32.xlu0 %v4454
        %v4456 = vpop.xlane.xlu0 %4455
        %v4457 = vsel %vm841, %v4359, 0.0
        %4458 = vadd.xlane.f32.xlu0 %v4457
        %v4459 = vpop.xlane.xlu0 %4458
        %v4460 = vsel %vm841, %v4360, 0.0
        %4461 = vadd.xlane.f32.xlu0 %v4460
        %v4462 = vpop.xlane.xlu0 %4461
        %v4463 = vsel %vm2759, %v4361, 0.0
        %4464 = vadd.xlane.f32.xlu0 %v4463
        %v4465 = vpop.xlane.xlu0 %4464
        %v4466 = vsel %vm841, %v4362, 0.0
        %4467 = vadd.xlane.f32.xlu0 %v4466
        %v4468 = vpop.xlane.xlu0 %4467
        %v4469 = vsel %vm841, %v4363, 0.0
        %4470 = vadd.xlane.f32.xlu0 %v4469
        %v4471 = vpop.xlane.xlu0 %4470
        %v4472 = vsel %vm841, %v4364, 0.0
        %4473 = vadd.xlane.f32.xlu0 %v4472
        %v4474 = vpop.xlane.xlu0 %4473
        %v4475 = vsel %vm841, %v4365, 0.0
        %4476 = vadd.xlane.f32.xlu0 %v4475
        %v4477 = vpop.xlane.xlu0 %4476
        %v4478 = vsel %vm841, %v4366, 0.0
        %4479 = vadd.xlane.f32.xlu0 %v4478
        %v4480 = vpop.xlane.xlu0 %4479
        %v4481 = vsel %vm841, %v4367, 0.0
        %4482 = vadd.xlane.f32.xlu0 %v4481
        %v4483 = vpop.xlane.xlu0 %4482
        %v4484 = vsel %vm841, %v4368, 0.0
        %4485 = vadd.xlane.f32.xlu0 %v4484
        %v4486 = vpop.xlane.xlu0 %4485
        %v4487 = vsel %vm841, %v4369, 0.0
        %4488 = vadd.xlane.f32.xlu0 %v4487
        %v4489 = vpop.xlane.xlu0 %4488
        %v4490 = vsel %vm841, %v4370, 0.0
        %4491 = vadd.xlane.f32.xlu0 %v4490
        %v4492 = vpop.xlane.xlu0 %4491
        %v4493 = vsel %vm841, %v4371, 0.0
        %4494 = vadd.xlane.f32.xlu0 %v4493
        %v4495 = vpop.xlane.xlu0 %4494
        %v4496 = vsel %vm841, %v4372, 0.0
        %4497 = vadd.xlane.f32.xlu0 %v4496
        %v4498 = vpop.xlane.xlu0 %4497
        %v4499 = vsel %vm841, %v4373, 0.0
        %4500 = vadd.xlane.f32.xlu0 %v4499
        %v4501 = vpop.xlane.xlu0 %4500
        %v4502 = vsel %vm2759, %v4374, 0.0
        %4503 = vadd.xlane.f32.xlu0 %v4502
        %v4504 = vpop.xlane.xlu0 %4503
        %v4505 = vsel %vm841, %v4375, 0.0
        %4506 = vadd.xlane.f32.xlu0 %v4505
        %v4507 = vpop.xlane.xlu0 %4506
        %v4508 = vsel %vm841, %v4376, 0.0
        %4509 = vadd.xlane.f32.xlu0 %v4508
        %v4510 = vpop.xlane.xlu0 %4509
        %v4511 = vsel %vm841, %v4377, 0.0
        %4512 = vadd.xlane.f32.xlu0 %v4511
        %v4513 = vpop.xlane.xlu0 %4512
        %v4514 = vsel %vm841, %v4378, 0.0
        %4515 = vadd.xlane.f32.xlu0 %v4514
        %v4516 = vpop.xlane.xlu0 %4515
        %v4517 = vsel %vm841, %v4379, 0.0
        %4518 = vadd.xlane.f32.xlu0 %v4517
        %v4519 = vpop.xlane.xlu0 %4518
        %v4520 = vsel %vm841, %v4380, 0.0
        %4521 = vadd.xlane.f32.xlu0 %v4520
        %v4522 = vpop.xlane.xlu0 %4521
        %v4523 = vsel %vm841, %v4381, 0.0
        %4524 = vadd.xlane.f32.xlu0 %v4523
        %v4525 = vpop.xlane.xlu0 %4524
        %v4526 = vsel %vm841, %v4382, 0.0
        %4527 = vadd.xlane.f32.xlu0 %v4526
        %v4528 = vpop.xlane.xlu0 %4527
        %v4529 = vsel %vm841, %v4383, 0.0
        %4530 = vadd.xlane.f32.xlu0 %v4529
        %v4531 = vpop.xlane.xlu0 %4530
        %v4532 = vsel %vm841, %v4384, 0.0
        %4533 = vadd.xlane.f32.xlu0 %v4532
        %v4534 = vpop.xlane.xlu0 %4533
        %v4535 = vsel %vm841, %v4385, 0.0
        %4536 = vadd.xlane.f32.xlu0 %v4535
        %v4537 = vpop.xlane.xlu0 %4536
        %v4538 = vsel %vm841, %v4386, 0.0
        %4539 = vadd.xlane.f32.xlu0 %v4538
        %v4540 = vpop.xlane.xlu0 %4539
        %v4541 = vsel %vm2759, %v4387, 0.0
        %4542 = vadd.xlane.f32.xlu0 %v4541
        %v4543 = vpop.xlane.xlu0 %4542
        %v4544 = vmul.f32 %v528, %v4390
        %v4545 = vmul.f32 %v529, %v4393
        %v4546 = vmul.f32 %v530, %v4396
        %v4547 = vmul.f32 %v531, %v4399
        %v4548 = vmul.f32 %v532, %v4402
        %v4549 = vmul.f32 %v533, %v4405
        %v4550 = vmul.f32 %v534, %v4408
        %v4551 = vmul.f32 %v535, %v4411
        %v4552 = vmul.f32 %v536, %v4414
        %v4553 = vmul.f32 %v537, %v4417
        %v4554 = vmul.f32 %v538, %v4420
        %v4555 = vmul.f32 %v539, %v4423
        %v4556 = vmul.f32 %v540, %v4426
        %v4557 = vmul.f32 %v541, %v4429
        %v4558 = vmul.f32 %v542, %v4432
        %v4559 = vmul.f32 %v543, %v4435
        %v4560 = vmul.f32 %v544, %v4438
        %v4561 = vmul.f32 %v545, %v4441
        %v4562 = vmul.f32 %v546, %v4444
        %v4563 = vmul.f32 %v547, %v4447
        %v4564 = vmul.f32 %v548, %v4450
        %v4565 = vmul.f32 %v549, %v4453
        %v4566 = vmul.f32 %v550, %v4456
        %v4567 = vmul.f32 %v551, %v4459
        %v4568 = vmul.f32 %v552, %v4462
        %v4569 = vmul.f32 %v553, %v4465
        %v4570 = vmul.f32 %v554, %v4468
        %v4571 = vmul.f32 %v555, %v4471
        %v4572 = vmul.f32 %v556, %v4474
        %v4573 = vmul.f32 %v557, %v4477
        %v4574 = vmul.f32 %v558, %v4480
        %v4575 = vmul.f32 %v559, %v4483
        %v4576 = vmul.f32 %v560, %v4486
        %v4577 = vmul.f32 %v561, %v4489
        %v4578 = vmul.f32 %v562, %v4492
        %v4579 = vmul.f32 %v563, %v4495
        %v4580 = vmul.f32 %v564, %v4498
        %v4581 = vmul.f32 %v565, %v4501
        %v4582 = vmul.f32 %v566, %v4504
        %v4583 = vmul.f32 %v567, %v4507
        %v4584 = vmul.f32 %v568, %v4510
        %v4585 = vmul.f32 %v569, %v4513
        %v4586 = vmul.f32 %v570, %v4516
        %v4587 = vmul.f32 %v571, %v4519
        %v4588 = vmul.f32 %v572, %v4522
        %v4589 = vmul.f32 %v573, %v4525
        %v4590 = vmul.f32 %v574, %v4528
        %v4591 = vmul.f32 %v575, %v4531
        %v4592 = vmul.f32 %v576, %v4534
        %v4593 = vmul.f32 %v577, %v4537
        %v4594 = vmul.f32 %v578, %v4540
        %v4595 = vmul.f32 %v579, %v4543
        %v4596 = vsel %vm1389, %v4544, 0.0
        %v4597 = vsel %vm1389, %v4545, 0.0
        %v4598 = vadd.f32 %v4596, %v4597
        %v4599 = vsel %vm1389, %v4546, 0.0
        %v4600 = vadd.f32 %v4598, %v4599
        %v4601 = vsel %vm1389, %v4547, 0.0
        %v4602 = vadd.f32 %v4600, %v4601
        %v4603 = vsel %vm1389, %v4548, 0.0
        %v4604 = vadd.f32 %v4602, %v4603
        %v4605 = vsel %vm1389, %v4549, 0.0
        %v4606 = vadd.f32 %v4604, %v4605
        %v4607 = vsel %vm1389, %v4550, 0.0
        %v4608 = vadd.f32 %v4606, %v4607
        %v4609 = vsel %vm1389, %v4551, 0.0
        %v4610 = vadd.f32 %v4608, %v4609
        %v4611 = vsel %vm1389, %v4552, 0.0
        %v4612 = vadd.f32 %v4610, %v4611
        %v4613 = vsel %vm1389, %v4553, 0.0
        %v4614 = vadd.f32 %v4612, %v4613
        %v4615 = vsel %vm1389, %v4554, 0.0
        %v4616 = vadd.f32 %v4614, %v4615
        %v4617 = vsel %vm1389, %v4555, 0.0
        %v4618 = vadd.f32 %v4616, %v4617
        %v4619 = vsel %vm1413, %v4556, 0.0
        %v4620 = vadd.f32 %v4618, %v4619
        %v4621 = vsel %vm1389, %v4557, 0.0
        %v4622 = vadd.f32 %v4620, %v4621
        %v4623 = vsel %vm1389, %v4558, 0.0
        %v4624 = vadd.f32 %v4622, %v4623
        %v4625 = vsel %vm1389, %v4559, 0.0
        %v4626 = vadd.f32 %v4624, %v4625
        %v4627 = vsel %vm1389, %v4560, 0.0
        %v4628 = vadd.f32 %v4626, %v4627
        %v4629 = vsel %vm1389, %v4561, 0.0
        %v4630 = vadd.f32 %v4628, %v4629
        %v4631 = vsel %vm1389, %v4562, 0.0
        %v4632 = vadd.f32 %v4630, %v4631
        %v4633 = vsel %vm1389, %v4563, 0.0
        %v4634 = vadd.f32 %v4632, %v4633
        %v4635 = vsel %vm1389, %v4564, 0.0
        %v4636 = vadd.f32 %v4634, %v4635
        %v4637 = vsel %vm1389, %v4565, 0.0
        %v4638 = vadd.f32 %v4636, %v4637
        %v4639 = vsel %vm1389, %v4566, 0.0
        %v4640 = vadd.f32 %v4638, %v4639
        %v4641 = vsel %vm1389, %v4567, 0.0
        %v4642 = vadd.f32 %v4640, %v4641
        %v4643 = vsel %vm1389, %v4568, 0.0
        %v4644 = vadd.f32 %v4642, %v4643
        %v4645 = vsel %vm1413, %v4569, 0.0
        %v4646 = vadd.f32 %v4644, %v4645
        %v4647 = vsel %vm1389, %v4570, 0.0
        %v4648 = vadd.f32 %v4646, %v4647
        %v4649 = vsel %vm1389, %v4571, 0.0
        %v4650 = vadd.f32 %v4648, %v4649
        %v4651 = vsel %vm1389, %v4572, 0.0
        %v4652 = vadd.f32 %v4650, %v4651
        %v4653 = vsel %vm1389, %v4573, 0.0
        %v4654 = vadd.f32 %v4652, %v4653
        %v4655 = vsel %vm1389, %v4574, 0.0
        %v4656 = vadd.f32 %v4654, %v4655
        %v4657 = vsel %vm1389, %v4575, 0.0
        %v4658 = vadd.f32 %v4656, %v4657
        %v4659 = vsel %vm1389, %v4576, 0.0
        %v4660 = vadd.f32 %v4658, %v4659
        %v4661 = vsel %vm1389, %v4577, 0.0
        %v4662 = vadd.f32 %v4660, %v4661
        %v4663 = vsel %vm1389, %v4578, 0.0
        %v4664 = vadd.f32 %v4662, %v4663
        %v4665 = vsel %vm1389, %v4579, 0.0
        %v4666 = vadd.f32 %v4664, %v4665
        %v4667 = vsel %vm1389, %v4580, 0.0
        %v4668 = vadd.f32 %v4666, %v4667
        %v4669 = vsel %vm1389, %v4581, 0.0
        %v4670 = vadd.f32 %v4668, %v4669
        %v4671 = vsel %vm1413, %v4582, 0.0
        %v4672 = vadd.f32 %v4670, %v4671
        %v4673 = vsel %vm1389, %v4583, 0.0
        %v4674 = vadd.f32 %v4672, %v4673
        %v4675 = vsel %vm1389, %v4584, 0.0
        %v4676 = vadd.f32 %v4674, %v4675
        %v4677 = vsel %vm1389, %v4585, 0.0
        %v4678 = vadd.f32 %v4676, %v4677
        %v4679 = vsel %vm1389, %v4586, 0.0
        %v4680 = vadd.f32 %v4678, %v4679
        %v4681 = vsel %vm1389, %v4587, 0.0
        %v4682 = vadd.f32 %v4680, %v4681
        %v4683 = vsel %vm1389, %v4588, 0.0
        %v4684 = vadd.f32 %v4682, %v4683
        %v4685 = vsel %vm1389, %v4589, 0.0
        %v4686 = vadd.f32 %v4684, %v4685
        %v4687 = vsel %vm1389, %v4590, 0.0
        %v4688 = vadd.f32 %v4686, %v4687
        %v4689 = vsel %vm1389, %v4591, 0.0
        %v4690 = vadd.f32 %v4688, %v4689
        %v4691 = vsel %vm1389, %v4592, 0.0
        %v4692 = vadd.f32 %v4690, %v4691
        %v4693 = vsel %vm1389, %v4593, 0.0
        %v4694 = vadd.f32 %v4692, %v4693
        %v4695 = vsel %vm1389, %v4594, 0.0
        %v4696 = vadd.f32 %v4694, %v4695
        %v4697 = vsel %vm1413, %v4595, 0.0
        %v4698 = vadd.f32 %v4696, %v4697
        %4699 = vadd.xlane.f32.xlu0 %v4698
        %v4700 = vpop.xlane.xlu0 %4699
        %v4701 = vrot.slane %v4700, 4
        %v4702 = vadd.f32 %v4700, %v4701
        %v4703 = vrot.slane %v4702, 2
        %v4704 = vadd.f32 %v4702, %v4703
        %v4705 = vrot.slane %v4704, 1
        %v4706 = vadd.f32 %v4704, %v4705
        %s4707 = vtos %v4706
        %v4708 = vmul.f32 %v731, %v4228
        %v4709 = vmul.f32 %v732, %v4229
        %v4710 = vmul.f32 %v733, %v4230
        %v4711 = vmul.f32 %v734, %v4231
        %v4712 = vmul.f32 %v735, %v4232
        %v4713 = vmul.f32 %v736, %v4233
        %v4714 = vmul.f32 %v737, %v4234
        %v4715 = vmul.f32 %v738, %v4235
        %v4716 = vmul.f32 %v739, %v4236
        %v4717 = vmul.f32 %v740, %v4237
        %v4718 = vmul.f32 %v741, %v4238
        %v4719 = vmul.f32 %v742, %v4239
        %v4720 = vmul.f32 %v743, %v4240
        %v4721 = vmul.f32 %v744, %v4241
        %v4722 = vmul.f32 %v745, %v4242
        %v4723 = vmul.f32 %v746, %v4243
        %v4724 = vmul.f32 %v747, %v4244
        %v4725 = vmul.f32 %v748, %v4245
        %v4726 = vmul.f32 %v749, %v4246
        %v4727 = vmul.f32 %v750, %v4247
        %v4728 = vmul.f32 %v751, %v4248
        %v4729 = vmul.f32 %v752, %v4249
        %v4730 = vmul.f32 %v753, %v4250
        %v4731 = vmul.f32 %v754, %v4251
        %v4732 = vmul.f32 %v755, %v4252
        %v4733 = vmul.f32 %v756, %v4253
        %v4734 = vmul.f32 %v757, %v4254
        %v4735 = vmul.f32 %v758, %v4255
        %v4736 = vmul.f32 %v759, %v4256
        %v4737 = vmul.f32 %v760, %v4257
        %v4738 = vmul.f32 %v761, %v4258
        %v4739 = vmul.f32 %v762, %v4259
        %v4740 = vmul.f32 %v763, %v4260
        %v4741 = vmul.f32 %v764, %v4261
        %v4742 = vmul.f32 %v765, %v4262
        %v4743 = vmul.f32 %v766, %v4263
        %v4744 = vmul.f32 %v767, %v4264
        %v4745 = vmul.f32 %v768, %v4265
        %v4746 = vmul.f32 %v769, %v4266
        %v4747 = vmul.f32 %v770, %v4267
        %v4748 = vmul.f32 %v771, %v4268
        %v4749 = vmul.f32 %v772, %v4269
        %v4750 = vmul.f32 %v773, %v4270
        %v4751 = vmul.f32 %v774, %v4271
        %v4752 = vmul.f32 %v775, %v4272
        %v4753 = vmul.f32 %v776, %v4273
        %v4754 = vmul.f32 %v777, %v4274
        %v4755 = vmul.f32 %v778, %v4275
        %v4756 = vmul.f32 %v779, %v4276
        %v4757 = vmul.f32 %v780, %v4277
        %v4758 = vmul.f32 %v781, %v4278
        %v4759 = vmul.f32 %v782, %v4279
        %v4760 = vsel %vm841, %v4708, 0.0
        %4761 = vadd.xlane.f32.xlu0 %v4760
        %v4762 = vpop.xlane.xlu0 %4761
        %v4763 = vsel %vm841, %v4709, 0.0
        %4764 = vadd.xlane.f32.xlu0 %v4763
        %v4765 = vpop.xlane.xlu0 %4764
        %v4766 = vsel %vm841, %v4710, 0.0
        %4767 = vadd.xlane.f32.xlu0 %v4766
        %v4768 = vpop.xlane.xlu0 %4767
        %v4769 = vsel %vm841, %v4711, 0.0
        %4770 = vadd.xlane.f32.xlu0 %v4769
        %v4771 = vpop.xlane.xlu0 %4770
        %v4772 = vsel %vm841, %v4712, 0.0
        %4773 = vadd.xlane.f32.xlu0 %v4772
        %v4774 = vpop.xlane.xlu0 %4773
        %v4775 = vsel %vm841, %v4713, 0.0
        %4776 = vadd.xlane.f32.xlu0 %v4775
        %v4777 = vpop.xlane.xlu0 %4776
        %v4778 = vsel %vm841, %v4714, 0.0
        %4779 = vadd.xlane.f32.xlu0 %v4778
        %v4780 = vpop.xlane.xlu0 %4779
        %v4781 = vsel %vm841, %v4715, 0.0
        %4782 = vadd.xlane.f32.xlu0 %v4781
        %v4783 = vpop.xlane.xlu0 %4782
        %v4784 = vsel %vm841, %v4716, 0.0
        %4785 = vadd.xlane.f32.xlu0 %v4784
        %v4786 = vpop.xlane.xlu0 %4785
        %v4787 = vsel %vm841, %v4717, 0.0
        %4788 = vadd.xlane.f32.xlu0 %v4787
        %v4789 = vpop.xlane.xlu0 %4788
        %v4790 = vsel %vm841, %v4718, 0.0
        %4791 = vadd.xlane.f32.xlu0 %v4790
        %v4792 = vpop.xlane.xlu0 %4791
        %v4793 = vsel %vm841, %v4719, 0.0
        %4794 = vadd.xlane.f32.xlu0 %v4793
        %v4795 = vpop.xlane.xlu0 %4794
        %v4796 = vsel %vm2759, %v4720, 0.0
        %4797 = vadd.xlane.f32.xlu0 %v4796
        %v4798 = vpop.xlane.xlu0 %4797
        %v4799 = vsel %vm841, %v4721, 0.0
        %4800 = vadd.xlane.f32.xlu0 %v4799
        %v4801 = vpop.xlane.xlu0 %4800
        %v4802 = vsel %vm841, %v4722, 0.0
        %4803 = vadd.xlane.f32.xlu0 %v4802
        %v4804 = vpop.xlane.xlu0 %4803
        %v4805 = vsel %vm841, %v4723, 0.0
        %4806 = vadd.xlane.f32.xlu0 %v4805
        %v4807 = vpop.xlane.xlu0 %4806
        %v4808 = vsel %vm841, %v4724, 0.0
        %4809 = vadd.xlane.f32.xlu0 %v4808
        %v4810 = vpop.xlane.xlu0 %4809
        %v4811 = vsel %vm841, %v4725, 0.0
        %4812 = vadd.xlane.f32.xlu0 %v4811
        %v4813 = vpop.xlane.xlu0 %4812
        %v4814 = vsel %vm841, %v4726, 0.0
        %4815 = vadd.xlane.f32.xlu0 %v4814
        %v4816 = vpop.xlane.xlu0 %4815
        %v4817 = vsel %vm841, %v4727, 0.0
        %4818 = vadd.xlane.f32.xlu0 %v4817
        %v4819 = vpop.xlane.xlu0 %4818
        %v4820 = vsel %vm841, %v4728, 0.0
        %4821 = vadd.xlane.f32.xlu0 %v4820
        %v4822 = vpop.xlane.xlu0 %4821
        %v4823 = vsel %vm841, %v4729, 0.0
        %4824 = vadd.xlane.f32.xlu0 %v4823
        %v4825 = vpop.xlane.xlu0 %4824
        %v4826 = vsel %vm841, %v4730, 0.0
        %4827 = vadd.xlane.f32.xlu0 %v4826
        %v4828 = vpop.xlane.xlu0 %4827
        %v4829 = vsel %vm841, %v4731, 0.0
        %4830 = vadd.xlane.f32.xlu0 %v4829
        %v4831 = vpop.xlane.xlu0 %4830
        %v4832 = vsel %vm841, %v4732, 0.0
        %4833 = vadd.xlane.f32.xlu0 %v4832
        %v4834 = vpop.xlane.xlu0 %4833
        %v4835 = vsel %vm2759, %v4733, 0.0
        %4836 = vadd.xlane.f32.xlu0 %v4835
        %v4837 = vpop.xlane.xlu0 %4836
        %v4838 = vsel %vm841, %v4734, 0.0
        %4839 = vadd.xlane.f32.xlu0 %v4838
        %v4840 = vpop.xlane.xlu0 %4839
        %v4841 = vsel %vm841, %v4735, 0.0
        %4842 = vadd.xlane.f32.xlu0 %v4841
        %v4843 = vpop.xlane.xlu0 %4842
        %v4844 = vsel %vm841, %v4736, 0.0
        %4845 = vadd.xlane.f32.xlu0 %v4844
        %v4846 = vpop.xlane.xlu0 %4845
        %v4847 = vsel %vm841, %v4737, 0.0
        %4848 = vadd.xlane.f32.xlu0 %v4847
        %v4849 = vpop.xlane.xlu0 %4848
        %v4850 = vsel %vm841, %v4738, 0.0
        %4851 = vadd.xlane.f32.xlu0 %v4850
        %v4852 = vpop.xlane.xlu0 %4851
        %v4853 = vsel %vm841, %v4739, 0.0
        %4854 = vadd.xlane.f32.xlu0 %v4853
        %v4855 = vpop.xlane.xlu0 %4854
        %v4856 = vsel %vm841, %v4740, 0.0
        %4857 = vadd.xlane.f32.xlu0 %v4856
        %v4858 = vpop.xlane.xlu0 %4857
        %v4859 = vsel %vm841, %v4741, 0.0
        %4860 = vadd.xlane.f32.xlu0 %v4859
        %v4861 = vpop.xlane.xlu0 %4860
        %v4862 = vsel %vm841, %v4742, 0.0
        %4863 = vadd.xlane.f32.xlu0 %v4862
        %v4864 = vpop.xlane.xlu0 %4863
        %v4865 = vsel %vm841, %v4743, 0.0
        %4866 = vadd.xlane.f32.xlu0 %v4865
        %v4867 = vpop.xlane.xlu0 %4866
        %v4868 = vsel %vm841, %v4744, 0.0
        %4869 = vadd.xlane.f32.xlu0 %v4868
        %v4870 = vpop.xlane.xlu0 %4869
        %v4871 = vsel %vm841, %v4745, 0.0
        %4872 = vadd.xlane.f32.xlu0 %v4871
        %v4873 = vpop.xlane.xlu0 %4872
        %v4874 = vsel %vm2759, %v4746, 0.0
        %4875 = vadd.xlane.f32.xlu0 %v4874
        %v4876 = vpop.xlane.xlu0 %4875
        %v4877 = vsel %vm841, %v4747, 0.0
        %4878 = vadd.xlane.f32.xlu0 %v4877
        %v4879 = vpop.xlane.xlu0 %4878
        %v4880 = vsel %vm841, %v4748, 0.0
        %4881 = vadd.xlane.f32.xlu0 %v4880
        %v4882 = vpop.xlane.xlu0 %4881
        %v4883 = vsel %vm841, %v4749, 0.0
        %4884 = vadd.xlane.f32.xlu0 %v4883
        %v4885 = vpop.xlane.xlu0 %4884
        %v4886 = vsel %vm841, %v4750, 0.0
        %4887 = vadd.xlane.f32.xlu0 %v4886
        %v4888 = vpop.xlane.xlu0 %4887
        %v4889 = vsel %vm841, %v4751, 0.0
        %4890 = vadd.xlane.f32.xlu0 %v4889
        %v4891 = vpop.xlane.xlu0 %4890
        %v4892 = vsel %vm841, %v4752, 0.0
        %4893 = vadd.xlane.f32.xlu0 %v4892
        %v4894 = vpop.xlane.xlu0 %4893
        %v4895 = vsel %vm841, %v4753, 0.0
        %4896 = vadd.xlane.f32.xlu0 %v4895
        %v4897 = vpop.xlane.xlu0 %4896
        %v4898 = vsel %vm841, %v4754, 0.0
        %4899 = vadd.xlane.f32.xlu0 %v4898
        %v4900 = vpop.xlane.xlu0 %4899
        %v4901 = vsel %vm841, %v4755, 0.0
        %4902 = vadd.xlane.f32.xlu0 %v4901
        %v4903 = vpop.xlane.xlu0 %4902
        %v4904 = vsel %vm841, %v4756, 0.0
        %4905 = vadd.xlane.f32.xlu0 %v4904
        %v4906 = vpop.xlane.xlu0 %4905
        %v4907 = vsel %vm841, %v4757, 0.0
        %4908 = vadd.xlane.f32.xlu0 %v4907
        %v4909 = vpop.xlane.xlu0 %4908
        %v4910 = vsel %vm841, %v4758, 0.0
        %4911 = vadd.xlane.f32.xlu0 %v4910
        %v4912 = vpop.xlane.xlu0 %4911
        %v4913 = vsel %vm2759, %v4759, 0.0
        %4914 = vadd.xlane.f32.xlu0 %v4913
        %v4915 = vpop.xlane.xlu0 %4914
        %v4916 = vmul.f32 %v417, %v4762
        %v4917 = vmul.f32 %v418, %v4765
        %v4918 = vmul.f32 %v419, %v4768
        %v4919 = vmul.f32 %v420, %v4771
        %v4920 = vmul.f32 %v421, %v4774
        %v4921 = vmul.f32 %v422, %v4777
        %v4922 = vmul.f32 %v423, %v4780
        %v4923 = vmul.f32 %v424, %v4783
        %v4924 = vmul.f32 %v425, %v4786
        %v4925 = vmul.f32 %v426, %v4789
        %v4926 = vmul.f32 %v427, %v4792
        %v4927 = vmul.f32 %v428, %v4795
        %v4928 = vmul.f32 %v429, %v4798
        %v4929 = vmul.f32 %v430, %v4801
        %v4930 = vmul.f32 %v431, %v4804
        %v4931 = vmul.f32 %v432, %v4807
        %v4932 = vmul.f32 %v433, %v4810
        %v4933 = vmul.f32 %v434, %v4813
        %v4934 = vmul.f32 %v435, %v4816
        %v4935 = vmul.f32 %v436, %v4819
        %v4936 = vmul.f32 %v437, %v4822
        %v4937 = vmul.f32 %v438, %v4825
        %v4938 = vmul.f32 %v439, %v4828
        %v4939 = vmul.f32 %v440, %v4831
        %v4940 = vmul.f32 %v441, %v4834
        %v4941 = vmul.f32 %v442, %v4837
        %v4942 = vmul.f32 %v443, %v4840
        %v4943 = vmul.f32 %v444, %v4843
        %v4944 = vmul.f32 %v445, %v4846
        %v4945 = vmul.f32 %v446, %v4849
        %v4946 = vmul.f32 %v447, %v4852
        %v4947 = vmul.f32 %v448, %v4855
        %v4948 = vmul.f32 %v449, %v4858
        %v4949 = vmul.f32 %v450, %v4861
        %v4950 = vmul.f32 %v451, %v4864
        %v4951 = vmul.f32 %v452, %v4867
        %v4952 = vmul.f32 %v453, %v4870
        %v4953 = vmul.f32 %v454, %v4873
        %v4954 = vmul.f32 %v455, %v4876
        %v4955 = vmul.f32 %v456, %v4879
        %v4956 = vmul.f32 %v457, %v4882
        %v4957 = vmul.f32 %v458, %v4885
        %v4958 = vmul.f32 %v459, %v4888
        %v4959 = vmul.f32 %v460, %v4891
        %v4960 = vmul.f32 %v461, %v4894
        %v4961 = vmul.f32 %v462, %v4897
        %v4962 = vmul.f32 %v463, %v4900
        %v4963 = vmul.f32 %v464, %v4903
        %v4964 = vmul.f32 %v465, %v4906
        %v4965 = vmul.f32 %v466, %v4909
        %v4966 = vmul.f32 %v467, %v4912
        %v4967 = vmul.f32 %v468, %v4915
        %v4968 = vsel %vm1389, %v4916, 0.0
        %v4969 = vsel %vm1389, %v4917, 0.0
        %v4970 = vadd.f32 %v4968, %v4969
        %v4971 = vsel %vm1389, %v4918, 0.0
        %v4972 = vadd.f32 %v4970, %v4971
        %v4973 = vsel %vm1389, %v4919, 0.0
        %v4974 = vadd.f32 %v4972, %v4973
        %v4975 = vsel %vm1389, %v4920, 0.0
        %v4976 = vadd.f32 %v4974, %v4975
        %v4977 = vsel %vm1389, %v4921, 0.0
        %v4978 = vadd.f32 %v4976, %v4977
        %v4979 = vsel %vm1389, %v4922, 0.0
        %v4980 = vadd.f32 %v4978, %v4979
        %v4981 = vsel %vm1389, %v4923, 0.0
        %v4982 = vadd.f32 %v4980, %v4981
        %v4983 = vsel %vm1389, %v4924, 0.0
        %v4984 = vadd.f32 %v4982, %v4983
        %v4985 = vsel %vm1389, %v4925, 0.0
        %v4986 = vadd.f32 %v4984, %v4985
        %v4987 = vsel %vm1389, %v4926, 0.0
        %v4988 = vadd.f32 %v4986, %v4987
        %v4989 = vsel %vm1389, %v4927, 0.0
        %v4990 = vadd.f32 %v4988, %v4989
        %v4991 = vsel %vm1413, %v4928, 0.0
        %v4992 = vadd.f32 %v4990, %v4991
        %v4993 = vsel %vm1389, %v4929, 0.0
        %v4994 = vadd.f32 %v4992, %v4993
        %v4995 = vsel %vm1389, %v4930, 0.0
        %v4996 = vadd.f32 %v4994, %v4995
        %v4997 = vsel %vm1389, %v4931, 0.0
        %v4998 = vadd.f32 %v4996, %v4997
        %v4999 = vsel %vm1389, %v4932, 0.0
        %v5000 = vadd.f32 %v4998, %v4999
        %v5001 = vsel %vm1389, %v4933, 0.0
        %v5002 = vadd.f32 %v5000, %v5001
        %v5003 = vsel %vm1389, %v4934, 0.0
        %v5004 = vadd.f32 %v5002, %v5003
        %v5005 = vsel %vm1389, %v4935, 0.0
        %v5006 = vadd.f32 %v5004, %v5005
        %v5007 = vsel %vm1389, %v4936, 0.0
        %v5008 = vadd.f32 %v5006, %v5007
        %v5009 = vsel %vm1389, %v4937, 0.0
        %v5010 = vadd.f32 %v5008, %v5009
        %v5011 = vsel %vm1389, %v4938, 0.0
        %v5012 = vadd.f32 %v5010, %v5011
        %v5013 = vsel %vm1389, %v4939, 0.0
        %v5014 = vadd.f32 %v5012, %v5013
        %v5015 = vsel %vm1389, %v4940, 0.0
        %v5016 = vadd.f32 %v5014, %v5015
        %v5017 = vsel %vm1413, %v4941, 0.0
        %v5018 = vadd.f32 %v5016, %v5017
        %v5019 = vsel %vm1389, %v4942, 0.0
        %v5020 = vadd.f32 %v5018, %v5019
        %v5021 = vsel %vm1389, %v4943, 0.0
        %v5022 = vadd.f32 %v5020, %v5021
        %v5023 = vsel %vm1389, %v4944, 0.0
        %v5024 = vadd.f32 %v5022, %v5023
        %v5025 = vsel %vm1389, %v4945, 0.0
        %v5026 = vadd.f32 %v5024, %v5025
        %v5027 = vsel %vm1389, %v4946, 0.0
        %v5028 = vadd.f32 %v5026, %v5027
        %v5029 = vsel %vm1389, %v4947, 0.0
        %v5030 = vadd.f32 %v5028, %v5029
        %v5031 = vsel %vm1389, %v4948, 0.0
        %v5032 = vadd.f32 %v5030, %v5031
        %v5033 = vsel %vm1389, %v4949, 0.0
        %v5034 = vadd.f32 %v5032, %v5033
        %v5035 = vsel %vm1389, %v4950, 0.0
        %v5036 = vadd.f32 %v5034, %v5035
        %v5037 = vsel %vm1389, %v4951, 0.0
        %v5038 = vadd.f32 %v5036, %v5037
        %v5039 = vsel %vm1389, %v4952, 0.0
        %v5040 = vadd.f32 %v5038, %v5039
        %v5041 = vsel %vm1389, %v4953, 0.0
        %v5042 = vadd.f32 %v5040, %v5041
        %v5043 = vsel %vm1413, %v4954, 0.0
        %v5044 = vadd.f32 %v5042, %v5043
        %v5045 = vsel %vm1389, %v4955, 0.0
        %v5046 = vadd.f32 %v5044, %v5045
        %v5047 = vsel %vm1389, %v4956, 0.0
        %v5048 = vadd.f32 %v5046, %v5047
        %v5049 = vsel %vm1389, %v4957, 0.0
        %v5050 = vadd.f32 %v5048, %v5049
        %v5051 = vsel %vm1389, %v4958, 0.0
        %v5052 = vadd.f32 %v5050, %v5051
        %v5053 = vsel %vm1389, %v4959, 0.0
        %v5054 = vadd.f32 %v5052, %v5053
        %v5055 = vsel %vm1389, %v4960, 0.0
        %v5056 = vadd.f32 %v5054, %v5055
        %v5057 = vsel %vm1389, %v4961, 0.0
        %v5058 = vadd.f32 %v5056, %v5057
        %v5059 = vsel %vm1389, %v4962, 0.0
        %v5060 = vadd.f32 %v5058, %v5059
        %v5061 = vsel %vm1389, %v4963, 0.0
        %v5062 = vadd.f32 %v5060, %v5061
        %v5063 = vsel %vm1389, %v4964, 0.0
        %v5064 = vadd.f32 %v5062, %v5063
        %v5065 = vsel %vm1389, %v4965, 0.0
        %v5066 = vadd.f32 %v5064, %v5065
        %v5067 = vsel %vm1389, %v4966, 0.0
        %v5068 = vadd.f32 %v5066, %v5067
        %v5069 = vsel %vm1413, %v4967, 0.0
        %v5070 = vadd.f32 %v5068, %v5069
        %5071 = vadd.xlane.f32.xlu0 %v5070
        %v5072 = vpop.xlane.xlu0 %5071
        %v5073 = vrot.slane %v5072, 4
        %v5074 = vadd.f32 %v5072, %v5073
        %v5075 = vrot.slane %v5074, 2
        %v5076 = vadd.f32 %v5074, %v5075
        %v5077 = vrot.slane %v5076, 1
        %v5078 = vadd.f32 %v5076, %v5077
        %s5079 = vtos %v5078
        %vm5080 = vcmp.lt.s32.totalorder %v474, 100
        %vm5081 = vcmp.lt.s32.totalorder %v475, 100
        %vm5082 = vcmp.lt.s32.totalorder %v476, 100
        %vm5083 = vcmp.lt.s32.totalorder %v477, 100
        %vm5084 = vcmp.lt.s32.totalorder %v478, 100
        %vm5085 = vcmp.lt.s32.totalorder %v479, 100
        %vm5086 = vcmp.lt.s32.totalorder %v480, 100
        %vm5087 = vcmp.lt.s32.totalorder %v481, 100
        %vm5088 = vcmp.lt.s32.totalorder %v482, 100
        %vm5089 = vcmp.lt.s32.totalorder %v483, 100
        %vm5090 = vcmp.lt.s32.totalorder %v484, 100
        %vm5091 = vcmp.lt.s32.totalorder %v485, 100
        %vm5092 = vcmp.lt.s32.totalorder %v486, 100
        %vm5093 = vcmp.lt.s32.totalorder %v488, 100
        %v5094 = vsel %vm5080, 1, 0
        %v5095 = vsel %vm5081, 1, 0
        %v5096 = vsel %vm5082, 1, 0
        %v5097 = vsel %vm5083, 1, 0
        %v5098 = vsel %vm5084, 1, 0
        %v5099 = vsel %vm5085, 1, 0
        %v5100 = vsel %vm5086, 1, 0
        %v5101 = vsel %vm5087, 1, 0
        %v5102 = vsel %vm5088, 1, 0
        %v5103 = vsel %vm5089, 1, 0
        %v5104 = vsel %vm5090, 1, 0
        %v5105 = vsel %vm5091, 1, 0
        %v5106 = vsel %vm5092, 1, 0
        %vm5107 = vcmp.eq.s32.totalorder %v5094, 1
        %vm5108 = vcmp.eq.s32.totalorder %v5095, 1
        %vm5109 = vcmp.eq.s32.totalorder %v5096, 1
        %vm5110 = vcmp.eq.s32.totalorder %v5097, 1
        %vm5111 = vcmp.eq.s32.totalorder %v5098, 1
        %vm5112 = vcmp.eq.s32.totalorder %v5099, 1
        %vm5113 = vcmp.eq.s32.totalorder %v5100, 1
        %vm5114 = vcmp.eq.s32.totalorder %v5101, 1
        %vm5115 = vcmp.eq.s32.totalorder %v5102, 1
        %vm5116 = vcmp.eq.s32.totalorder %v5103, 1
        %vm5117 = vcmp.eq.s32.totalorder %v5104, 1
        %vm5118 = vcmp.eq.s32.totalorder %v5105, 1
        %vm5119 = vcmp.eq.s32.totalorder %v5106, 1
        %v5120 = vsel %vm5093, 1, 0
        %vm5121 = vcmp.eq.s32.totalorder %v5120, 1
        %vm5122 = vmand %vm5107, %vm5121
        %vm5123 = vmand %vm5108, %vm5121
        %vm5124 = vmand %vm5109, %vm5121
        %vm5125 = vmand %vm5110, %vm5121
        %vm5126 = vmand %vm5111, %vm5121
        %vm5127 = vmand %vm5112, %vm5121
        %vm5128 = vmand %vm5113, %vm5121
        %vm5129 = vmand %vm5114, %vm5121
        %vm5130 = vmand %vm5115, %vm5121
        %vm5131 = vmand %vm5116, %vm5121
        %vm5132 = vmand %vm5117, %vm5121
        %vm5133 = vmand %vm5118, %vm5121
        %vm5134 = vmand %vm5119, %vm5121
        %v5135 = vmax.f32 %v3296, %v4228
        %v5136 = vmax.f32 %v3297, %v4229
        %v5137 = vmax.f32 %v3298, %v4230
        %v5138 = vmax.f32 %v3299, %v4231
        %v5139 = vmax.f32 %v3300, %v4232
        %v5140 = vmax.f32 %v3301, %v4233
        %v5141 = vmax.f32 %v3302, %v4234
        %v5142 = vmax.f32 %v3303, %v4235
        %v5143 = vmax.f32 %v3304, %v4236
        %v5144 = vmax.f32 %v3305, %v4237
        %v5145 = vmax.f32 %v3306, %v4238
        %v5146 = vmax.f32 %v3307, %v4239
        %v5147 = vmax.f32 %v3308, %v4240
        %v5148 = vmax.f32 %v3309, %v4241
        %v5149 = vmax.f32 %v3310, %v4242
        %v5150 = vmax.f32 %v3311, %v4243
        %v5151 = vmax.f32 %v3312, %v4244
        %v5152 = vmax.f32 %v3313, %v4245
        %v5153 = vmax.f32 %v3314, %v4246
        %v5154 = vmax.f32 %v3315, %v4247
        %v5155 = vmax.f32 %v3316, %v4248
        %v5156 = vmax.f32 %v3317, %v4249
        %v5157 = vmax.f32 %v3318, %v4250
        %v5158 = vmax.f32 %v3319, %v4251
        %v5159 = vmax.f32 %v3320, %v4252
        %v5160 = vmax.f32 %v3321, %v4253
        %v5161 = vmax.f32 %v3322, %v4254
        %v5162 = vmax.f32 %v3323, %v4255
        %v5163 = vmax.f32 %v3324, %v4256
        %v5164 = vmax.f32 %v3325, %v4257
        %v5165 = vmax.f32 %v3326, %v4258
        %v5166 = vmax.f32 %v3327, %v4259
        %v5167 = vmax.f32 %v3328, %v4260
        %v5168 = vmax.f32 %v3329, %v4261
        %v5169 = vmax.f32 %v3330, %v4262
        %v5170 = vmax.f32 %v3331, %v4263
        %v5171 = vmax.f32 %v3332, %v4264
        %v5172 = vmax.f32 %v3333, %v4265
        %v5173 = vmax.f32 %v3334, %v4266
        %v5174 = vmax.f32 %v3335, %v4267
        %v5175 = vmax.f32 %v3336, %v4268
        %v5176 = vmax.f32 %v3337, %v4269
        %v5177 = vmax.f32 %v3338, %v4270
        %v5178 = vmax.f32 %v3339, %v4271
        %v5179 = vmax.f32 %v3340, %v4272
        %v5180 = vmax.f32 %v3341, %v4273
        %v5181 = vmax.f32 %v3342, %v4274
        %v5182 = vmax.f32 %v3343, %v4275
        %v5183 = vmax.f32 %v3344, %v4276
        %v5184 = vmax.f32 %v3345, %v4277
        %v5185 = vmax.f32 %v3346, %v4278
        %v5186 = vmax.f32 %v3347, %v4279
        %v5187 = vsel %vm5122, 1, 0
        %v5188 = vsel %vm5123, 1, 0
        %v5189 = vsel %vm5124, 1, 0
        %v5190 = vsel %vm5125, 1, 0
        %v5191 = vsel %vm5126, 1, 0
        %v5192 = vsel %vm5127, 1, 0
        %v5193 = vsel %vm5128, 1, 0
        %v5194 = vsel %vm5129, 1, 0
        %v5195 = vsel %vm5130, 1, 0
        %v5196 = vsel %vm5131, 1, 0
        %v5197 = vsel %vm5132, 1, 0
        %v5198 = vsel %vm5133, 1, 0
        %v5199 = vsel %vm5134, 1, 0
        %vm5200 = vcmp.eq.s32.totalorder %v5187, 1
        %vm5201 = vcmp.eq.s32.totalorder %v5188, 1
        %vm5202 = vcmp.eq.s32.totalorder %v5189, 1
        %vm5203 = vcmp.eq.s32.totalorder %v5190, 1
        %vm5204 = vcmp.eq.s32.totalorder %v5191, 1
        %vm5205 = vcmp.eq.s32.totalorder %v5192, 1
        %vm5206 = vcmp.eq.s32.totalorder %v5193, 1
        %vm5207 = vcmp.eq.s32.totalorder %v5194, 1
        %vm5208 = vcmp.eq.s32.totalorder %v5195, 1
        %vm5209 = vcmp.eq.s32.totalorder %v5196, 1
        %vm5210 = vcmp.eq.s32.totalorder %v5197, 1
        %vm5211 = vcmp.eq.s32.totalorder %v5198, 1
        %vm5212 = vcmp.eq.s32.totalorder %v5199, 1
        %v5213 = vsel %vm5200, %v5135, %v3296
        %v5214 = vsel %vm5201, %v5136, %v3297
        %v5215 = vsel %vm5202, %v5137, %v3298
        %v5216 = vsel %vm5203, %v5138, %v3299
        %v5217 = vsel %vm5204, %v5139, %v3300
        %v5218 = vsel %vm5205, %v5140, %v3301
        %v5219 = vsel %vm5206, %v5141, %v3302
        %v5220 = vsel %vm5207, %v5142, %v3303
        %v5221 = vsel %vm5208, %v5143, %v3304
        %v5222 = vsel %vm5209, %v5144, %v3305
        %v5223 = vsel %vm5210, %v5145, %v3306
        %v5224 = vsel %vm5211, %v5146, %v3307
        %v5225 = vsel %vm5212, %v5147, %v3308
        %v5226 = vsel %vm5200, %v5148, %v3309
        %v5227 = vsel %vm5201, %v5149, %v3310
        %v5228 = vsel %vm5202, %v5150, %v3311
        %v5229 = vsel %vm5203, %v5151, %v3312
        %v5230 = vsel %vm5204, %v5152, %v3313
        %v5231 = vsel %vm5205, %v5153, %v3314
        %v5232 = vsel %vm5206, %v5154, %v3315
        %v5233 = vsel %vm5207, %v5155, %v3316
        %v5234 = vsel %vm5208, %v5156, %v3317
        %v5235 = vsel %vm5209, %v5157, %v3318
        %v5236 = vsel %vm5210, %v5158, %v3319
        %v5237 = vsel %vm5211, %v5159, %v3320
        %v5238 = vsel %vm5212, %v5160, %v3321
        %v5239 = vsel %vm5200, %v5161, %v3322
        %v5240 = vsel %vm5201, %v5162, %v3323
        %v5241 = vsel %vm5202, %v5163, %v3324
        %v5242 = vsel %vm5203, %v5164, %v3325
        %v5243 = vsel %vm5204, %v5165, %v3326
        %v5244 = vsel %vm5205, %v5166, %v3327
        %v5245 = vsel %vm5206, %v5167, %v3328
        %v5246 = vsel %vm5207, %v5168, %v3329
        %v5247 = vsel %vm5208, %v5169, %v3330
        %v5248 = vsel %vm5209, %v5170, %v3331
        %v5249 = vsel %vm5210, %v5171, %v3332
        %v5250 = vsel %vm5211, %v5172, %v3333
        %v5251 = vsel %vm5212, %v5173, %v3334
        %v5252 = vsel %vm5200, %v5174, %v3335
        %v5253 = vsel %vm5201, %v5175, %v3336
        %v5254 = vsel %vm5202, %v5176, %v3337
        %v5255 = vsel %vm5203, %v5177, %v3338
        %v5256 = vsel %vm5204, %v5178, %v3339
        %v5257 = vsel %vm5205, %v5179, %v3340
        %v5258 = vsel %vm5206, %v5180, %v3341
        %v5259 = vsel %vm5207, %v5181, %v3342
        %v5260 = vsel %vm5208, %v5182, %v3343
        %v5261 = vsel %vm5209, %v5183, %v3344
        %v5262 = vsel %vm5210, %v5184, %v3345
        %v5263 = vsel %vm5211, %v5185, %v3346
        %v5264 = vsel %vm5212, %v5186, %v3347
        %v5265 = vmul.f32 %v663, %v5213
        %v5266 = vmul.f32 %v664, %v5214
        %v5267 = vmul.f32 %v665, %v5215
        %v5268 = vmul.f32 %v666, %v5216
        %v5269 = vmul.f32 %v667, %v5217
        %v5270 = vmul.f32 %v668, %v5218
        %v5271 = vmul.f32 %v669, %v5219
        %v5272 = vmul.f32 %v670, %v5220
        %v5273 = vmul.f32 %v671, %v5221
        %v5274 = vmul.f32 %v672, %v5222
        %v5275 = vmul.f32 %v673, %v5223
        %v5276 = vmul.f32 %v674, %v5224
        %v5277 = vmul.f32 %v675, %v5225
        %v5278 = vmul.f32 %v676, %v5226
        %v5279 = vmul.f32 %v677, %v5227
        %v5280 = vmul.f32 %v678, %v5228
        %v5281 = vmul.f32 %v679, %v5229
        %v5282 = vmul.f32 %v680, %v5230
        %v5283 = vmul.f32 %v681, %v5231
        %v5284 = vmul.f32 %v682, %v5232
        %v5285 = vmul.f32 %v683, %v5233
        %v5286 = vmul.f32 %v684, %v5234
        %v5287 = vmul.f32 %v685, %v5235
        %v5288 = vmul.f32 %v686, %v5236
        %v5289 = vmul.f32 %v687, %v5237
        %v5290 = vmul.f32 %v688, %v5238
        %v5291 = vmul.f32 %v689, %v5239
        %v5292 = vmul.f32 %v690, %v5240
        %v5293 = vmul.f32 %v691, %v5241
        %v5294 = vmul.f32 %v692, %v5242
        %v5295 = vmul.f32 %v693, %v5243
        %v5296 = vmul.f32 %v694, %v5244
        %v5297 = vmul.f32 %v695, %v5245
        %v5298 = vmul.f32 %v696, %v5246
        %v5299 = vmul.f32 %v697, %v5247
        %v5300 = vmul.f32 %v698, %v5248
        %v5301 = vmul.f32 %v699, %v5249
        %v5302 = vmul.f32 %v700, %v5250
        %v5303 = vmul.f32 %v701, %v5251
        %v5304 = vmul.f32 %v702, %v5252
        %v5305 = vmul.f32 %v703, %v5253
        %v5306 = vmul.f32 %v704, %v5254
        %v5307 = vmul.f32 %v705, %v5255
        %v5308 = vmul.f32 %v706, %v5256
        %v5309 = vmul.f32 %v707, %v5257
        %v5310 = vmul.f32 %v708, %v5258
        %v5311 = vmul.f32 %v709, %v5259
        %v5312 = vmul.f32 %v710, %v5260
        %v5313 = vmul.f32 %v711, %v5261
        %v5314 = vmul.f32 %v712, %v5262
        %v5315 = vmul.f32 %v713, %v5263
        %v5316 = vmul.f32 %v714, %v5264
        %v5317 = vsel %vm841, %v5265, 0.0
        %5318 = vadd.xlane.f32.xlu0 %v5317
        %v5319 = vpop.xlane.xlu0 %5318
        %v5320 = vsel %vm841, %v5266, 0.0
        %5321 = vadd.xlane.f32.xlu0 %v5320
        %v5322 = vpop.xlane.xlu0 %5321
        %v5323 = vsel %vm841, %v5267, 0.0
        %5324 = vadd.xlane.f32.xlu0 %v5323
        %v5325 = vpop.xlane.xlu0 %5324
        %v5326 = vsel %vm841, %v5268, 0.0
        %5327 = vadd.xlane.f32.xlu0 %v5326
        %v5328 = vpop.xlane.xlu0 %5327
        %v5329 = vsel %vm841, %v5269, 0.0
        %5330 = vadd.xlane.f32.xlu0 %v5329
        %v5331 = vpop.xlane.xlu0 %5330
        %v5332 = vsel %vm841, %v5270, 0.0
        %5333 = vadd.xlane.f32.xlu0 %v5332
        %v5334 = vpop.xlane.xlu0 %5333
        %v5335 = vsel %vm841, %v5271, 0.0
        %5336 = vadd.xlane.f32.xlu0 %v5335
        %v5337 = vpop.xlane.xlu0 %5336
        %v5338 = vsel %vm841, %v5272, 0.0
        %5339 = vadd.xlane.f32.xlu0 %v5338
        %v5340 = vpop.xlane.xlu0 %5339
        %v5341 = vsel %vm841, %v5273, 0.0
        %5342 = vadd.xlane.f32.xlu0 %v5341
        %v5343 = vpop.xlane.xlu0 %5342
        %v5344 = vsel %vm841, %v5274, 0.0
        %5345 = vadd.xlane.f32.xlu0 %v5344
        %v5346 = vpop.xlane.xlu0 %5345
        %v5347 = vsel %vm841, %v5275, 0.0
        %5348 = vadd.xlane.f32.xlu0 %v5347
        %v5349 = vpop.xlane.xlu0 %5348
        %v5350 = vsel %vm841, %v5276, 0.0
        %5351 = vadd.xlane.f32.xlu0 %v5350
        %v5352 = vpop.xlane.xlu0 %5351
        %v5353 = vsel %vm2759, %v5277, 0.0
        %5354 = vadd.xlane.f32.xlu0 %v5353
        %v5355 = vpop.xlane.xlu0 %5354
        %v5356 = vsel %vm841, %v5278, 0.0
        %5357 = vadd.xlane.f32.xlu0 %v5356
        %v5358 = vpop.xlane.xlu0 %5357
        %v5359 = vsel %vm841, %v5279, 0.0
        %5360 = vadd.xlane.f32.xlu0 %v5359
        %v5361 = vpop.xlane.xlu0 %5360
        %v5362 = vsel %vm841, %v5280, 0.0
        %5363 = vadd.xlane.f32.xlu0 %v5362
        %v5364 = vpop.xlane.xlu0 %5363
        %v5365 = vsel %vm841, %v5281, 0.0
        %5366 = vadd.xlane.f32.xlu0 %v5365
        %v5367 = vpop.xlane.xlu0 %5366
        %v5368 = vsel %vm841, %v5282, 0.0
        %5369 = vadd.xlane.f32.xlu0 %v5368
        %v5370 = vpop.xlane.xlu0 %5369
        %v5371 = vsel %vm841, %v5283, 0.0
        %5372 = vadd.xlane.f32.xlu0 %v5371
        %v5373 = vpop.xlane.xlu0 %5372
        %v5374 = vsel %vm841, %v5284, 0.0
        %5375 = vadd.xlane.f32.xlu0 %v5374
        %v5376 = vpop.xlane.xlu0 %5375
        %v5377 = vsel %vm841, %v5285, 0.0
        %5378 = vadd.xlane.f32.xlu0 %v5377
        %v5379 = vpop.xlane.xlu0 %5378
        %v5380 = vsel %vm841, %v5286, 0.0
        %5381 = vadd.xlane.f32.xlu0 %v5380
        %v5382 = vpop.xlane.xlu0 %5381
        %v5383 = vsel %vm841, %v5287, 0.0
        %5384 = vadd.xlane.f32.xlu0 %v5383
        %v5385 = vpop.xlane.xlu0 %5384
        %v5386 = vsel %vm841, %v5288, 0.0
        %5387 = vadd.xlane.f32.xlu0 %v5386
        %v5388 = vpop.xlane.xlu0 %5387
        %v5389 = vsel %vm841, %v5289, 0.0
        %5390 = vadd.xlane.f32.xlu0 %v5389
        %v5391 = vpop.xlane.xlu0 %5390
        %v5392 = vsel %vm2759, %v5290, 0.0
        %5393 = vadd.xlane.f32.xlu0 %v5392
        %v5394 = vpop.xlane.xlu0 %5393
        %v5395 = vsel %vm841, %v5291, 0.0
        %5396 = vadd.xlane.f32.xlu0 %v5395
        %v5397 = vpop.xlane.xlu0 %5396
        %v5398 = vsel %vm841, %v5292, 0.0
        %5399 = vadd.xlane.f32.xlu0 %v5398
        %v5400 = vpop.xlane.xlu0 %5399
        %v5401 = vsel %vm841, %v5293, 0.0
        %5402 = vadd.xlane.f32.xlu0 %v5401
        %v5403 = vpop.xlane.xlu0 %5402
        %v5404 = vsel %vm841, %v5294, 0.0
        %5405 = vadd.xlane.f32.xlu0 %v5404
        %v5406 = vpop.xlane.xlu0 %5405
        %v5407 = vsel %vm841, %v5295, 0.0
        %5408 = vadd.xlane.f32.xlu0 %v5407
        %v5409 = vpop.xlane.xlu0 %5408
        %v5410 = vsel %vm841, %v5296, 0.0
        %5411 = vadd.xlane.f32.xlu0 %v5410
        %v5412 = vpop.xlane.xlu0 %5411
        %v5413 = vsel %vm841, %v5297, 0.0
        %5414 = vadd.xlane.f32.xlu0 %v5413
        %v5415 = vpop.xlane.xlu0 %5414
        %v5416 = vsel %vm841, %v5298, 0.0
        %5417 = vadd.xlane.f32.xlu0 %v5416
        %v5418 = vpop.xlane.xlu0 %5417
        %v5419 = vsel %vm841, %v5299, 0.0
        %5420 = vadd.xlane.f32.xlu0 %v5419
        %v5421 = vpop.xlane.xlu0 %5420
        %v5422 = vsel %vm841, %v5300, 0.0
        %5423 = vadd.xlane.f32.xlu0 %v5422
        %v5424 = vpop.xlane.xlu0 %5423
        %v5425 = vsel %vm841, %v5301, 0.0
        %5426 = vadd.xlane.f32.xlu0 %v5425
        %v5427 = vpop.xlane.xlu0 %5426
        %v5428 = vsel %vm841, %v5302, 0.0
        %5429 = vadd.xlane.f32.xlu0 %v5428
        %v5430 = vpop.xlane.xlu0 %5429
        %v5431 = vsel %vm2759, %v5303, 0.0
        %5432 = vadd.xlane.f32.xlu0 %v5431
        %v5433 = vpop.xlane.xlu0 %5432
        %v5434 = vsel %vm841, %v5304, 0.0
        %5435 = vadd.xlane.f32.xlu0 %v5434
        %v5436 = vpop.xlane.xlu0 %5435
        %v5437 = vsel %vm841, %v5305, 0.0
        %5438 = vadd.xlane.f32.xlu0 %v5437
        %v5439 = vpop.xlane.xlu0 %5438
        %v5440 = vsel %vm841, %v5306, 0.0
        %5441 = vadd.xlane.f32.xlu0 %v5440
        %v5442 = vpop.xlane.xlu0 %5441
        %v5443 = vsel %vm841, %v5307, 0.0
        %5444 = vadd.xlane.f32.xlu0 %v5443
        %v5445 = vpop.xlane.xlu0 %5444
        %v5446 = vsel %vm841, %v5308, 0.0
        %5447 = vadd.xlane.f32.xlu0 %v5446
        %v5448 = vpop.xlane.xlu0 %5447
        %v5449 = vsel %vm841, %v5309, 0.0
        %5450 = vadd.xlane.f32.xlu0 %v5449
        %v5451 = vpop.xlane.xlu0 %5450
        %v5452 = vsel %vm841, %v5310, 0.0
        %5453 = vadd.xlane.f32.xlu0 %v5452
        %v5454 = vpop.xlane.xlu0 %5453
        %v5455 = vsel %vm841, %v5311, 0.0
        %5456 = vadd.xlane.f32.xlu0 %v5455
        %v5457 = vpop.xlane.xlu0 %5456
        %v5458 = vsel %vm841, %v5312, 0.0
        %5459 = vadd.xlane.f32.xlu0 %v5458
        %v5460 = vpop.xlane.xlu0 %5459
        %v5461 = vsel %vm841, %v5313, 0.0
        %5462 = vadd.xlane.f32.xlu0 %v5461
        %v5463 = vpop.xlane.xlu0 %5462
        %v5464 = vsel %vm841, %v5314, 0.0
        %5465 = vadd.xlane.f32.xlu0 %v5464
        %v5466 = vpop.xlane.xlu0 %5465
        %v5467 = vsel %vm841, %v5315, 0.0
        %5468 = vadd.xlane.f32.xlu0 %v5467
        %v5469 = vpop.xlane.xlu0 %5468
        %v5470 = vsel %vm2759, %v5316, 0.0
        %5471 = vadd.xlane.f32.xlu0 %v5470
        %v5472 = vpop.xlane.xlu0 %5471
        %v5473 = vmul.f32 %v528, %v5319
        %v5474 = vmul.f32 %v529, %v5322
        %v5475 = vmul.f32 %v530, %v5325
        %v5476 = vmul.f32 %v531, %v5328
        %v5477 = vmul.f32 %v532, %v5331
        %v5478 = vmul.f32 %v533, %v5334
        %v5479 = vmul.f32 %v534, %v5337
        %v5480 = vmul.f32 %v535, %v5340
        %v5481 = vmul.f32 %v536, %v5343
        %v5482 = vmul.f32 %v537, %v5346
        %v5483 = vmul.f32 %v538, %v5349
        %v5484 = vmul.f32 %v539, %v5352
        %v5485 = vmul.f32 %v540, %v5355
        %v5486 = vmul.f32 %v541, %v5358
        %v5487 = vmul.f32 %v542, %v5361
        %v5488 = vmul.f32 %v543, %v5364
        %v5489 = vmul.f32 %v544, %v5367
        %v5490 = vmul.f32 %v545, %v5370
        %v5491 = vmul.f32 %v546, %v5373
        %v5492 = vmul.f32 %v547, %v5376
        %v5493 = vmul.f32 %v548, %v5379
        %v5494 = vmul.f32 %v549, %v5382
        %v5495 = vmul.f32 %v550, %v5385
        %v5496 = vmul.f32 %v551, %v5388
        %v5497 = vmul.f32 %v552, %v5391
        %v5498 = vmul.f32 %v553, %v5394
        %v5499 = vmul.f32 %v554, %v5397
        %v5500 = vmul.f32 %v555, %v5400
        %v5501 = vmul.f32 %v556, %v5403
        %v5502 = vmul.f32 %v557, %v5406
        %v5503 = vmul.f32 %v558, %v5409
        %v5504 = vmul.f32 %v559, %v5412
        %v5505 = vmul.f32 %v560, %v5415
        %v5506 = vmul.f32 %v561, %v5418
        %v5507 = vmul.f32 %v562, %v5421
        %v5508 = vmul.f32 %v563, %v5424
        %v5509 = vmul.f32 %v564, %v5427
        %v5510 = vmul.f32 %v565, %v5430
        %v5511 = vmul.f32 %v566, %v5433
        %v5512 = vmul.f32 %v567, %v5436
        %v5513 = vmul.f32 %v568, %v5439
        %v5514 = vmul.f32 %v569, %v5442
        %v5515 = vmul.f32 %v570, %v5445
        %v5516 = vmul.f32 %v571, %v5448
        %v5517 = vmul.f32 %v572, %v5451
        %v5518 = vmul.f32 %v573, %v5454
        %v5519 = vmul.f32 %v574, %v5457
        %v5520 = vmul.f32 %v575, %v5460
        %v5521 = vmul.f32 %v576, %v5463
        %v5522 = vmul.f32 %v577, %v5466
        %v5523 = vmul.f32 %v578, %v5469
        %v5524 = vmul.f32 %v579, %v5472
        %v5525 = vsel %vm1389, %v5473, 0.0
        %v5526 = vsel %vm1389, %v5474, 0.0
        %v5527 = vadd.f32 %v5525, %v5526
        %v5528 = vsel %vm1389, %v5475, 0.0
        %v5529 = vadd.f32 %v5527, %v5528
        %v5530 = vsel %vm1389, %v5476, 0.0
        %v5531 = vadd.f32 %v5529, %v5530
        %v5532 = vsel %vm1389, %v5477, 0.0
        %v5533 = vadd.f32 %v5531, %v5532
        %v5534 = vsel %vm1389, %v5478, 0.0
        %v5535 = vadd.f32 %v5533, %v5534
        %v5536 = vsel %vm1389, %v5479, 0.0
        %v5537 = vadd.f32 %v5535, %v5536
        %v5538 = vsel %vm1389, %v5480, 0.0
        %v5539 = vadd.f32 %v5537, %v5538
        %v5540 = vsel %vm1389, %v5481, 0.0
        %v5541 = vadd.f32 %v5539, %v5540
        %v5542 = vsel %vm1389, %v5482, 0.0
        %v5543 = vadd.f32 %v5541, %v5542
        %v5544 = vsel %vm1389, %v5483, 0.0
        %v5545 = vadd.f32 %v5543, %v5544
        %v5546 = vsel %vm1389, %v5484, 0.0
        %v5547 = vadd.f32 %v5545, %v5546
        %v5548 = vsel %vm1413, %v5485, 0.0
        %v5549 = vadd.f32 %v5547, %v5548
        %v5550 = vsel %vm1389, %v5486, 0.0
        %v5551 = vadd.f32 %v5549, %v5550
        %v5552 = vsel %vm1389, %v5487, 0.0
        %v5553 = vadd.f32 %v5551, %v5552
        %v5554 = vsel %vm1389, %v5488, 0.0
        %v5555 = vadd.f32 %v5553, %v5554
        %v5556 = vsel %vm1389, %v5489, 0.0
        %v5557 = vadd.f32 %v5555, %v5556
        %v5558 = vsel %vm1389, %v5490, 0.0
        %v5559 = vadd.f32 %v5557, %v5558
        %v5560 = vsel %vm1389, %v5491, 0.0
        %v5561 = vadd.f32 %v5559, %v5560
        %v5562 = vsel %vm1389, %v5492, 0.0
        %v5563 = vadd.f32 %v5561, %v5562
        %v5564 = vsel %vm1389, %v5493, 0.0
        %v5565 = vadd.f32 %v5563, %v5564
        %v5566 = vsel %vm1389, %v5494, 0.0
        %v5567 = vadd.f32 %v5565, %v5566
        %v5568 = vsel %vm1389, %v5495, 0.0
        %v5569 = vadd.f32 %v5567, %v5568
        %v5570 = vsel %vm1389, %v5496, 0.0
        %v5571 = vadd.f32 %v5569, %v5570
        %v5572 = vsel %vm1389, %v5497, 0.0
        %v5573 = vadd.f32 %v5571, %v5572
        %v5574 = vsel %vm1413, %v5498, 0.0
        %v5575 = vadd.f32 %v5573, %v5574
        %v5576 = vsel %vm1389, %v5499, 0.0
        %v5577 = vadd.f32 %v5575, %v5576
        %v5578 = vsel %vm1389, %v5500, 0.0
        %v5579 = vadd.f32 %v5577, %v5578
        %v5580 = vsel %vm1389, %v5501, 0.0
        %v5581 = vadd.f32 %v5579, %v5580
        %v5582 = vsel %vm1389, %v5502, 0.0
        %v5583 = vadd.f32 %v5581, %v5582
        %v5584 = vsel %vm1389, %v5503, 0.0
        %v5585 = vadd.f32 %v5583, %v5584
        %v5586 = vsel %vm1389, %v5504, 0.0
        %v5587 = vadd.f32 %v5585, %v5586
        %v5588 = vsel %vm1389, %v5505, 0.0
        %v5589 = vadd.f32 %v5587, %v5588
        %v5590 = vsel %vm1389, %v5506, 0.0
        %v5591 = vadd.f32 %v5589, %v5590
        %v5592 = vsel %vm1389, %v5507, 0.0
        %v5593 = vadd.f32 %v5591, %v5592
        %v5594 = vsel %vm1389, %v5508, 0.0
        %v5595 = vadd.f32 %v5593, %v5594
        %v5596 = vsel %vm1389, %v5509, 0.0
        %v5597 = vadd.f32 %v5595, %v5596
        %v5598 = vsel %vm1389, %v5510, 0.0
        %v5599 = vadd.f32 %v5597, %v5598
        %v5600 = vsel %vm1413, %v5511, 0.0
        %v5601 = vadd.f32 %v5599, %v5600
        %v5602 = vsel %vm1389, %v5512, 0.0
        %v5603 = vadd.f32 %v5601, %v5602
        %v5604 = vsel %vm1389, %v5513, 0.0
        %v5605 = vadd.f32 %v5603, %v5604
        %v5606 = vsel %vm1389, %v5514, 0.0
        %v5607 = vadd.f32 %v5605, %v5606
        %v5608 = vsel %vm1389, %v5515, 0.0
        %v5609 = vadd.f32 %v5607, %v5608
        %v5610 = vsel %vm1389, %v5516, 0.0
        %v5611 = vadd.f32 %v5609, %v5610
        %v5612 = vsel %vm1389, %v5517, 0.0
        %v5613 = vadd.f32 %v5611, %v5612
        %v5614 = vsel %vm1389, %v5518, 0.0
        %v5615 = vadd.f32 %v5613, %v5614
        %v5616 = vsel %vm1389, %v5519, 0.0
        %v5617 = vadd.f32 %v5615, %v5616
        %v5618 = vsel %vm1389, %v5520, 0.0
        %v5619 = vadd.f32 %v5617, %v5618
        %v5620 = vsel %vm1389, %v5521, 0.0
        %v5621 = vadd.f32 %v5619, %v5620
        %v5622 = vsel %vm1389, %v5522, 0.0
        %v5623 = vadd.f32 %v5621, %v5622
        %v5624 = vsel %vm1389, %v5523, 0.0
        %v5625 = vadd.f32 %v5623, %v5624
        %v5626 = vsel %vm1413, %v5524, 0.0
        %v5627 = vadd.f32 %v5625, %v5626
        %5628 = vadd.xlane.f32.xlu0 %v5627
        %v5629 = vpop.xlane.xlu0 %5628
        %v5630 = vrot.slane %v5629, 4
        %v5631 = vadd.f32 %v5629, %v5630
        %v5632 = vrot.slane %v5631, 2
        %v5633 = vadd.f32 %v5631, %v5632
        %v5634 = vrot.slane %v5633, 1
        %v5635 = vadd.f32 %v5633, %v5634
        %s5636 = vtos %v5635
        %v5637 = vsub.f32 %v4284, %v3400
        %v5638 = vsub.f32 %v4285, %v3401
        %v5639 = vsub.f32 %v4286, %v3402
        %v5640 = vsub.f32 %v4287, %v3403
        %v5641 = vsub.f32 %v4288, %v3404
        %v5642 = vsub.f32 %v4289, %v3405
        %v5643 = vsub.f32 %v4290, %v3406
        %v5644 = vsub.f32 %v4291, %v3407
        %v5645 = vsub.f32 %v4292, %v3408
        %v5646 = vsub.f32 %v4293, %v3409
        %v5647 = vsub.f32 %v4294, %v3410
        %v5648 = vsub.f32 %v4295, %v3411
        %v5649 = vsub.f32 %v4296, %v3412
        %v5650 = vsub.f32 %v4297, %v3413
        %v5651 = vsub.f32 %v4298, %v3414
        %v5652 = vsub.f32 %v4299, %v3415
        %v5653 = vsub.f32 %v4300, %v3416
        %v5654 = vsub.f32 %v4301, %v3417
        %v5655 = vsub.f32 %v4302, %v3418
        %v5656 = vsub.f32 %v4303, %v3419
        %v5657 = vsub.f32 %v4304, %v3420
        %v5658 = vsub.f32 %v4305, %v3421
        %v5659 = vsub.f32 %v4306, %v3422
        %v5660 = vsub.f32 %v4307, %v3423
        %v5661 = vsub.f32 %v4308, %v3424
        %v5662 = vsub.f32 %v4309, %v3425
        %v5663 = vsub.f32 %v4310, %v3426
        %v5664 = vsub.f32 %v4311, %v3427
        %v5665 = vsub.f32 %v4312, %v3428
        %v5666 = vsub.f32 %v4313, %v3429
        %v5667 = vsub.f32 %v4314, %v3430
        %v5668 = vsub.f32 %v4315, %v3431
        %v5669 = vsub.f32 %v4316, %v3432
        %v5670 = vsub.f32 %v4317, %v3433
        %v5671 = vsub.f32 %v4318, %v3434
        %v5672 = vsub.f32 %v4319, %v3435
        %v5673 = vsub.f32 %v4320, %v3436
        %v5674 = vsub.f32 %v4321, %v3437
        %v5675 = vsub.f32 %v4322, %v3438
        %v5676 = vsub.f32 %v4323, %v3439
        %v5677 = vsub.f32 %v4324, %v3440
        %v5678 = vsub.f32 %v4325, %v3441
        %v5679 = vsub.f32 %v4326, %v3442
        %v5680 = vsub.f32 %v4327, %v3443
        %v5681 = vsub.f32 %v4328, %v3444
        %v5682 = vsub.f32 %v4329, %v3445
        %v5683 = vsub.f32 %v4330, %v3446
        %v5684 = vsub.f32 %v4331, %v3447
        %v5685 = vsub.f32 %v4332, %v3448
        %v5686 = vsub.f32 %v4333, %v3449
        %v5687 = vsub.f32 %v4334, %v3450
        %v5688 = vsub.f32 %v4335, %v3451
        %v5689 = vand.u32 2147483647, %v5637
        %v5690 = vand.u32 2147483647, %v5638
        %v5691 = vand.u32 2147483647, %v5639
        %v5692 = vand.u32 2147483647, %v5640
        %v5693 = vand.u32 2147483647, %v5641
        %v5694 = vand.u32 2147483647, %v5642
        %v5695 = vand.u32 2147483647, %v5643
        %v5696 = vand.u32 2147483647, %v5644
        %v5697 = vand.u32 2147483647, %v5645
        %v5698 = vand.u32 2147483647, %v5646
        %v5699 = vand.u32 2147483647, %v5647
        %v5700 = vand.u32 2147483647, %v5648
        %v5701 = vand.u32 2147483647, %v5649
        %v5702 = vand.u32 2147483647, %v5650
        %v5703 = vand.u32 2147483647, %v5651
        %v5704 = vand.u32 2147483647, %v5652
        %v5705 = vand.u32 2147483647, %v5653
        %v5706 = vand.u32 2147483647, %v5654
        %v5707 = vand.u32 2147483647, %v5655
        %v5708 = vand.u32 2147483647, %v5656
        %v5709 = vand.u32 2147483647, %v5657
        %v5710 = vand.u32 2147483647, %v5658
        %v5711 = vand.u32 2147483647, %v5659
        %v5712 = vand.u32 2147483647, %v5660
        %v5713 = vand.u32 2147483647, %v5661
        %v5714 = vand.u32 2147483647, %v5662
        %v5715 = vand.u32 2147483647, %v5663
        %v5716 = vand.u32 2147483647, %v5664
        %v5717 = vand.u32 2147483647, %v5665
        %v5718 = vand.u32 2147483647, %v5666
        %v5719 = vand.u32 2147483647, %v5667
        %v5720 = vand.u32 2147483647, %v5668
        %v5721 = vand.u32 2147483647, %v5669
        %v5722 = vand.u32 2147483647, %v5670
        %v5723 = vand.u32 2147483647, %v5671
        %v5724 = vand.u32 2147483647, %v5672
        %v5725 = vand.u32 2147483647, %v5673
        %v5726 = vand.u32 2147483647, %v5674
        %v5727 = vand.u32 2147483647, %v5675
        %v5728 = vand.u32 2147483647, %v5676
        %v5729 = vand.u32 2147483647, %v5677
        %v5730 = vand.u32 2147483647, %v5678
        %v5731 = vand.u32 2147483647, %v5679
        %v5732 = vand.u32 2147483647, %v5680
        %v5733 = vand.u32 2147483647, %v5681
        %v5734 = vand.u32 2147483647, %v5682
        %v5735 = vand.u32 2147483647, %v5683
        %v5736 = vand.u32 2147483647, %v5684
        %v5737 = vand.u32 2147483647, %v5685
        %v5738 = vand.u32 2147483647, %v5686
        %v5739 = vand.u32 2147483647, %v5687
        %v5740 = vand.u32 2147483647, %v5688
        %v5741 = vmul.f32 %v731, %v5689
        %v5742 = vmul.f32 %v732, %v5690
        %v5743 = vmul.f32 %v733, %v5691
        %v5744 = vmul.f32 %v734, %v5692
        %v5745 = vmul.f32 %v735, %v5693
        %v5746 = vmul.f32 %v736, %v5694
        %v5747 = vmul.f32 %v737, %v5695
        %v5748 = vmul.f32 %v738, %v5696
        %v5749 = vmul.f32 %v739, %v5697
        %v5750 = vmul.f32 %v740, %v5698
        %v5751 = vmul.f32 %v741, %v5699
        %v5752 = vmul.f32 %v742, %v5700
        %v5753 = vmul.f32 %v743, %v5701
        %v5754 = vmul.f32 %v744, %v5702
        %v5755 = vmul.f32 %v745, %v5703
        %v5756 = vmul.f32 %v746, %v5704
        %v5757 = vmul.f32 %v747, %v5705
        %v5758 = vmul.f32 %v748, %v5706
        %v5759 = vmul.f32 %v749, %v5707
        %v5760 = vmul.f32 %v750, %v5708
        %v5761 = vmul.f32 %v751, %v5709
        %v5762 = vmul.f32 %v752, %v5710
        %v5763 = vmul.f32 %v753, %v5711
        %v5764 = vmul.f32 %v754, %v5712
        %v5765 = vmul.f32 %v755, %v5713
        %v5766 = vmul.f32 %v756, %v5714
        %v5767 = vmul.f32 %v757, %v5715
        %v5768 = vmul.f32 %v758, %v5716
        %v5769 = vmul.f32 %v759, %v5717
        %v5770 = vmul.f32 %v760, %v5718
        %v5771 = vmul.f32 %v761, %v5719
        %v5772 = vmul.f32 %v762, %v5720
        %v5773 = vmul.f32 %v763, %v5721
        %v5774 = vmul.f32 %v764, %v5722
        %v5775 = vmul.f32 %v765, %v5723
        %v5776 = vmul.f32 %v766, %v5724
        %v5777 = vmul.f32 %v767, %v5725
        %v5778 = vmul.f32 %v768, %v5726
        %v5779 = vmul.f32 %v769, %v5727
        %v5780 = vmul.f32 %v770, %v5728
        %v5781 = vmul.f32 %v771, %v5729
        %v5782 = vmul.f32 %v772, %v5730
        %v5783 = vmul.f32 %v773, %v5731
        %v5784 = vmul.f32 %v774, %v5732
        %v5785 = vmul.f32 %v775, %v5733
        %v5786 = vmul.f32 %v776, %v5734
        %v5787 = vmul.f32 %v777, %v5735
        %v5788 = vmul.f32 %v778, %v5736
        %v5789 = vmul.f32 %v779, %v5737
        %v5790 = vmul.f32 %v780, %v5738
        %v5791 = vmul.f32 %v781, %v5739
        %v5792 = vmul.f32 %v782, %v5740
        %v5793 = vsel %vm841, %v5741, 0.0
        %5794 = vadd.xlane.f32.xlu0 %v5793
        %v5795 = vpop.xlane.xlu0 %5794
        %v5796 = vsel %vm841, %v5742, 0.0
        %5797 = vadd.xlane.f32.xlu0 %v5796
        %v5798 = vpop.xlane.xlu0 %5797
        %v5799 = vsel %vm841, %v5743, 0.0
        %5800 = vadd.xlane.f32.xlu0 %v5799
        %v5801 = vpop.xlane.xlu0 %5800
        %v5802 = vsel %vm841, %v5744, 0.0
        %5803 = vadd.xlane.f32.xlu0 %v5802
        %v5804 = vpop.xlane.xlu0 %5803
        %v5805 = vsel %vm841, %v5745, 0.0
        %5806 = vadd.xlane.f32.xlu0 %v5805
        %v5807 = vpop.xlane.xlu0 %5806
        %v5808 = vsel %vm841, %v5746, 0.0
        %5809 = vadd.xlane.f32.xlu0 %v5808
        %v5810 = vpop.xlane.xlu0 %5809
        %v5811 = vsel %vm841, %v5747, 0.0
        %5812 = vadd.xlane.f32.xlu0 %v5811
        %v5813 = vpop.xlane.xlu0 %5812
        %v5814 = vsel %vm841, %v5748, 0.0
        %5815 = vadd.xlane.f32.xlu0 %v5814
        %v5816 = vpop.xlane.xlu0 %5815
        %v5817 = vsel %vm841, %v5749, 0.0
        %5818 = vadd.xlane.f32.xlu0 %v5817
        %v5819 = vpop.xlane.xlu0 %5818
        %v5820 = vsel %vm841, %v5750, 0.0
        %5821 = vadd.xlane.f32.xlu0 %v5820
        %v5822 = vpop.xlane.xlu0 %5821
        %v5823 = vsel %vm841, %v5751, 0.0
        %5824 = vadd.xlane.f32.xlu0 %v5823
        %v5825 = vpop.xlane.xlu0 %5824
        %v5826 = vsel %vm841, %v5752, 0.0
        %5827 = vadd.xlane.f32.xlu0 %v5826
        %v5828 = vpop.xlane.xlu0 %5827
        %v5829 = vsel %vm2759, %v5753, 0.0
        %5830 = vadd.xlane.f32.xlu0 %v5829
        %v5831 = vpop.xlane.xlu0 %5830
        %v5832 = vsel %vm841, %v5754, 0.0
        %5833 = vadd.xlane.f32.xlu0 %v5832
        %v5834 = vpop.xlane.xlu0 %5833
        %v5835 = vsel %vm841, %v5755, 0.0
        %5836 = vadd.xlane.f32.xlu0 %v5835
        %v5837 = vpop.xlane.xlu0 %5836
        %v5838 = vsel %vm841, %v5756, 0.0
        %5839 = vadd.xlane.f32.xlu0 %v5838
        %v5840 = vpop.xlane.xlu0 %5839
        %v5841 = vsel %vm841, %v5757, 0.0
        %5842 = vadd.xlane.f32.xlu0 %v5841
        %v5843 = vpop.xlane.xlu0 %5842
        %v5844 = vsel %vm841, %v5758, 0.0
        %5845 = vadd.xlane.f32.xlu0 %v5844
        %v5846 = vpop.xlane.xlu0 %5845
        %v5847 = vsel %vm841, %v5759, 0.0
        %5848 = vadd.xlane.f32.xlu0 %v5847
        %v5849 = vpop.xlane.xlu0 %5848
        %v5850 = vsel %vm841, %v5760, 0.0
        %5851 = vadd.xlane.f32.xlu0 %v5850
        %v5852 = vpop.xlane.xlu0 %5851
        %v5853 = vsel %vm841, %v5761, 0.0
        %5854 = vadd.xlane.f32.xlu0 %v5853
        %v5855 = vpop.xlane.xlu0 %5854
        %v5856 = vsel %vm841, %v5762, 0.0
        %5857 = vadd.xlane.f32.xlu0 %v5856
        %v5858 = vpop.xlane.xlu0 %5857
        %v5859 = vsel %vm841, %v5763, 0.0
        %5860 = vadd.xlane.f32.xlu0 %v5859
        %v5861 = vpop.xlane.xlu0 %5860
        %v5862 = vsel %vm841, %v5764, 0.0
        %5863 = vadd.xlane.f32.xlu0 %v5862
        %v5864 = vpop.xlane.xlu0 %5863
        %v5865 = vsel %vm841, %v5765, 0.0
        %5866 = vadd.xlane.f32.xlu0 %v5865
        %v5867 = vpop.xlane.xlu0 %5866
        %v5868 = vsel %vm2759, %v5766, 0.0
        %5869 = vadd.xlane.f32.xlu0 %v5868
        %v5870 = vpop.xlane.xlu0 %5869
        %v5871 = vsel %vm841, %v5767, 0.0
        %5872 = vadd.xlane.f32.xlu0 %v5871
        %v5873 = vpop.xlane.xlu0 %5872
        %v5874 = vsel %vm841, %v5768, 0.0
        %5875 = vadd.xlane.f32.xlu0 %v5874
        %v5876 = vpop.xlane.xlu0 %5875
        %v5877 = vsel %vm841, %v5769, 0.0
        %5878 = vadd.xlane.f32.xlu0 %v5877
        %v5879 = vpop.xlane.xlu0 %5878
        %v5880 = vsel %vm841, %v5770, 0.0
        %5881 = vadd.xlane.f32.xlu0 %v5880
        %v5882 = vpop.xlane.xlu0 %5881
        %v5883 = vsel %vm841, %v5771, 0.0
        %5884 = vadd.xlane.f32.xlu0 %v5883
        %v5885 = vpop.xlane.xlu0 %5884
        %v5886 = vsel %vm841, %v5772, 0.0
        %5887 = vadd.xlane.f32.xlu0 %v5886
        %v5888 = vpop.xlane.xlu0 %5887
        %v5889 = vsel %vm841, %v5773, 0.0
        %5890 = vadd.xlane.f32.xlu0 %v5889
        %v5891 = vpop.xlane.xlu0 %5890
        %v5892 = vsel %vm841, %v5774, 0.0
        %5893 = vadd.xlane.f32.xlu0 %v5892
        %v5894 = vpop.xlane.xlu0 %5893
        %v5895 = vsel %vm841, %v5775, 0.0
        %5896 = vadd.xlane.f32.xlu0 %v5895
        %v5897 = vpop.xlane.xlu0 %5896
        %v5898 = vsel %vm841, %v5776, 0.0
        %5899 = vadd.xlane.f32.xlu0 %v5898
        %v5900 = vpop.xlane.xlu0 %5899
        %v5901 = vsel %vm841, %v5777, 0.0
        %5902 = vadd.xlane.f32.xlu0 %v5901
        %v5903 = vpop.xlane.xlu0 %5902
        %v5904 = vsel %vm841, %v5778, 0.0
        %5905 = vadd.xlane.f32.xlu0 %v5904
        %v5906 = vpop.xlane.xlu0 %5905
        %v5907 = vsel %vm2759, %v5779, 0.0
        %5908 = vadd.xlane.f32.xlu0 %v5907
        %v5909 = vpop.xlane.xlu0 %5908
        %v5910 = vsel %vm841, %v5780, 0.0
        %5911 = vadd.xlane.f32.xlu0 %v5910
        %v5912 = vpop.xlane.xlu0 %5911
        %v5913 = vsel %vm841, %v5781, 0.0
        %5914 = vadd.xlane.f32.xlu0 %v5913
        %v5915 = vpop.xlane.xlu0 %5914
        %v5916 = vsel %vm841, %v5782, 0.0
        %5917 = vadd.xlane.f32.xlu0 %v5916
        %v5918 = vpop.xlane.xlu0 %5917
        %v5919 = vsel %vm841, %v5783, 0.0
        %5920 = vadd.xlane.f32.xlu0 %v5919
        %v5921 = vpop.xlane.xlu0 %5920
        %v5922 = vsel %vm841, %v5784, 0.0
        %5923 = vadd.xlane.f32.xlu0 %v5922
        %v5924 = vpop.xlane.xlu0 %5923
        %v5925 = vsel %vm841, %v5785, 0.0
        %5926 = vadd.xlane.f32.xlu0 %v5925
        %v5927 = vpop.xlane.xlu0 %5926
        %v5928 = vsel %vm841, %v5786, 0.0
        %5929 = vadd.xlane.f32.xlu0 %v5928
        %v5930 = vpop.xlane.xlu0 %5929
        %v5931 = vsel %vm841, %v5787, 0.0
        %5932 = vadd.xlane.f32.xlu0 %v5931
        %v5933 = vpop.xlane.xlu0 %5932
        %v5934 = vsel %vm841, %v5788, 0.0
        %5935 = vadd.xlane.f32.xlu0 %v5934
        %v5936 = vpop.xlane.xlu0 %5935
        %v5937 = vsel %vm841, %v5789, 0.0
        %5938 = vadd.xlane.f32.xlu0 %v5937
        %v5939 = vpop.xlane.xlu0 %5938
        %v5940 = vsel %vm841, %v5790, 0.0
        %5941 = vadd.xlane.f32.xlu0 %v5940
        %v5942 = vpop.xlane.xlu0 %5941
        %v5943 = vsel %vm841, %v5791, 0.0
        %5944 = vadd.xlane.f32.xlu0 %v5943
        %v5945 = vpop.xlane.xlu0 %5944
        %v5946 = vsel %vm2759, %v5792, 0.0
        %5947 = vadd.xlane.f32.xlu0 %v5946
        %v5948 = vpop.xlane.xlu0 %5947
        %v5949 = vmul.f32 %v528, %v5795
        %v5950 = vmul.f32 %v529, %v5798
        %v5951 = vmul.f32 %v530, %v5801
        %v5952 = vmul.f32 %v531, %v5804
        %v5953 = vmul.f32 %v532, %v5807
        %v5954 = vmul.f32 %v533, %v5810
        %v5955 = vmul.f32 %v534, %v5813
        %v5956 = vmul.f32 %v535, %v5816
        %v5957 = vmul.f32 %v536, %v5819
        %v5958 = vmul.f32 %v537, %v5822
        %v5959 = vmul.f32 %v538, %v5825
        %v5960 = vmul.f32 %v539, %v5828
        %v5961 = vmul.f32 %v540, %v5831
        %v5962 = vmul.f32 %v541, %v5834
        %v5963 = vmul.f32 %v542, %v5837
        %v5964 = vmul.f32 %v543, %v5840
        %v5965 = vmul.f32 %v544, %v5843
        %v5966 = vmul.f32 %v545, %v5846
        %v5967 = vmul.f32 %v546, %v5849
        %v5968 = vmul.f32 %v547, %v5852
        %v5969 = vmul.f32 %v548, %v5855
        %v5970 = vmul.f32 %v549, %v5858
        %v5971 = vmul.f32 %v550, %v5861
        %v5972 = vmul.f32 %v551, %v5864
        %v5973 = vmul.f32 %v552, %v5867
        %v5974 = vmul.f32 %v553, %v5870
        %v5975 = vmul.f32 %v554, %v5873
        %v5976 = vmul.f32 %v555, %v5876
        %v5977 = vmul.f32 %v556, %v5879
        %v5978 = vmul.f32 %v557, %v5882
        %v5979 = vmul.f32 %v558, %v5885
        %v5980 = vmul.f32 %v559, %v5888
        %v5981 = vmul.f32 %v560, %v5891
        %v5982 = vmul.f32 %v561, %v5894
        %v5983 = vmul.f32 %v562, %v5897
        %v5984 = vmul.f32 %v563, %v5900
        %v5985 = vmul.f32 %v564, %v5903
        %v5986 = vmul.f32 %v565, %v5906
        %v5987 = vmul.f32 %v566, %v5909
        %v5988 = vmul.f32 %v567, %v5912
        %v5989 = vmul.f32 %v568, %v5915
        %v5990 = vmul.f32 %v569, %v5918
        %v5991 = vmul.f32 %v570, %v5921
        %v5992 = vmul.f32 %v571, %v5924
        %v5993 = vmul.f32 %v572, %v5927
        %v5994 = vmul.f32 %v573, %v5930
        %v5995 = vmul.f32 %v574, %v5933
        %v5996 = vmul.f32 %v575, %v5936
        %v5997 = vmul.f32 %v576, %v5939
        %v5998 = vmul.f32 %v577, %v5942
        %v5999 = vmul.f32 %v578, %v5945
        %v6000 = vmul.f32 %v579, %v5948
        %v6001 = vsel %vm1389, %v5949, 0.0
        %v6002 = vsel %vm1389, %v5950, 0.0
        %v6003 = vadd.f32 %v6001, %v6002
        %v6004 = vsel %vm1389, %v5951, 0.0
        %v6005 = vadd.f32 %v6003, %v6004
        %v6006 = vsel %vm1389, %v5952, 0.0
        %v6007 = vadd.f32 %v6005, %v6006
        %v6008 = vsel %vm1389, %v5953, 0.0
        %v6009 = vadd.f32 %v6007, %v6008
        %v6010 = vsel %vm1389, %v5954, 0.0
        %v6011 = vadd.f32 %v6009, %v6010
        %v6012 = vsel %vm1389, %v5955, 0.0
        %v6013 = vadd.f32 %v6011, %v6012
        %v6014 = vsel %vm1389, %v5956, 0.0
        %v6015 = vadd.f32 %v6013, %v6014
        %v6016 = vsel %vm1389, %v5957, 0.0
        %v6017 = vadd.f32 %v6015, %v6016
        %v6018 = vsel %vm1389, %v5958, 0.0
        %v6019 = vadd.f32 %v6017, %v6018
        %v6020 = vsel %vm1389, %v5959, 0.0
        %v6021 = vadd.f32 %v6019, %v6020
        %v6022 = vsel %vm1389, %v5960, 0.0
        %v6023 = vadd.f32 %v6021, %v6022
        %v6024 = vsel %vm1413, %v5961, 0.0
        %v6025 = vadd.f32 %v6023, %v6024
        %v6026 = vsel %vm1389, %v5962, 0.0
        %v6027 = vadd.f32 %v6025, %v6026
        %v6028 = vsel %vm1389, %v5963, 0.0
        %v6029 = vadd.f32 %v6027, %v6028
        %v6030 = vsel %vm1389, %v5964, 0.0
        %v6031 = vadd.f32 %v6029, %v6030
        %v6032 = vsel %vm1389, %v5965, 0.0
        %v6033 = vadd.f32 %v6031, %v6032
        %v6034 = vsel %vm1389, %v5966, 0.0
        %v6035 = vadd.f32 %v6033, %v6034
        %v6036 = vsel %vm1389, %v5967, 0.0
        %v6037 = vadd.f32 %v6035, %v6036
        %v6038 = vsel %vm1389, %v5968, 0.0
        %v6039 = vadd.f32 %v6037, %v6038
        %v6040 = vsel %vm1389, %v5969, 0.0
        %v6041 = vadd.f32 %v6039, %v6040
        %v6042 = vsel %vm1389, %v5970, 0.0
        %v6043 = vadd.f32 %v6041, %v6042
        %v6044 = vsel %vm1389, %v5971, 0.0
        %v6045 = vadd.f32 %v6043, %v6044
        %v6046 = vsel %vm1389, %v5972, 0.0
        %v6047 = vadd.f32 %v6045, %v6046
        %v6048 = vsel %vm1389, %v5973, 0.0
        %v6049 = vadd.f32 %v6047, %v6048
        %v6050 = vsel %vm1413, %v5974, 0.0
        %v6051 = vadd.f32 %v6049, %v6050
        %v6052 = vsel %vm1389, %v5975, 0.0
        %v6053 = vadd.f32 %v6051, %v6052
        %v6054 = vsel %vm1389, %v5976, 0.0
        %v6055 = vadd.f32 %v6053, %v6054
        %v6056 = vsel %vm1389, %v5977, 0.0
        %v6057 = vadd.f32 %v6055, %v6056
        %v6058 = vsel %vm1389, %v5978, 0.0
        %v6059 = vadd.f32 %v6057, %v6058
        %v6060 = vsel %vm1389, %v5979, 0.0
        %v6061 = vadd.f32 %v6059, %v6060
        %v6062 = vsel %vm1389, %v5980, 0.0
        %v6063 = vadd.f32 %v6061, %v6062
        %v6064 = vsel %vm1389, %v5981, 0.0
        %v6065 = vadd.f32 %v6063, %v6064
        %v6066 = vsel %vm1389, %v5982, 0.0
        %v6067 = vadd.f32 %v6065, %v6066
        %v6068 = vsel %vm1389, %v5983, 0.0
        %v6069 = vadd.f32 %v6067, %v6068
        %v6070 = vsel %vm1389, %v5984, 0.0
        %v6071 = vadd.f32 %v6069, %v6070
        %v6072 = vsel %vm1389, %v5985, 0.0
        %v6073 = vadd.f32 %v6071, %v6072
        %v6074 = vsel %vm1389, %v5986, 0.0
        %v6075 = vadd.f32 %v6073, %v6074
        %v6076 = vsel %vm1413, %v5987, 0.0
        %v6077 = vadd.f32 %v6075, %v6076
        %v6078 = vsel %vm1389, %v5988, 0.0
        %v6079 = vadd.f32 %v6077, %v6078
        %v6080 = vsel %vm1389, %v5989, 0.0
        %v6081 = vadd.f32 %v6079, %v6080
        %v6082 = vsel %vm1389, %v5990, 0.0
        %v6083 = vadd.f32 %v6081, %v6082
        %v6084 = vsel %vm1389, %v5991, 0.0
        %v6085 = vadd.f32 %v6083, %v6084
        %v6086 = vsel %vm1389, %v5992, 0.0
        %v6087 = vadd.f32 %v6085, %v6086
        %v6088 = vsel %vm1389, %v5993, 0.0
        %v6089 = vadd.f32 %v6087, %v6088
        %v6090 = vsel %vm1389, %v5994, 0.0
        %v6091 = vadd.f32 %v6089, %v6090
        %v6092 = vsel %vm1389, %v5995, 0.0
        %v6093 = vadd.f32 %v6091, %v6092
        %v6094 = vsel %vm1389, %v5996, 0.0
        %v6095 = vadd.f32 %v6093, %v6094
        %v6096 = vsel %vm1389, %v5997, 0.0
        %v6097 = vadd.f32 %v6095, %v6096
        %v6098 = vsel %vm1389, %v5998, 0.0
        %v6099 = vadd.f32 %v6097, %v6098
        %v6100 = vsel %vm1389, %v5999, 0.0
        %v6101 = vadd.f32 %v6099, %v6100
        %v6102 = vsel %vm1413, %v6000, 0.0
        %v6103 = vadd.f32 %v6101, %v6102
        %6104 = vadd.xlane.f32.xlu0 %v6103
        %v6105 = vpop.xlane.xlu0 %6104
        %v6106 = vrot.slane %v6105, 4
        %v6107 = vadd.f32 %v6105, %v6106
        %v6108 = vrot.slane %v6107, 2
        %v6109 = vadd.f32 %v6107, %v6108
        %v6110 = vrot.slane %v6109, 1
        %v6111 = vadd.f32 %v6109, %v6110
        %s6112 = vtos %v6111
        %vm6113 = vcmp.gt.f32.partialorder %v663, 0.5
        %vm6114 = vcmp.gt.f32.partialorder %v664, 0.5
        %vm6115 = vcmp.gt.f32.partialorder %v665, 0.5
        %vm6116 = vcmp.gt.f32.partialorder %v666, 0.5
        %vm6117 = vcmp.gt.f32.partialorder %v667, 0.5
        %vm6118 = vcmp.gt.f32.partialorder %v668, 0.5
        %vm6119 = vcmp.gt.f32.partialorder %v669, 0.5
        %vm6120 = vcmp.gt.f32.partialorder %v670, 0.5
        %vm6121 = vcmp.gt.f32.partialorder %v671, 0.5
        %vm6122 = vcmp.gt.f32.partialorder %v672, 0.5
        %vm6123 = vcmp.gt.f32.partialorder %v673, 0.5
        %vm6124 = vcmp.gt.f32.partialorder %v674, 0.5
        %vm6125 = vcmp.gt.f32.partialorder %v675, 0.5
        %vm6126 = vcmp.gt.f32.partialorder %v676, 0.5
        %vm6127 = vcmp.gt.f32.partialorder %v677, 0.5
        %vm6128 = vcmp.gt.f32.partialorder %v678, 0.5
        %vm6129 = vcmp.gt.f32.partialorder %v679, 0.5
        %vm6130 = vcmp.gt.f32.partialorder %v680, 0.5
        %vm6131 = vcmp.gt.f32.partialorder %v681, 0.5
        %vm6132 = vcmp.gt.f32.partialorder %v682, 0.5
        %vm6133 = vcmp.gt.f32.partialorder %v683, 0.5
        %vm6134 = vcmp.gt.f32.partialorder %v684, 0.5
        %vm6135 = vcmp.gt.f32.partialorder %v685, 0.5
        %vm6136 = vcmp.gt.f32.partialorder %v686, 0.5
        %vm6137 = vcmp.gt.f32.partialorder %v687, 0.5
        %vm6138 = vcmp.gt.f32.partialorder %v688, 0.5
        %vm6139 = vcmp.gt.f32.partialorder %v689, 0.5
        %vm6140 = vcmp.gt.f32.partialorder %v690, 0.5
        %vm6141 = vcmp.gt.f32.partialorder %v691, 0.5
        %vm6142 = vcmp.gt.f32.partialorder %v692, 0.5
        %vm6143 = vcmp.gt.f32.partialorder %v693, 0.5
        %vm6144 = vcmp.gt.f32.partialorder %v694, 0.5
        %vm6145 = vcmp.gt.f32.partialorder %v695, 0.5
        %vm6146 = vcmp.gt.f32.partialorder %v696, 0.5
        %vm6147 = vcmp.gt.f32.partialorder %v697, 0.5
        %vm6148 = vcmp.gt.f32.partialorder %v698, 0.5
        %vm6149 = vcmp.gt.f32.partialorder %v699, 0.5
        %vm6150 = vcmp.gt.f32.partialorder %v700, 0.5
        %vm6151 = vcmp.gt.f32.partialorder %v701, 0.5
        %vm6152 = vcmp.gt.f32.partialorder %v702, 0.5
        %vm6153 = vcmp.gt.f32.partialorder %v703, 0.5
        %vm6154 = vcmp.gt.f32.partialorder %v704, 0.5
        %vm6155 = vcmp.gt.f32.partialorder %v705, 0.5
        %vm6156 = vcmp.gt.f32.partialorder %v706, 0.5
        %vm6157 = vcmp.gt.f32.partialorder %v707, 0.5
        %vm6158 = vcmp.gt.f32.partialorder %v708, 0.5
        %vm6159 = vcmp.gt.f32.partialorder %v709, 0.5
        %vm6160 = vcmp.gt.f32.partialorder %v710, 0.5
        %vm6161 = vcmp.gt.f32.partialorder %v711, 0.5
        %vm6162 = vcmp.gt.f32.partialorder %v712, 0.5
        %vm6163 = vcmp.gt.f32.partialorder %v713, 0.5
        %vm6164 = vcmp.gt.f32.partialorder %v714, 0.5
        %v6165 = vsel %vm6113, %v488, 101
        %v6166 = vsel %vm6114, %v488, 101
        %v6167 = vsel %vm6115, %v488, 101
        %v6168 = vsel %vm6116, %v488, 101
        %v6169 = vsel %vm6117, %v488, 101
        %v6170 = vsel %vm6118, %v488, 101
        %v6171 = vsel %vm6119, %v488, 101
        %v6172 = vsel %vm6120, %v488, 101
        %v6173 = vsel %vm6121, %v488, 101
        %v6174 = vsel %vm6122, %v488, 101
        %v6175 = vsel %vm6123, %v488, 101
        %v6176 = vsel %vm6124, %v488, 101
        %v6177 = vsel %vm6125, %v488, 101
        %v6178 = vsel %vm6126, %v488, 101
        %v6179 = vsel %vm6127, %v488, 101
        %v6180 = vsel %vm6128, %v488, 101
        %v6181 = vsel %vm6129, %v488, 101
        %v6182 = vsel %vm6130, %v488, 101
        %v6183 = vsel %vm6131, %v488, 101
        %v6184 = vsel %vm6132, %v488, 101
        %v6185 = vsel %vm6133, %v488, 101
        %v6186 = vsel %vm6134, %v488, 101
        %v6187 = vsel %vm6135, %v488, 101
        %v6188 = vsel %vm6136, %v488, 101
        %v6189 = vsel %vm6137, %v488, 101
        %v6190 = vsel %vm6138, %v488, 101
        %v6191 = vsel %vm6139, %v488, 101
        %v6192 = vsel %vm6140, %v488, 101
        %v6193 = vsel %vm6141, %v488, 101
        %v6194 = vsel %vm6142, %v488, 101
        %v6195 = vsel %vm6143, %v488, 101
        %v6196 = vsel %vm6144, %v488, 101
        %v6197 = vsel %vm6145, %v488, 101
        %v6198 = vsel %vm6146, %v488, 101
        %v6199 = vsel %vm6147, %v488, 101
        %v6200 = vsel %vm6148, %v488, 101
        %v6201 = vsel %vm6149, %v488, 101
        %v6202 = vsel %vm6150, %v488, 101
        %v6203 = vsel %vm6151, %v488, 101
        %v6204 = vsel %vm6152, %v488, 101
        %v6205 = vsel %vm6153, %v488, 101
        %v6206 = vsel %vm6154, %v488, 101
        %v6207 = vsel %vm6155, %v488, 101
        %v6208 = vsel %vm6156, %v488, 101
        %v6209 = vsel %vm6157, %v488, 101
        %v6210 = vsel %vm6158, %v488, 101
        %v6211 = vsel %vm6159, %v488, 101
        %v6212 = vsel %vm6160, %v488, 101
        %v6213 = vsel %vm6161, %v488, 101
        %v6214 = vsel %vm6162, %v488, 101
        %v6215 = vsel %vm6163, %v488, 101
        %v6216 = vsel %vm6164, %v488, 101
        %v6217 = vsel %vm841, %v6165, 2147483647
        %v6218 = vand.u32 %v6217, 65535
        %v6219 = vshra.s32 %v6217, 16
        %v6220 = vcvt.s32.f32 %v6218
        %v6221 = vcvt.s32.f32 %v6219
        %6222 = vmin.xlane.f32.xlu0 %v6221
        %v6223 = vpop.xlane.xlu0 %6222
        %vm6224 = vcmp.eq.f32.partialorder %v6221, %v6223
        %v6225 = vsel %vm6224, %v6220, inf
        %6226 = vmin.xlane.f32.xlu0 %v6225
        %v6227 = vpop.xlane.xlu0 %6226
        %v6228 = vcvt.f32.s32 %v6227
        %v6229 = vcvt.f32.s32 %v6223
        %v6230 = vshll.u32 %v6229, 16
        %v6231 = vadd.s32 %v6230, %v6228
        %v6232 = vsel %vm841, %v6166, 2147483647
        %v6233 = vand.u32 %v6232, 65535
        %v6234 = vshra.s32 %v6232, 16
        %v6235 = vcvt.s32.f32 %v6233
        %v6236 = vcvt.s32.f32 %v6234
        %6237 = vmin.xlane.f32.xlu0 %v6236
        %v6238 = vpop.xlane.xlu0 %6237
        %vm6239 = vcmp.eq.f32.partialorder %v6236, %v6238
        %v6240 = vsel %vm6239, %v6235, inf
        %6241 = vmin.xlane.f32.xlu0 %v6240
        %v6242 = vpop.xlane.xlu0 %6241
        %v6243 = vcvt.f32.s32 %v6242
        %v6244 = vcvt.f32.s32 %v6238
        %v6245 = vshll.u32 %v6244, 16
        %v6246 = vadd.s32 %v6245, %v6243
        %v6247 = vsel %vm841, %v6167, 2147483647
        %v6248 = vand.u32 %v6247, 65535
        %v6249 = vshra.s32 %v6247, 16
        %v6250 = vcvt.s32.f32 %v6248
        %v6251 = vcvt.s32.f32 %v6249
        %6252 = vmin.xlane.f32.xlu0 %v6251
        %v6253 = vpop.xlane.xlu0 %6252
        %vm6254 = vcmp.eq.f32.partialorder %v6251, %v6253
        %v6255 = vsel %vm6254, %v6250, inf
        %6256 = vmin.xlane.f32.xlu0 %v6255
        %v6257 = vpop.xlane.xlu0 %6256
        %v6258 = vcvt.f32.s32 %v6257
        %v6259 = vcvt.f32.s32 %v6253
        %v6260 = vshll.u32 %v6259, 16
        %v6261 = vadd.s32 %v6260, %v6258
        %v6262 = vsel %vm841, %v6168, 2147483647
        %v6263 = vand.u32 %v6262, 65535
        %v6264 = vshra.s32 %v6262, 16
        %v6265 = vcvt.s32.f32 %v6263
        %v6266 = vcvt.s32.f32 %v6264
        %6267 = vmin.xlane.f32.xlu0 %v6266
        %v6268 = vpop.xlane.xlu0 %6267
        %vm6269 = vcmp.eq.f32.partialorder %v6266, %v6268
        %v6270 = vsel %vm6269, %v6265, inf
        %6271 = vmin.xlane.f32.xlu0 %v6270
        %v6272 = vpop.xlane.xlu0 %6271
        %v6273 = vcvt.f32.s32 %v6272
        %v6274 = vcvt.f32.s32 %v6268
        %v6275 = vshll.u32 %v6274, 16
        %v6276 = vadd.s32 %v6275, %v6273
        %v6277 = vsel %vm841, %v6169, 2147483647
        %v6278 = vand.u32 %v6277, 65535
        %v6279 = vshra.s32 %v6277, 16
        %v6280 = vcvt.s32.f32 %v6278
        %v6281 = vcvt.s32.f32 %v6279
        %6282 = vmin.xlane.f32.xlu0 %v6281
        %v6283 = vpop.xlane.xlu0 %6282
        %vm6284 = vcmp.eq.f32.partialorder %v6281, %v6283
        %v6285 = vsel %vm6284, %v6280, inf
        %6286 = vmin.xlane.f32.xlu0 %v6285
        %v6287 = vpop.xlane.xlu0 %6286
        %v6288 = vcvt.f32.s32 %v6287
        %v6289 = vcvt.f32.s32 %v6283
        %v6290 = vshll.u32 %v6289, 16
        %v6291 = vadd.s32 %v6290, %v6288
        %v6292 = vsel %vm841, %v6170, 2147483647
        %v6293 = vand.u32 %v6292, 65535
        %v6294 = vshra.s32 %v6292, 16
        %v6295 = vcvt.s32.f32 %v6293
        %v6296 = vcvt.s32.f32 %v6294
        %6297 = vmin.xlane.f32.xlu0 %v6296
        %v6298 = vpop.xlane.xlu0 %6297
        %vm6299 = vcmp.eq.f32.partialorder %v6296, %v6298
        %v6300 = vsel %vm6299, %v6295, inf
        %6301 = vmin.xlane.f32.xlu0 %v6300
        %v6302 = vpop.xlane.xlu0 %6301
        %v6303 = vcvt.f32.s32 %v6302
        %v6304 = vcvt.f32.s32 %v6298
        %v6305 = vshll.u32 %v6304, 16
        %v6306 = vadd.s32 %v6305, %v6303
        %v6307 = vsel %vm841, %v6171, 2147483647
        %v6308 = vand.u32 %v6307, 65535
        %v6309 = vshra.s32 %v6307, 16
        %v6310 = vcvt.s32.f32 %v6308
        %v6311 = vcvt.s32.f32 %v6309
        %6312 = vmin.xlane.f32.xlu0 %v6311
        %v6313 = vpop.xlane.xlu0 %6312
        %vm6314 = vcmp.eq.f32.partialorder %v6311, %v6313
        %v6315 = vsel %vm6314, %v6310, inf
        %6316 = vmin.xlane.f32.xlu0 %v6315
        %v6317 = vpop.xlane.xlu0 %6316
        %v6318 = vcvt.f32.s32 %v6317
        %v6319 = vcvt.f32.s32 %v6313
        %v6320 = vshll.u32 %v6319, 16
        %v6321 = vadd.s32 %v6320, %v6318
        %v6322 = vsel %vm841, %v6172, 2147483647
        %v6323 = vand.u32 %v6322, 65535
        %v6324 = vshra.s32 %v6322, 16
        %v6325 = vcvt.s32.f32 %v6323
        %v6326 = vcvt.s32.f32 %v6324
        %6327 = vmin.xlane.f32.xlu0 %v6326
        %v6328 = vpop.xlane.xlu0 %6327
        %vm6329 = vcmp.eq.f32.partialorder %v6326, %v6328
        %v6330 = vsel %vm6329, %v6325, inf
        %6331 = vmin.xlane.f32.xlu0 %v6330
        %v6332 = vpop.xlane.xlu0 %6331
        %v6333 = vcvt.f32.s32 %v6332
        %v6334 = vcvt.f32.s32 %v6328
        %v6335 = vshll.u32 %v6334, 16
        %v6336 = vadd.s32 %v6335, %v6333
        %v6337 = vsel %vm841, %v6173, 2147483647
        %v6338 = vand.u32 %v6337, 65535
        %v6339 = vshra.s32 %v6337, 16
        %v6340 = vcvt.s32.f32 %v6338
        %v6341 = vcvt.s32.f32 %v6339
        %6342 = vmin.xlane.f32.xlu0 %v6341
        %v6343 = vpop.xlane.xlu0 %6342
        %vm6344 = vcmp.eq.f32.partialorder %v6341, %v6343
        %v6345 = vsel %vm6344, %v6340, inf
        %6346 = vmin.xlane.f32.xlu0 %v6345
        %v6347 = vpop.xlane.xlu0 %6346
        %v6348 = vcvt.f32.s32 %v6347
        %v6349 = vcvt.f32.s32 %v6343
        %v6350 = vshll.u32 %v6349, 16
        %v6351 = vadd.s32 %v6350, %v6348
        %v6352 = vsel %vm841, %v6174, 2147483647
        %v6353 = vand.u32 %v6352, 65535
        %v6354 = vshra.s32 %v6352, 16
        %v6355 = vcvt.s32.f32 %v6353
        %v6356 = vcvt.s32.f32 %v6354
        %6357 = vmin.xlane.f32.xlu0 %v6356
        %v6358 = vpop.xlane.xlu0 %6357
        %vm6359 = vcmp.eq.f32.partialorder %v6356, %v6358
        %v6360 = vsel %vm6359, %v6355, inf
        %6361 = vmin.xlane.f32.xlu0 %v6360
        %v6362 = vpop.xlane.xlu0 %6361
        %v6363 = vcvt.f32.s32 %v6362
        %v6364 = vcvt.f32.s32 %v6358
        %v6365 = vshll.u32 %v6364, 16
        %v6366 = vadd.s32 %v6365, %v6363
        %v6367 = vsel %vm841, %v6175, 2147483647
        %v6368 = vand.u32 %v6367, 65535
        %v6369 = vshra.s32 %v6367, 16
        %v6370 = vcvt.s32.f32 %v6368
        %v6371 = vcvt.s32.f32 %v6369
        %6372 = vmin.xlane.f32.xlu0 %v6371
        %v6373 = vpop.xlane.xlu0 %6372
        %vm6374 = vcmp.eq.f32.partialorder %v6371, %v6373
        %v6375 = vsel %vm6374, %v6370, inf
        %6376 = vmin.xlane.f32.xlu0 %v6375
        %v6377 = vpop.xlane.xlu0 %6376
        %v6378 = vcvt.f32.s32 %v6377
        %v6379 = vcvt.f32.s32 %v6373
        %v6380 = vshll.u32 %v6379, 16
        %v6381 = vadd.s32 %v6380, %v6378
        %v6382 = vsel %vm841, %v6176, 2147483647
        %v6383 = vand.u32 %v6382, 65535
        %v6384 = vshra.s32 %v6382, 16
        %v6385 = vcvt.s32.f32 %v6383
        %v6386 = vcvt.s32.f32 %v6384
        %6387 = vmin.xlane.f32.xlu0 %v6386
        %v6388 = vpop.xlane.xlu0 %6387
        %vm6389 = vcmp.eq.f32.partialorder %v6386, %v6388
        %v6390 = vsel %vm6389, %v6385, inf
        %6391 = vmin.xlane.f32.xlu0 %v6390
        %v6392 = vpop.xlane.xlu0 %6391
        %v6393 = vcvt.f32.s32 %v6392
        %v6394 = vcvt.f32.s32 %v6388
        %v6395 = vshll.u32 %v6394, 16
        %v6396 = vadd.s32 %v6395, %v6393
        %v6397 = vsel %vm2759, %v6177, 2147483647
        %v6398 = vand.u32 %v6397, 65535
        %v6399 = vshra.s32 %v6397, 16
        %v6400 = vcvt.s32.f32 %v6398
        %v6401 = vcvt.s32.f32 %v6399
        %6402 = vmin.xlane.f32.xlu0 %v6401
        %v6403 = vpop.xlane.xlu0 %6402
        %vm6404 = vcmp.eq.f32.partialorder %v6401, %v6403
        %v6405 = vsel %vm6404, %v6400, inf
        %6406 = vmin.xlane.f32.xlu0 %v6405
        %v6407 = vpop.xlane.xlu0 %6406
        %v6408 = vcvt.f32.s32 %v6407
        %v6409 = vcvt.f32.s32 %v6403
        %v6410 = vshll.u32 %v6409, 16
        %v6411 = vadd.s32 %v6410, %v6408
        %v6412 = vsel %vm841, %v6178, 2147483647
        %v6413 = vand.u32 %v6412, 65535
        %v6414 = vshra.s32 %v6412, 16
        %v6415 = vcvt.s32.f32 %v6413
        %v6416 = vcvt.s32.f32 %v6414
        %6417 = vmin.xlane.f32.xlu0 %v6416
        %v6418 = vpop.xlane.xlu0 %6417
        %vm6419 = vcmp.eq.f32.partialorder %v6416, %v6418
        %v6420 = vsel %vm6419, %v6415, inf
        %6421 = vmin.xlane.f32.xlu0 %v6420
        %v6422 = vpop.xlane.xlu0 %6421
        %v6423 = vcvt.f32.s32 %v6422
        %v6424 = vcvt.f32.s32 %v6418
        %v6425 = vshll.u32 %v6424, 16
        %v6426 = vadd.s32 %v6425, %v6423
        %v6427 = vsel %vm841, %v6179, 2147483647
        %v6428 = vand.u32 %v6427, 65535
        %v6429 = vshra.s32 %v6427, 16
        %v6430 = vcvt.s32.f32 %v6428
        %v6431 = vcvt.s32.f32 %v6429
        %6432 = vmin.xlane.f32.xlu0 %v6431
        %v6433 = vpop.xlane.xlu0 %6432
        %vm6434 = vcmp.eq.f32.partialorder %v6431, %v6433
        %v6435 = vsel %vm6434, %v6430, inf
        %6436 = vmin.xlane.f32.xlu0 %v6435
        %v6437 = vpop.xlane.xlu0 %6436
        %v6438 = vcvt.f32.s32 %v6437
        %v6439 = vcvt.f32.s32 %v6433
        %v6440 = vshll.u32 %v6439, 16
        %v6441 = vadd.s32 %v6440, %v6438
        %v6442 = vsel %vm841, %v6180, 2147483647
        %v6443 = vand.u32 %v6442, 65535
        %v6444 = vshra.s32 %v6442, 16
        %v6445 = vcvt.s32.f32 %v6443
        %v6446 = vcvt.s32.f32 %v6444
        %6447 = vmin.xlane.f32.xlu0 %v6446
        %v6448 = vpop.xlane.xlu0 %6447
        %vm6449 = vcmp.eq.f32.partialorder %v6446, %v6448
        %v6450 = vsel %vm6449, %v6445, inf
        %6451 = vmin.xlane.f32.xlu0 %v6450
        %v6452 = vpop.xlane.xlu0 %6451
        %v6453 = vcvt.f32.s32 %v6452
        %v6454 = vcvt.f32.s32 %v6448
        %v6455 = vshll.u32 %v6454, 16
        %v6456 = vadd.s32 %v6455, %v6453
        %v6457 = vsel %vm841, %v6181, 2147483647
        %v6458 = vand.u32 %v6457, 65535
        %v6459 = vshra.s32 %v6457, 16
        %v6460 = vcvt.s32.f32 %v6458
        %v6461 = vcvt.s32.f32 %v6459
        %6462 = vmin.xlane.f32.xlu0 %v6461
        %v6463 = vpop.xlane.xlu0 %6462
        %vm6464 = vcmp.eq.f32.partialorder %v6461, %v6463
        %v6465 = vsel %vm6464, %v6460, inf
        %6466 = vmin.xlane.f32.xlu0 %v6465
        %v6467 = vpop.xlane.xlu0 %6466
        %v6468 = vcvt.f32.s32 %v6467
        %v6469 = vcvt.f32.s32 %v6463
        %v6470 = vshll.u32 %v6469, 16
        %v6471 = vadd.s32 %v6470, %v6468
        %v6472 = vsel %vm841, %v6182, 2147483647
        %v6473 = vand.u32 %v6472, 65535
        %v6474 = vshra.s32 %v6472, 16
        %v6475 = vcvt.s32.f32 %v6473
        %v6476 = vcvt.s32.f32 %v6474
        %6477 = vmin.xlane.f32.xlu0 %v6476
        %v6478 = vpop.xlane.xlu0 %6477
        %vm6479 = vcmp.eq.f32.partialorder %v6476, %v6478
        %v6480 = vsel %vm6479, %v6475, inf
        %6481 = vmin.xlane.f32.xlu0 %v6480
        %v6482 = vpop.xlane.xlu0 %6481
        %v6483 = vcvt.f32.s32 %v6482
        %v6484 = vcvt.f32.s32 %v6478
        %v6485 = vshll.u32 %v6484, 16
        %v6486 = vadd.s32 %v6485, %v6483
        %v6487 = vsel %vm841, %v6183, 2147483647
        %v6488 = vand.u32 %v6487, 65535
        %v6489 = vshra.s32 %v6487, 16
        %v6490 = vcvt.s32.f32 %v6488
        %v6491 = vcvt.s32.f32 %v6489
        %6492 = vmin.xlane.f32.xlu0 %v6491
        %v6493 = vpop.xlane.xlu0 %6492
        %vm6494 = vcmp.eq.f32.partialorder %v6491, %v6493
        %v6495 = vsel %vm6494, %v6490, inf
        %6496 = vmin.xlane.f32.xlu0 %v6495
        %v6497 = vpop.xlane.xlu0 %6496
        %v6498 = vcvt.f32.s32 %v6497
        %v6499 = vcvt.f32.s32 %v6493
        %v6500 = vshll.u32 %v6499, 16
        %v6501 = vadd.s32 %v6500, %v6498
        %v6502 = vsel %vm841, %v6184, 2147483647
        %v6503 = vand.u32 %v6502, 65535
        %v6504 = vshra.s32 %v6502, 16
        %v6505 = vcvt.s32.f32 %v6503
        %v6506 = vcvt.s32.f32 %v6504
        %6507 = vmin.xlane.f32.xlu0 %v6506
        %v6508 = vpop.xlane.xlu0 %6507
        %vm6509 = vcmp.eq.f32.partialorder %v6506, %v6508
        %v6510 = vsel %vm6509, %v6505, inf
        %6511 = vmin.xlane.f32.xlu0 %v6510
        %v6512 = vpop.xlane.xlu0 %6511
        %v6513 = vcvt.f32.s32 %v6512
        %v6514 = vcvt.f32.s32 %v6508
        %v6515 = vshll.u32 %v6514, 16
        %v6516 = vadd.s32 %v6515, %v6513
        %v6517 = vsel %vm841, %v6185, 2147483647
        %v6518 = vand.u32 %v6517, 65535
        %v6519 = vshra.s32 %v6517, 16
        %v6520 = vcvt.s32.f32 %v6518
        %v6521 = vcvt.s32.f32 %v6519
        %6522 = vmin.xlane.f32.xlu0 %v6521
        %v6523 = vpop.xlane.xlu0 %6522
        %vm6524 = vcmp.eq.f32.partialorder %v6521, %v6523
        %v6525 = vsel %vm6524, %v6520, inf
        %6526 = vmin.xlane.f32.xlu0 %v6525
        %v6527 = vpop.xlane.xlu0 %6526
        %v6528 = vcvt.f32.s32 %v6527
        %v6529 = vcvt.f32.s32 %v6523
        %v6530 = vshll.u32 %v6529, 16
        %v6531 = vadd.s32 %v6530, %v6528
        %v6532 = vsel %vm841, %v6186, 2147483647
        %v6533 = vand.u32 %v6532, 65535
        %v6534 = vshra.s32 %v6532, 16
        %v6535 = vcvt.s32.f32 %v6533
        %v6536 = vcvt.s32.f32 %v6534
        %6537 = vmin.xlane.f32.xlu0 %v6536
        %v6538 = vpop.xlane.xlu0 %6537
        %vm6539 = vcmp.eq.f32.partialorder %v6536, %v6538
        %v6540 = vsel %vm6539, %v6535, inf
        %6541 = vmin.xlane.f32.xlu0 %v6540
        %v6542 = vpop.xlane.xlu0 %6541
        %v6543 = vcvt.f32.s32 %v6542
        %v6544 = vcvt.f32.s32 %v6538
        %v6545 = vshll.u32 %v6544, 16
        %v6546 = vadd.s32 %v6545, %v6543
        %v6547 = vsel %vm841, %v6187, 2147483647
        %v6548 = vand.u32 %v6547, 65535
        %v6549 = vshra.s32 %v6547, 16
        %v6550 = vcvt.s32.f32 %v6548
        %v6551 = vcvt.s32.f32 %v6549
        %6552 = vmin.xlane.f32.xlu0 %v6551
        %v6553 = vpop.xlane.xlu0 %6552
        %vm6554 = vcmp.eq.f32.partialorder %v6551, %v6553
        %v6555 = vsel %vm6554, %v6550, inf
        %6556 = vmin.xlane.f32.xlu0 %v6555
        %v6557 = vpop.xlane.xlu0 %6556
        %v6558 = vcvt.f32.s32 %v6557
        %v6559 = vcvt.f32.s32 %v6553
        %v6560 = vshll.u32 %v6559, 16
        %v6561 = vadd.s32 %v6560, %v6558
        %v6562 = vsel %vm841, %v6188, 2147483647
        %v6563 = vand.u32 %v6562, 65535
        %v6564 = vshra.s32 %v6562, 16
        %v6565 = vcvt.s32.f32 %v6563
        %v6566 = vcvt.s32.f32 %v6564
        %6567 = vmin.xlane.f32.xlu0 %v6566
        %v6568 = vpop.xlane.xlu0 %6567
        %vm6569 = vcmp.eq.f32.partialorder %v6566, %v6568
        %v6570 = vsel %vm6569, %v6565, inf
        %6571 = vmin.xlane.f32.xlu0 %v6570
        %v6572 = vpop.xlane.xlu0 %6571
        %v6573 = vcvt.f32.s32 %v6572
        %v6574 = vcvt.f32.s32 %v6568
        %v6575 = vshll.u32 %v6574, 16
        %v6576 = vadd.s32 %v6575, %v6573
        %v6577 = vsel %vm841, %v6189, 2147483647
        %v6578 = vand.u32 %v6577, 65535
        %v6579 = vshra.s32 %v6577, 16
        %v6580 = vcvt.s32.f32 %v6578
        %v6581 = vcvt.s32.f32 %v6579
        %6582 = vmin.xlane.f32.xlu0 %v6581
        %v6583 = vpop.xlane.xlu0 %6582
        %vm6584 = vcmp.eq.f32.partialorder %v6581, %v6583
        %v6585 = vsel %vm6584, %v6580, inf
        %6586 = vmin.xlane.f32.xlu0 %v6585
        %v6587 = vpop.xlane.xlu0 %6586
        %v6588 = vcvt.f32.s32 %v6587
        %v6589 = vcvt.f32.s32 %v6583
        %v6590 = vshll.u32 %v6589, 16
        %v6591 = vadd.s32 %v6590, %v6588
        %v6592 = vsel %vm2759, %v6190, 2147483647
        %v6593 = vand.u32 %v6592, 65535
        %v6594 = vshra.s32 %v6592, 16
        %v6595 = vcvt.s32.f32 %v6593
        %v6596 = vcvt.s32.f32 %v6594
        %6597 = vmin.xlane.f32.xlu0 %v6596
        %v6598 = vpop.xlane.xlu0 %6597
        %vm6599 = vcmp.eq.f32.partialorder %v6596, %v6598
        %v6600 = vsel %vm6599, %v6595, inf
        %6601 = vmin.xlane.f32.xlu0 %v6600
        %v6602 = vpop.xlane.xlu0 %6601
        %v6603 = vcvt.f32.s32 %v6602
        %v6604 = vcvt.f32.s32 %v6598
        %v6605 = vshll.u32 %v6604, 16
        %v6606 = vadd.s32 %v6605, %v6603
        %v6607 = vsel %vm841, %v6191, 2147483647
        %v6608 = vand.u32 %v6607, 65535
        %v6609 = vshra.s32 %v6607, 16
        %v6610 = vcvt.s32.f32 %v6608
        %v6611 = vcvt.s32.f32 %v6609
        %6612 = vmin.xlane.f32.xlu0 %v6611
        %v6613 = vpop.xlane.xlu0 %6612
        %vm6614 = vcmp.eq.f32.partialorder %v6611, %v6613
        %v6615 = vsel %vm6614, %v6610, inf
        %6616 = vmin.xlane.f32.xlu0 %v6615
        %v6617 = vpop.xlane.xlu0 %6616
        %v6618 = vcvt.f32.s32 %v6617
        %v6619 = vcvt.f32.s32 %v6613
        %v6620 = vshll.u32 %v6619, 16
        %v6621 = vadd.s32 %v6620, %v6618
        %v6622 = vsel %vm841, %v6192, 2147483647
        %v6623 = vand.u32 %v6622, 65535
        %v6624 = vshra.s32 %v6622, 16
        %v6625 = vcvt.s32.f32 %v6623
        %v6626 = vcvt.s32.f32 %v6624
        %6627 = vmin.xlane.f32.xlu0 %v6626
        %v6628 = vpop.xlane.xlu0 %6627
        %vm6629 = vcmp.eq.f32.partialorder %v6626, %v6628
        %v6630 = vsel %vm6629, %v6625, inf
        %6631 = vmin.xlane.f32.xlu0 %v6630
        %v6632 = vpop.xlane.xlu0 %6631
        %v6633 = vcvt.f32.s32 %v6632
        %v6634 = vcvt.f32.s32 %v6628
        %v6635 = vshll.u32 %v6634, 16
        %v6636 = vadd.s32 %v6635, %v6633
        %v6637 = vsel %vm841, %v6193, 2147483647
        %v6638 = vand.u32 %v6637, 65535
        %v6639 = vshra.s32 %v6637, 16
        %v6640 = vcvt.s32.f32 %v6638
        %v6641 = vcvt.s32.f32 %v6639
        %6642 = vmin.xlane.f32.xlu0 %v6641
        %v6643 = vpop.xlane.xlu0 %6642
        %vm6644 = vcmp.eq.f32.partialorder %v6641, %v6643
        %v6645 = vsel %vm6644, %v6640, inf
        %6646 = vmin.xlane.f32.xlu0 %v6645
        %v6647 = vpop.xlane.xlu0 %6646
        %v6648 = vcvt.f32.s32 %v6647
        %v6649 = vcvt.f32.s32 %v6643
        %v6650 = vshll.u32 %v6649, 16
        %v6651 = vadd.s32 %v6650, %v6648
        %v6652 = vsel %vm841, %v6194, 2147483647
        %v6653 = vand.u32 %v6652, 65535
        %v6654 = vshra.s32 %v6652, 16
        %v6655 = vcvt.s32.f32 %v6653
        %v6656 = vcvt.s32.f32 %v6654
        %6657 = vmin.xlane.f32.xlu0 %v6656
        %v6658 = vpop.xlane.xlu0 %6657
        %vm6659 = vcmp.eq.f32.partialorder %v6656, %v6658
        %v6660 = vsel %vm6659, %v6655, inf
        %6661 = vmin.xlane.f32.xlu0 %v6660
        %v6662 = vpop.xlane.xlu0 %6661
        %v6663 = vcvt.f32.s32 %v6662
        %v6664 = vcvt.f32.s32 %v6658
        %v6665 = vshll.u32 %v6664, 16
        %v6666 = vadd.s32 %v6665, %v6663
        %v6667 = vsel %vm841, %v6195, 2147483647
        %v6668 = vand.u32 %v6667, 65535
        %v6669 = vshra.s32 %v6667, 16
        %v6670 = vcvt.s32.f32 %v6668
        %v6671 = vcvt.s32.f32 %v6669
        %6672 = vmin.xlane.f32.xlu0 %v6671
        %v6673 = vpop.xlane.xlu0 %6672
        %vm6674 = vcmp.eq.f32.partialorder %v6671, %v6673
        %v6675 = vsel %vm6674, %v6670, inf
        %6676 = vmin.xlane.f32.xlu0 %v6675
        %v6677 = vpop.xlane.xlu0 %6676
        %v6678 = vcvt.f32.s32 %v6677
        %v6679 = vcvt.f32.s32 %v6673
        %v6680 = vshll.u32 %v6679, 16
        %v6681 = vadd.s32 %v6680, %v6678
        %v6682 = vsel %vm841, %v6196, 2147483647
        %v6683 = vand.u32 %v6682, 65535
        %v6684 = vshra.s32 %v6682, 16
        %v6685 = vcvt.s32.f32 %v6683
        %v6686 = vcvt.s32.f32 %v6684
        %6687 = vmin.xlane.f32.xlu0 %v6686
        %v6688 = vpop.xlane.xlu0 %6687
        %vm6689 = vcmp.eq.f32.partialorder %v6686, %v6688
        %v6690 = vsel %vm6689, %v6685, inf
        %6691 = vmin.xlane.f32.xlu0 %v6690
        %v6692 = vpop.xlane.xlu0 %6691
        %v6693 = vcvt.f32.s32 %v6692
        %v6694 = vcvt.f32.s32 %v6688
        %v6695 = vshll.u32 %v6694, 16
        %v6696 = vadd.s32 %v6695, %v6693
        %v6697 = vsel %vm841, %v6197, 2147483647
        %v6698 = vand.u32 %v6697, 65535
        %v6699 = vshra.s32 %v6697, 16
        %v6700 = vcvt.s32.f32 %v6698
        %v6701 = vcvt.s32.f32 %v6699
        %6702 = vmin.xlane.f32.xlu0 %v6701
        %v6703 = vpop.xlane.xlu0 %6702
        %vm6704 = vcmp.eq.f32.partialorder %v6701, %v6703
        %v6705 = vsel %vm6704, %v6700, inf
        %6706 = vmin.xlane.f32.xlu0 %v6705
        %v6707 = vpop.xlane.xlu0 %6706
        %v6708 = vcvt.f32.s32 %v6707
        %v6709 = vcvt.f32.s32 %v6703
        %v6710 = vshll.u32 %v6709, 16
        %v6711 = vadd.s32 %v6710, %v6708
        %v6712 = vsel %vm841, %v6198, 2147483647
        %v6713 = vand.u32 %v6712, 65535
        %v6714 = vshra.s32 %v6712, 16
        %v6715 = vcvt.s32.f32 %v6713
        %v6716 = vcvt.s32.f32 %v6714
        %6717 = vmin.xlane.f32.xlu0 %v6716
        %v6718 = vpop.xlane.xlu0 %6717
        %vm6719 = vcmp.eq.f32.partialorder %v6716, %v6718
        %v6720 = vsel %vm6719, %v6715, inf
        %6721 = vmin.xlane.f32.xlu0 %v6720
        %v6722 = vpop.xlane.xlu0 %6721
        %v6723 = vcvt.f32.s32 %v6722
        %v6724 = vcvt.f32.s32 %v6718
        %v6725 = vshll.u32 %v6724, 16
        %v6726 = vadd.s32 %v6725, %v6723
        %v6727 = vsel %vm841, %v6199, 2147483647
        %v6728 = vand.u32 %v6727, 65535
        %v6729 = vshra.s32 %v6727, 16
        %v6730 = vcvt.s32.f32 %v6728
        %v6731 = vcvt.s32.f32 %v6729
        %6732 = vmin.xlane.f32.xlu0 %v6731
        %v6733 = vpop.xlane.xlu0 %6732
        %vm6734 = vcmp.eq.f32.partialorder %v6731, %v6733
        %v6735 = vsel %vm6734, %v6730, inf
        %6736 = vmin.xlane.f32.xlu0 %v6735
        %v6737 = vpop.xlane.xlu0 %6736
        %v6738 = vcvt.f32.s32 %v6737
        %v6739 = vcvt.f32.s32 %v6733
        %v6740 = vshll.u32 %v6739, 16
        %v6741 = vadd.s32 %v6740, %v6738
        %v6742 = vsel %vm841, %v6200, 2147483647
        %v6743 = vand.u32 %v6742, 65535
        %v6744 = vshra.s32 %v6742, 16
        %v6745 = vcvt.s32.f32 %v6743
        %v6746 = vcvt.s32.f32 %v6744
        %6747 = vmin.xlane.f32.xlu0 %v6746
        %v6748 = vpop.xlane.xlu0 %6747
        %vm6749 = vcmp.eq.f32.partialorder %v6746, %v6748
        %v6750 = vsel %vm6749, %v6745, inf
        %6751 = vmin.xlane.f32.xlu0 %v6750
        %v6752 = vpop.xlane.xlu0 %6751
        %v6753 = vcvt.f32.s32 %v6752
        %v6754 = vcvt.f32.s32 %v6748
        %v6755 = vshll.u32 %v6754, 16
        %v6756 = vadd.s32 %v6755, %v6753
        %v6757 = vsel %vm841, %v6201, 2147483647
        %v6758 = vand.u32 %v6757, 65535
        %v6759 = vshra.s32 %v6757, 16
        %v6760 = vcvt.s32.f32 %v6758
        %v6761 = vcvt.s32.f32 %v6759
        %6762 = vmin.xlane.f32.xlu0 %v6761
        %v6763 = vpop.xlane.xlu0 %6762
        %vm6764 = vcmp.eq.f32.partialorder %v6761, %v6763
        %v6765 = vsel %vm6764, %v6760, inf
        %6766 = vmin.xlane.f32.xlu0 %v6765
        %v6767 = vpop.xlane.xlu0 %6766
        %v6768 = vcvt.f32.s32 %v6767
        %v6769 = vcvt.f32.s32 %v6763
        %v6770 = vshll.u32 %v6769, 16
        %v6771 = vadd.s32 %v6770, %v6768
        %v6772 = vsel %vm841, %v6202, 2147483647
        %v6773 = vand.u32 %v6772, 65535
        %v6774 = vshra.s32 %v6772, 16
        %v6775 = vcvt.s32.f32 %v6773
        %v6776 = vcvt.s32.f32 %v6774
        %6777 = vmin.xlane.f32.xlu0 %v6776
        %v6778 = vpop.xlane.xlu0 %6777
        %vm6779 = vcmp.eq.f32.partialorder %v6776, %v6778
        %v6780 = vsel %vm6779, %v6775, inf
        %6781 = vmin.xlane.f32.xlu0 %v6780
        %v6782 = vpop.xlane.xlu0 %6781
        %v6783 = vcvt.f32.s32 %v6782
        %v6784 = vcvt.f32.s32 %v6778
        %v6785 = vshll.u32 %v6784, 16
        %v6786 = vadd.s32 %v6785, %v6783
        %v6787 = vsel %vm2759, %v6203, 2147483647
        %v6788 = vand.u32 %v6787, 65535
        %v6789 = vshra.s32 %v6787, 16
        %v6790 = vcvt.s32.f32 %v6788
        %v6791 = vcvt.s32.f32 %v6789
        %6792 = vmin.xlane.f32.xlu0 %v6791
        %v6793 = vpop.xlane.xlu0 %6792
        %vm6794 = vcmp.eq.f32.partialorder %v6791, %v6793
        %v6795 = vsel %vm6794, %v6790, inf
        %6796 = vmin.xlane.f32.xlu0 %v6795
        %v6797 = vpop.xlane.xlu0 %6796
        %v6798 = vcvt.f32.s32 %v6797
        %v6799 = vcvt.f32.s32 %v6793
        %v6800 = vshll.u32 %v6799, 16
        %v6801 = vadd.s32 %v6800, %v6798
        %v6802 = vsel %vm841, %v6204, 2147483647
        %v6803 = vand.u32 %v6802, 65535
        %v6804 = vshra.s32 %v6802, 16
        %v6805 = vcvt.s32.f32 %v6803
        %v6806 = vcvt.s32.f32 %v6804
        %6807 = vmin.xlane.f32.xlu0 %v6806
        %v6808 = vpop.xlane.xlu0 %6807
        %vm6809 = vcmp.eq.f32.partialorder %v6806, %v6808
        %v6810 = vsel %vm6809, %v6805, inf
        %6811 = vmin.xlane.f32.xlu0 %v6810
        %v6812 = vpop.xlane.xlu0 %6811
        %v6813 = vcvt.f32.s32 %v6812
        %v6814 = vcvt.f32.s32 %v6808
        %v6815 = vshll.u32 %v6814, 16
        %v6816 = vadd.s32 %v6815, %v6813
        %v6817 = vsel %vm841, %v6205, 2147483647
        %v6818 = vand.u32 %v6817, 65535
        %v6819 = vshra.s32 %v6817, 16
        %v6820 = vcvt.s32.f32 %v6818
        %v6821 = vcvt.s32.f32 %v6819
        %6822 = vmin.xlane.f32.xlu0 %v6821
        %v6823 = vpop.xlane.xlu0 %6822
        %vm6824 = vcmp.eq.f32.partialorder %v6821, %v6823
        %v6825 = vsel %vm6824, %v6820, inf
        %6826 = vmin.xlane.f32.xlu0 %v6825
        %v6827 = vpop.xlane.xlu0 %6826
        %v6828 = vcvt.f32.s32 %v6827
        %v6829 = vcvt.f32.s32 %v6823
        %v6830 = vshll.u32 %v6829, 16
        %v6831 = vadd.s32 %v6830, %v6828
        %v6832 = vsel %vm841, %v6206, 2147483647
        %v6833 = vand.u32 %v6832, 65535
        %v6834 = vshra.s32 %v6832, 16
        %v6835 = vcvt.s32.f32 %v6833
        %v6836 = vcvt.s32.f32 %v6834
        %6837 = vmin.xlane.f32.xlu0 %v6836
        %v6838 = vpop.xlane.xlu0 %6837
        %vm6839 = vcmp.eq.f32.partialorder %v6836, %v6838
        %v6840 = vsel %vm6839, %v6835, inf
        %6841 = vmin.xlane.f32.xlu0 %v6840
        %v6842 = vpop.xlane.xlu0 %6841
        %v6843 = vcvt.f32.s32 %v6842
        %v6844 = vcvt.f32.s32 %v6838
        %v6845 = vshll.u32 %v6844, 16
        %v6846 = vadd.s32 %v6845, %v6843
        %v6847 = vsel %vm841, %v6207, 2147483647
        %v6848 = vand.u32 %v6847, 65535
        %v6849 = vshra.s32 %v6847, 16
        %v6850 = vcvt.s32.f32 %v6848
        %v6851 = vcvt.s32.f32 %v6849
        %6852 = vmin.xlane.f32.xlu0 %v6851
        %v6853 = vpop.xlane.xlu0 %6852
        %vm6854 = vcmp.eq.f32.partialorder %v6851, %v6853
        %v6855 = vsel %vm6854, %v6850, inf
        %6856 = vmin.xlane.f32.xlu0 %v6855
        %v6857 = vpop.xlane.xlu0 %6856
        %v6858 = vcvt.f32.s32 %v6857
        %v6859 = vcvt.f32.s32 %v6853
        %v6860 = vshll.u32 %v6859, 16
        %v6861 = vadd.s32 %v6860, %v6858
        %v6862 = vsel %vm841, %v6208, 2147483647
        %v6863 = vand.u32 %v6862, 65535
        %v6864 = vshra.s32 %v6862, 16
        %v6865 = vcvt.s32.f32 %v6863
        %v6866 = vcvt.s32.f32 %v6864
        %6867 = vmin.xlane.f32.xlu0 %v6866
        %v6868 = vpop.xlane.xlu0 %6867
        %vm6869 = vcmp.eq.f32.partialorder %v6866, %v6868
        %v6870 = vsel %vm6869, %v6865, inf
        %6871 = vmin.xlane.f32.xlu0 %v6870
        %v6872 = vpop.xlane.xlu0 %6871
        %v6873 = vcvt.f32.s32 %v6872
        %v6874 = vcvt.f32.s32 %v6868
        %v6875 = vshll.u32 %v6874, 16
        %v6876 = vadd.s32 %v6875, %v6873
        %v6877 = vsel %vm841, %v6209, 2147483647
        %v6878 = vand.u32 %v6877, 65535
        %v6879 = vshra.s32 %v6877, 16
        %v6880 = vcvt.s32.f32 %v6878
        %v6881 = vcvt.s32.f32 %v6879
        %6882 = vmin.xlane.f32.xlu0 %v6881
        %v6883 = vpop.xlane.xlu0 %6882
        %vm6884 = vcmp.eq.f32.partialorder %v6881, %v6883
        %v6885 = vsel %vm6884, %v6880, inf
        %6886 = vmin.xlane.f32.xlu0 %v6885
        %v6887 = vpop.xlane.xlu0 %6886
        %v6888 = vcvt.f32.s32 %v6887
        %v6889 = vcvt.f32.s32 %v6883
        %v6890 = vshll.u32 %v6889, 16
        %v6891 = vadd.s32 %v6890, %v6888
        %v6892 = vsel %vm841, %v6210, 2147483647
        %v6893 = vand.u32 %v6892, 65535
        %v6894 = vshra.s32 %v6892, 16
        %v6895 = vcvt.s32.f32 %v6893
        %v6896 = vcvt.s32.f32 %v6894
        %6897 = vmin.xlane.f32.xlu0 %v6896
        %v6898 = vpop.xlane.xlu0 %6897
        %vm6899 = vcmp.eq.f32.partialorder %v6896, %v6898
        %v6900 = vsel %vm6899, %v6895, inf
        %6901 = vmin.xlane.f32.xlu0 %v6900
        %v6902 = vpop.xlane.xlu0 %6901
        %v6903 = vcvt.f32.s32 %v6902
        %v6904 = vcvt.f32.s32 %v6898
        %v6905 = vshll.u32 %v6904, 16
        %v6906 = vadd.s32 %v6905, %v6903
        %v6907 = vsel %vm841, %v6211, 2147483647
        %v6908 = vand.u32 %v6907, 65535
        %v6909 = vshra.s32 %v6907, 16
        %v6910 = vcvt.s32.f32 %v6908
        %v6911 = vcvt.s32.f32 %v6909
        %6912 = vmin.xlane.f32.xlu0 %v6911
        %v6913 = vpop.xlane.xlu0 %6912
        %vm6914 = vcmp.eq.f32.partialorder %v6911, %v6913
        %v6915 = vsel %vm6914, %v6910, inf
        %6916 = vmin.xlane.f32.xlu0 %v6915
        %v6917 = vpop.xlane.xlu0 %6916
        %v6918 = vcvt.f32.s32 %v6917
        %v6919 = vcvt.f32.s32 %v6913
        %v6920 = vshll.u32 %v6919, 16
        %v6921 = vadd.s32 %v6920, %v6918
        %v6922 = vsel %vm841, %v6212, 2147483647
        %v6923 = vand.u32 %v6922, 65535
        %v6924 = vshra.s32 %v6922, 16
        %v6925 = vcvt.s32.f32 %v6923
        %v6926 = vcvt.s32.f32 %v6924
        %6927 = vmin.xlane.f32.xlu0 %v6926
        %v6928 = vpop.xlane.xlu0 %6927
        %vm6929 = vcmp.eq.f32.partialorder %v6926, %v6928
        %v6930 = vsel %vm6929, %v6925, inf
        %6931 = vmin.xlane.f32.xlu0 %v6930
        %v6932 = vpop.xlane.xlu0 %6931
        %v6933 = vcvt.f32.s32 %v6932
        %v6934 = vcvt.f32.s32 %v6928
        %v6935 = vshll.u32 %v6934, 16
        %v6936 = vadd.s32 %v6935, %v6933
        %v6937 = vsel %vm841, %v6213, 2147483647
        %v6938 = vand.u32 %v6937, 65535
        %v6939 = vshra.s32 %v6937, 16
        %v6940 = vcvt.s32.f32 %v6938
        %v6941 = vcvt.s32.f32 %v6939
        %6942 = vmin.xlane.f32.xlu0 %v6941
        %v6943 = vpop.xlane.xlu0 %6942
        %vm6944 = vcmp.eq.f32.partialorder %v6941, %v6943
        %v6945 = vsel %vm6944, %v6940, inf
        %6946 = vmin.xlane.f32.xlu0 %v6945
        %v6947 = vpop.xlane.xlu0 %6946
        %v6948 = vcvt.f32.s32 %v6947
        %v6949 = vcvt.f32.s32 %v6943
        %v6950 = vshll.u32 %v6949, 16
        %v6951 = vadd.s32 %v6950, %v6948
        %v6952 = vsel %vm841, %v6214, 2147483647
        %v6953 = vand.u32 %v6952, 65535
        %v6954 = vshra.s32 %v6952, 16
        %v6955 = vcvt.s32.f32 %v6953
        %v6956 = vcvt.s32.f32 %v6954
        %6957 = vmin.xlane.f32.xlu0 %v6956
        %v6958 = vpop.xlane.xlu0 %6957
        %vm6959 = vcmp.eq.f32.partialorder %v6956, %v6958
        %v6960 = vsel %vm6959, %v6955, inf
        %6961 = vmin.xlane.f32.xlu0 %v6960
        %v6962 = vpop.xlane.xlu0 %6961
        %v6963 = vcvt.f32.s32 %v6962
        %v6964 = vcvt.f32.s32 %v6958
        %v6965 = vshll.u32 %v6964, 16
        %v6966 = vadd.s32 %v6965, %v6963
        %v6967 = vsel %vm841, %v6215, 2147483647
        %v6968 = vand.u32 %v6967, 65535
        %v6969 = vshra.s32 %v6967, 16
        %v6970 = vcvt.s32.f32 %v6968
        %v6971 = vcvt.s32.f32 %v6969
        %6972 = vmin.xlane.f32.xlu0 %v6971
        %v6973 = vpop.xlane.xlu0 %6972
        %vm6974 = vcmp.eq.f32.partialorder %v6971, %v6973
        %v6975 = vsel %vm6974, %v6970, inf
        %6976 = vmin.xlane.f32.xlu0 %v6975
        %v6977 = vpop.xlane.xlu0 %6976
        %v6978 = vcvt.f32.s32 %v6977
        %v6979 = vcvt.f32.s32 %v6973
        %v6980 = vshll.u32 %v6979, 16
        %v6981 = vadd.s32 %v6980, %v6978
        %v6982 = vsel %vm2759, %v6216, 2147483647
        %v6983 = vand.u32 %v6982, 65535
        %v6984 = vshra.s32 %v6982, 16
        %v6985 = vcvt.s32.f32 %v6983
        %v6986 = vcvt.s32.f32 %v6984
        %6987 = vmin.xlane.f32.xlu0 %v6986
        %v6988 = vpop.xlane.xlu0 %6987
        %vm6989 = vcmp.eq.f32.partialorder %v6986, %v6988
        %v6990 = vsel %vm6989, %v6985, inf
        %6991 = vmin.xlane.f32.xlu0 %v6990
        %v6992 = vpop.xlane.xlu0 %6991
        %v6993 = vcvt.f32.s32 %v6992
        %v6994 = vcvt.f32.s32 %v6988
        %v6995 = vshll.u32 %v6994, 16
        %v6996 = vadd.s32 %v6995, %v6993
        %vm6997 = vcmp.eq.s32.totalorder %v6231, 101
        %vm6998 = vcmp.eq.s32.totalorder %v6246, 101
        %vm6999 = vcmp.eq.s32.totalorder %v6261, 101
        %vm7000 = vcmp.eq.s32.totalorder %v6276, 101
        %vm7001 = vcmp.eq.s32.totalorder %v6291, 101
        %vm7002 = vcmp.eq.s32.totalorder %v6306, 101
        %vm7003 = vcmp.eq.s32.totalorder %v6321, 101
        %vm7004 = vcmp.eq.s32.totalorder %v6336, 101
        %vm7005 = vcmp.eq.s32.totalorder %v6351, 101
        %vm7006 = vcmp.eq.s32.totalorder %v6366, 101
        %vm7007 = vcmp.eq.s32.totalorder %v6381, 101
        %vm7008 = vcmp.eq.s32.totalorder %v6396, 101
        %vm7009 = vcmp.eq.s32.totalorder %v6411, 101
        %vm7010 = vcmp.eq.s32.totalorder %v6426, 101
        %vm7011 = vcmp.eq.s32.totalorder %v6441, 101
        %vm7012 = vcmp.eq.s32.totalorder %v6456, 101
        %vm7013 = vcmp.eq.s32.totalorder %v6471, 101
        %vm7014 = vcmp.eq.s32.totalorder %v6486, 101
        %vm7015 = vcmp.eq.s32.totalorder %v6501, 101
        %vm7016 = vcmp.eq.s32.totalorder %v6516, 101
        %vm7017 = vcmp.eq.s32.totalorder %v6531, 101
        %vm7018 = vcmp.eq.s32.totalorder %v6546, 101
        %vm7019 = vcmp.eq.s32.totalorder %v6561, 101
        %vm7020 = vcmp.eq.s32.totalorder %v6576, 101
        %vm7021 = vcmp.eq.s32.totalorder %v6591, 101
        %vm7022 = vcmp.eq.s32.totalorder %v6606, 101
        %vm7023 = vcmp.eq.s32.totalorder %v6621, 101
        %vm7024 = vcmp.eq.s32.totalorder %v6636, 101
        %vm7025 = vcmp.eq.s32.totalorder %v6651, 101
        %vm7026 = vcmp.eq.s32.totalorder %v6666, 101
        %vm7027 = vcmp.eq.s32.totalorder %v6681, 101
        %vm7028 = vcmp.eq.s32.totalorder %v6696, 101
        %vm7029 = vcmp.eq.s32.totalorder %v6711, 101
        %vm7030 = vcmp.eq.s32.totalorder %v6726, 101
        %vm7031 = vcmp.eq.s32.totalorder %v6741, 101
        %vm7032 = vcmp.eq.s32.totalorder %v6756, 101
        %vm7033 = vcmp.eq.s32.totalorder %v6771, 101
        %vm7034 = vcmp.eq.s32.totalorder %v6786, 101
        %vm7035 = vcmp.eq.s32.totalorder %v6801, 101
        %vm7036 = vcmp.eq.s32.totalorder %v6816, 101
        %vm7037 = vcmp.eq.s32.totalorder %v6831, 101
        %vm7038 = vcmp.eq.s32.totalorder %v6846, 101
        %vm7039 = vcmp.eq.s32.totalorder %v6861, 101
        %vm7040 = vcmp.eq.s32.totalorder %v6876, 101
        %vm7041 = vcmp.eq.s32.totalorder %v6891, 101
        %vm7042 = vcmp.eq.s32.totalorder %v6906, 101
        %vm7043 = vcmp.eq.s32.totalorder %v6921, 101
        %vm7044 = vcmp.eq.s32.totalorder %v6936, 101
        %vm7045 = vcmp.eq.s32.totalorder %v6951, 101
        %vm7046 = vcmp.eq.s32.totalorder %v6966, 101
        %vm7047 = vcmp.eq.s32.totalorder %v6981, 101
        %vm7048 = vcmp.eq.s32.totalorder %v6996, 101
        %v7049 = vsel %vm6997, 0, %v6231
        %v7050 = vsel %vm6998, 0, %v6246
        %v7051 = vsel %vm6999, 0, %v6261
        %v7052 = vsel %vm7000, 0, %v6276
        %v7053 = vsel %vm7001, 0, %v6291
        %v7054 = vsel %vm7002, 0, %v6306
        %v7055 = vsel %vm7003, 0, %v6321
        %v7056 = vsel %vm7004, 0, %v6336
        %v7057 = vsel %vm7005, 0, %v6351
        %v7058 = vsel %vm7006, 0, %v6366
        %v7059 = vsel %vm7007, 0, %v6381
        %v7060 = vsel %vm7008, 0, %v6396
        %v7061 = vsel %vm7009, 0, %v6411
        %v7062 = vsel %vm7010, 0, %v6426
        %v7063 = vsel %vm7011, 0, %v6441
        %v7064 = vsel %vm7012, 0, %v6456
        %v7065 = vsel %vm7013, 0, %v6471
        %v7066 = vsel %vm7014, 0, %v6486
        %v7067 = vsel %vm7015, 0, %v6501
        %v7068 = vsel %vm7016, 0, %v6516
        %v7069 = vsel %vm7017, 0, %v6531
        %v7070 = vsel %vm7018, 0, %v6546
        %v7071 = vsel %vm7019, 0, %v6561
        %v7072 = vsel %vm7020, 0, %v6576
        %v7073 = vsel %vm7021, 0, %v6591
        %v7074 = vsel %vm7022, 0, %v6606
        %v7075 = vsel %vm7023, 0, %v6621
        %v7076 = vsel %vm7024, 0, %v6636
        %v7077 = vsel %vm7025, 0, %v6651
        %v7078 = vsel %vm7026, 0, %v6666
        %v7079 = vsel %vm7027, 0, %v6681
        %v7080 = vsel %vm7028, 0, %v6696
        %v7081 = vsel %vm7029, 0, %v6711
        %v7082 = vsel %vm7030, 0, %v6726
        %v7083 = vsel %vm7031, 0, %v6741
        %v7084 = vsel %vm7032, 0, %v6756
        %v7085 = vsel %vm7033, 0, %v6771
        %v7086 = vsel %vm7034, 0, %v6786
        %v7087 = vsel %vm7035, 0, %v6801
        %v7088 = vsel %vm7036, 0, %v6816
        %v7089 = vsel %vm7037, 0, %v6831
        %v7090 = vsel %vm7038, 0, %v6846
        %v7091 = vsel %vm7039, 0, %v6861
        %v7092 = vsel %vm7040, 0, %v6876
        %v7093 = vsel %vm7041, 0, %v6891
        %v7094 = vsel %vm7042, 0, %v6906
        %v7095 = vsel %vm7043, 0, %v6921
        %v7096 = vsel %vm7044, 0, %v6936
        %v7097 = vsel %vm7045, 0, %v6951
        %v7098 = vsel %vm7046, 0, %v6966
        %v7099 = vsel %vm7047, 0, %v6981
        %v7100 = vsel %vm7048, 0, %v6996
        %vm7101 = vcmp.gt.f32.partialorder %v417, 0.5
        %vm7102 = vcmp.gt.f32.partialorder %v418, 0.5
        %vm7103 = vcmp.gt.f32.partialorder %v419, 0.5
        %vm7104 = vcmp.gt.f32.partialorder %v420, 0.5
        %vm7105 = vcmp.gt.f32.partialorder %v421, 0.5
        %vm7106 = vcmp.gt.f32.partialorder %v422, 0.5
        %vm7107 = vcmp.gt.f32.partialorder %v423, 0.5
        %vm7108 = vcmp.gt.f32.partialorder %v424, 0.5
        %vm7109 = vcmp.gt.f32.partialorder %v425, 0.5
        %vm7110 = vcmp.gt.f32.partialorder %v426, 0.5
        %vm7111 = vcmp.gt.f32.partialorder %v427, 0.5
        %vm7112 = vcmp.gt.f32.partialorder %v428, 0.5
        %vm7113 = vcmp.gt.f32.partialorder %v429, 0.5
        %vm7114 = vcmp.gt.f32.partialorder %v430, 0.5
        %vm7115 = vcmp.gt.f32.partialorder %v431, 0.5
        %vm7116 = vcmp.gt.f32.partialorder %v432, 0.5
        %vm7117 = vcmp.gt.f32.partialorder %v433, 0.5
        %vm7118 = vcmp.gt.f32.partialorder %v434, 0.5
        %vm7119 = vcmp.gt.f32.partialorder %v435, 0.5
        %vm7120 = vcmp.gt.f32.partialorder %v436, 0.5
        %vm7121 = vcmp.gt.f32.partialorder %v437, 0.5
        %vm7122 = vcmp.gt.f32.partialorder %v438, 0.5
        %vm7123 = vcmp.gt.f32.partialorder %v439, 0.5
        %vm7124 = vcmp.gt.f32.partialorder %v440, 0.5
        %vm7125 = vcmp.gt.f32.partialorder %v441, 0.5
        %vm7126 = vcmp.gt.f32.partialorder %v442, 0.5
        %vm7127 = vcmp.gt.f32.partialorder %v443, 0.5
        %vm7128 = vcmp.gt.f32.partialorder %v444, 0.5
        %vm7129 = vcmp.gt.f32.partialorder %v445, 0.5
        %vm7130 = vcmp.gt.f32.partialorder %v446, 0.5
        %vm7131 = vcmp.gt.f32.partialorder %v447, 0.5
        %vm7132 = vcmp.gt.f32.partialorder %v448, 0.5
        %vm7133 = vcmp.gt.f32.partialorder %v449, 0.5
        %vm7134 = vcmp.gt.f32.partialorder %v450, 0.5
        %vm7135 = vcmp.gt.f32.partialorder %v451, 0.5
        %vm7136 = vcmp.gt.f32.partialorder %v452, 0.5
        %vm7137 = vcmp.gt.f32.partialorder %v453, 0.5
        %vm7138 = vcmp.gt.f32.partialorder %v454, 0.5
        %vm7139 = vcmp.gt.f32.partialorder %v455, 0.5
        %vm7140 = vcmp.gt.f32.partialorder %v456, 0.5
        %vm7141 = vcmp.gt.f32.partialorder %v457, 0.5
        %vm7142 = vcmp.gt.f32.partialorder %v458, 0.5
        %vm7143 = vcmp.gt.f32.partialorder %v459, 0.5
        %vm7144 = vcmp.gt.f32.partialorder %v460, 0.5
        %vm7145 = vcmp.gt.f32.partialorder %v461, 0.5
        %vm7146 = vcmp.gt.f32.partialorder %v462, 0.5
        %vm7147 = vcmp.gt.f32.partialorder %v463, 0.5
        %vm7148 = vcmp.gt.f32.partialorder %v464, 0.5
        %vm7149 = vcmp.gt.f32.partialorder %v465, 0.5
        %vm7150 = vcmp.gt.f32.partialorder %v466, 0.5
        %vm7151 = vcmp.gt.f32.partialorder %v467, 0.5
        %vm7152 = vcmp.gt.f32.partialorder %v468, 0.5
        %vm7153 = vcmp.gt.f32.partialorder %v731, 0.5
        %vm7154 = vcmp.gt.f32.partialorder %v732, 0.5
        %vm7155 = vcmp.gt.f32.partialorder %v733, 0.5
        %vm7156 = vcmp.gt.f32.partialorder %v734, 0.5
        %vm7157 = vcmp.gt.f32.partialorder %v735, 0.5
        %vm7158 = vcmp.gt.f32.partialorder %v736, 0.5
        %vm7159 = vcmp.gt.f32.partialorder %v737, 0.5
        %vm7160 = vcmp.gt.f32.partialorder %v738, 0.5
        %vm7161 = vcmp.gt.f32.partialorder %v739, 0.5
        %vm7162 = vcmp.gt.f32.partialorder %v740, 0.5
        %vm7163 = vcmp.gt.f32.partialorder %v741, 0.5
        %vm7164 = vcmp.gt.f32.partialorder %v742, 0.5
        %vm7165 = vcmp.gt.f32.partialorder %v743, 0.5
        %vm7166 = vcmp.gt.f32.partialorder %v744, 0.5
        %vm7167 = vcmp.gt.f32.partialorder %v745, 0.5
        %vm7168 = vcmp.gt.f32.partialorder %v746, 0.5
        %vm7169 = vcmp.gt.f32.partialorder %v747, 0.5
        %vm7170 = vcmp.gt.f32.partialorder %v748, 0.5
        %vm7171 = vcmp.gt.f32.partialorder %v749, 0.5
        %vm7172 = vcmp.gt.f32.partialorder %v750, 0.5
        %vm7173 = vcmp.gt.f32.partialorder %v751, 0.5
        %vm7174 = vcmp.gt.f32.partialorder %v752, 0.5
        %vm7175 = vcmp.gt.f32.partialorder %v753, 0.5
        %vm7176 = vcmp.gt.f32.partialorder %v754, 0.5
        %vm7177 = vcmp.gt.f32.partialorder %v755, 0.5
        %vm7178 = vcmp.gt.f32.partialorder %v756, 0.5
        %vm7179 = vcmp.gt.f32.partialorder %v757, 0.5
        %vm7180 = vcmp.gt.f32.partialorder %v758, 0.5
        %vm7181 = vcmp.gt.f32.partialorder %v759, 0.5
        %vm7182 = vcmp.gt.f32.partialorder %v760, 0.5
        %vm7183 = vcmp.gt.f32.partialorder %v761, 0.5
        %vm7184 = vcmp.gt.f32.partialorder %v762, 0.5
        %vm7185 = vcmp.gt.f32.partialorder %v763, 0.5
        %vm7186 = vcmp.gt.f32.partialorder %v764, 0.5
        %vm7187 = vcmp.gt.f32.partialorder %v765, 0.5
        %vm7188 = vcmp.gt.f32.partialorder %v766, 0.5
        %vm7189 = vcmp.gt.f32.partialorder %v767, 0.5
        %vm7190 = vcmp.gt.f32.partialorder %v768, 0.5
        %vm7191 = vcmp.gt.f32.partialorder %v769, 0.5
        %vm7192 = vcmp.gt.f32.partialorder %v770, 0.5
        %vm7193 = vcmp.gt.f32.partialorder %v771, 0.5
        %vm7194 = vcmp.gt.f32.partialorder %v772, 0.5
        %vm7195 = vcmp.gt.f32.partialorder %v773, 0.5
        %vm7196 = vcmp.gt.f32.partialorder %v774, 0.5
        %vm7197 = vcmp.gt.f32.partialorder %v775, 0.5
        %vm7198 = vcmp.gt.f32.partialorder %v776, 0.5
        %vm7199 = vcmp.gt.f32.partialorder %v777, 0.5
        %vm7200 = vcmp.gt.f32.partialorder %v778, 0.5
        %vm7201 = vcmp.gt.f32.partialorder %v779, 0.5
        %vm7202 = vcmp.gt.f32.partialorder %v780, 0.5
        %vm7203 = vcmp.gt.f32.partialorder %v781, 0.5
        %vm7204 = vcmp.gt.f32.partialorder %v782, 0.5
        %v7205 = vsel %vm7101, 1, 0
        %v7206 = vsel %vm7102, 1, 0
        %v7207 = vsel %vm7103, 1, 0
        %v7208 = vsel %vm7104, 1, 0
        %v7209 = vsel %vm7105, 1, 0
        %v7210 = vsel %vm7106, 1, 0
        %v7211 = vsel %vm7107, 1, 0
        %v7212 = vsel %vm7108, 1, 0
        %v7213 = vsel %vm7109, 1, 0
        %v7214 = vsel %vm7110, 1, 0
        %v7215 = vsel %vm7111, 1, 0
        %v7216 = vsel %vm7112, 1, 0
        %v7217 = vsel %vm7113, 1, 0
        %v7218 = vsel %vm7114, 1, 0
        %v7219 = vsel %vm7115, 1, 0
        %v7220 = vsel %vm7116, 1, 0
        %v7221 = vsel %vm7117, 1, 0
        %v7222 = vsel %vm7118, 1, 0
        %v7223 = vsel %vm7119, 1, 0
        %v7224 = vsel %vm7120, 1, 0
        %v7225 = vsel %vm7121, 1, 0
        %v7226 = vsel %vm7122, 1, 0
        %v7227 = vsel %vm7123, 1, 0
        %v7228 = vsel %vm7124, 1, 0
        %v7229 = vsel %vm7125, 1, 0
        %v7230 = vsel %vm7126, 1, 0
        %v7231 = vsel %vm7127, 1, 0
        %v7232 = vsel %vm7128, 1, 0
        %v7233 = vsel %vm7129, 1, 0
        %v7234 = vsel %vm7130, 1, 0
        %v7235 = vsel %vm7131, 1, 0
        %v7236 = vsel %vm7132, 1, 0
        %v7237 = vsel %vm7133, 1, 0
        %v7238 = vsel %vm7134, 1, 0
        %v7239 = vsel %vm7135, 1, 0
        %v7240 = vsel %vm7136, 1, 0
        %v7241 = vsel %vm7137, 1, 0
        %v7242 = vsel %vm7138, 1, 0
        %v7243 = vsel %vm7139, 1, 0
        %v7244 = vsel %vm7140, 1, 0
        %v7245 = vsel %vm7141, 1, 0
        %v7246 = vsel %vm7142, 1, 0
        %v7247 = vsel %vm7143, 1, 0
        %v7248 = vsel %vm7144, 1, 0
        %v7249 = vsel %vm7145, 1, 0
        %v7250 = vsel %vm7146, 1, 0
        %v7251 = vsel %vm7147, 1, 0
        %v7252 = vsel %vm7148, 1, 0
        %v7253 = vsel %vm7149, 1, 0
        %v7254 = vsel %vm7150, 1, 0
        %v7255 = vsel %vm7151, 1, 0
        %v7256 = vsel %vm7152, 1, 0
        %7257 = vset.pattern.permute.xlu0 0
        %7258 = vperm.xlu0 %7257, %v7205
        %v7259 = vpop.permute.xlu0 %7258
        %7260 = vset.pattern.permute.xlu0 0
        %7261 = vperm.xlu0 %7260, %v7206
        %v7262 = vpop.permute.xlu0 %7261
        %7263 = vset.pattern.permute.xlu0 0
        %7264 = vperm.xlu0 %7263, %v7207
        %v7265 = vpop.permute.xlu0 %7264
        %7266 = vset.pattern.permute.xlu0 0
        %7267 = vperm.xlu0 %7266, %v7208
        %v7268 = vpop.permute.xlu0 %7267
        %7269 = vset.pattern.permute.xlu0 0
        %7270 = vperm.xlu0 %7269, %v7209
        %v7271 = vpop.permute.xlu0 %7270
        %7272 = vset.pattern.permute.xlu0 0
        %7273 = vperm.xlu0 %7272, %v7210
        %v7274 = vpop.permute.xlu0 %7273
        %7275 = vset.pattern.permute.xlu0 0
        %7276 = vperm.xlu0 %7275, %v7211
        %v7277 = vpop.permute.xlu0 %7276
        %7278 = vset.pattern.permute.xlu0 0
        %7279 = vperm.xlu0 %7278, %v7212
        %v7280 = vpop.permute.xlu0 %7279
        %7281 = vset.pattern.permute.xlu0 0
        %7282 = vperm.xlu0 %7281, %v7213
        %v7283 = vpop.permute.xlu0 %7282
        %7284 = vset.pattern.permute.xlu0 0
        %7285 = vperm.xlu0 %7284, %v7214
        %v7286 = vpop.permute.xlu0 %7285
        %7287 = vset.pattern.permute.xlu0 0
        %7288 = vperm.xlu0 %7287, %v7215
        %v7289 = vpop.permute.xlu0 %7288
        %7290 = vset.pattern.permute.xlu0 0
        %7291 = vperm.xlu0 %7290, %v7216
        %v7292 = vpop.permute.xlu0 %7291
        %7293 = vset.pattern.permute.xlu0 0
        %7294 = vperm.xlu0 %7293, %v7217
        %v7295 = vpop.permute.xlu0 %7294
        %7296 = vset.pattern.permute.xlu0 0
        %7297 = vperm.xlu0 %7296, %v7218
        %v7298 = vpop.permute.xlu0 %7297
        %7299 = vset.pattern.permute.xlu0 0
        %7300 = vperm.xlu0 %7299, %v7219
        %v7301 = vpop.permute.xlu0 %7300
        %7302 = vset.pattern.permute.xlu0 0
        %7303 = vperm.xlu0 %7302, %v7220
        %v7304 = vpop.permute.xlu0 %7303
        %7305 = vset.pattern.permute.xlu0 0
        %7306 = vperm.xlu0 %7305, %v7221
        %v7307 = vpop.permute.xlu0 %7306
        %7308 = vset.pattern.permute.xlu0 0
        %7309 = vperm.xlu0 %7308, %v7222
        %v7310 = vpop.permute.xlu0 %7309
        %7311 = vset.pattern.permute.xlu0 0
        %7312 = vperm.xlu0 %7311, %v7223
        %v7313 = vpop.permute.xlu0 %7312
        %7314 = vset.pattern.permute.xlu0 0
        %7315 = vperm.xlu0 %7314, %v7224
        %v7316 = vpop.permute.xlu0 %7315
        %7317 = vset.pattern.permute.xlu0 0
        %7318 = vperm.xlu0 %7317, %v7225
        %v7319 = vpop.permute.xlu0 %7318
        %7320 = vset.pattern.permute.xlu0 0
        %7321 = vperm.xlu0 %7320, %v7226
        %v7322 = vpop.permute.xlu0 %7321
        %7323 = vset.pattern.permute.xlu0 0
        %7324 = vperm.xlu0 %7323, %v7227
        %v7325 = vpop.permute.xlu0 %7324
        %7326 = vset.pattern.permute.xlu0 0
        %7327 = vperm.xlu0 %7326, %v7228
        %v7328 = vpop.permute.xlu0 %7327
        %7329 = vset.pattern.permute.xlu0 0
        %7330 = vperm.xlu0 %7329, %v7229
        %v7331 = vpop.permute.xlu0 %7330
        %7332 = vset.pattern.permute.xlu0 0
        %7333 = vperm.xlu0 %7332, %v7230
        %v7334 = vpop.permute.xlu0 %7333
        %7335 = vset.pattern.permute.xlu0 0
        %7336 = vperm.xlu0 %7335, %v7231
        %v7337 = vpop.permute.xlu0 %7336
        %7338 = vset.pattern.permute.xlu0 0
        %7339 = vperm.xlu0 %7338, %v7232
        %v7340 = vpop.permute.xlu0 %7339
        %7341 = vset.pattern.permute.xlu0 0
        %7342 = vperm.xlu0 %7341, %v7233
        %v7343 = vpop.permute.xlu0 %7342
        %7344 = vset.pattern.permute.xlu0 0
        %7345 = vperm.xlu0 %7344, %v7234
        %v7346 = vpop.permute.xlu0 %7345
        %7347 = vset.pattern.permute.xlu0 0
        %7348 = vperm.xlu0 %7347, %v7235
        %v7349 = vpop.permute.xlu0 %7348
        %7350 = vset.pattern.permute.xlu0 0
        %7351 = vperm.xlu0 %7350, %v7236
        %v7352 = vpop.permute.xlu0 %7351
        %7353 = vset.pattern.permute.xlu0 0
        %7354 = vperm.xlu0 %7353, %v7237
        %v7355 = vpop.permute.xlu0 %7354
        %7356 = vset.pattern.permute.xlu0 0
        %7357 = vperm.xlu0 %7356, %v7238
        %v7358 = vpop.permute.xlu0 %7357
        %7359 = vset.pattern.permute.xlu0 0
        %7360 = vperm.xlu0 %7359, %v7239
        %v7361 = vpop.permute.xlu0 %7360
        %7362 = vset.pattern.permute.xlu0 0
        %7363 = vperm.xlu0 %7362, %v7240
        %v7364 = vpop.permute.xlu0 %7363
        %7365 = vset.pattern.permute.xlu0 0
        %7366 = vperm.xlu0 %7365, %v7241
        %v7367 = vpop.permute.xlu0 %7366
        %7368 = vset.pattern.permute.xlu0 0
        %7369 = vperm.xlu0 %7368, %v7242
        %v7370 = vpop.permute.xlu0 %7369
        %7371 = vset.pattern.permute.xlu0 0
        %7372 = vperm.xlu0 %7371, %v7243
        %v7373 = vpop.permute.xlu0 %7372
        %7374 = vset.pattern.permute.xlu0 0
        %7375 = vperm.xlu0 %7374, %v7244
        %v7376 = vpop.permute.xlu0 %7375
        %7377 = vset.pattern.permute.xlu0 0
        %7378 = vperm.xlu0 %7377, %v7245
        %v7379 = vpop.permute.xlu0 %7378
        %7380 = vset.pattern.permute.xlu0 0
        %7381 = vperm.xlu0 %7380, %v7246
        %v7382 = vpop.permute.xlu0 %7381
        %7383 = vset.pattern.permute.xlu0 0
        %7384 = vperm.xlu0 %7383, %v7247
        %v7385 = vpop.permute.xlu0 %7384
        %7386 = vset.pattern.permute.xlu0 0
        %7387 = vperm.xlu0 %7386, %v7248
        %v7388 = vpop.permute.xlu0 %7387
        %7389 = vset.pattern.permute.xlu0 0
        %7390 = vperm.xlu0 %7389, %v7249
        %v7391 = vpop.permute.xlu0 %7390
        %7392 = vset.pattern.permute.xlu0 0
        %7393 = vperm.xlu0 %7392, %v7250
        %v7394 = vpop.permute.xlu0 %7393
        %7395 = vset.pattern.permute.xlu0 0
        %7396 = vperm.xlu0 %7395, %v7251
        %v7397 = vpop.permute.xlu0 %7396
        %7398 = vset.pattern.permute.xlu0 0
        %7399 = vperm.xlu0 %7398, %v7252
        %v7400 = vpop.permute.xlu0 %7399
        %7401 = vset.pattern.permute.xlu0 0
        %7402 = vperm.xlu0 %7401, %v7253
        %v7403 = vpop.permute.xlu0 %7402
        %7404 = vset.pattern.permute.xlu0 0
        %7405 = vperm.xlu0 %7404, %v7254
        %v7406 = vpop.permute.xlu0 %7405
        %7407 = vset.pattern.permute.xlu0 0
        %7408 = vperm.xlu0 %7407, %v7255
        %v7409 = vpop.permute.xlu0 %7408
        %7410 = vset.pattern.permute.xlu0 0
        %7411 = vperm.xlu0 %7410, %v7256
        %v7412 = vpop.permute.xlu0 %7411
        %vm7413 = vcmp.eq.s32.totalorder %v7259, 1
        %vm7414 = vcmp.eq.s32.totalorder %v7262, 1
        %vm7415 = vcmp.eq.s32.totalorder %v7265, 1
        %vm7416 = vcmp.eq.s32.totalorder %v7268, 1
        %vm7417 = vcmp.eq.s32.totalorder %v7271, 1
        %vm7418 = vcmp.eq.s32.totalorder %v7274, 1
        %vm7419 = vcmp.eq.s32.totalorder %v7277, 1
        %vm7420 = vcmp.eq.s32.totalorder %v7280, 1
        %vm7421 = vcmp.eq.s32.totalorder %v7283, 1
        %vm7422 = vcmp.eq.s32.totalorder %v7286, 1
        %vm7423 = vcmp.eq.s32.totalorder %v7289, 1
        %vm7424 = vcmp.eq.s32.totalorder %v7292, 1
        %vm7425 = vcmp.eq.s32.totalorder %v7295, 1
        %vm7426 = vcmp.eq.s32.totalorder %v7298, 1
        %vm7427 = vcmp.eq.s32.totalorder %v7301, 1
        %vm7428 = vcmp.eq.s32.totalorder %v7304, 1
        %vm7429 = vcmp.eq.s32.totalorder %v7307, 1
        %vm7430 = vcmp.eq.s32.totalorder %v7310, 1
        %vm7431 = vcmp.eq.s32.totalorder %v7313, 1
        %vm7432 = vcmp.eq.s32.totalorder %v7316, 1
        %vm7433 = vcmp.eq.s32.totalorder %v7319, 1
        %vm7434 = vcmp.eq.s32.totalorder %v7322, 1
        %vm7435 = vcmp.eq.s32.totalorder %v7325, 1
        %vm7436 = vcmp.eq.s32.totalorder %v7328, 1
        %vm7437 = vcmp.eq.s32.totalorder %v7331, 1
        %vm7438 = vcmp.eq.s32.totalorder %v7334, 1
        %vm7439 = vcmp.eq.s32.totalorder %v7337, 1
        %vm7440 = vcmp.eq.s32.totalorder %v7340, 1
        %vm7441 = vcmp.eq.s32.totalorder %v7343, 1
        %vm7442 = vcmp.eq.s32.totalorder %v7346, 1
        %vm7443 = vcmp.eq.s32.totalorder %v7349, 1
        %vm7444 = vcmp.eq.s32.totalorder %v7352, 1
        %vm7445 = vcmp.eq.s32.totalorder %v7355, 1
        %vm7446 = vcmp.eq.s32.totalorder %v7358, 1
        %vm7447 = vcmp.eq.s32.totalorder %v7361, 1
        %vm7448 = vcmp.eq.s32.totalorder %v7364, 1
        %vm7449 = vcmp.eq.s32.totalorder %v7367, 1
        %vm7450 = vcmp.eq.s32.totalorder %v7370, 1
        %vm7451 = vcmp.eq.s32.totalorder %v7373, 1
        %vm7452 = vcmp.eq.s32.totalorder %v7376, 1
        %vm7453 = vcmp.eq.s32.totalorder %v7379, 1
        %vm7454 = vcmp.eq.s32.totalorder %v7382, 1
        %vm7455 = vcmp.eq.s32.totalorder %v7385, 1
        %vm7456 = vcmp.eq.s32.totalorder %v7388, 1
        %vm7457 = vcmp.eq.s32.totalorder %v7391, 1
        %vm7458 = vcmp.eq.s32.totalorder %v7394, 1
        %vm7459 = vcmp.eq.s32.totalorder %v7397, 1
        %vm7460 = vcmp.eq.s32.totalorder %v7400, 1
        %vm7461 = vcmp.eq.s32.totalorder %v7403, 1
        %vm7462 = vcmp.eq.s32.totalorder %v7406, 1
        %vm7463 = vcmp.eq.s32.totalorder %v7409, 1
        %vm7464 = vcmp.eq.s32.totalorder %v7412, 1
        %vm7465 = vmand %vm7413, %vm7153
        %vm7466 = vmand %vm7414, %vm7154
        %vm7467 = vmand %vm7415, %vm7155
        %vm7468 = vmand %vm7416, %vm7156
        %vm7469 = vmand %vm7417, %vm7157
        %vm7470 = vmand %vm7418, %vm7158
        %vm7471 = vmand %vm7419, %vm7159
        %vm7472 = vmand %vm7420, %vm7160
        %vm7473 = vmand %vm7421, %vm7161
        %vm7474 = vmand %vm7422, %vm7162
        %vm7475 = vmand %vm7423, %vm7163
        %vm7476 = vmand %vm7424, %vm7164
        %vm7477 = vmand %vm7425, %vm7165
        %vm7478 = vmand %vm7426, %vm7166
        %vm7479 = vmand %vm7427, %vm7167
        %vm7480 = vmand %vm7428, %vm7168
        %vm7481 = vmand %vm7429, %vm7169
        %vm7482 = vmand %vm7430, %vm7170
        %vm7483 = vmand %vm7431, %vm7171
        %vm7484 = vmand %vm7432, %vm7172
        %vm7485 = vmand %vm7433, %vm7173
        %vm7486 = vmand %vm7434, %vm7174
        %vm7487 = vmand %vm7435, %vm7175
        %vm7488 = vmand %vm7436, %vm7176
        %vm7489 = vmand %vm7437, %vm7177
        %vm7490 = vmand %vm7438, %vm7178
        %vm7491 = vmand %vm7439, %vm7179
        %vm7492 = vmand %vm7440, %vm7180
        %vm7493 = vmand %vm7441, %vm7181
        %vm7494 = vmand %vm7442, %vm7182
        %vm7495 = vmand %vm7443, %vm7183
        %vm7496 = vmand %vm7444, %vm7184
        %vm7497 = vmand %vm7445, %vm7185
        %vm7498 = vmand %vm7446, %vm7186
        %vm7499 = vmand %vm7447, %vm7187
        %vm7500 = vmand %vm7448, %vm7188
        %vm7501 = vmand %vm7449, %vm7189
        %vm7502 = vmand %vm7450, %vm7190
        %vm7503 = vmand %vm7451, %vm7191
        %vm7504 = vmand %vm7452, %vm7192
        %vm7505 = vmand %vm7453, %vm7193
        %vm7506 = vmand %vm7454, %vm7194
        %vm7507 = vmand %vm7455, %vm7195
        %vm7508 = vmand %vm7456, %vm7196
        %vm7509 = vmand %vm7457, %vm7197
        %vm7510 = vmand %vm7458, %vm7198
        %vm7511 = vmand %vm7459, %vm7199
        %vm7512 = vmand %vm7460, %vm7200
        %vm7513 = vmand %vm7461, %vm7201
        %vm7514 = vmand %vm7462, %vm7202
        %vm7515 = vmand %vm7463, %vm7203
        %vm7516 = vmand %vm7464, %vm7204
        %v7517 = vsel %vm7465, %v474, 101
        %v7518 = vsel %vm7466, %v475, 101
        %v7519 = vsel %vm7467, %v476, 101
        %v7520 = vsel %vm7468, %v477, 101
        %v7521 = vsel %vm7469, %v478, 101
        %v7522 = vsel %vm7470, %v479, 101
        %v7523 = vsel %vm7471, %v480, 101
        %v7524 = vsel %vm7472, %v481, 101
        %v7525 = vsel %vm7473, %v482, 101
        %v7526 = vsel %vm7474, %v483, 101
        %v7527 = vsel %vm7475, %v484, 101
        %v7528 = vsel %vm7476, %v485, 101
        %v7529 = vsel %vm7477, %v486, 101
        %v7530 = vsel %vm7478, %v474, 101
        %v7531 = vsel %vm7479, %v475, 101
        %v7532 = vsel %vm7480, %v476, 101
        %v7533 = vsel %vm7481, %v477, 101
        %v7534 = vsel %vm7482, %v478, 101
        %v7535 = vsel %vm7483, %v479, 101
        %v7536 = vsel %vm7484, %v480, 101
        %v7537 = vsel %vm7485, %v481, 101
        %v7538 = vsel %vm7486, %v482, 101
        %v7539 = vsel %vm7487, %v483, 101
        %v7540 = vsel %vm7488, %v484, 101
        %v7541 = vsel %vm7489, %v485, 101
        %v7542 = vsel %vm7490, %v486, 101
        %v7543 = vsel %vm7491, %v474, 101
        %v7544 = vsel %vm7492, %v475, 101
        %v7545 = vsel %vm7493, %v476, 101
        %v7546 = vsel %vm7494, %v477, 101
        %v7547 = vsel %vm7495, %v478, 101
        %v7548 = vsel %vm7496, %v479, 101
        %v7549 = vsel %vm7497, %v480, 101
        %v7550 = vsel %vm7498, %v481, 101
        %v7551 = vsel %vm7499, %v482, 101
        %v7552 = vsel %vm7500, %v483, 101
        %v7553 = vsel %vm7501, %v484, 101
        %v7554 = vsel %vm7502, %v485, 101
        %v7555 = vsel %vm7503, %v486, 101
        %v7556 = vsel %vm7504, %v474, 101
        %v7557 = vsel %vm7505, %v475, 101
        %v7558 = vsel %vm7506, %v476, 101
        %v7559 = vsel %vm7507, %v477, 101
        %v7560 = vsel %vm7508, %v478, 101
        %v7561 = vsel %vm7509, %v479, 101
        %v7562 = vsel %vm7510, %v480, 101
        %v7563 = vsel %vm7511, %v481, 101
        %v7564 = vsel %vm7512, %v482, 101
        %v7565 = vsel %vm7513, %v483, 101
        %v7566 = vsel %vm7514, %v484, 101
        %v7567 = vsel %vm7515, %v485, 101
        %v7568 = vsel %vm7516, %v486, 101
        %v7569 = vsel %vm841, %v7517, 2147483647
        %v7570 = vsel %vm841, %v7518, 2147483647
        %vm7571 = vcmp.lt.s32.totalorder %v7569, %v7570
        %v7572 = vsel %vm7571, %v7569, %v7570
        %v7573 = vsel %vm841, %v7519, 2147483647
        %vm7574 = vcmp.lt.s32.totalorder %v7572, %v7573
        %v7575 = vsel %vm7574, %v7572, %v7573
        %v7576 = vsel %vm841, %v7520, 2147483647
        %vm7577 = vcmp.lt.s32.totalorder %v7575, %v7576
        %v7578 = vsel %vm7577, %v7575, %v7576
        %v7579 = vsel %vm841, %v7521, 2147483647
        %vm7580 = vcmp.lt.s32.totalorder %v7578, %v7579
        %v7581 = vsel %vm7580, %v7578, %v7579
        %v7582 = vsel %vm841, %v7522, 2147483647
        %vm7583 = vcmp.lt.s32.totalorder %v7581, %v7582
        %v7584 = vsel %vm7583, %v7581, %v7582
        %v7585 = vsel %vm841, %v7523, 2147483647
        %vm7586 = vcmp.lt.s32.totalorder %v7584, %v7585
        %v7587 = vsel %vm7586, %v7584, %v7585
        %v7588 = vsel %vm841, %v7524, 2147483647
        %vm7589 = vcmp.lt.s32.totalorder %v7587, %v7588
        %v7590 = vsel %vm7589, %v7587, %v7588
        %v7591 = vsel %vm841, %v7525, 2147483647
        %vm7592 = vcmp.lt.s32.totalorder %v7590, %v7591
        %v7593 = vsel %vm7592, %v7590, %v7591
        %v7594 = vsel %vm841, %v7526, 2147483647
        %vm7595 = vcmp.lt.s32.totalorder %v7593, %v7594
        %v7596 = vsel %vm7595, %v7593, %v7594
        %v7597 = vsel %vm841, %v7527, 2147483647
        %vm7598 = vcmp.lt.s32.totalorder %v7596, %v7597
        %v7599 = vsel %vm7598, %v7596, %v7597
        %v7600 = vsel %vm841, %v7528, 2147483647
        %vm7601 = vcmp.lt.s32.totalorder %v7599, %v7600
        %v7602 = vsel %vm7601, %v7599, %v7600
        %v7603 = vsel %vm2759, %v7529, 2147483647
        %vm7604 = vcmp.lt.s32.totalorder %v7602, %v7603
        %v7605 = vsel %vm7604, %v7602, %v7603
        %v7606 = vrot.slane %v7605, 4
        %vm7607 = vcmp.lt.s32.totalorder %v7605, %v7606
        %v7608 = vsel %vm7607, %v7605, %v7606
        %v7609 = vrot.slane %v7608, 2
        %vm7610 = vcmp.lt.s32.totalorder %v7608, %v7609
        %v7611 = vsel %vm7610, %v7608, %v7609
        %v7612 = vrot.slane %v7611, 1
        %vm7613 = vcmp.lt.s32.totalorder %v7611, %v7612
        %v7614 = vsel %vm7613, %v7611, %v7612
        %v7615 = vsel %vm841, %v7530, 2147483647
        %v7616 = vsel %vm841, %v7531, 2147483647
        %vm7617 = vcmp.lt.s32.totalorder %v7615, %v7616
        %v7618 = vsel %vm7617, %v7615, %v7616
        %v7619 = vsel %vm841, %v7532, 2147483647
        %vm7620 = vcmp.lt.s32.totalorder %v7618, %v7619
        %v7621 = vsel %vm7620, %v7618, %v7619
        %v7622 = vsel %vm841, %v7533, 2147483647
        %vm7623 = vcmp.lt.s32.totalorder %v7621, %v7622
        %v7624 = vsel %vm7623, %v7621, %v7622
        %v7625 = vsel %vm841, %v7534, 2147483647
        %vm7626 = vcmp.lt.s32.totalorder %v7624, %v7625
        %v7627 = vsel %vm7626, %v7624, %v7625
        %v7628 = vsel %vm841, %v7535, 2147483647
        %vm7629 = vcmp.lt.s32.totalorder %v7627, %v7628
        %v7630 = vsel %vm7629, %v7627, %v7628
        %v7631 = vsel %vm841, %v7536, 2147483647
        %vm7632 = vcmp.lt.s32.totalorder %v7630, %v7631
        %v7633 = vsel %vm7632, %v7630, %v7631
        %v7634 = vsel %vm841, %v7537, 2147483647
        %vm7635 = vcmp.lt.s32.totalorder %v7633, %v7634
        %v7636 = vsel %vm7635, %v7633, %v7634
        %v7637 = vsel %vm841, %v7538, 2147483647
        %vm7638 = vcmp.lt.s32.totalorder %v7636, %v7637
        %v7639 = vsel %vm7638, %v7636, %v7637
        %v7640 = vsel %vm841, %v7539, 2147483647
        %vm7641 = vcmp.lt.s32.totalorder %v7639, %v7640
        %v7642 = vsel %vm7641, %v7639, %v7640
        %v7643 = vsel %vm841, %v7540, 2147483647
        %vm7644 = vcmp.lt.s32.totalorder %v7642, %v7643
        %v7645 = vsel %vm7644, %v7642, %v7643
        %v7646 = vsel %vm841, %v7541, 2147483647
        %vm7647 = vcmp.lt.s32.totalorder %v7645, %v7646
        %v7648 = vsel %vm7647, %v7645, %v7646
        %v7649 = vsel %vm2759, %v7542, 2147483647
        %vm7650 = vcmp.lt.s32.totalorder %v7648, %v7649
        %v7651 = vsel %vm7650, %v7648, %v7649
        %v7652 = vrot.slane %v7651, 4
        %vm7653 = vcmp.lt.s32.totalorder %v7651, %v7652
        %v7654 = vsel %vm7653, %v7651, %v7652
        %v7655 = vrot.slane %v7654, 2
        %vm7656 = vcmp.lt.s32.totalorder %v7654, %v7655
        %v7657 = vsel %vm7656, %v7654, %v7655
        %v7658 = vrot.slane %v7657, 1
        %vm7659 = vcmp.lt.s32.totalorder %v7657, %v7658
        %v7660 = vsel %vm7659, %v7657, %v7658
        %v7661 = vsel %vm841, %v7543, 2147483647
        %v7662 = vsel %vm841, %v7544, 2147483647
        %vm7663 = vcmp.lt.s32.totalorder %v7661, %v7662
        %v7664 = vsel %vm7663, %v7661, %v7662
        %v7665 = vsel %vm841, %v7545, 2147483647
        %vm7666 = vcmp.lt.s32.totalorder %v7664, %v7665
        %v7667 = vsel %vm7666, %v7664, %v7665
        %v7668 = vsel %vm841, %v7546, 2147483647
        %vm7669 = vcmp.lt.s32.totalorder %v7667, %v7668
        %v7670 = vsel %vm7669, %v7667, %v7668
        %v7671 = vsel %vm841, %v7547, 2147483647
        %vm7672 = vcmp.lt.s32.totalorder %v7670, %v7671
        %v7673 = vsel %vm7672, %v7670, %v7671
        %v7674 = vsel %vm841, %v7548, 2147483647
        %vm7675 = vcmp.lt.s32.totalorder %v7673, %v7674
        %v7676 = vsel %vm7675, %v7673, %v7674
        %v7677 = vsel %vm841, %v7549, 2147483647
        %vm7678 = vcmp.lt.s32.totalorder %v7676, %v7677
        %v7679 = vsel %vm7678, %v7676, %v7677
        %v7680 = vsel %vm841, %v7550, 2147483647
        %vm7681 = vcmp.lt.s32.totalorder %v7679, %v7680
        %v7682 = vsel %vm7681, %v7679, %v7680
        %v7683 = vsel %vm841, %v7551, 2147483647
        %vm7684 = vcmp.lt.s32.totalorder %v7682, %v7683
        %v7685 = vsel %vm7684, %v7682, %v7683
        %v7686 = vsel %vm841, %v7552, 2147483647
        %vm7687 = vcmp.lt.s32.totalorder %v7685, %v7686
        %v7688 = vsel %vm7687, %v7685, %v7686
        %v7689 = vsel %vm841, %v7553, 2147483647
        %vm7690 = vcmp.lt.s32.totalorder %v7688, %v7689
        %v7691 = vsel %vm7690, %v7688, %v7689
        %v7692 = vsel %vm841, %v7554, 2147483647
        %vm7693 = vcmp.lt.s32.totalorder %v7691, %v7692
        %v7694 = vsel %vm7693, %v7691, %v7692
        %v7695 = vsel %vm2759, %v7555, 2147483647
        %vm7696 = vcmp.lt.s32.totalorder %v7694, %v7695
        %v7697 = vsel %vm7696, %v7694, %v7695
        %v7698 = vrot.slane %v7697, 4
        %vm7699 = vcmp.lt.s32.totalorder %v7697, %v7698
        %v7700 = vsel %vm7699, %v7697, %v7698
        %v7701 = vrot.slane %v7700, 2
        %vm7702 = vcmp.lt.s32.totalorder %v7700, %v7701
        %v7703 = vsel %vm7702, %v7700, %v7701
        %v7704 = vrot.slane %v7703, 1
        %vm7705 = vcmp.lt.s32.totalorder %v7703, %v7704
        %v7706 = vsel %vm7705, %v7703, %v7704
        %v7707 = vsel %vm841, %v7556, 2147483647
        %v7708 = vsel %vm841, %v7557, 2147483647
        %vm7709 = vcmp.lt.s32.totalorder %v7707, %v7708
        %v7710 = vsel %vm7709, %v7707, %v7708
        %v7711 = vsel %vm841, %v7558, 2147483647
        %vm7712 = vcmp.lt.s32.totalorder %v7710, %v7711
        %v7713 = vsel %vm7712, %v7710, %v7711
        %v7714 = vsel %vm841, %v7559, 2147483647
        %vm7715 = vcmp.lt.s32.totalorder %v7713, %v7714
        %v7716 = vsel %vm7715, %v7713, %v7714
        %v7717 = vsel %vm841, %v7560, 2147483647
        %vm7718 = vcmp.lt.s32.totalorder %v7716, %v7717
        %v7719 = vsel %vm7718, %v7716, %v7717
        %v7720 = vsel %vm841, %v7561, 2147483647
        %vm7721 = vcmp.lt.s32.totalorder %v7719, %v7720
        %v7722 = vsel %vm7721, %v7719, %v7720
        %v7723 = vsel %vm841, %v7562, 2147483647
        %vm7724 = vcmp.lt.s32.totalorder %v7722, %v7723
        %v7725 = vsel %vm7724, %v7722, %v7723
        %v7726 = vsel %vm841, %v7563, 2147483647
        %vm7727 = vcmp.lt.s32.totalorder %v7725, %v7726
        %v7728 = vsel %vm7727, %v7725, %v7726
        %v7729 = vsel %vm841, %v7564, 2147483647
        %vm7730 = vcmp.lt.s32.totalorder %v7728, %v7729
        %v7731 = vsel %vm7730, %v7728, %v7729
        %v7732 = vsel %vm841, %v7565, 2147483647
        %vm7733 = vcmp.lt.s32.totalorder %v7731, %v7732
        %v7734 = vsel %vm7733, %v7731, %v7732
        %v7735 = vsel %vm841, %v7566, 2147483647
        %vm7736 = vcmp.lt.s32.totalorder %v7734, %v7735
        %v7737 = vsel %vm7736, %v7734, %v7735
        %v7738 = vsel %vm841, %v7567, 2147483647
        %vm7739 = vcmp.lt.s32.totalorder %v7737, %v7738
        %v7740 = vsel %vm7739, %v7737, %v7738
        %v7741 = vsel %vm2759, %v7568, 2147483647
        %vm7742 = vcmp.lt.s32.totalorder %v7740, %v7741
        %v7743 = vsel %vm7742, %v7740, %v7741
        %v7744 = vrot.slane %v7743, 4
        %vm7745 = vcmp.lt.s32.totalorder %v7743, %v7744
        %v7746 = vsel %vm7745, %v7743, %v7744
        %v7747 = vrot.slane %v7746, 2
        %vm7748 = vcmp.lt.s32.totalorder %v7746, %v7747
        %v7749 = vsel %vm7748, %v7746, %v7747
        %v7750 = vrot.slane %v7749, 1
        %vm7751 = vcmp.lt.s32.totalorder %v7749, %v7750
        %v7752 = vsel %vm7751, %v7749, %v7750
        %vm7753 = vcmp.eq.s32.totalorder %v7614, 101
        %vm7754 = vcmp.eq.s32.totalorder %v7660, 101
        %vm7755 = vcmp.eq.s32.totalorder %v7706, 101
        %vm7756 = vcmp.eq.s32.totalorder %v7752, 101
        %v7757 = vsel %vm7753, 0, %v7614
        %v7758 = vsel %vm7754, 0, %v7660
        %v7759 = vsel %vm7755, 0, %v7706
        %v7760 = vsel %vm7756, 0, %v7752
        %v7761 = vsel %vm841, %v5213, -inf
        %7762 = vmax.xlane.f32.xlu0 %v7761
        %v7763 = vpop.xlane.xlu0 %7762
        %v7764 = vsel %vm841, %v5214, -inf
        %7765 = vmax.xlane.f32.xlu0 %v7764
        %v7766 = vpop.xlane.xlu0 %7765
        %v7767 = vsel %vm841, %v5215, -inf
        %7768 = vmax.xlane.f32.xlu0 %v7767
        %v7769 = vpop.xlane.xlu0 %7768
        %v7770 = vsel %vm841, %v5216, -inf
        %7771 = vmax.xlane.f32.xlu0 %v7770
        %v7772 = vpop.xlane.xlu0 %7771
        %v7773 = vsel %vm841, %v5217, -inf
        %7774 = vmax.xlane.f32.xlu0 %v7773
        %v7775 = vpop.xlane.xlu0 %7774
        %v7776 = vsel %vm841, %v5218, -inf
        %7777 = vmax.xlane.f32.xlu0 %v7776
        %v7778 = vpop.xlane.xlu0 %7777
        %v7779 = vsel %vm841, %v5219, -inf
        %7780 = vmax.xlane.f32.xlu0 %v7779
        %v7781 = vpop.xlane.xlu0 %7780
        %v7782 = vsel %vm841, %v5220, -inf
        %7783 = vmax.xlane.f32.xlu0 %v7782
        %v7784 = vpop.xlane.xlu0 %7783
        %v7785 = vsel %vm841, %v5221, -inf
        %7786 = vmax.xlane.f32.xlu0 %v7785
        %v7787 = vpop.xlane.xlu0 %7786
        %v7788 = vsel %vm841, %v5222, -inf
        %7789 = vmax.xlane.f32.xlu0 %v7788
        %v7790 = vpop.xlane.xlu0 %7789
        %v7791 = vsel %vm841, %v5223, -inf
        %7792 = vmax.xlane.f32.xlu0 %v7791
        %v7793 = vpop.xlane.xlu0 %7792
        %v7794 = vsel %vm841, %v5224, -inf
        %7795 = vmax.xlane.f32.xlu0 %v7794
        %v7796 = vpop.xlane.xlu0 %7795
        %v7797 = vsel %vm2759, %v5225, -inf
        %7798 = vmax.xlane.f32.xlu0 %v7797
        %v7799 = vpop.xlane.xlu0 %7798
        %v7800 = vsel %vm841, %v5226, -inf
        %7801 = vmax.xlane.f32.xlu0 %v7800
        %v7802 = vpop.xlane.xlu0 %7801
        %v7803 = vsel %vm841, %v5227, -inf
        %7804 = vmax.xlane.f32.xlu0 %v7803
        %v7805 = vpop.xlane.xlu0 %7804
        %v7806 = vsel %vm841, %v5228, -inf
        %7807 = vmax.xlane.f32.xlu0 %v7806
        %v7808 = vpop.xlane.xlu0 %7807
        %v7809 = vsel %vm841, %v5229, -inf
        %7810 = vmax.xlane.f32.xlu0 %v7809
        %v7811 = vpop.xlane.xlu0 %7810
        %v7812 = vsel %vm841, %v5230, -inf
        %7813 = vmax.xlane.f32.xlu0 %v7812
        %v7814 = vpop.xlane.xlu0 %7813
        %v7815 = vsel %vm841, %v5231, -inf
        %7816 = vmax.xlane.f32.xlu0 %v7815
        %v7817 = vpop.xlane.xlu0 %7816
        %v7818 = vsel %vm841, %v5232, -inf
        %7819 = vmax.xlane.f32.xlu0 %v7818
        %v7820 = vpop.xlane.xlu0 %7819
        %v7821 = vsel %vm841, %v5233, -inf
        %7822 = vmax.xlane.f32.xlu0 %v7821
        %v7823 = vpop.xlane.xlu0 %7822
        %v7824 = vsel %vm841, %v5234, -inf
        %7825 = vmax.xlane.f32.xlu0 %v7824
        %v7826 = vpop.xlane.xlu0 %7825
        %v7827 = vsel %vm841, %v5235, -inf
        %7828 = vmax.xlane.f32.xlu0 %v7827
        %v7829 = vpop.xlane.xlu0 %7828
        %v7830 = vsel %vm841, %v5236, -inf
        %7831 = vmax.xlane.f32.xlu0 %v7830
        %v7832 = vpop.xlane.xlu0 %7831
        %v7833 = vsel %vm841, %v5237, -inf
        %7834 = vmax.xlane.f32.xlu0 %v7833
        %v7835 = vpop.xlane.xlu0 %7834
        %v7836 = vsel %vm2759, %v5238, -inf
        %7837 = vmax.xlane.f32.xlu0 %v7836
        %v7838 = vpop.xlane.xlu0 %7837
        %v7839 = vsel %vm841, %v5239, -inf
        %7840 = vmax.xlane.f32.xlu0 %v7839
        %v7841 = vpop.xlane.xlu0 %7840
        %v7842 = vsel %vm841, %v5240, -inf
        %7843 = vmax.xlane.f32.xlu0 %v7842
        %v7844 = vpop.xlane.xlu0 %7843
        %v7845 = vsel %vm841, %v5241, -inf
        %7846 = vmax.xlane.f32.xlu0 %v7845
        %v7847 = vpop.xlane.xlu0 %7846
        %v7848 = vsel %vm841, %v5242, -inf
        %7849 = vmax.xlane.f32.xlu0 %v7848
        %v7850 = vpop.xlane.xlu0 %7849
        %v7851 = vsel %vm841, %v5243, -inf
        %7852 = vmax.xlane.f32.xlu0 %v7851
        %v7853 = vpop.xlane.xlu0 %7852
        %v7854 = vsel %vm841, %v5244, -inf
        %7855 = vmax.xlane.f32.xlu0 %v7854
        %v7856 = vpop.xlane.xlu0 %7855
        %v7857 = vsel %vm841, %v5245, -inf
        %7858 = vmax.xlane.f32.xlu0 %v7857
        %v7859 = vpop.xlane.xlu0 %7858
        %v7860 = vsel %vm841, %v5246, -inf
        %7861 = vmax.xlane.f32.xlu0 %v7860
        %v7862 = vpop.xlane.xlu0 %7861
        %v7863 = vsel %vm841, %v5247, -inf
        %7864 = vmax.xlane.f32.xlu0 %v7863
        %v7865 = vpop.xlane.xlu0 %7864
        %v7866 = vsel %vm841, %v5248, -inf
        %7867 = vmax.xlane.f32.xlu0 %v7866
        %v7868 = vpop.xlane.xlu0 %7867
        %v7869 = vsel %vm841, %v5249, -inf
        %7870 = vmax.xlane.f32.xlu0 %v7869
        %v7871 = vpop.xlane.xlu0 %7870
        %v7872 = vsel %vm841, %v5250, -inf
        %7873 = vmax.xlane.f32.xlu0 %v7872
        %v7874 = vpop.xlane.xlu0 %7873
        %v7875 = vsel %vm2759, %v5251, -inf
        %7876 = vmax.xlane.f32.xlu0 %v7875
        %v7877 = vpop.xlane.xlu0 %7876
        %v7878 = vsel %vm841, %v5252, -inf
        %7879 = vmax.xlane.f32.xlu0 %v7878
        %v7880 = vpop.xlane.xlu0 %7879
        %v7881 = vsel %vm841, %v5253, -inf
        %7882 = vmax.xlane.f32.xlu0 %v7881
        %v7883 = vpop.xlane.xlu0 %7882
        %v7884 = vsel %vm841, %v5254, -inf
        %7885 = vmax.xlane.f32.xlu0 %v7884
        %v7886 = vpop.xlane.xlu0 %7885
        %v7887 = vsel %vm841, %v5255, -inf
        %7888 = vmax.xlane.f32.xlu0 %v7887
        %v7889 = vpop.xlane.xlu0 %7888
        %v7890 = vsel %vm841, %v5256, -inf
        %7891 = vmax.xlane.f32.xlu0 %v7890
        %v7892 = vpop.xlane.xlu0 %7891
        %v7893 = vsel %vm841, %v5257, -inf
        %7894 = vmax.xlane.f32.xlu0 %v7893
        %v7895 = vpop.xlane.xlu0 %7894
        %v7896 = vsel %vm841, %v5258, -inf
        %7897 = vmax.xlane.f32.xlu0 %v7896
        %v7898 = vpop.xlane.xlu0 %7897
        %v7899 = vsel %vm841, %v5259, -inf
        %7900 = vmax.xlane.f32.xlu0 %v7899
        %v7901 = vpop.xlane.xlu0 %7900
        %v7902 = vsel %vm841, %v5260, -inf
        %7903 = vmax.xlane.f32.xlu0 %v7902
        %v7904 = vpop.xlane.xlu0 %7903
        %v7905 = vsel %vm841, %v5261, -inf
        %7906 = vmax.xlane.f32.xlu0 %v7905
        %v7907 = vpop.xlane.xlu0 %7906
        %v7908 = vsel %vm841, %v5262, -inf
        %7909 = vmax.xlane.f32.xlu0 %v7908
        %v7910 = vpop.xlane.xlu0 %7909
        %v7911 = vsel %vm841, %v5263, -inf
        %7912 = vmax.xlane.f32.xlu0 %v7911
        %v7913 = vpop.xlane.xlu0 %7912
        %v7914 = vsel %vm2759, %v5264, -inf
        %7915 = vmax.xlane.f32.xlu0 %v7914
        %v7916 = vpop.xlane.xlu0 %7915
        %vm7917 = vcmp.eq.f32.partialorder %v5213, %v7763
        %vm7918 = vcmp.eq.f32.partialorder %v5214, %v7766
        %vm7919 = vcmp.eq.f32.partialorder %v5215, %v7769
        %vm7920 = vcmp.eq.f32.partialorder %v5216, %v7772
        %vm7921 = vcmp.eq.f32.partialorder %v5217, %v7775
        %vm7922 = vcmp.eq.f32.partialorder %v5218, %v7778
        %vm7923 = vcmp.eq.f32.partialorder %v5219, %v7781
        %vm7924 = vcmp.eq.f32.partialorder %v5220, %v7784
        %vm7925 = vcmp.eq.f32.partialorder %v5221, %v7787
        %vm7926 = vcmp.eq.f32.partialorder %v5222, %v7790
        %vm7927 = vcmp.eq.f32.partialorder %v5223, %v7793
        %vm7928 = vcmp.eq.f32.partialorder %v5224, %v7796
        %vm7929 = vcmp.eq.f32.partialorder %v5225, %v7799
        %vm7930 = vcmp.eq.f32.partialorder %v5226, %v7802
        %vm7931 = vcmp.eq.f32.partialorder %v5227, %v7805
        %vm7932 = vcmp.eq.f32.partialorder %v5228, %v7808
        %vm7933 = vcmp.eq.f32.partialorder %v5229, %v7811
        %vm7934 = vcmp.eq.f32.partialorder %v5230, %v7814
        %vm7935 = vcmp.eq.f32.partialorder %v5231, %v7817
        %vm7936 = vcmp.eq.f32.partialorder %v5232, %v7820
        %vm7937 = vcmp.eq.f32.partialorder %v5233, %v7823
        %vm7938 = vcmp.eq.f32.partialorder %v5234, %v7826
        %vm7939 = vcmp.eq.f32.partialorder %v5235, %v7829
        %vm7940 = vcmp.eq.f32.partialorder %v5236, %v7832
        %vm7941 = vcmp.eq.f32.partialorder %v5237, %v7835
        %vm7942 = vcmp.eq.f32.partialorder %v5238, %v7838
        %vm7943 = vcmp.eq.f32.partialorder %v5239, %v7841
        %vm7944 = vcmp.eq.f32.partialorder %v5240, %v7844
        %vm7945 = vcmp.eq.f32.partialorder %v5241, %v7847
        %vm7946 = vcmp.eq.f32.partialorder %v5242, %v7850
        %vm7947 = vcmp.eq.f32.partialorder %v5243, %v7853
        %vm7948 = vcmp.eq.f32.partialorder %v5244, %v7856
        %vm7949 = vcmp.eq.f32.partialorder %v5245, %v7859
        %vm7950 = vcmp.eq.f32.partialorder %v5246, %v7862
        %vm7951 = vcmp.eq.f32.partialorder %v5247, %v7865
        %vm7952 = vcmp.eq.f32.partialorder %v5248, %v7868
        %vm7953 = vcmp.eq.f32.partialorder %v5249, %v7871
        %vm7954 = vcmp.eq.f32.partialorder %v5250, %v7874
        %vm7955 = vcmp.eq.f32.partialorder %v5251, %v7877
        %vm7956 = vcmp.eq.f32.partialorder %v5252, %v7880
        %vm7957 = vcmp.eq.f32.partialorder %v5253, %v7883
        %vm7958 = vcmp.eq.f32.partialorder %v5254, %v7886
        %vm7959 = vcmp.eq.f32.partialorder %v5255, %v7889
        %vm7960 = vcmp.eq.f32.partialorder %v5256, %v7892
        %vm7961 = vcmp.eq.f32.partialorder %v5257, %v7895
        %vm7962 = vcmp.eq.f32.partialorder %v5258, %v7898
        %vm7963 = vcmp.eq.f32.partialorder %v5259, %v7901
        %vm7964 = vcmp.eq.f32.partialorder %v5260, %v7904
        %vm7965 = vcmp.eq.f32.partialorder %v5261, %v7907
        %vm7966 = vcmp.eq.f32.partialorder %v5262, %v7910
        %vm7967 = vcmp.eq.f32.partialorder %v5263, %v7913
        %vm7968 = vcmp.eq.f32.partialorder %v5264, %v7916
        %v7969 = vsel %vm7917, %v488, 101
        %v7970 = vsel %vm7918, %v488, 101
        %v7971 = vsel %vm7919, %v488, 101
        %v7972 = vsel %vm7920, %v488, 101
        %v7973 = vsel %vm7921, %v488, 101
        %v7974 = vsel %vm7922, %v488, 101
        %v7975 = vsel %vm7923, %v488, 101
        %v7976 = vsel %vm7924, %v488, 101
        %v7977 = vsel %vm7925, %v488, 101
        %v7978 = vsel %vm7926, %v488, 101
        %v7979 = vsel %vm7927, %v488, 101
        %v7980 = vsel %vm7928, %v488, 101
        %v7981 = vsel %vm7929, %v488, 101
        %v7982 = vsel %vm7930, %v488, 101
        %v7983 = vsel %vm7931, %v488, 101
        %v7984 = vsel %vm7932, %v488, 101
        %v7985 = vsel %vm7933, %v488, 101
        %v7986 = vsel %vm7934, %v488, 101
        %v7987 = vsel %vm7935, %v488, 101
        %v7988 = vsel %vm7936, %v488, 101
        %v7989 = vsel %vm7937, %v488, 101
        %v7990 = vsel %vm7938, %v488, 101
        %v7991 = vsel %vm7939, %v488, 101
        %v7992 = vsel %vm7940, %v488, 101
        %v7993 = vsel %vm7941, %v488, 101
        %v7994 = vsel %vm7942, %v488, 101
        %v7995 = vsel %vm7943, %v488, 101
        %v7996 = vsel %vm7944, %v488, 101
        %v7997 = vsel %vm7945, %v488, 101
        %v7998 = vsel %vm7946, %v488, 101
        %v7999 = vsel %vm7947, %v488, 101
        %v8000 = vsel %vm7948, %v488, 101
        %v8001 = vsel %vm7949, %v488, 101
        %v8002 = vsel %vm7950, %v488, 101
        %v8003 = vsel %vm7951, %v488, 101
        %v8004 = vsel %vm7952, %v488, 101
        %v8005 = vsel %vm7953, %v488, 101
        %v8006 = vsel %vm7954, %v488, 101
        %v8007 = vsel %vm7955, %v488, 101
        %v8008 = vsel %vm7956, %v488, 101
        %v8009 = vsel %vm7957, %v488, 101
        %v8010 = vsel %vm7958, %v488, 101
        %v8011 = vsel %vm7959, %v488, 101
        %v8012 = vsel %vm7960, %v488, 101
        %v8013 = vsel %vm7961, %v488, 101
        %v8014 = vsel %vm7962, %v488, 101
        %v8015 = vsel %vm7963, %v488, 101
        %v8016 = vsel %vm7964, %v488, 101
        %v8017 = vsel %vm7965, %v488, 101
        %v8018 = vsel %vm7966, %v488, 101
        %v8019 = vsel %vm7967, %v488, 101
        %v8020 = vsel %vm7968, %v488, 101
        %v8021 = vsel %vm841, %v7969, 2147483647
        %v8022 = vand.u32 %v8021, 65535
        %v8023 = vshra.s32 %v8021, 16
        %v8024 = vcvt.s32.f32 %v8022
        %v8025 = vcvt.s32.f32 %v8023
        %8026 = vmin.xlane.f32.xlu0 %v8025
        %v8027 = vpop.xlane.xlu0 %8026
        %vm8028 = vcmp.eq.f32.partialorder %v8025, %v8027
        %v8029 = vsel %vm8028, %v8024, inf
        %8030 = vmin.xlane.f32.xlu0 %v8029
        %v8031 = vpop.xlane.xlu0 %8030
        %v8032 = vcvt.f32.s32 %v8031
        %v8033 = vcvt.f32.s32 %v8027
        %v8034 = vshll.u32 %v8033, 16
        %v8035 = vadd.s32 %v8034, %v8032
        %v8036 = vsel %vm841, %v7970, 2147483647
        %v8037 = vand.u32 %v8036, 65535
        %v8038 = vshra.s32 %v8036, 16
        %v8039 = vcvt.s32.f32 %v8037
        %v8040 = vcvt.s32.f32 %v8038
        %8041 = vmin.xlane.f32.xlu0 %v8040
        %v8042 = vpop.xlane.xlu0 %8041
        %vm8043 = vcmp.eq.f32.partialorder %v8040, %v8042
        %v8044 = vsel %vm8043, %v8039, inf
        %8045 = vmin.xlane.f32.xlu0 %v8044
        %v8046 = vpop.xlane.xlu0 %8045
        %v8047 = vcvt.f32.s32 %v8046
        %v8048 = vcvt.f32.s32 %v8042
        %v8049 = vshll.u32 %v8048, 16
        %v8050 = vadd.s32 %v8049, %v8047
        %v8051 = vsel %vm841, %v7971, 2147483647
        %v8052 = vand.u32 %v8051, 65535
        %v8053 = vshra.s32 %v8051, 16
        %v8054 = vcvt.s32.f32 %v8052
        %v8055 = vcvt.s32.f32 %v8053
        %8056 = vmin.xlane.f32.xlu0 %v8055
        %v8057 = vpop.xlane.xlu0 %8056
        %vm8058 = vcmp.eq.f32.partialorder %v8055, %v8057
        %v8059 = vsel %vm8058, %v8054, inf
        %8060 = vmin.xlane.f32.xlu0 %v8059
        %v8061 = vpop.xlane.xlu0 %8060
        %v8062 = vcvt.f32.s32 %v8061
        %v8063 = vcvt.f32.s32 %v8057
        %v8064 = vshll.u32 %v8063, 16
        %v8065 = vadd.s32 %v8064, %v8062
        %v8066 = vsel %vm841, %v7972, 2147483647
        %v8067 = vand.u32 %v8066, 65535
        %v8068 = vshra.s32 %v8066, 16
        %v8069 = vcvt.s32.f32 %v8067
        %v8070 = vcvt.s32.f32 %v8068
        %8071 = vmin.xlane.f32.xlu0 %v8070
        %v8072 = vpop.xlane.xlu0 %8071
        %vm8073 = vcmp.eq.f32.partialorder %v8070, %v8072
        %v8074 = vsel %vm8073, %v8069, inf
        %8075 = vmin.xlane.f32.xlu0 %v8074
        %v8076 = vpop.xlane.xlu0 %8075
        %v8077 = vcvt.f32.s32 %v8076
        %v8078 = vcvt.f32.s32 %v8072
        %v8079 = vshll.u32 %v8078, 16
        %v8080 = vadd.s32 %v8079, %v8077
        %v8081 = vsel %vm841, %v7973, 2147483647
        %v8082 = vand.u32 %v8081, 65535
        %v8083 = vshra.s32 %v8081, 16
        %v8084 = vcvt.s32.f32 %v8082
        %v8085 = vcvt.s32.f32 %v8083
        %8086 = vmin.xlane.f32.xlu0 %v8085
        %v8087 = vpop.xlane.xlu0 %8086
        %vm8088 = vcmp.eq.f32.partialorder %v8085, %v8087
        %v8089 = vsel %vm8088, %v8084, inf
        %8090 = vmin.xlane.f32.xlu0 %v8089
        %v8091 = vpop.xlane.xlu0 %8090
        %v8092 = vcvt.f32.s32 %v8091
        %v8093 = vcvt.f32.s32 %v8087
        %v8094 = vshll.u32 %v8093, 16
        %v8095 = vadd.s32 %v8094, %v8092
        %v8096 = vsel %vm841, %v7974, 2147483647
        %v8097 = vand.u32 %v8096, 65535
        %v8098 = vshra.s32 %v8096, 16
        %v8099 = vcvt.s32.f32 %v8097
        %v8100 = vcvt.s32.f32 %v8098
        %8101 = vmin.xlane.f32.xlu0 %v8100
        %v8102 = vpop.xlane.xlu0 %8101
        %vm8103 = vcmp.eq.f32.partialorder %v8100, %v8102
        %v8104 = vsel %vm8103, %v8099, inf
        %8105 = vmin.xlane.f32.xlu0 %v8104
        %v8106 = vpop.xlane.xlu0 %8105
        %v8107 = vcvt.f32.s32 %v8106
        %v8108 = vcvt.f32.s32 %v8102
        %v8109 = vshll.u32 %v8108, 16
        %v8110 = vadd.s32 %v8109, %v8107
        %v8111 = vsel %vm841, %v7975, 2147483647
        %v8112 = vand.u32 %v8111, 65535
        %v8113 = vshra.s32 %v8111, 16
        %v8114 = vcvt.s32.f32 %v8112
        %v8115 = vcvt.s32.f32 %v8113
        %8116 = vmin.xlane.f32.xlu0 %v8115
        %v8117 = vpop.xlane.xlu0 %8116
        %vm8118 = vcmp.eq.f32.partialorder %v8115, %v8117
        %v8119 = vsel %vm8118, %v8114, inf
        %8120 = vmin.xlane.f32.xlu0 %v8119
        %v8121 = vpop.xlane.xlu0 %8120
        %v8122 = vcvt.f32.s32 %v8121
        %v8123 = vcvt.f32.s32 %v8117
        %v8124 = vshll.u32 %v8123, 16
        %v8125 = vadd.s32 %v8124, %v8122
        %v8126 = vsel %vm841, %v7976, 2147483647
        %v8127 = vand.u32 %v8126, 65535
        %v8128 = vshra.s32 %v8126, 16
        %v8129 = vcvt.s32.f32 %v8127
        %v8130 = vcvt.s32.f32 %v8128
        %8131 = vmin.xlane.f32.xlu0 %v8130
        %v8132 = vpop.xlane.xlu0 %8131
        %vm8133 = vcmp.eq.f32.partialorder %v8130, %v8132
        %v8134 = vsel %vm8133, %v8129, inf
        %8135 = vmin.xlane.f32.xlu0 %v8134
        %v8136 = vpop.xlane.xlu0 %8135
        %v8137 = vcvt.f32.s32 %v8136
        %v8138 = vcvt.f32.s32 %v8132
        %v8139 = vshll.u32 %v8138, 16
        %v8140 = vadd.s32 %v8139, %v8137
        %v8141 = vsel %vm841, %v7977, 2147483647
        %v8142 = vand.u32 %v8141, 65535
        %v8143 = vshra.s32 %v8141, 16
        %v8144 = vcvt.s32.f32 %v8142
        %v8145 = vcvt.s32.f32 %v8143
        %8146 = vmin.xlane.f32.xlu0 %v8145
        %v8147 = vpop.xlane.xlu0 %8146
        %vm8148 = vcmp.eq.f32.partialorder %v8145, %v8147
        %v8149 = vsel %vm8148, %v8144, inf
        %8150 = vmin.xlane.f32.xlu0 %v8149
        %v8151 = vpop.xlane.xlu0 %8150
        %v8152 = vcvt.f32.s32 %v8151
        %v8153 = vcvt.f32.s32 %v8147
        %v8154 = vshll.u32 %v8153, 16
        %v8155 = vadd.s32 %v8154, %v8152
        %v8156 = vsel %vm841, %v7978, 2147483647
        %v8157 = vand.u32 %v8156, 65535
        %v8158 = vshra.s32 %v8156, 16
        %v8159 = vcvt.s32.f32 %v8157
        %v8160 = vcvt.s32.f32 %v8158
        %8161 = vmin.xlane.f32.xlu0 %v8160
        %v8162 = vpop.xlane.xlu0 %8161
        %vm8163 = vcmp.eq.f32.partialorder %v8160, %v8162
        %v8164 = vsel %vm8163, %v8159, inf
        %8165 = vmin.xlane.f32.xlu0 %v8164
        %v8166 = vpop.xlane.xlu0 %8165
        %v8167 = vcvt.f32.s32 %v8166
        %v8168 = vcvt.f32.s32 %v8162
        %v8169 = vshll.u32 %v8168, 16
        %v8170 = vadd.s32 %v8169, %v8167
        %v8171 = vsel %vm841, %v7979, 2147483647
        %v8172 = vand.u32 %v8171, 65535
        %v8173 = vshra.s32 %v8171, 16
        %v8174 = vcvt.s32.f32 %v8172
        %v8175 = vcvt.s32.f32 %v8173
        %8176 = vmin.xlane.f32.xlu0 %v8175
        %v8177 = vpop.xlane.xlu0 %8176
        %vm8178 = vcmp.eq.f32.partialorder %v8175, %v8177
        %v8179 = vsel %vm8178, %v8174, inf
        %8180 = vmin.xlane.f32.xlu0 %v8179
        %v8181 = vpop.xlane.xlu0 %8180
        %v8182 = vcvt.f32.s32 %v8181
        %v8183 = vcvt.f32.s32 %v8177
        %v8184 = vshll.u32 %v8183, 16
        %v8185 = vadd.s32 %v8184, %v8182
        %v8186 = vsel %vm841, %v7980, 2147483647
        %v8187 = vand.u32 %v8186, 65535
        %v8188 = vshra.s32 %v8186, 16
        %v8189 = vcvt.s32.f32 %v8187
        %v8190 = vcvt.s32.f32 %v8188
        %8191 = vmin.xlane.f32.xlu0 %v8190
        %v8192 = vpop.xlane.xlu0 %8191
        %vm8193 = vcmp.eq.f32.partialorder %v8190, %v8192
        %v8194 = vsel %vm8193, %v8189, inf
        %8195 = vmin.xlane.f32.xlu0 %v8194
        %v8196 = vpop.xlane.xlu0 %8195
        %v8197 = vcvt.f32.s32 %v8196
        %v8198 = vcvt.f32.s32 %v8192
        %v8199 = vshll.u32 %v8198, 16
        %v8200 = vadd.s32 %v8199, %v8197
        %v8201 = vsel %vm2759, %v7981, 2147483647
        %v8202 = vand.u32 %v8201, 65535
        %v8203 = vshra.s32 %v8201, 16
        %v8204 = vcvt.s32.f32 %v8202
        %v8205 = vcvt.s32.f32 %v8203
        %8206 = vmin.xlane.f32.xlu0 %v8205
        %v8207 = vpop.xlane.xlu0 %8206
        %vm8208 = vcmp.eq.f32.partialorder %v8205, %v8207
        %v8209 = vsel %vm8208, %v8204, inf
        %8210 = vmin.xlane.f32.xlu0 %v8209
        %v8211 = vpop.xlane.xlu0 %8210
        %v8212 = vcvt.f32.s32 %v8211
        %v8213 = vcvt.f32.s32 %v8207
        %v8214 = vshll.u32 %v8213, 16
        %v8215 = vadd.s32 %v8214, %v8212
        %v8216 = vsel %vm841, %v7982, 2147483647
        %v8217 = vand.u32 %v8216, 65535
        %v8218 = vshra.s32 %v8216, 16
        %v8219 = vcvt.s32.f32 %v8217
        %v8220 = vcvt.s32.f32 %v8218
        %8221 = vmin.xlane.f32.xlu0 %v8220
        %v8222 = vpop.xlane.xlu0 %8221
        %vm8223 = vcmp.eq.f32.partialorder %v8220, %v8222
        %v8224 = vsel %vm8223, %v8219, inf
        %8225 = vmin.xlane.f32.xlu0 %v8224
        %v8226 = vpop.xlane.xlu0 %8225
        %v8227 = vcvt.f32.s32 %v8226
        %v8228 = vcvt.f32.s32 %v8222
        %v8229 = vshll.u32 %v8228, 16
        %v8230 = vadd.s32 %v8229, %v8227
        %v8231 = vsel %vm841, %v7983, 2147483647
        %v8232 = vand.u32 %v8231, 65535
        %v8233 = vshra.s32 %v8231, 16
        %v8234 = vcvt.s32.f32 %v8232
        %v8235 = vcvt.s32.f32 %v8233
        %8236 = vmin.xlane.f32.xlu0 %v8235
        %v8237 = vpop.xlane.xlu0 %8236
        %vm8238 = vcmp.eq.f32.partialorder %v8235, %v8237
        %v8239 = vsel %vm8238, %v8234, inf
        %8240 = vmin.xlane.f32.xlu0 %v8239
        %v8241 = vpop.xlane.xlu0 %8240
        %v8242 = vcvt.f32.s32 %v8241
        %v8243 = vcvt.f32.s32 %v8237
        %v8244 = vshll.u32 %v8243, 16
        %v8245 = vadd.s32 %v8244, %v8242
        %v8246 = vsel %vm841, %v7984, 2147483647
        %v8247 = vand.u32 %v8246, 65535
        %v8248 = vshra.s32 %v8246, 16
        %v8249 = vcvt.s32.f32 %v8247
        %v8250 = vcvt.s32.f32 %v8248
        %8251 = vmin.xlane.f32.xlu0 %v8250
        %v8252 = vpop.xlane.xlu0 %8251
        %vm8253 = vcmp.eq.f32.partialorder %v8250, %v8252
        %v8254 = vsel %vm8253, %v8249, inf
        %8255 = vmin.xlane.f32.xlu0 %v8254
        %v8256 = vpop.xlane.xlu0 %8255
        %v8257 = vcvt.f32.s32 %v8256
        %v8258 = vcvt.f32.s32 %v8252
        %v8259 = vshll.u32 %v8258, 16
        %v8260 = vadd.s32 %v8259, %v8257
        %v8261 = vsel %vm841, %v7985, 2147483647
        %v8262 = vand.u32 %v8261, 65535
        %v8263 = vshra.s32 %v8261, 16
        %v8264 = vcvt.s32.f32 %v8262
        %v8265 = vcvt.s32.f32 %v8263
        %8266 = vmin.xlane.f32.xlu0 %v8265
        %v8267 = vpop.xlane.xlu0 %8266
        %vm8268 = vcmp.eq.f32.partialorder %v8265, %v8267
        %v8269 = vsel %vm8268, %v8264, inf
        %8270 = vmin.xlane.f32.xlu0 %v8269
        %v8271 = vpop.xlane.xlu0 %8270
        %v8272 = vcvt.f32.s32 %v8271
        %v8273 = vcvt.f32.s32 %v8267
        %v8274 = vshll.u32 %v8273, 16
        %v8275 = vadd.s32 %v8274, %v8272
        %v8276 = vsel %vm841, %v7986, 2147483647
        %v8277 = vand.u32 %v8276, 65535
        %v8278 = vshra.s32 %v8276, 16
        %v8279 = vcvt.s32.f32 %v8277
        %v8280 = vcvt.s32.f32 %v8278
        %8281 = vmin.xlane.f32.xlu0 %v8280
        %v8282 = vpop.xlane.xlu0 %8281
        %vm8283 = vcmp.eq.f32.partialorder %v8280, %v8282
        %v8284 = vsel %vm8283, %v8279, inf
        %8285 = vmin.xlane.f32.xlu0 %v8284
        %v8286 = vpop.xlane.xlu0 %8285
        %v8287 = vcvt.f32.s32 %v8286
        %v8288 = vcvt.f32.s32 %v8282
        %v8289 = vshll.u32 %v8288, 16
        %v8290 = vadd.s32 %v8289, %v8287
        %v8291 = vsel %vm841, %v7987, 2147483647
        %v8292 = vand.u32 %v8291, 65535
        %v8293 = vshra.s32 %v8291, 16
        %v8294 = vcvt.s32.f32 %v8292
        %v8295 = vcvt.s32.f32 %v8293
        %8296 = vmin.xlane.f32.xlu0 %v8295
        %v8297 = vpop.xlane.xlu0 %8296
        %vm8298 = vcmp.eq.f32.partialorder %v8295, %v8297
        %v8299 = vsel %vm8298, %v8294, inf
        %8300 = vmin.xlane.f32.xlu0 %v8299
        %v8301 = vpop.xlane.xlu0 %8300
        %v8302 = vcvt.f32.s32 %v8301
        %v8303 = vcvt.f32.s32 %v8297
        %v8304 = vshll.u32 %v8303, 16
        %v8305 = vadd.s32 %v8304, %v8302
        %v8306 = vsel %vm841, %v7988, 2147483647
        %v8307 = vand.u32 %v8306, 65535
        %v8308 = vshra.s32 %v8306, 16
        %v8309 = vcvt.s32.f32 %v8307
        %v8310 = vcvt.s32.f32 %v8308
        %8311 = vmin.xlane.f32.xlu0 %v8310
        %v8312 = vpop.xlane.xlu0 %8311
        %vm8313 = vcmp.eq.f32.partialorder %v8310, %v8312
        %v8314 = vsel %vm8313, %v8309, inf
        %8315 = vmin.xlane.f32.xlu0 %v8314
        %v8316 = vpop.xlane.xlu0 %8315
        %v8317 = vcvt.f32.s32 %v8316
        %v8318 = vcvt.f32.s32 %v8312
        %v8319 = vshll.u32 %v8318, 16
        %v8320 = vadd.s32 %v8319, %v8317
        %v8321 = vsel %vm841, %v7989, 2147483647
        %v8322 = vand.u32 %v8321, 65535
        %v8323 = vshra.s32 %v8321, 16
        %v8324 = vcvt.s32.f32 %v8322
        %v8325 = vcvt.s32.f32 %v8323
        %8326 = vmin.xlane.f32.xlu0 %v8325
        %v8327 = vpop.xlane.xlu0 %8326
        %vm8328 = vcmp.eq.f32.partialorder %v8325, %v8327
        %v8329 = vsel %vm8328, %v8324, inf
        %8330 = vmin.xlane.f32.xlu0 %v8329
        %v8331 = vpop.xlane.xlu0 %8330
        %v8332 = vcvt.f32.s32 %v8331
        %v8333 = vcvt.f32.s32 %v8327
        %v8334 = vshll.u32 %v8333, 16
        %v8335 = vadd.s32 %v8334, %v8332
        %v8336 = vsel %vm841, %v7990, 2147483647
        %v8337 = vand.u32 %v8336, 65535
        %v8338 = vshra.s32 %v8336, 16
        %v8339 = vcvt.s32.f32 %v8337
        %v8340 = vcvt.s32.f32 %v8338
        %8341 = vmin.xlane.f32.xlu0 %v8340
        %v8342 = vpop.xlane.xlu0 %8341
        %vm8343 = vcmp.eq.f32.partialorder %v8340, %v8342
        %v8344 = vsel %vm8343, %v8339, inf
        %8345 = vmin.xlane.f32.xlu0 %v8344
        %v8346 = vpop.xlane.xlu0 %8345
        %v8347 = vcvt.f32.s32 %v8346
        %v8348 = vcvt.f32.s32 %v8342
        %v8349 = vshll.u32 %v8348, 16
        %v8350 = vadd.s32 %v8349, %v8347
        %v8351 = vsel %vm841, %v7991, 2147483647
        %v8352 = vand.u32 %v8351, 65535
        %v8353 = vshra.s32 %v8351, 16
        %v8354 = vcvt.s32.f32 %v8352
        %v8355 = vcvt.s32.f32 %v8353
        %8356 = vmin.xlane.f32.xlu0 %v8355
        %v8357 = vpop.xlane.xlu0 %8356
        %vm8358 = vcmp.eq.f32.partialorder %v8355, %v8357
        %v8359 = vsel %vm8358, %v8354, inf
        %8360 = vmin.xlane.f32.xlu0 %v8359
        %v8361 = vpop.xlane.xlu0 %8360
        %v8362 = vcvt.f32.s32 %v8361
        %v8363 = vcvt.f32.s32 %v8357
        %v8364 = vshll.u32 %v8363, 16
        %v8365 = vadd.s32 %v8364, %v8362
        %v8366 = vsel %vm841, %v7992, 2147483647
        %v8367 = vand.u32 %v8366, 65535
        %v8368 = vshra.s32 %v8366, 16
        %v8369 = vcvt.s32.f32 %v8367
        %v8370 = vcvt.s32.f32 %v8368
        %8371 = vmin.xlane.f32.xlu0 %v8370
        %v8372 = vpop.xlane.xlu0 %8371
        %vm8373 = vcmp.eq.f32.partialorder %v8370, %v8372
        %v8374 = vsel %vm8373, %v8369, inf
        %8375 = vmin.xlane.f32.xlu0 %v8374
        %v8376 = vpop.xlane.xlu0 %8375
        %v8377 = vcvt.f32.s32 %v8376
        %v8378 = vcvt.f32.s32 %v8372
        %v8379 = vshll.u32 %v8378, 16
        %v8380 = vadd.s32 %v8379, %v8377
        %v8381 = vsel %vm841, %v7993, 2147483647
        %v8382 = vand.u32 %v8381, 65535
        %v8383 = vshra.s32 %v8381, 16
        %v8384 = vcvt.s32.f32 %v8382
        %v8385 = vcvt.s32.f32 %v8383
        %8386 = vmin.xlane.f32.xlu0 %v8385
        %v8387 = vpop.xlane.xlu0 %8386
        %vm8388 = vcmp.eq.f32.partialorder %v8385, %v8387
        %v8389 = vsel %vm8388, %v8384, inf
        %8390 = vmin.xlane.f32.xlu0 %v8389
        %v8391 = vpop.xlane.xlu0 %8390
        %v8392 = vcvt.f32.s32 %v8391
        %v8393 = vcvt.f32.s32 %v8387
        %v8394 = vshll.u32 %v8393, 16
        %v8395 = vadd.s32 %v8394, %v8392
        %v8396 = vsel %vm2759, %v7994, 2147483647
        %v8397 = vand.u32 %v8396, 65535
        %v8398 = vshra.s32 %v8396, 16
        %v8399 = vcvt.s32.f32 %v8397
        %v8400 = vcvt.s32.f32 %v8398
        %8401 = vmin.xlane.f32.xlu0 %v8400
        %v8402 = vpop.xlane.xlu0 %8401
        %vm8403 = vcmp.eq.f32.partialorder %v8400, %v8402
        %v8404 = vsel %vm8403, %v8399, inf
        %8405 = vmin.xlane.f32.xlu0 %v8404
        %v8406 = vpop.xlane.xlu0 %8405
        %v8407 = vcvt.f32.s32 %v8406
        %v8408 = vcvt.f32.s32 %v8402
        %v8409 = vshll.u32 %v8408, 16
        %v8410 = vadd.s32 %v8409, %v8407
        %v8411 = vsel %vm841, %v7995, 2147483647
        %v8412 = vand.u32 %v8411, 65535
        %v8413 = vshra.s32 %v8411, 16
        %v8414 = vcvt.s32.f32 %v8412
        %v8415 = vcvt.s32.f32 %v8413
        %8416 = vmin.xlane.f32.xlu0 %v8415
        %v8417 = vpop.xlane.xlu0 %8416
        %vm8418 = vcmp.eq.f32.partialorder %v8415, %v8417
        %v8419 = vsel %vm8418, %v8414, inf
        %8420 = vmin.xlane.f32.xlu0 %v8419
        %v8421 = vpop.xlane.xlu0 %8420
        %v8422 = vcvt.f32.s32 %v8421
        %v8423 = vcvt.f32.s32 %v8417
        %v8424 = vshll.u32 %v8423, 16
        %v8425 = vadd.s32 %v8424, %v8422
        %v8426 = vsel %vm841, %v7996, 2147483647
        %v8427 = vand.u32 %v8426, 65535
        %v8428 = vshra.s32 %v8426, 16
        %v8429 = vcvt.s32.f32 %v8427
        %v8430 = vcvt.s32.f32 %v8428
        %8431 = vmin.xlane.f32.xlu0 %v8430
        %v8432 = vpop.xlane.xlu0 %8431
        %vm8433 = vcmp.eq.f32.partialorder %v8430, %v8432
        %v8434 = vsel %vm8433, %v8429, inf
        %8435 = vmin.xlane.f32.xlu0 %v8434
        %v8436 = vpop.xlane.xlu0 %8435
        %v8437 = vcvt.f32.s32 %v8436
        %v8438 = vcvt.f32.s32 %v8432
        %v8439 = vshll.u32 %v8438, 16
        %v8440 = vadd.s32 %v8439, %v8437
        %v8441 = vsel %vm841, %v7997, 2147483647
        %v8442 = vand.u32 %v8441, 65535
        %v8443 = vshra.s32 %v8441, 16
        %v8444 = vcvt.s32.f32 %v8442
        %v8445 = vcvt.s32.f32 %v8443
        %8446 = vmin.xlane.f32.xlu0 %v8445
        %v8447 = vpop.xlane.xlu0 %8446
        %vm8448 = vcmp.eq.f32.partialorder %v8445, %v8447
        %v8449 = vsel %vm8448, %v8444, inf
        %8450 = vmin.xlane.f32.xlu0 %v8449
        %v8451 = vpop.xlane.xlu0 %8450
        %v8452 = vcvt.f32.s32 %v8451
        %v8453 = vcvt.f32.s32 %v8447
        %v8454 = vshll.u32 %v8453, 16
        %v8455 = vadd.s32 %v8454, %v8452
        %v8456 = vsel %vm841, %v7998, 2147483647
        %v8457 = vand.u32 %v8456, 65535
        %v8458 = vshra.s32 %v8456, 16
        %v8459 = vcvt.s32.f32 %v8457
        %v8460 = vcvt.s32.f32 %v8458
        %8461 = vmin.xlane.f32.xlu0 %v8460
        %v8462 = vpop.xlane.xlu0 %8461
        %vm8463 = vcmp.eq.f32.partialorder %v8460, %v8462
        %v8464 = vsel %vm8463, %v8459, inf
        %8465 = vmin.xlane.f32.xlu0 %v8464
        %v8466 = vpop.xlane.xlu0 %8465
        %v8467 = vcvt.f32.s32 %v8466
        %v8468 = vcvt.f32.s32 %v8462
        %v8469 = vshll.u32 %v8468, 16
        %v8470 = vadd.s32 %v8469, %v8467
        %v8471 = vsel %vm841, %v7999, 2147483647
        %v8472 = vand.u32 %v8471, 65535
        %v8473 = vshra.s32 %v8471, 16
        %v8474 = vcvt.s32.f32 %v8472
        %v8475 = vcvt.s32.f32 %v8473
        %8476 = vmin.xlane.f32.xlu0 %v8475
        %v8477 = vpop.xlane.xlu0 %8476
        %vm8478 = vcmp.eq.f32.partialorder %v8475, %v8477
        %v8479 = vsel %vm8478, %v8474, inf
        %8480 = vmin.xlane.f32.xlu0 %v8479
        %v8481 = vpop.xlane.xlu0 %8480
        %v8482 = vcvt.f32.s32 %v8481
        %v8483 = vcvt.f32.s32 %v8477
        %v8484 = vshll.u32 %v8483, 16
        %v8485 = vadd.s32 %v8484, %v8482
        %v8486 = vsel %vm841, %v8000, 2147483647
        %v8487 = vand.u32 %v8486, 65535
        %v8488 = vshra.s32 %v8486, 16
        %v8489 = vcvt.s32.f32 %v8487
        %v8490 = vcvt.s32.f32 %v8488
        %8491 = vmin.xlane.f32.xlu0 %v8490
        %v8492 = vpop.xlane.xlu0 %8491
        %vm8493 = vcmp.eq.f32.partialorder %v8490, %v8492
        %v8494 = vsel %vm8493, %v8489, inf
        %8495 = vmin.xlane.f32.xlu0 %v8494
        %v8496 = vpop.xlane.xlu0 %8495
        %v8497 = vcvt.f32.s32 %v8496
        %v8498 = vcvt.f32.s32 %v8492
        %v8499 = vshll.u32 %v8498, 16
        %v8500 = vadd.s32 %v8499, %v8497
        %v8501 = vsel %vm841, %v8001, 2147483647
        %v8502 = vand.u32 %v8501, 65535
        %v8503 = vshra.s32 %v8501, 16
        %v8504 = vcvt.s32.f32 %v8502
        %v8505 = vcvt.s32.f32 %v8503
        %8506 = vmin.xlane.f32.xlu0 %v8505
        %v8507 = vpop.xlane.xlu0 %8506
        %vm8508 = vcmp.eq.f32.partialorder %v8505, %v8507
        %v8509 = vsel %vm8508, %v8504, inf
        %8510 = vmin.xlane.f32.xlu0 %v8509
        %v8511 = vpop.xlane.xlu0 %8510
        %v8512 = vcvt.f32.s32 %v8511
        %v8513 = vcvt.f32.s32 %v8507
        %v8514 = vshll.u32 %v8513, 16
        %v8515 = vadd.s32 %v8514, %v8512
        %v8516 = vsel %vm841, %v8002, 2147483647
        %v8517 = vand.u32 %v8516, 65535
        %v8518 = vshra.s32 %v8516, 16
        %v8519 = vcvt.s32.f32 %v8517
        %v8520 = vcvt.s32.f32 %v8518
        %8521 = vmin.xlane.f32.xlu0 %v8520
        %v8522 = vpop.xlane.xlu0 %8521
        %vm8523 = vcmp.eq.f32.partialorder %v8520, %v8522
        %v8524 = vsel %vm8523, %v8519, inf
        %8525 = vmin.xlane.f32.xlu0 %v8524
        %v8526 = vpop.xlane.xlu0 %8525
        %v8527 = vcvt.f32.s32 %v8526
        %v8528 = vcvt.f32.s32 %v8522
        %v8529 = vshll.u32 %v8528, 16
        %v8530 = vadd.s32 %v8529, %v8527
        %v8531 = vsel %vm841, %v8003, 2147483647
        %v8532 = vand.u32 %v8531, 65535
        %v8533 = vshra.s32 %v8531, 16
        %v8534 = vcvt.s32.f32 %v8532
        %v8535 = vcvt.s32.f32 %v8533
        %8536 = vmin.xlane.f32.xlu0 %v8535
        %v8537 = vpop.xlane.xlu0 %8536
        %vm8538 = vcmp.eq.f32.partialorder %v8535, %v8537
        %v8539 = vsel %vm8538, %v8534, inf
        %8540 = vmin.xlane.f32.xlu0 %v8539
        %v8541 = vpop.xlane.xlu0 %8540
        %v8542 = vcvt.f32.s32 %v8541
        %v8543 = vcvt.f32.s32 %v8537
        %v8544 = vshll.u32 %v8543, 16
        %v8545 = vadd.s32 %v8544, %v8542
        %v8546 = vsel %vm841, %v8004, 2147483647
        %v8547 = vand.u32 %v8546, 65535
        %v8548 = vshra.s32 %v8546, 16
        %v8549 = vcvt.s32.f32 %v8547
        %v8550 = vcvt.s32.f32 %v8548
        %8551 = vmin.xlane.f32.xlu0 %v8550
        %v8552 = vpop.xlane.xlu0 %8551
        %vm8553 = vcmp.eq.f32.partialorder %v8550, %v8552
        %v8554 = vsel %vm8553, %v8549, inf
        %8555 = vmin.xlane.f32.xlu0 %v8554
        %v8556 = vpop.xlane.xlu0 %8555
        %v8557 = vcvt.f32.s32 %v8556
        %v8558 = vcvt.f32.s32 %v8552
        %v8559 = vshll.u32 %v8558, 16
        %v8560 = vadd.s32 %v8559, %v8557
        %v8561 = vsel %vm841, %v8005, 2147483647
        %v8562 = vand.u32 %v8561, 65535
        %v8563 = vshra.s32 %v8561, 16
        %v8564 = vcvt.s32.f32 %v8562
        %v8565 = vcvt.s32.f32 %v8563
        %8566 = vmin.xlane.f32.xlu0 %v8565
        %v8567 = vpop.xlane.xlu0 %8566
        %vm8568 = vcmp.eq.f32.partialorder %v8565, %v8567
        %v8569 = vsel %vm8568, %v8564, inf
        %8570 = vmin.xlane.f32.xlu0 %v8569
        %v8571 = vpop.xlane.xlu0 %8570
        %v8572 = vcvt.f32.s32 %v8571
        %v8573 = vcvt.f32.s32 %v8567
        %v8574 = vshll.u32 %v8573, 16
        %v8575 = vadd.s32 %v8574, %v8572
        %v8576 = vsel %vm841, %v8006, 2147483647
        %v8577 = vand.u32 %v8576, 65535
        %v8578 = vshra.s32 %v8576, 16
        %v8579 = vcvt.s32.f32 %v8577
        %v8580 = vcvt.s32.f32 %v8578
        %8581 = vmin.xlane.f32.xlu0 %v8580
        %v8582 = vpop.xlane.xlu0 %8581
        %vm8583 = vcmp.eq.f32.partialorder %v8580, %v8582
        %v8584 = vsel %vm8583, %v8579, inf
        %8585 = vmin.xlane.f32.xlu0 %v8584
        %v8586 = vpop.xlane.xlu0 %8585
        %v8587 = vcvt.f32.s32 %v8586
        %v8588 = vcvt.f32.s32 %v8582
        %v8589 = vshll.u32 %v8588, 16
        %v8590 = vadd.s32 %v8589, %v8587
        %v8591 = vsel %vm2759, %v8007, 2147483647
        %v8592 = vand.u32 %v8591, 65535
        %v8593 = vshra.s32 %v8591, 16
        %v8594 = vcvt.s32.f32 %v8592
        %v8595 = vcvt.s32.f32 %v8593
        %8596 = vmin.xlane.f32.xlu0 %v8595
        %v8597 = vpop.xlane.xlu0 %8596
        %vm8598 = vcmp.eq.f32.partialorder %v8595, %v8597
        %v8599 = vsel %vm8598, %v8594, inf
        %8600 = vmin.xlane.f32.xlu0 %v8599
        %v8601 = vpop.xlane.xlu0 %8600
        %v8602 = vcvt.f32.s32 %v8601
        %v8603 = vcvt.f32.s32 %v8597
        %v8604 = vshll.u32 %v8603, 16
        %v8605 = vadd.s32 %v8604, %v8602
        %v8606 = vsel %vm841, %v8008, 2147483647
        %v8607 = vand.u32 %v8606, 65535
        %v8608 = vshra.s32 %v8606, 16
        %v8609 = vcvt.s32.f32 %v8607
        %v8610 = vcvt.s32.f32 %v8608
        %8611 = vmin.xlane.f32.xlu0 %v8610
        %v8612 = vpop.xlane.xlu0 %8611
        %vm8613 = vcmp.eq.f32.partialorder %v8610, %v8612
        %v8614 = vsel %vm8613, %v8609, inf
        %8615 = vmin.xlane.f32.xlu0 %v8614
        %v8616 = vpop.xlane.xlu0 %8615
        %v8617 = vcvt.f32.s32 %v8616
        %v8618 = vcvt.f32.s32 %v8612
        %v8619 = vshll.u32 %v8618, 16
        %v8620 = vadd.s32 %v8619, %v8617
        %v8621 = vsel %vm841, %v8009, 2147483647
        %v8622 = vand.u32 %v8621, 65535
        %v8623 = vshra.s32 %v8621, 16
        %v8624 = vcvt.s32.f32 %v8622
        %v8625 = vcvt.s32.f32 %v8623
        %8626 = vmin.xlane.f32.xlu0 %v8625
        %v8627 = vpop.xlane.xlu0 %8626
        %vm8628 = vcmp.eq.f32.partialorder %v8625, %v8627
        %v8629 = vsel %vm8628, %v8624, inf
        %8630 = vmin.xlane.f32.xlu0 %v8629
        %v8631 = vpop.xlane.xlu0 %8630
        %v8632 = vcvt.f32.s32 %v8631
        %v8633 = vcvt.f32.s32 %v8627
        %v8634 = vshll.u32 %v8633, 16
        %v8635 = vadd.s32 %v8634, %v8632
        %v8636 = vsel %vm841, %v8010, 2147483647
        %v8637 = vand.u32 %v8636, 65535
        %v8638 = vshra.s32 %v8636, 16
        %v8639 = vcvt.s32.f32 %v8637
        %v8640 = vcvt.s32.f32 %v8638
        %8641 = vmin.xlane.f32.xlu0 %v8640
        %v8642 = vpop.xlane.xlu0 %8641
        %vm8643 = vcmp.eq.f32.partialorder %v8640, %v8642
        %v8644 = vsel %vm8643, %v8639, inf
        %8645 = vmin.xlane.f32.xlu0 %v8644
        %v8646 = vpop.xlane.xlu0 %8645
        %v8647 = vcvt.f32.s32 %v8646
        %v8648 = vcvt.f32.s32 %v8642
        %v8649 = vshll.u32 %v8648, 16
        %v8650 = vadd.s32 %v8649, %v8647
        %v8651 = vsel %vm841, %v8011, 2147483647
        %v8652 = vand.u32 %v8651, 65535
        %v8653 = vshra.s32 %v8651, 16
        %v8654 = vcvt.s32.f32 %v8652
        %v8655 = vcvt.s32.f32 %v8653
        %8656 = vmin.xlane.f32.xlu0 %v8655
        %v8657 = vpop.xlane.xlu0 %8656
        %vm8658 = vcmp.eq.f32.partialorder %v8655, %v8657
        %v8659 = vsel %vm8658, %v8654, inf
        %8660 = vmin.xlane.f32.xlu0 %v8659
        %v8661 = vpop.xlane.xlu0 %8660
        %v8662 = vcvt.f32.s32 %v8661
        %v8663 = vcvt.f32.s32 %v8657
        %v8664 = vshll.u32 %v8663, 16
        %v8665 = vadd.s32 %v8664, %v8662
        %v8666 = vsel %vm841, %v8012, 2147483647
        %v8667 = vand.u32 %v8666, 65535
        %v8668 = vshra.s32 %v8666, 16
        %v8669 = vcvt.s32.f32 %v8667
        %v8670 = vcvt.s32.f32 %v8668
        %8671 = vmin.xlane.f32.xlu0 %v8670
        %v8672 = vpop.xlane.xlu0 %8671
        %vm8673 = vcmp.eq.f32.partialorder %v8670, %v8672
        %v8674 = vsel %vm8673, %v8669, inf
        %8675 = vmin.xlane.f32.xlu0 %v8674
        %v8676 = vpop.xlane.xlu0 %8675
        %v8677 = vcvt.f32.s32 %v8676
        %v8678 = vcvt.f32.s32 %v8672
        %v8679 = vshll.u32 %v8678, 16
        %v8680 = vadd.s32 %v8679, %v8677
        %v8681 = vsel %vm841, %v8013, 2147483647
        %v8682 = vand.u32 %v8681, 65535
        %v8683 = vshra.s32 %v8681, 16
        %v8684 = vcvt.s32.f32 %v8682
        %v8685 = vcvt.s32.f32 %v8683
        %8686 = vmin.xlane.f32.xlu0 %v8685
        %v8687 = vpop.xlane.xlu0 %8686
        %vm8688 = vcmp.eq.f32.partialorder %v8685, %v8687
        %v8689 = vsel %vm8688, %v8684, inf
        %8690 = vmin.xlane.f32.xlu0 %v8689
        %v8691 = vpop.xlane.xlu0 %8690
        %v8692 = vcvt.f32.s32 %v8691
        %v8693 = vcvt.f32.s32 %v8687
        %v8694 = vshll.u32 %v8693, 16
        %v8695 = vadd.s32 %v8694, %v8692
        %v8696 = vsel %vm841, %v8014, 2147483647
        %v8697 = vand.u32 %v8696, 65535
        %v8698 = vshra.s32 %v8696, 16
        %v8699 = vcvt.s32.f32 %v8697
        %v8700 = vcvt.s32.f32 %v8698
        %8701 = vmin.xlane.f32.xlu0 %v8700
        %v8702 = vpop.xlane.xlu0 %8701
        %vm8703 = vcmp.eq.f32.partialorder %v8700, %v8702
        %v8704 = vsel %vm8703, %v8699, inf
        %8705 = vmin.xlane.f32.xlu0 %v8704
        %v8706 = vpop.xlane.xlu0 %8705
        %v8707 = vcvt.f32.s32 %v8706
        %v8708 = vcvt.f32.s32 %v8702
        %v8709 = vshll.u32 %v8708, 16
        %v8710 = vadd.s32 %v8709, %v8707
        %v8711 = vsel %vm841, %v8015, 2147483647
        %v8712 = vand.u32 %v8711, 65535
        %v8713 = vshra.s32 %v8711, 16
        %v8714 = vcvt.s32.f32 %v8712
        %v8715 = vcvt.s32.f32 %v8713
        %8716 = vmin.xlane.f32.xlu0 %v8715
        %v8717 = vpop.xlane.xlu0 %8716
        %vm8718 = vcmp.eq.f32.partialorder %v8715, %v8717
        %v8719 = vsel %vm8718, %v8714, inf
        %8720 = vmin.xlane.f32.xlu0 %v8719
        %v8721 = vpop.xlane.xlu0 %8720
        %v8722 = vcvt.f32.s32 %v8721
        %v8723 = vcvt.f32.s32 %v8717
        %v8724 = vshll.u32 %v8723, 16
        %v8725 = vadd.s32 %v8724, %v8722
        %v8726 = vsel %vm841, %v8016, 2147483647
        %v8727 = vand.u32 %v8726, 65535
        %v8728 = vshra.s32 %v8726, 16
        %v8729 = vcvt.s32.f32 %v8727
        %v8730 = vcvt.s32.f32 %v8728
        %8731 = vmin.xlane.f32.xlu0 %v8730
        %v8732 = vpop.xlane.xlu0 %8731
        %vm8733 = vcmp.eq.f32.partialorder %v8730, %v8732
        %v8734 = vsel %vm8733, %v8729, inf
        %8735 = vmin.xlane.f32.xlu0 %v8734
        %v8736 = vpop.xlane.xlu0 %8735
        %v8737 = vcvt.f32.s32 %v8736
        %v8738 = vcvt.f32.s32 %v8732
        %v8739 = vshll.u32 %v8738, 16
        %v8740 = vadd.s32 %v8739, %v8737
        %v8741 = vsel %vm841, %v8017, 2147483647
        %v8742 = vand.u32 %v8741, 65535
        %v8743 = vshra.s32 %v8741, 16
        %v8744 = vcvt.s32.f32 %v8742
        %v8745 = vcvt.s32.f32 %v8743
        %8746 = vmin.xlane.f32.xlu0 %v8745
        %v8747 = vpop.xlane.xlu0 %8746
        %vm8748 = vcmp.eq.f32.partialorder %v8745, %v8747
        %v8749 = vsel %vm8748, %v8744, inf
        %8750 = vmin.xlane.f32.xlu0 %v8749
        %v8751 = vpop.xlane.xlu0 %8750
        %v8752 = vcvt.f32.s32 %v8751
        %v8753 = vcvt.f32.s32 %v8747
        %v8754 = vshll.u32 %v8753, 16
        %v8755 = vadd.s32 %v8754, %v8752
        %v8756 = vsel %vm841, %v8018, 2147483647
        %v8757 = vand.u32 %v8756, 65535
        %v8758 = vshra.s32 %v8756, 16
        %v8759 = vcvt.s32.f32 %v8757
        %v8760 = vcvt.s32.f32 %v8758
        %8761 = vmin.xlane.f32.xlu0 %v8760
        %v8762 = vpop.xlane.xlu0 %8761
        %vm8763 = vcmp.eq.f32.partialorder %v8760, %v8762
        %v8764 = vsel %vm8763, %v8759, inf
        %8765 = vmin.xlane.f32.xlu0 %v8764
        %v8766 = vpop.xlane.xlu0 %8765
        %v8767 = vcvt.f32.s32 %v8766
        %v8768 = vcvt.f32.s32 %v8762
        %v8769 = vshll.u32 %v8768, 16
        %v8770 = vadd.s32 %v8769, %v8767
        %v8771 = vsel %vm841, %v8019, 2147483647
        %v8772 = vand.u32 %v8771, 65535
        %v8773 = vshra.s32 %v8771, 16
        %v8774 = vcvt.s32.f32 %v8772
        %v8775 = vcvt.s32.f32 %v8773
        %8776 = vmin.xlane.f32.xlu0 %v8775
        %v8777 = vpop.xlane.xlu0 %8776
        %vm8778 = vcmp.eq.f32.partialorder %v8775, %v8777
        %v8779 = vsel %vm8778, %v8774, inf
        %8780 = vmin.xlane.f32.xlu0 %v8779
        %v8781 = vpop.xlane.xlu0 %8780
        %v8782 = vcvt.f32.s32 %v8781
        %v8783 = vcvt.f32.s32 %v8777
        %v8784 = vshll.u32 %v8783, 16
        %v8785 = vadd.s32 %v8784, %v8782
        %v8786 = vsel %vm2759, %v8020, 2147483647
        %v8787 = vand.u32 %v8786, 65535
        %v8788 = vshra.s32 %v8786, 16
        %v8789 = vcvt.s32.f32 %v8787
        %v8790 = vcvt.s32.f32 %v8788
        %8791 = vmin.xlane.f32.xlu0 %v8790
        %v8792 = vpop.xlane.xlu0 %8791
        %vm8793 = vcmp.eq.f32.partialorder %v8790, %v8792
        %v8794 = vsel %vm8793, %v8789, inf
        %8795 = vmin.xlane.f32.xlu0 %v8794
        %v8796 = vpop.xlane.xlu0 %8795
        %v8797 = vcvt.f32.s32 %v8796
        %v8798 = vcvt.f32.s32 %v8792
        %v8799 = vshll.u32 %v8798, 16
        %v8800 = vadd.s32 %v8799, %v8797
        %v8801 = vsel %vm841, %v4228, -inf
        %v8802 = vsel %vm841, %v4229, -inf
        %v8803 = vmax.f32 %v8801, %v8802
        %v8804 = vsel %vm841, %v4230, -inf
        %v8805 = vmax.f32 %v8803, %v8804
        %v8806 = vsel %vm841, %v4231, -inf
        %v8807 = vmax.f32 %v8805, %v8806
        %v8808 = vsel %vm841, %v4232, -inf
        %v8809 = vmax.f32 %v8807, %v8808
        %v8810 = vsel %vm841, %v4233, -inf
        %v8811 = vmax.f32 %v8809, %v8810
        %v8812 = vsel %vm841, %v4234, -inf
        %v8813 = vmax.f32 %v8811, %v8812
        %v8814 = vsel %vm841, %v4235, -inf
        %v8815 = vmax.f32 %v8813, %v8814
        %v8816 = vsel %vm841, %v4236, -inf
        %v8817 = vmax.f32 %v8815, %v8816
        %v8818 = vsel %vm841, %v4237, -inf
        %v8819 = vmax.f32 %v8817, %v8818
        %v8820 = vsel %vm841, %v4238, -inf
        %v8821 = vmax.f32 %v8819, %v8820
        %v8822 = vsel %vm841, %v4239, -inf
        %v8823 = vmax.f32 %v8821, %v8822
        %v8824 = vsel %vm2759, %v4240, -inf
        %v8825 = vmax.f32 %v8823, %v8824
        %v8826 = vrot.slane %v8825, 4
        %v8827 = vmax.f32 %v8825, %v8826
        %v8828 = vrot.slane %v8827, 2
        %v8829 = vmax.f32 %v8827, %v8828
        %v8830 = vrot.slane %v8829, 1
        %v8831 = vmax.f32 %v8829, %v8830
        %v8832 = vsel %vm841, %v4241, -inf
        %v8833 = vsel %vm841, %v4242, -inf
        %v8834 = vmax.f32 %v8832, %v8833
        %v8835 = vsel %vm841, %v4243, -inf
        %v8836 = vmax.f32 %v8834, %v8835
        %v8837 = vsel %vm841, %v4244, -inf
        %v8838 = vmax.f32 %v8836, %v8837
        %v8839 = vsel %vm841, %v4245, -inf
        %v8840 = vmax.f32 %v8838, %v8839
        %v8841 = vsel %vm841, %v4246, -inf
        %v8842 = vmax.f32 %v8840, %v8841
        %v8843 = vsel %vm841, %v4247, -inf
        %v8844 = vmax.f32 %v8842, %v8843
        %v8845 = vsel %vm841, %v4248, -inf
        %v8846 = vmax.f32 %v8844, %v8845
        %v8847 = vsel %vm841, %v4249, -inf
        %v8848 = vmax.f32 %v8846, %v8847
        %v8849 = vsel %vm841, %v4250, -inf
        %v8850 = vmax.f32 %v8848, %v8849
        %v8851 = vsel %vm841, %v4251, -inf
        %v8852 = vmax.f32 %v8850, %v8851
        %v8853 = vsel %vm841, %v4252, -inf
        %v8854 = vmax.f32 %v8852, %v8853
        %v8855 = vsel %vm2759, %v4253, -inf
        %v8856 = vmax.f32 %v8854, %v8855
        %v8857 = vrot.slane %v8856, 4
        %v8858 = vmax.f32 %v8856, %v8857
        %v8859 = vrot.slane %v8858, 2
        %v8860 = vmax.f32 %v8858, %v8859
        %v8861 = vrot.slane %v8860, 1
        %v8862 = vmax.f32 %v8860, %v8861
        %v8863 = vsel %vm841, %v4254, -inf
        %v8864 = vsel %vm841, %v4255, -inf
        %v8865 = vmax.f32 %v8863, %v8864
        %v8866 = vsel %vm841, %v4256, -inf
        %v8867 = vmax.f32 %v8865, %v8866
        %v8868 = vsel %vm841, %v4257, -inf
        %v8869 = vmax.f32 %v8867, %v8868
        %v8870 = vsel %vm841, %v4258, -inf
        %v8871 = vmax.f32 %v8869, %v8870
        %v8872 = vsel %vm841, %v4259, -inf
        %v8873 = vmax.f32 %v8871, %v8872
        %v8874 = vsel %vm841, %v4260, -inf
        %v8875 = vmax.f32 %v8873, %v8874
        %v8876 = vsel %vm841, %v4261, -inf
        %v8877 = vmax.f32 %v8875, %v8876
        %v8878 = vsel %vm841, %v4262, -inf
        %v8879 = vmax.f32 %v8877, %v8878
        %v8880 = vsel %vm841, %v4263, -inf
        %v8881 = vmax.f32 %v8879, %v8880
        %v8882 = vsel %vm841, %v4264, -inf
        %v8883 = vmax.f32 %v8881, %v8882
        %v8884 = vsel %vm841, %v4265, -inf
        %v8885 = vmax.f32 %v8883, %v8884
        %v8886 = vsel %vm2759, %v4266, -inf
        %v8887 = vmax.f32 %v8885, %v8886
        %v8888 = vrot.slane %v8887, 4
        %v8889 = vmax.f32 %v8887, %v8888
        %v8890 = vrot.slane %v8889, 2
        %v8891 = vmax.f32 %v8889, %v8890
        %v8892 = vrot.slane %v8891, 1
        %v8893 = vmax.f32 %v8891, %v8892
        %v8894 = vsel %vm841, %v4267, -inf
        %v8895 = vsel %vm841, %v4268, -inf
        %v8896 = vmax.f32 %v8894, %v8895
        %v8897 = vsel %vm841, %v4269, -inf
        %v8898 = vmax.f32 %v8896, %v8897
        %v8899 = vsel %vm841, %v4270, -inf
        %v8900 = vmax.f32 %v8898, %v8899
        %v8901 = vsel %vm841, %v4271, -inf
        %v8902 = vmax.f32 %v8900, %v8901
        %v8903 = vsel %vm841, %v4272, -inf
        %v8904 = vmax.f32 %v8902, %v8903
        %v8905 = vsel %vm841, %v4273, -inf
        %v8906 = vmax.f32 %v8904, %v8905
        %v8907 = vsel %vm841, %v4274, -inf
        %v8908 = vmax.f32 %v8906, %v8907
        %v8909 = vsel %vm841, %v4275, -inf
        %v8910 = vmax.f32 %v8908, %v8909
        %v8911 = vsel %vm841, %v4276, -inf
        %v8912 = vmax.f32 %v8910, %v8911
        %v8913 = vsel %vm841, %v4277, -inf
        %v8914 = vmax.f32 %v8912, %v8913
        %v8915 = vsel %vm841, %v4278, -inf
        %v8916 = vmax.f32 %v8914, %v8915
        %v8917 = vsel %vm2759, %v4279, -inf
        %v8918 = vmax.f32 %v8916, %v8917
        %v8919 = vrot.slane %v8918, 4
        %v8920 = vmax.f32 %v8918, %v8919
        %v8921 = vrot.slane %v8920, 2
        %v8922 = vmax.f32 %v8920, %v8921
        %v8923 = vrot.slane %v8922, 1
        %v8924 = vmax.f32 %v8922, %v8923
        %vm8925 = vcmp.eq.f32.partialorder %v4228, %v8831
        %vm8926 = vcmp.eq.f32.partialorder %v4229, %v8831
        %vm8927 = vcmp.eq.f32.partialorder %v4230, %v8831
        %vm8928 = vcmp.eq.f32.partialorder %v4231, %v8831
        %vm8929 = vcmp.eq.f32.partialorder %v4232, %v8831
        %vm8930 = vcmp.eq.f32.partialorder %v4233, %v8831
        %vm8931 = vcmp.eq.f32.partialorder %v4234, %v8831
        %vm8932 = vcmp.eq.f32.partialorder %v4235, %v8831
        %vm8933 = vcmp.eq.f32.partialorder %v4236, %v8831
        %vm8934 = vcmp.eq.f32.partialorder %v4237, %v8831
        %vm8935 = vcmp.eq.f32.partialorder %v4238, %v8831
        %vm8936 = vcmp.eq.f32.partialorder %v4239, %v8831
        %vm8937 = vcmp.eq.f32.partialorder %v4240, %v8831
        %vm8938 = vcmp.eq.f32.partialorder %v4241, %v8862
        %vm8939 = vcmp.eq.f32.partialorder %v4242, %v8862
        %vm8940 = vcmp.eq.f32.partialorder %v4243, %v8862
        %vm8941 = vcmp.eq.f32.partialorder %v4244, %v8862
        %vm8942 = vcmp.eq.f32.partialorder %v4245, %v8862
        %vm8943 = vcmp.eq.f32.partialorder %v4246, %v8862
        %vm8944 = vcmp.eq.f32.partialorder %v4247, %v8862
        %vm8945 = vcmp.eq.f32.partialorder %v4248, %v8862
        %vm8946 = vcmp.eq.f32.partialorder %v4249, %v8862
        %vm8947 = vcmp.eq.f32.partialorder %v4250, %v8862
        %vm8948 = vcmp.eq.f32.partialorder %v4251, %v8862
        %vm8949 = vcmp.eq.f32.partialorder %v4252, %v8862
        %vm8950 = vcmp.eq.f32.partialorder %v4253, %v8862
        %vm8951 = vcmp.eq.f32.partialorder %v4254, %v8893
        %vm8952 = vcmp.eq.f32.partialorder %v4255, %v8893
        %vm8953 = vcmp.eq.f32.partialorder %v4256, %v8893
        %vm8954 = vcmp.eq.f32.partialorder %v4257, %v8893
        %vm8955 = vcmp.eq.f32.partialorder %v4258, %v8893
        %vm8956 = vcmp.eq.f32.partialorder %v4259, %v8893
        %vm8957 = vcmp.eq.f32.partialorder %v4260, %v8893
        %vm8958 = vcmp.eq.f32.partialorder %v4261, %v8893
        %vm8959 = vcmp.eq.f32.partialorder %v4262, %v8893
        %vm8960 = vcmp.eq.f32.partialorder %v4263, %v8893
        %vm8961 = vcmp.eq.f32.partialorder %v4264, %v8893
        %vm8962 = vcmp.eq.f32.partialorder %v4265, %v8893
        %vm8963 = vcmp.eq.f32.partialorder %v4266, %v8893
        %vm8964 = vcmp.eq.f32.partialorder %v4267, %v8924
        %vm8965 = vcmp.eq.f32.partialorder %v4268, %v8924
        %vm8966 = vcmp.eq.f32.partialorder %v4269, %v8924
        %vm8967 = vcmp.eq.f32.partialorder %v4270, %v8924
        %vm8968 = vcmp.eq.f32.partialorder %v4271, %v8924
        %vm8969 = vcmp.eq.f32.partialorder %v4272, %v8924
        %vm8970 = vcmp.eq.f32.partialorder %v4273, %v8924
        %vm8971 = vcmp.eq.f32.partialorder %v4274, %v8924
        %vm8972 = vcmp.eq.f32.partialorder %v4275, %v8924
        %vm8973 = vcmp.eq.f32.partialorder %v4276, %v8924
        %vm8974 = vcmp.eq.f32.partialorder %v4277, %v8924
        %vm8975 = vcmp.eq.f32.partialorder %v4278, %v8924
        %vm8976 = vcmp.eq.f32.partialorder %v4279, %v8924
        %v8977 = vsel %vm8925, %v474, 101
        %v8978 = vsel %vm8926, %v475, 101
        %v8979 = vsel %vm8927, %v476, 101
        %v8980 = vsel %vm8928, %v477, 101
        %v8981 = vsel %vm8929, %v478, 101
        %v8982 = vsel %vm8930, %v479, 101
        %v8983 = vsel %vm8931, %v480, 101
        %v8984 = vsel %vm8932, %v481, 101
        %v8985 = vsel %vm8933, %v482, 101
        %v8986 = vsel %vm8934, %v483, 101
        %v8987 = vsel %vm8935, %v484, 101
        %v8988 = vsel %vm8936, %v485, 101
        %v8989 = vsel %vm8937, %v486, 101
        %v8990 = vsel %vm8938, %v474, 101
        %v8991 = vsel %vm8939, %v475, 101
        %v8992 = vsel %vm8940, %v476, 101
        %v8993 = vsel %vm8941, %v477, 101
        %v8994 = vsel %vm8942, %v478, 101
        %v8995 = vsel %vm8943, %v479, 101
        %v8996 = vsel %vm8944, %v480, 101
        %v8997 = vsel %vm8945, %v481, 101
        %v8998 = vsel %vm8946, %v482, 101
        %v8999 = vsel %vm8947, %v483, 101
        %v9000 = vsel %vm8948, %v484, 101
        %v9001 = vsel %vm8949, %v485, 101
        %v9002 = vsel %vm8950, %v486, 101
        %v9003 = vsel %vm8951, %v474, 101
        %v9004 = vsel %vm8952, %v475, 101
        %v9005 = vsel %vm8953, %v476, 101
        %v9006 = vsel %vm8954, %v477, 101
        %v9007 = vsel %vm8955, %v478, 101
        %v9008 = vsel %vm8956, %v479, 101
        %v9009 = vsel %vm8957, %v480, 101
        %v9010 = vsel %vm8958, %v481, 101
        %v9011 = vsel %vm8959, %v482, 101
        %v9012 = vsel %vm8960, %v483, 101
        %v9013 = vsel %vm8961, %v484, 101
        %v9014 = vsel %vm8962, %v485, 101
        %v9015 = vsel %vm8963, %v486, 101
        %v9016 = vsel %vm8964, %v474, 101
        %v9017 = vsel %vm8965, %v475, 101
        %v9018 = vsel %vm8966, %v476, 101
        %v9019 = vsel %vm8967, %v477, 101
        %v9020 = vsel %vm8968, %v478, 101
        %v9021 = vsel %vm8969, %v479, 101
        %v9022 = vsel %vm8970, %v480, 101
        %v9023 = vsel %vm8971, %v481, 101
        %v9024 = vsel %vm8972, %v482, 101
        %v9025 = vsel %vm8973, %v483, 101
        %v9026 = vsel %vm8974, %v484, 101
        %v9027 = vsel %vm8975, %v485, 101
        %v9028 = vsel %vm8976, %v486, 101
        %v9029 = vsel %vm841, %v8977, 2147483647
        %v9030 = vsel %vm841, %v8978, 2147483647
        %vm9031 = vcmp.lt.s32.totalorder %v9029, %v9030
        %v9032 = vsel %vm9031, %v9029, %v9030
        %v9033 = vsel %vm841, %v8979, 2147483647
        %vm9034 = vcmp.lt.s32.totalorder %v9032, %v9033
        %v9035 = vsel %vm9034, %v9032, %v9033
        %v9036 = vsel %vm841, %v8980, 2147483647
        %vm9037 = vcmp.lt.s32.totalorder %v9035, %v9036
        %v9038 = vsel %vm9037, %v9035, %v9036
        %v9039 = vsel %vm841, %v8981, 2147483647
        %vm9040 = vcmp.lt.s32.totalorder %v9038, %v9039
        %v9041 = vsel %vm9040, %v9038, %v9039
        %v9042 = vsel %vm841, %v8982, 2147483647
        %vm9043 = vcmp.lt.s32.totalorder %v9041, %v9042
        %v9044 = vsel %vm9043, %v9041, %v9042
        %v9045 = vsel %vm841, %v8983, 2147483647
        %vm9046 = vcmp.lt.s32.totalorder %v9044, %v9045
        %v9047 = vsel %vm9046, %v9044, %v9045
        %v9048 = vsel %vm841, %v8984, 2147483647
        %vm9049 = vcmp.lt.s32.totalorder %v9047, %v9048
        %v9050 = vsel %vm9049, %v9047, %v9048
        %v9051 = vsel %vm841, %v8985, 2147483647
        %vm9052 = vcmp.lt.s32.totalorder %v9050, %v9051
        %v9053 = vsel %vm9052, %v9050, %v9051
        %v9054 = vsel %vm841, %v8986, 2147483647
        %vm9055 = vcmp.lt.s32.totalorder %v9053, %v9054
        %v9056 = vsel %vm9055, %v9053, %v9054
        %v9057 = vsel %vm841, %v8987, 2147483647
        %vm9058 = vcmp.lt.s32.totalorder %v9056, %v9057
        %v9059 = vsel %vm9058, %v9056, %v9057
        %v9060 = vsel %vm841, %v8988, 2147483647
        %vm9061 = vcmp.lt.s32.totalorder %v9059, %v9060
        %v9062 = vsel %vm9061, %v9059, %v9060
        %v9063 = vsel %vm2759, %v8989, 2147483647
        %vm9064 = vcmp.lt.s32.totalorder %v9062, %v9063
        %v9065 = vsel %vm9064, %v9062, %v9063
        %v9066 = vrot.slane %v9065, 4
        %vm9067 = vcmp.lt.s32.totalorder %v9065, %v9066
        %v9068 = vsel %vm9067, %v9065, %v9066
        %v9069 = vrot.slane %v9068, 2
        %vm9070 = vcmp.lt.s32.totalorder %v9068, %v9069
        %v9071 = vsel %vm9070, %v9068, %v9069
        %v9072 = vrot.slane %v9071, 1
        %vm9073 = vcmp.lt.s32.totalorder %v9071, %v9072
        %v9074 = vsel %vm9073, %v9071, %v9072
        %v9075 = vsel %vm841, %v8990, 2147483647
        %v9076 = vsel %vm841, %v8991, 2147483647
        %vm9077 = vcmp.lt.s32.totalorder %v9075, %v9076
        %v9078 = vsel %vm9077, %v9075, %v9076
        %v9079 = vsel %vm841, %v8992, 2147483647
        %vm9080 = vcmp.lt.s32.totalorder %v9078, %v9079
        %v9081 = vsel %vm9080, %v9078, %v9079
        %v9082 = vsel %vm841, %v8993, 2147483647
        %vm9083 = vcmp.lt.s32.totalorder %v9081, %v9082
        %v9084 = vsel %vm9083, %v9081, %v9082
        %v9085 = vsel %vm841, %v8994, 2147483647
        %vm9086 = vcmp.lt.s32.totalorder %v9084, %v9085
        %v9087 = vsel %vm9086, %v9084, %v9085
        %v9088 = vsel %vm841, %v8995, 2147483647
        %vm9089 = vcmp.lt.s32.totalorder %v9087, %v9088
        %v9090 = vsel %vm9089, %v9087, %v9088
        %v9091 = vsel %vm841, %v8996, 2147483647
        %vm9092 = vcmp.lt.s32.totalorder %v9090, %v9091
        %v9093 = vsel %vm9092, %v9090, %v9091
        %v9094 = vsel %vm841, %v8997, 2147483647
        %vm9095 = vcmp.lt.s32.totalorder %v9093, %v9094
        %v9096 = vsel %vm9095, %v9093, %v9094
        %v9097 = vsel %vm841, %v8998, 2147483647
        %vm9098 = vcmp.lt.s32.totalorder %v9096, %v9097
        %v9099 = vsel %vm9098, %v9096, %v9097
        %v9100 = vsel %vm841, %v8999, 2147483647
        %vm9101 = vcmp.lt.s32.totalorder %v9099, %v9100
        %v9102 = vsel %vm9101, %v9099, %v9100
        %v9103 = vsel %vm841, %v9000, 2147483647
        %vm9104 = vcmp.lt.s32.totalorder %v9102, %v9103
        %v9105 = vsel %vm9104, %v9102, %v9103
        %v9106 = vsel %vm841, %v9001, 2147483647
        %vm9107 = vcmp.lt.s32.totalorder %v9105, %v9106
        %v9108 = vsel %vm9107, %v9105, %v9106
        %v9109 = vsel %vm2759, %v9002, 2147483647
        %vm9110 = vcmp.lt.s32.totalorder %v9108, %v9109
        %v9111 = vsel %vm9110, %v9108, %v9109
        %v9112 = vrot.slane %v9111, 4
        %vm9113 = vcmp.lt.s32.totalorder %v9111, %v9112
        %v9114 = vsel %vm9113, %v9111, %v9112
        %v9115 = vrot.slane %v9114, 2
        %vm9116 = vcmp.lt.s32.totalorder %v9114, %v9115
        %v9117 = vsel %vm9116, %v9114, %v9115
        %v9118 = vrot.slane %v9117, 1
        %vm9119 = vcmp.lt.s32.totalorder %v9117, %v9118
        %v9120 = vsel %vm9119, %v9117, %v9118
        %v9121 = vsel %vm841, %v9003, 2147483647
        %v9122 = vsel %vm841, %v9004, 2147483647
        %vm9123 = vcmp.lt.s32.totalorder %v9121, %v9122
        %v9124 = vsel %vm9123, %v9121, %v9122
        %v9125 = vsel %vm841, %v9005, 2147483647
        %vm9126 = vcmp.lt.s32.totalorder %v9124, %v9125
        %v9127 = vsel %vm9126, %v9124, %v9125
        %v9128 = vsel %vm841, %v9006, 2147483647
        %vm9129 = vcmp.lt.s32.totalorder %v9127, %v9128
        %v9130 = vsel %vm9129, %v9127, %v9128
        %v9131 = vsel %vm841, %v9007, 2147483647
        %vm9132 = vcmp.lt.s32.totalorder %v9130, %v9131
        %v9133 = vsel %vm9132, %v9130, %v9131
        %v9134 = vsel %vm841, %v9008, 2147483647
        %vm9135 = vcmp.lt.s32.totalorder %v9133, %v9134
        %v9136 = vsel %vm9135, %v9133, %v9134
        %v9137 = vsel %vm841, %v9009, 2147483647
        %vm9138 = vcmp.lt.s32.totalorder %v9136, %v9137
        %v9139 = vsel %vm9138, %v9136, %v9137
        %v9140 = vsel %vm841, %v9010, 2147483647
        %vm9141 = vcmp.lt.s32.totalorder %v9139, %v9140
        %v9142 = vsel %vm9141, %v9139, %v9140
        %v9143 = vsel %vm841, %v9011, 2147483647
        %vm9144 = vcmp.lt.s32.totalorder %v9142, %v9143
        %v9145 = vsel %vm9144, %v9142, %v9143
        %v9146 = vsel %vm841, %v9012, 2147483647
        %vm9147 = vcmp.lt.s32.totalorder %v9145, %v9146
        %v9148 = vsel %vm9147, %v9145, %v9146
        %v9149 = vsel %vm841, %v9013, 2147483647
        %vm9150 = vcmp.lt.s32.totalorder %v9148, %v9149
        %v9151 = vsel %vm9150, %v9148, %v9149
        %v9152 = vsel %vm841, %v9014, 2147483647
        %vm9153 = vcmp.lt.s32.totalorder %v9151, %v9152
        %v9154 = vsel %vm9153, %v9151, %v9152
        %v9155 = vsel %vm2759, %v9015, 2147483647
        %vm9156 = vcmp.lt.s32.totalorder %v9154, %v9155
        %v9157 = vsel %vm9156, %v9154, %v9155
        %v9158 = vrot.slane %v9157, 4
        %vm9159 = vcmp.lt.s32.totalorder %v9157, %v9158
        %v9160 = vsel %vm9159, %v9157, %v9158
        %v9161 = vrot.slane %v9160, 2
        %vm9162 = vcmp.lt.s32.totalorder %v9160, %v9161
        %v9163 = vsel %vm9162, %v9160, %v9161
        %v9164 = vrot.slane %v9163, 1
        %vm9165 = vcmp.lt.s32.totalorder %v9163, %v9164
        %v9166 = vsel %vm9165, %v9163, %v9164
        %v9167 = vsel %vm841, %v9016, 2147483647
        %v9168 = vsel %vm841, %v9017, 2147483647
        %vm9169 = vcmp.lt.s32.totalorder %v9167, %v9168
        %v9170 = vsel %vm9169, %v9167, %v9168
        %v9171 = vsel %vm841, %v9018, 2147483647
        %vm9172 = vcmp.lt.s32.totalorder %v9170, %v9171
        %v9173 = vsel %vm9172, %v9170, %v9171
        %v9174 = vsel %vm841, %v9019, 2147483647
        %vm9175 = vcmp.lt.s32.totalorder %v9173, %v9174
        %v9176 = vsel %vm9175, %v9173, %v9174
        %v9177 = vsel %vm841, %v9020, 2147483647
        %vm9178 = vcmp.lt.s32.totalorder %v9176, %v9177
        %v9179 = vsel %vm9178, %v9176, %v9177
        %v9180 = vsel %vm841, %v9021, 2147483647
        %vm9181 = vcmp.lt.s32.totalorder %v9179, %v9180
        %v9182 = vsel %vm9181, %v9179, %v9180
        %v9183 = vsel %vm841, %v9022, 2147483647
        %vm9184 = vcmp.lt.s32.totalorder %v9182, %v9183
        %v9185 = vsel %vm9184, %v9182, %v9183
        %v9186 = vsel %vm841, %v9023, 2147483647
        %vm9187 = vcmp.lt.s32.totalorder %v9185, %v9186
        %v9188 = vsel %vm9187, %v9185, %v9186
        %v9189 = vsel %vm841, %v9024, 2147483647
        %vm9190 = vcmp.lt.s32.totalorder %v9188, %v9189
        %v9191 = vsel %vm9190, %v9188, %v9189
        %v9192 = vsel %vm841, %v9025, 2147483647
        %vm9193 = vcmp.lt.s32.totalorder %v9191, %v9192
        %v9194 = vsel %vm9193, %v9191, %v9192
        %v9195 = vsel %vm841, %v9026, 2147483647
        %vm9196 = vcmp.lt.s32.totalorder %v9194, %v9195
        %v9197 = vsel %vm9196, %v9194, %v9195
        %v9198 = vsel %vm841, %v9027, 2147483647
        %vm9199 = vcmp.lt.s32.totalorder %v9197, %v9198
        %v9200 = vsel %vm9199, %v9197, %v9198
        %v9201 = vsel %vm2759, %v9028, 2147483647
        %vm9202 = vcmp.lt.s32.totalorder %v9200, %v9201
        %v9203 = vsel %vm9202, %v9200, %v9201
        %v9204 = vrot.slane %v9203, 4
        %vm9205 = vcmp.lt.s32.totalorder %v9203, %v9204
        %v9206 = vsel %vm9205, %v9203, %v9204
        %v9207 = vrot.slane %v9206, 2
        %vm9208 = vcmp.lt.s32.totalorder %v9206, %v9207
        %v9209 = vsel %vm9208, %v9206, %v9207
        %v9210 = vrot.slane %v9209, 1
        %vm9211 = vcmp.lt.s32.totalorder %v9209, %v9210
        %v9212 = vsel %vm9211, %v9209, %v9210
        %vm9213 = vcmp.eq.s32.totalorder %v8035, %v7049
        %vm9214 = vcmp.eq.s32.totalorder %v8050, %v7050
        %vm9215 = vcmp.eq.s32.totalorder %v8065, %v7051
        %vm9216 = vcmp.eq.s32.totalorder %v8080, %v7052
        %vm9217 = vcmp.eq.s32.totalorder %v8095, %v7053
        %vm9218 = vcmp.eq.s32.totalorder %v8110, %v7054
        %vm9219 = vcmp.eq.s32.totalorder %v8125, %v7055
        %vm9220 = vcmp.eq.s32.totalorder %v8140, %v7056
        %vm9221 = vcmp.eq.s32.totalorder %v8155, %v7057
        %vm9222 = vcmp.eq.s32.totalorder %v8170, %v7058
        %vm9223 = vcmp.eq.s32.totalorder %v8185, %v7059
        %vm9224 = vcmp.eq.s32.totalorder %v8200, %v7060
        %vm9225 = vcmp.eq.s32.totalorder %v8215, %v7061
        %vm9226 = vcmp.eq.s32.totalorder %v8230, %v7062
        %vm9227 = vcmp.eq.s32.totalorder %v8245, %v7063
        %vm9228 = vcmp.eq.s32.totalorder %v8260, %v7064
        %vm9229 = vcmp.eq.s32.totalorder %v8275, %v7065
        %vm9230 = vcmp.eq.s32.totalorder %v8290, %v7066
        %vm9231 = vcmp.eq.s32.totalorder %v8305, %v7067
        %vm9232 = vcmp.eq.s32.totalorder %v8320, %v7068
        %vm9233 = vcmp.eq.s32.totalorder %v8335, %v7069
        %vm9234 = vcmp.eq.s32.totalorder %v8350, %v7070
        %vm9235 = vcmp.eq.s32.totalorder %v8365, %v7071
        %vm9236 = vcmp.eq.s32.totalorder %v8380, %v7072
        %vm9237 = vcmp.eq.s32.totalorder %v8395, %v7073
        %vm9238 = vcmp.eq.s32.totalorder %v8410, %v7074
        %vm9239 = vcmp.eq.s32.totalorder %v8425, %v7075
        %vm9240 = vcmp.eq.s32.totalorder %v8440, %v7076
        %vm9241 = vcmp.eq.s32.totalorder %v8455, %v7077
        %vm9242 = vcmp.eq.s32.totalorder %v8470, %v7078
        %vm9243 = vcmp.eq.s32.totalorder %v8485, %v7079
        %vm9244 = vcmp.eq.s32.totalorder %v8500, %v7080
        %vm9245 = vcmp.eq.s32.totalorder %v8515, %v7081
        %vm9246 = vcmp.eq.s32.totalorder %v8530, %v7082
        %vm9247 = vcmp.eq.s32.totalorder %v8545, %v7083
        %vm9248 = vcmp.eq.s32.totalorder %v8560, %v7084
        %vm9249 = vcmp.eq.s32.totalorder %v8575, %v7085
        %vm9250 = vcmp.eq.s32.totalorder %v8590, %v7086
        %vm9251 = vcmp.eq.s32.totalorder %v8605, %v7087
        %vm9252 = vcmp.eq.s32.totalorder %v8620, %v7088
        %vm9253 = vcmp.eq.s32.totalorder %v8635, %v7089
        %vm9254 = vcmp.eq.s32.totalorder %v8650, %v7090
        %vm9255 = vcmp.eq.s32.totalorder %v8665, %v7091
        %vm9256 = vcmp.eq.s32.totalorder %v8680, %v7092
        %vm9257 = vcmp.eq.s32.totalorder %v8695, %v7093
        %vm9258 = vcmp.eq.s32.totalorder %v8710, %v7094
        %vm9259 = vcmp.eq.s32.totalorder %v8725, %v7095
        %vm9260 = vcmp.eq.s32.totalorder %v8740, %v7096
        %vm9261 = vcmp.eq.s32.totalorder %v8755, %v7097
        %vm9262 = vcmp.eq.s32.totalorder %v8770, %v7098
        %vm9263 = vcmp.eq.s32.totalorder %v8785, %v7099
        %vm9264 = vcmp.eq.s32.totalorder %v8800, %v7100
        %v9265 = vsel %vm9213, 1, 0
        %v9266 = vsel %vm9214, 1, 0
        %v9267 = vsel %vm9215, 1, 0
        %v9268 = vsel %vm9216, 1, 0
        %v9269 = vsel %vm9217, 1, 0
        %v9270 = vsel %vm9218, 1, 0
        %v9271 = vsel %vm9219, 1, 0
        %v9272 = vsel %vm9220, 1, 0
        %v9273 = vsel %vm9221, 1, 0
        %v9274 = vsel %vm9222, 1, 0
        %v9275 = vsel %vm9223, 1, 0
        %v9276 = vsel %vm9224, 1, 0
        %v9277 = vsel %vm9225, 1, 0
        %v9278 = vsel %vm9226, 1, 0
        %v9279 = vsel %vm9227, 1, 0
        %v9280 = vsel %vm9228, 1, 0
        %v9281 = vsel %vm9229, 1, 0
        %v9282 = vsel %vm9230, 1, 0
        %v9283 = vsel %vm9231, 1, 0
        %v9284 = vsel %vm9232, 1, 0
        %v9285 = vsel %vm9233, 1, 0
        %v9286 = vsel %vm9234, 1, 0
        %v9287 = vsel %vm9235, 1, 0
        %v9288 = vsel %vm9236, 1, 0
        %v9289 = vsel %vm9237, 1, 0
        %v9290 = vsel %vm9238, 1, 0
        %v9291 = vsel %vm9239, 1, 0
        %v9292 = vsel %vm9240, 1, 0
        %v9293 = vsel %vm9241, 1, 0
        %v9294 = vsel %vm9242, 1, 0
        %v9295 = vsel %vm9243, 1, 0
        %v9296 = vsel %vm9244, 1, 0
        %v9297 = vsel %vm9245, 1, 0
        %v9298 = vsel %vm9246, 1, 0
        %v9299 = vsel %vm9247, 1, 0
        %v9300 = vsel %vm9248, 1, 0
        %v9301 = vsel %vm9249, 1, 0
        %v9302 = vsel %vm9250, 1, 0
        %v9303 = vsel %vm9251, 1, 0
        %v9304 = vsel %vm9252, 1, 0
        %v9305 = vsel %vm9253, 1, 0
        %v9306 = vsel %vm9254, 1, 0
        %v9307 = vsel %vm9255, 1, 0
        %v9308 = vsel %vm9256, 1, 0
        %v9309 = vsel %vm9257, 1, 0
        %v9310 = vsel %vm9258, 1, 0
        %v9311 = vsel %vm9259, 1, 0
        %v9312 = vsel %vm9260, 1, 0
        %v9313 = vsel %vm9261, 1, 0
        %v9314 = vsel %vm9262, 1, 0
        %v9315 = vsel %vm9263, 1, 0
        %v9316 = vsel %vm9264, 1, 0
        %v9317 = vcvt.s32.f32 %v9265
        %v9318 = vcvt.s32.f32 %v9266
        %v9319 = vcvt.s32.f32 %v9267
        %v9320 = vcvt.s32.f32 %v9268
        %v9321 = vcvt.s32.f32 %v9269
        %v9322 = vcvt.s32.f32 %v9270
        %v9323 = vcvt.s32.f32 %v9271
        %v9324 = vcvt.s32.f32 %v9272
        %v9325 = vcvt.s32.f32 %v9273
        %v9326 = vcvt.s32.f32 %v9274
        %v9327 = vcvt.s32.f32 %v9275
        %v9328 = vcvt.s32.f32 %v9276
        %v9329 = vcvt.s32.f32 %v9277
        %v9330 = vcvt.s32.f32 %v9278
        %v9331 = vcvt.s32.f32 %v9279
        %v9332 = vcvt.s32.f32 %v9280
        %v9333 = vcvt.s32.f32 %v9281
        %v9334 = vcvt.s32.f32 %v9282
        %v9335 = vcvt.s32.f32 %v9283
        %v9336 = vcvt.s32.f32 %v9284
        %v9337 = vcvt.s32.f32 %v9285
        %v9338 = vcvt.s32.f32 %v9286
        %v9339 = vcvt.s32.f32 %v9287
        %v9340 = vcvt.s32.f32 %v9288
        %v9341 = vcvt.s32.f32 %v9289
        %v9342 = vcvt.s32.f32 %v9290
        %v9343 = vcvt.s32.f32 %v9291
        %v9344 = vcvt.s32.f32 %v9292
        %v9345 = vcvt.s32.f32 %v9293
        %v9346 = vcvt.s32.f32 %v9294
        %v9347 = vcvt.s32.f32 %v9295
        %v9348 = vcvt.s32.f32 %v9296
        %v9349 = vcvt.s32.f32 %v9297
        %v9350 = vcvt.s32.f32 %v9298
        %v9351 = vcvt.s32.f32 %v9299
        %v9352 = vcvt.s32.f32 %v9300
        %v9353 = vcvt.s32.f32 %v9301
        %v9354 = vcvt.s32.f32 %v9302
        %v9355 = vcvt.s32.f32 %v9303
        %v9356 = vcvt.s32.f32 %v9304
        %v9357 = vcvt.s32.f32 %v9305
        %v9358 = vcvt.s32.f32 %v9306
        %v9359 = vcvt.s32.f32 %v9307
        %v9360 = vcvt.s32.f32 %v9308
        %v9361 = vcvt.s32.f32 %v9309
        %v9362 = vcvt.s32.f32 %v9310
        %v9363 = vcvt.s32.f32 %v9311
        %v9364 = vcvt.s32.f32 %v9312
        %v9365 = vcvt.s32.f32 %v9313
        %v9366 = vcvt.s32.f32 %v9314
        %v9367 = vcvt.s32.f32 %v9315
        %v9368 = vcvt.s32.f32 %v9316
        %v9369 = vmul.f32 %v528, %v9317
        %v9370 = vmul.f32 %v529, %v9318
        %v9371 = vmul.f32 %v530, %v9319
        %v9372 = vmul.f32 %v531, %v9320
        %v9373 = vmul.f32 %v532, %v9321
        %v9374 = vmul.f32 %v533, %v9322
        %v9375 = vmul.f32 %v534, %v9323
        %v9376 = vmul.f32 %v535, %v9324
        %v9377 = vmul.f32 %v536, %v9325
        %v9378 = vmul.f32 %v537, %v9326
        %v9379 = vmul.f32 %v538, %v9327
        %v9380 = vmul.f32 %v539, %v9328
        %v9381 = vmul.f32 %v540, %v9329
        %v9382 = vmul.f32 %v541, %v9330
        %v9383 = vmul.f32 %v542, %v9331
        %v9384 = vmul.f32 %v543, %v9332
        %v9385 = vmul.f32 %v544, %v9333
        %v9386 = vmul.f32 %v545, %v9334
        %v9387 = vmul.f32 %v546, %v9335
        %v9388 = vmul.f32 %v547, %v9336
        %v9389 = vmul.f32 %v548, %v9337
        %v9390 = vmul.f32 %v549, %v9338
        %v9391 = vmul.f32 %v550, %v9339
        %v9392 = vmul.f32 %v551, %v9340
        %v9393 = vmul.f32 %v552, %v9341
        %v9394 = vmul.f32 %v553, %v9342
        %v9395 = vmul.f32 %v554, %v9343
        %v9396 = vmul.f32 %v555, %v9344
        %v9397 = vmul.f32 %v556, %v9345
        %v9398 = vmul.f32 %v557, %v9346
        %v9399 = vmul.f32 %v558, %v9347
        %v9400 = vmul.f32 %v559, %v9348
        %v9401 = vmul.f32 %v560, %v9349
        %v9402 = vmul.f32 %v561, %v9350
        %v9403 = vmul.f32 %v562, %v9351
        %v9404 = vmul.f32 %v563, %v9352
        %v9405 = vmul.f32 %v564, %v9353
        %v9406 = vmul.f32 %v565, %v9354
        %v9407 = vmul.f32 %v566, %v9355
        %v9408 = vmul.f32 %v567, %v9356
        %v9409 = vmul.f32 %v568, %v9357
        %v9410 = vmul.f32 %v569, %v9358
        %v9411 = vmul.f32 %v570, %v9359
        %v9412 = vmul.f32 %v571, %v9360
        %v9413 = vmul.f32 %v572, %v9361
        %v9414 = vmul.f32 %v573, %v9362
        %v9415 = vmul.f32 %v574, %v9363
        %v9416 = vmul.f32 %v575, %v9364
        %v9417 = vmul.f32 %v576, %v9365
        %v9418 = vmul.f32 %v577, %v9366
        %v9419 = vmul.f32 %v578, %v9367
        %v9420 = vmul.f32 %v579, %v9368
        %v9421 = vsel %vm1389, %v9369, 0.0
        %v9422 = vsel %vm1389, %v9370, 0.0
        %v9423 = vadd.f32 %v9421, %v9422
        %v9424 = vsel %vm1389, %v9371, 0.0
        %v9425 = vadd.f32 %v9423, %v9424
        %v9426 = vsel %vm1389, %v9372, 0.0
        %v9427 = vadd.f32 %v9425, %v9426
        %v9428 = vsel %vm1389, %v9373, 0.0
        %v9429 = vadd.f32 %v9427, %v9428
        %v9430 = vsel %vm1389, %v9374, 0.0
        %v9431 = vadd.f32 %v9429, %v9430
        %v9432 = vsel %vm1389, %v9375, 0.0
        %v9433 = vadd.f32 %v9431, %v9432
        %v9434 = vsel %vm1389, %v9376, 0.0
        %v9435 = vadd.f32 %v9433, %v9434
        %v9436 = vsel %vm1389, %v9377, 0.0
        %v9437 = vadd.f32 %v9435, %v9436
        %v9438 = vsel %vm1389, %v9378, 0.0
        %v9439 = vadd.f32 %v9437, %v9438
        %v9440 = vsel %vm1389, %v9379, 0.0
        %v9441 = vadd.f32 %v9439, %v9440
        %v9442 = vsel %vm1389, %v9380, 0.0
        %v9443 = vadd.f32 %v9441, %v9442
        %v9444 = vsel %vm1413, %v9381, 0.0
        %v9445 = vadd.f32 %v9443, %v9444
        %v9446 = vsel %vm1389, %v9382, 0.0
        %v9447 = vadd.f32 %v9445, %v9446
        %v9448 = vsel %vm1389, %v9383, 0.0
        %v9449 = vadd.f32 %v9447, %v9448
        %v9450 = vsel %vm1389, %v9384, 0.0
        %v9451 = vadd.f32 %v9449, %v9450
        %v9452 = vsel %vm1389, %v9385, 0.0
        %v9453 = vadd.f32 %v9451, %v9452
        %v9454 = vsel %vm1389, %v9386, 0.0
        %v9455 = vadd.f32 %v9453, %v9454
        %v9456 = vsel %vm1389, %v9387, 0.0
        %v9457 = vadd.f32 %v9455, %v9456
        %v9458 = vsel %vm1389, %v9388, 0.0
        %v9459 = vadd.f32 %v9457, %v9458
        %v9460 = vsel %vm1389, %v9389, 0.0
        %v9461 = vadd.f32 %v9459, %v9460
        %v9462 = vsel %vm1389, %v9390, 0.0
        %v9463 = vadd.f32 %v9461, %v9462
        %v9464 = vsel %vm1389, %v9391, 0.0
        %v9465 = vadd.f32 %v9463, %v9464
        %v9466 = vsel %vm1389, %v9392, 0.0
        %v9467 = vadd.f32 %v9465, %v9466
        %v9468 = vsel %vm1389, %v9393, 0.0
        %v9469 = vadd.f32 %v9467, %v9468
        %v9470 = vsel %vm1413, %v9394, 0.0
        %v9471 = vadd.f32 %v9469, %v9470
        %v9472 = vsel %vm1389, %v9395, 0.0
        %v9473 = vadd.f32 %v9471, %v9472
        %v9474 = vsel %vm1389, %v9396, 0.0
        %v9475 = vadd.f32 %v9473, %v9474
        %v9476 = vsel %vm1389, %v9397, 0.0
        %v9477 = vadd.f32 %v9475, %v9476
        %v9478 = vsel %vm1389, %v9398, 0.0
        %v9479 = vadd.f32 %v9477, %v9478
        %v9480 = vsel %vm1389, %v9399, 0.0
        %v9481 = vadd.f32 %v9479, %v9480
        %v9482 = vsel %vm1389, %v9400, 0.0
        %v9483 = vadd.f32 %v9481, %v9482
        %v9484 = vsel %vm1389, %v9401, 0.0
        %v9485 = vadd.f32 %v9483, %v9484
        %v9486 = vsel %vm1389, %v9402, 0.0
        %v9487 = vadd.f32 %v9485, %v9486
        %v9488 = vsel %vm1389, %v9403, 0.0
        %v9489 = vadd.f32 %v9487, %v9488
        %v9490 = vsel %vm1389, %v9404, 0.0
        %v9491 = vadd.f32 %v9489, %v9490
        %v9492 = vsel %vm1389, %v9405, 0.0
        %v9493 = vadd.f32 %v9491, %v9492
        %v9494 = vsel %vm1389, %v9406, 0.0
        %v9495 = vadd.f32 %v9493, %v9494
        %v9496 = vsel %vm1413, %v9407, 0.0
        %v9497 = vadd.f32 %v9495, %v9496
        %v9498 = vsel %vm1389, %v9408, 0.0
        %v9499 = vadd.f32 %v9497, %v9498
        %v9500 = vsel %vm1389, %v9409, 0.0
        %v9501 = vadd.f32 %v9499, %v9500
        %v9502 = vsel %vm1389, %v9410, 0.0
        %v9503 = vadd.f32 %v9501, %v9502
        %v9504 = vsel %vm1389, %v9411, 0.0
        %v9505 = vadd.f32 %v9503, %v9504
        %v9506 = vsel %vm1389, %v9412, 0.0
        %v9507 = vadd.f32 %v9505, %v9506
        %v9508 = vsel %vm1389, %v9413, 0.0
        %v9509 = vadd.f32 %v9507, %v9508
        %v9510 = vsel %vm1389, %v9414, 0.0
        %v9511 = vadd.f32 %v9509, %v9510
        %v9512 = vsel %vm1389, %v9415, 0.0
        %v9513 = vadd.f32 %v9511, %v9512
        %v9514 = vsel %vm1389, %v9416, 0.0
        %v9515 = vadd.f32 %v9513, %v9514
        %v9516 = vsel %vm1389, %v9417, 0.0
        %v9517 = vadd.f32 %v9515, %v9516
        %v9518 = vsel %vm1389, %v9418, 0.0
        %v9519 = vadd.f32 %v9517, %v9518
        %v9520 = vsel %vm1389, %v9419, 0.0
        %v9521 = vadd.f32 %v9519, %v9520
        %v9522 = vsel %vm1413, %v9420, 0.0
        %v9523 = vadd.f32 %v9521, %v9522
        %9524 = vadd.xlane.f32.xlu0 %v9523
        %v9525 = vpop.xlane.xlu0 %9524
        %v9526 = vrot.slane %v9525, 4
        %v9527 = vadd.f32 %v9525, %v9526
        %v9528 = vrot.slane %v9527, 2
        %v9529 = vadd.f32 %v9527, %v9528
        %v9530 = vrot.slane %v9529, 1
        %v9531 = vadd.f32 %v9529, %v9530
        %s9532 = vtos %v9531
        %v9533 = vsel %vm1389, %v528, 0.0
        %v9534 = vsel %vm1389, %v529, 0.0
        %v9535 = vadd.f32 %v9533, %v9534
        %v9536 = vsel %vm1389, %v530, 0.0
        %v9537 = vadd.f32 %v9535, %v9536
        %v9538 = vsel %vm1389, %v531, 0.0
        %v9539 = vadd.f32 %v9537, %v9538
        %v9540 = vsel %vm1389, %v532, 0.0
        %v9541 = vadd.f32 %v9539, %v9540
        %v9542 = vsel %vm1389, %v533, 0.0
        %v9543 = vadd.f32 %v9541, %v9542
        %v9544 = vsel %vm1389, %v534, 0.0
        %v9545 = vadd.f32 %v9543, %v9544
        %v9546 = vsel %vm1389, %v535, 0.0
        %v9547 = vadd.f32 %v9545, %v9546
        %v9548 = vsel %vm1389, %v536, 0.0
        %v9549 = vadd.f32 %v9547, %v9548
        %v9550 = vsel %vm1389, %v537, 0.0
        %v9551 = vadd.f32 %v9549, %v9550
        %v9552 = vsel %vm1389, %v538, 0.0
        %v9553 = vadd.f32 %v9551, %v9552
        %v9554 = vsel %vm1389, %v539, 0.0
        %v9555 = vadd.f32 %v9553, %v9554
        %v9556 = vsel %vm1413, %v540, 0.0
        %v9557 = vadd.f32 %v9555, %v9556
        %v9558 = vsel %vm1389, %v541, 0.0
        %v9559 = vadd.f32 %v9557, %v9558
        %v9560 = vsel %vm1389, %v542, 0.0
        %v9561 = vadd.f32 %v9559, %v9560
        %v9562 = vsel %vm1389, %v543, 0.0
        %v9563 = vadd.f32 %v9561, %v9562
        %v9564 = vsel %vm1389, %v544, 0.0
        %v9565 = vadd.f32 %v9563, %v9564
        %v9566 = vsel %vm1389, %v545, 0.0
        %v9567 = vadd.f32 %v9565, %v9566
        %v9568 = vsel %vm1389, %v546, 0.0
        %v9569 = vadd.f32 %v9567, %v9568
        %v9570 = vsel %vm1389, %v547, 0.0
        %v9571 = vadd.f32 %v9569, %v9570
        %v9572 = vsel %vm1389, %v548, 0.0
        %v9573 = vadd.f32 %v9571, %v9572
        %v9574 = vsel %vm1389, %v549, 0.0
        %v9575 = vadd.f32 %v9573, %v9574
        %v9576 = vsel %vm1389, %v550, 0.0
        %v9577 = vadd.f32 %v9575, %v9576
        %v9578 = vsel %vm1389, %v551, 0.0
        %v9579 = vadd.f32 %v9577, %v9578
        %v9580 = vsel %vm1389, %v552, 0.0
        %v9581 = vadd.f32 %v9579, %v9580
        %v9582 = vsel %vm1413, %v553, 0.0
        %v9583 = vadd.f32 %v9581, %v9582
        %v9584 = vsel %vm1389, %v554, 0.0
        %v9585 = vadd.f32 %v9583, %v9584
        %v9586 = vsel %vm1389, %v555, 0.0
        %v9587 = vadd.f32 %v9585, %v9586
        %v9588 = vsel %vm1389, %v556, 0.0
        %v9589 = vadd.f32 %v9587, %v9588
        %v9590 = vsel %vm1389, %v557, 0.0
        %v9591 = vadd.f32 %v9589, %v9590
        %v9592 = vsel %vm1389, %v558, 0.0
        %v9593 = vadd.f32 %v9591, %v9592
        %v9594 = vsel %vm1389, %v559, 0.0
        %v9595 = vadd.f32 %v9593, %v9594
        %v9596 = vsel %vm1389, %v560, 0.0
        %v9597 = vadd.f32 %v9595, %v9596
        %v9598 = vsel %vm1389, %v561, 0.0
        %v9599 = vadd.f32 %v9597, %v9598
        %v9600 = vsel %vm1389, %v562, 0.0
        %v9601 = vadd.f32 %v9599, %v9600
        %v9602 = vsel %vm1389, %v563, 0.0
        %v9603 = vadd.f32 %v9601, %v9602
        %v9604 = vsel %vm1389, %v564, 0.0
        %v9605 = vadd.f32 %v9603, %v9604
        %v9606 = vsel %vm1389, %v565, 0.0
        %v9607 = vadd.f32 %v9605, %v9606
        %v9608 = vsel %vm1413, %v566, 0.0
        %v9609 = vadd.f32 %v9607, %v9608
        %v9610 = vsel %vm1389, %v567, 0.0
        %v9611 = vadd.f32 %v9609, %v9610
        %v9612 = vsel %vm1389, %v568, 0.0
        %v9613 = vadd.f32 %v9611, %v9612
        %v9614 = vsel %vm1389, %v569, 0.0
        %v9615 = vadd.f32 %v9613, %v9614
        %v9616 = vsel %vm1389, %v570, 0.0
        %v9617 = vadd.f32 %v9615, %v9616
        %v9618 = vsel %vm1389, %v571, 0.0
        %v9619 = vadd.f32 %v9617, %v9618
        %v9620 = vsel %vm1389, %v572, 0.0
        %v9621 = vadd.f32 %v9619, %v9620
        %v9622 = vsel %vm1389, %v573, 0.0
        %v9623 = vadd.f32 %v9621, %v9622
        %v9624 = vsel %vm1389, %v574, 0.0
        %v9625 = vadd.f32 %v9623, %v9624
        %v9626 = vsel %vm1389, %v575, 0.0
        %v9627 = vadd.f32 %v9625, %v9626
        %v9628 = vsel %vm1389, %v576, 0.0
        %v9629 = vadd.f32 %v9627, %v9628
        %v9630 = vsel %vm1389, %v577, 0.0
        %v9631 = vadd.f32 %v9629, %v9630
        %v9632 = vsel %vm1389, %v578, 0.0
        %v9633 = vadd.f32 %v9631, %v9632
        %v9634 = vsel %vm1413, %v579, 0.0
        %v9635 = vadd.f32 %v9633, %v9634
        %9636 = vadd.xlane.f32.xlu0 %v9635
        %v9637 = vpop.xlane.xlu0 %9636
        %v9638 = vrot.slane %v9637, 4
        %v9639 = vadd.f32 %v9637, %v9638
        %v9640 = vrot.slane %v9639, 2
        %v9641 = vadd.f32 %v9639, %v9640
        %v9642 = vrot.slane %v9641, 1
        %v9643 = vadd.f32 %v9641, %v9642
        %s9644 = vtos %v9643
        %vm9645 = vcmp.eq.s32.totalorder %v9074, %v7757
        %vm9646 = vcmp.eq.s32.totalorder %v9120, %v7758
        %vm9647 = vcmp.eq.s32.totalorder %v9166, %v7759
        %vm9648 = vcmp.eq.s32.totalorder %v9212, %v7760
        %v9649 = vsel %vm9645, 1, 0
        %v9650 = vsel %vm9646, 1, 0
        %v9651 = vsel %vm9647, 1, 0
        %v9652 = vsel %vm9648, 1, 0
        %v9653 = vcvt.s32.f32 %v9649
        %v9654 = vcvt.s32.f32 %v9650
        %v9655 = vcvt.s32.f32 %v9651
        %v9656 = vcvt.s32.f32 %v9652
        %v9657 = vmul.f32 %v583, %v9653
        %v9658 = vmul.f32 %v584, %v9654
        %v9659 = vmul.f32 %v585, %v9655
        %v9660 = vmul.f32 %v586, %v9656
        %vm9661 = vcmask 819200
        %v9662 = vsel %vm9661, %v9657, 0.0
        %v9663 = vsel %vm9661, %v9658, 0.0
        %v9664 = vadd.f32 %v9662, %v9663
        %v9665 = vsel %vm9661, %v9659, 0.0
        %v9666 = vadd.f32 %v9664, %v9665
        %v9667 = vsel %vm9661, %v9660, 0.0
        %v9668 = vadd.f32 %v9666, %v9667
        %9669 = vadd.xlane.f32.xlu0 %v9668
        %v9670 = vpop.xlane.xlu0 %9669
        %v9671 = vrot.slane %v9670, 4
        %v9672 = vadd.f32 %v9670, %v9671
        %v9673 = vrot.slane %v9672, 2
        %v9674 = vadd.f32 %v9672, %v9673
        %v9675 = vrot.slane %v9674, 1
        %v9676 = vadd.f32 %v9674, %v9675
        %s9677 = vtos %v9676
        %v9678 = vsel %vm9661, %v583, 0.0
        %v9679 = vsel %vm9661, %v584, 0.0
        %v9680 = vadd.f32 %v9678, %v9679
        %v9681 = vsel %vm9661, %v585, 0.0
        %v9682 = vadd.f32 %v9680, %v9681
        %v9683 = vsel %vm9661, %v586, 0.0
        %v9684 = vadd.f32 %v9682, %v9683
        %9685 = vadd.xlane.f32.xlu0 %v9684
        %v9686 = vpop.xlane.xlu0 %9685
        %v9687 = vrot.slane %v9686, 4
        %v9688 = vadd.f32 %v9686, %v9687
        %v9689 = vrot.slane %v9688, 2
        %v9690 = vadd.f32 %v9688, %v9689
        %v9691 = vrot.slane %v9690, 1
        %v9692 = vadd.f32 %v9690, %v9691
        %s9693 = vtos %v9692
        %vm9694 = vcmp.eq.s32.totalorder %v488, 0
        %v9695 = vstv %s1502
        %v9696 = vsel %vm9694, %v9695, 0.0
        %vm9697 = vcmp.eq.s32.totalorder %v488, 1
        %v9698 = vstv %s1874
        %v9699 = vsel %vm9697, %v9698, %v9696
        %vm9700 = vcmp.eq.s32.totalorder %v488, 2
        %v9701 = vstv %s2194
        %v9702 = vsel %vm9700, %v9701, %v9699
        %vm9703 = vcmp.eq.s32.totalorder %v488, 3
        %v9704 = vstv %s2358
        %v9705 = vsel %vm9703, %v9704, %v9702
        %vm9706 = vcmp.eq.s32.totalorder %v488, 4
        %v9707 = vstv %s4707
        %v9708 = vsel %vm9706, %v9707, %v9705
        %vm9709 = vcmp.eq.s32.totalorder %v488, 5
        %v9710 = vstv %s5079
        %v9711 = vsel %vm9709, %v9710, %v9708
        %vm9712 = vcmp.eq.s32.totalorder %v488, 6
        %v9713 = vstv %s5636
        %v9714 = vsel %vm9712, %v9713, %v9711
        %vm9715 = vcmp.eq.s32.totalorder %v488, 7
        %v9716 = vstv %s6112
        %v9717 = vsel %vm9715, %v9716, %v9714
        %vm9718 = vcmp.eq.s32.totalorder %v488, 8
        %v9719 = vstv %s9532
        %v9720 = vsel %vm9718, %v9719, %v9717
        %vm9721 = vcmp.eq.s32.totalorder %v488, 9
        %v9722 = vstv %s9644
        %v9723 = vsel %vm9721, %v9722, %v9720
        %vm9724 = vcmp.eq.s32.totalorder %v488, 10
        %v9725 = vstv %s9677
        %v9726 = vsel %vm9724, %v9725, %v9723
        %vm9727 = vcmp.eq.s32.totalorder %v488, 11
        %v9728 = vstv %s9693
        %v9729 = vsel %vm9727, %v9728, %v9726
        %9730 = vst [vmem:[%s270] sm:$0x1] %v9729
        %9731 = vst.msk [vmem:[%s310] sm:$0xff] %vm1389, %v8035
        %9732 = vst.msk [vmem:[%s310 + $0x8] sm:$0xff] %vm1389, %v8050
        %9733 = vst.msk [vmem:[%s310 + $0x10] sm:$0xff] %vm1389, %v8065
        %9734 = vst.msk [vmem:[%s310 + $0x18] sm:$0xff] %vm1389, %v8080
        %9735 = vst.msk [vmem:[%s310 + $0x20] sm:$0xff] %vm1389, %v8095
        %9736 = vst.msk [vmem:[%s310 + $0x28] sm:$0xff] %vm1389, %v8110
        %9737 = vst.msk [vmem:[%s310 + $0x30] sm:$0xff] %vm1389, %v8125
        %9738 = vst.msk [vmem:[%s310 + $0x38] sm:$0xff] %vm1389, %v8140
        %9739 = vst.msk [vmem:[%s310 + $0x40] sm:$0xff] %vm1389, %v8155
        %9740 = vst.msk [vmem:[%s310 + $0x48] sm:$0xff] %vm1389, %v8170
        %9741 = vst.msk [vmem:[%s310 + $0x50] sm:$0xff] %vm1389, %v8185
        %9742 = vst.msk [vmem:[%s310 + $0x58] sm:$0xff] %vm1389, %v8200
        %9743 = vst.msk [vmem:[%s310 + $0x60] sm:$0x1f] %vm1413, %v8215
        %9744 = vst.msk [vmem:[%s310 + $0x68] sm:$0xff] %vm1389, %v8230
        %9745 = vst.msk [vmem:[%s310 + $0x70] sm:$0xff] %vm1389, %v8245
        %9746 = vst.msk [vmem:[%s310 + $0x78] sm:$0xff] %vm1389, %v8260
        %9747 = vst.msk [vmem:[%s310 + $0x80] sm:$0xff] %vm1389, %v8275
        %9748 = vst.msk [vmem:[%s310 + $0x88] sm:$0xff] %vm1389, %v8290
        %9749 = vst.msk [vmem:[%s310 + $0x90] sm:$0xff] %vm1389, %v8305
        %9750 = vst.msk [vmem:[%s310 + $0x98] sm:$0xff] %vm1389, %v8320
        %9751 = vst.msk [vmem:[%s310 + $0xa0] sm:$0xff] %vm1389, %v8335
        %9752 = vst.msk [vmem:[%s310 + $0xa8] sm:$0xff] %vm1389, %v8350
        %9753 = vst.msk [vmem:[%s310 + $0xb0] sm:$0xff] %vm1389, %v8365
        %9754 = vst.msk [vmem:[%s310 + $0xb8] sm:$0xff] %vm1389, %v8380
        %9755 = vst.msk [vmem:[%s310 + $0xc0] sm:$0xff] %vm1389, %v8395
        %9756 = vst.msk [vmem:[%s310 + $0xc8] sm:$0x1f] %vm1413, %v8410
        %9757 = vst.msk [vmem:[%s310 + $0xd0] sm:$0xff] %vm1389, %v8425
        %9758 = vst.msk [vmem:[%s310 + $0xd8] sm:$0xff] %vm1389, %v8440
        %9759 = vst.msk [vmem:[%s310 + $0xe0] sm:$0xff] %vm1389, %v8455
        %9760 = vst.msk [vmem:[%s310 + $0xe8] sm:$0xff] %vm1389, %v8470
        %9761 = vst.msk [vmem:[%s310 + $0xf0] sm:$0xff] %vm1389, %v8485
        %9762 = vst.msk [vmem:[%s310 + $0xf8] sm:$0xff] %vm1389, %v8500
        %9763 = vst.msk [vmem:[%s310 + $0x100] sm:$0xff] %vm1389, %v8515
        %9764 = vst.msk [vmem:[%s310 + $0x108] sm:$0xff] %vm1389, %v8530
        %9765 = vst.msk [vmem:[%s310 + $0x110] sm:$0xff] %vm1389, %v8545
        %9766 = vst.msk [vmem:[%s310 + $0x118] sm:$0xff] %vm1389, %v8560
        %9767 = vst.msk [vmem:[%s310 + $0x120] sm:$0xff] %vm1389, %v8575
        %9768 = vst.msk [vmem:[%s310 + $0x128] sm:$0xff] %vm1389, %v8590
        %9769 = vst.msk [vmem:[%s310 + $0x130] sm:$0x1f] %vm1413, %v8605
        %9770 = vst.msk [vmem:[%s310 + $0x138] sm:$0xff] %vm1389, %v8620
        %9771 = vst.msk [vmem:[%s310 + $0x140] sm:$0xff] %vm1389, %v8635
        %9772 = vst.msk [vmem:[%s310 + $0x148] sm:$0xff] %vm1389, %v8650
        %9773 = vst.msk [vmem:[%s310 + $0x150] sm:$0xff] %vm1389, %v8665
        %9774 = vst.msk [vmem:[%s310 + $0x158] sm:$0xff] %vm1389, %v8680
        %9775 = vst.msk [vmem:[%s310 + $0x160] sm:$0xff] %vm1389, %v8695
        %9776 = vst.msk [vmem:[%s310 + $0x168] sm:$0xff] %vm1389, %v8710
        %9777 = vst.msk [vmem:[%s310 + $0x170] sm:$0xff] %vm1389, %v8725
        %9778 = vst.msk [vmem:[%s310 + $0x178] sm:$0xff] %vm1389, %v8740
        %9779 = vst.msk [vmem:[%s310 + $0x180] sm:$0xff] %vm1389, %v8755
        %9780 = vst.msk [vmem:[%s310 + $0x188] sm:$0xff] %vm1389, %v8770
        %9781 = vst.msk [vmem:[%s310 + $0x190] sm:$0xff] %vm1389, %v8785
        %9782 = vst.msk [vmem:[%s310 + $0x198] sm:$0x1f] %vm1413, %v8800
        %s9783 = sand.u32 %s132, 1
        %s9784 = scalar_lea.sflag [#allocation3], %s9783
        %s9785 = sand.u32 %s132, 1
        %s9786 = scalar_lea.vmem [#allocation2], %s9785
        %s9787 = smul.u32 4, %s20
        %p9788 = scmp.lt.s32.totalorder %s9787, 7
        %s9789 = scalar_select %p9788, %s9787, 7
        %s9790 = smul.addr %s9789, 13
        %s9791 = smul.addr %s9790, 8
        %s9792 = scalar_lea.vmem %s5, %s9791
        // Predicated region
        $region37: #{tpu_custom_call.1} parent=35 // pred_check
          %p9793 = pneg %p142
        $region38: #{tpu_custom_call.1} parent=35 // pred_check_branch
          %9795 = sbr.rel (%p9793) target = $region40
        $region39: #{tpu_custom_call.1} parent=35 // pred_region
          %s9797 = ssub.s32 16, 16
          %9798 = vsyncadd %s9784, %s9797
          %s9799 = smul.addr %s20, 16
          %s9800 = scalar_lea.hbm %s4, %s9799
          %s9802 = sshll.u32 %s9786, 4
          %s9803 = int_to_ptr.vmem [resolvable:$true] %s9802
          %9805 = dma.vmem_to_hbm [thread:$0]  %s9803, 16, %s9800, %s9784
        $region40: #{tpu_custom_call.1} parent=35 // pred_fallthru
          _
        // Predicated region
        $region41: #{tpu_custom_call.1} parent=35 // pred_check
          %p9806 = pneg %p168
        $region42: #{tpu_custom_call.1} parent=35 // pred_check_branch
          %9808 = sbr.rel (%p9806) target = $region44
        $region43: #{tpu_custom_call.1} parent=35 // pred_region
          %s9809 = smul.u32 4, %s20
        $region44: #{tpu_custom_call.1} parent=35 // pred_fallthru
          _
      $region36: #{tpu_custom_call.1} parent=5 // pred_fallthru
        _
      %p9810 = scmp.le.s32.totalorder 2, %s15
      // Predicated region
      $region45: #{tpu_custom_call.1} parent=5 // pred_check
        %p9811 = pneg %p9810
      $region46: #{tpu_custom_call.1} parent=5 // pred_check_branch
        %9813 = sbr.rel (%p9811) target = $region48
      $region47: #{tpu_custom_call.1} parent=5 // pred_region
        %s9814 = ssub.s32 %s15, 2
        // Predicated region
        $region49: #{tpu_custom_call.1} parent=47 // pred_check
          %p9815 = pneg %p148
        $region50: #{tpu_custom_call.1} parent=47 // pred_check_branch
          %9817 = sbr.rel (%p9815) target = $region52
        $region51: #{tpu_custom_call.1} parent=47 // pred_region
          %s9818 = sand.u32 %s133, 1
          %s9819 = scalar_lea.sflag [#allocation3], %s9818
          %s9820 = sand.u32 %s133, 1
          %s9821 = scalar_lea.vmem [#allocation2], %s9820
          %9822 = dma.done %s9819, 16
        $region52: #{tpu_custom_call.1} parent=47 // pred_fallthru
          _
        // Predicated region
        $region53: #{tpu_custom_call.1} parent=47 // pred_check
          %p9823 = pneg %p174
        $region54: #{tpu_custom_call.1} parent=47 // pred_check_branch
          %9825 = sbr.rel (%p9823) target = $region56
        $region55: #{tpu_custom_call.1} parent=47 // pred_region
          %s9826 = smul.u32 4, %s21
          %p9827 = scmp.lt.s32.totalorder %s9826, 7
          %s9828 = scalar_select %p9827, %s9826, 7
          %s9829 = smul.addr %s9828, 13
          %s9830 = smul.addr %s9829, 8
          %s9831 = scalar_lea.vmem %s5, %s9830
        $region56: #{tpu_custom_call.1} parent=47 // pred_fallthru
          _
      $region48: #{tpu_custom_call.1} parent=5 // pred_fallthru
        _
    $region6: #{tpu_custom_call.1} parent=1 // loop_footer
      %s19 = sadd.s32 1, %s15
    $region7: #{tpu_custom_call.1} parent=1 // loop_footer_branch
      %14 = sbr.rel target = $region3
    $region8: #{tpu_custom_call.1} parent=1 // loop_exit
      _
    %9832 = vsyncpa [#allocation3], 1
    %s9833 = scalar_lea.sflag [#allocation3], 1
    %9834 = vsyncpa %s9833, 1

</llo_original>
